<compile_context>
chip_gen: v5e
topology: v5e:2x2
jax: 0.10.0
libtpu: 0.0.40
codegen_flags: <defaults>
</compile_context>

<pallas_src>
import jax
import jax.numpy as jnp
from jax import lax
from jax.experimental import pallas as pl
from jax.experimental.pallas import tpu as pltpu

NEG_SLOPE = 0.01  # nn.LeakyReLU default negative_slope


def edge_attention_kernel(w_ref, b_ref, x_ref, out_ref):
    """One grid step handles TILE_I attention rows.

    w_ref  : (M,)             f32, SMEM   1x1-conv weights (single out channel)
    b_ref  : (1,)             f32, SMEM   conv bias
    x_ref  : (M, TILE_I, N)   VMEM        edge-feature block
    out_ref: (M, TILE_I)      VMEM        node-feature block
    """
    M, tile_i, n = x_ref.shape
    needs_cast = x_ref.dtype != jnp.float32
    unroll = M <= 64  # keep LLO visibility for small channel counts

    def load_plane(m):
        xm = x_ref[m]                                   # (TILE_I, N)
        return xm.astype(jnp.float32) if needs_cast else xm

    # ---- 1x1 conv over channels: att[i, j] = sum_m w[m] * x[m, i, j] + b ----
    # Accumulating loop keeps the live temp at ~one (TILE_I, N) plane instead
    # of materializing an (M, TILE_I, N) temp before an axis-0 reduction.
    bias = b_ref[0]
    att0 = jnp.full((tile_i, n), bias, dtype=jnp.float32)

    def conv_body(m, acc):
        return acc + w_ref[m] * load_plane(m)

    att = lax.fori_loop(0, M, conv_body, att0, unroll=unroll)

    # ---- LeakyReLU (negative_slope = 0.01) ----
    att = jnp.where(att >= 0, att, NEG_SLOPE * att)

    # ---- row-wise softmax along the lane axis ----
    att = att - jnp.max(att, axis=-1, keepdims=True)
    e = jnp.exp(att)
    denom = jnp.sum(e, axis=-1, keepdims=True)
    coef = e * pl.reciprocal(denom, approx=True)        # divide -> EUP slot

    # ---- node[m, i] = sum_j coef[i, j] * x[m, i, j] ----
    def out_body(m, carry):
        row = jnp.sum(coef * load_plane(m), axis=-1)    # (TILE_I,)
        out_ref[m, :] = row.astype(out_ref.dtype)
        return carry

    lax.fori_loop(0, M, out_body, 0, unroll=unroll)


def _pick_tile_i(M, N, itemsize, budget_bytes=4 << 20):
    """Largest TILE_I that divides N, is a multiple of 8 (sublane) and keeps a
    single (M, TILE_I, N) block within budget_bytes.  Falls back to the
    smallest legal tile, or to a full-extent block if N < 8 / not 8-aligned."""
    divisors = [t for t in range(8, N + 1, 8) if N % t == 0]
    if not divisors:
        return N                                        # full-extent block
    row_bytes = M * N * itemsize
    fitting = [t for t in divisors if t * row_bytes <= budget_bytes]
    return max(fitting) if fitting else min(divisors)


def edge_attention(edge_feats, weight, bias, *, block_bytes=4 << 20):
    """edge_feats: (1, M, N, N); weight: (1, M, 1, 1); bias: (1,) -> (1, M, N)."""
    B, M, N, N2 = edge_feats.shape
    assert B == 1 and N == N2, "expected (1, M, N, N) edge features"

    x = edge_feats[0]                                   # (M, N, N)
    w = weight.reshape(M).astype(jnp.float32)           # (M,)
    b = bias.reshape(1).astype(jnp.float32)             # (1,)

    tile_i = _pick_tile_i(M, N, edge_feats.dtype.itemsize, block_bytes)
    grid = (N // tile_i,)

    out = pl.pallas_call(
        edge_attention_kernel,
        out_shape=jax.ShapeDtypeStruct((M, N), edge_feats.dtype),
        grid=grid,
        in_specs=[
            pl.BlockSpec(memory_space=pltpu.MemorySpace.SMEM),      # w
            pl.BlockSpec(memory_space=pltpu.MemorySpace.SMEM),      # b
            pl.BlockSpec((M, tile_i, N), lambda i: (0, i, 0)),      # x
        ],
        out_specs=pl.BlockSpec((M, tile_i), lambda i: (0, i)),
        compiler_params=pltpu.CompilerParams(
            dimension_semantics=("parallel",),          # rows are independent
            vmem_limit_bytes=32 * 1024 * 1024,
        ),
    )(w, b, x)
    # TODO(synk): for many small graphs (tiny N), batch several (N, N) maps
    # into one pallas_call to amortize per-call overhead and fill the lanes.
    return out[None]                                    # (1, M, N)


def edge_attention_ref(edge_feats, weight, bias):
    """Pure-JAX reference matching the PyTorch forward."""
    _, M, N, _ = edge_feats.shape
    att = jnp.sum(weight.reshape(1, M, 1, 1) * edge_feats,
                  axis=1, keepdims=True) + bias[0]                # (1,1,N,N)
    att = jnp.where(att >= 0, att, NEG_SLOPE * att)
    att = att - jnp.max(att, axis=-1, keepdims=True)
    e = jnp.exp(att)
    coef = e / jnp.sum(e, axis=-1, keepdims=True)                 # (1,1,N,N)
    return jnp.sum(coef * edge_feats, axis=-1)                    # (1,M,N)


if __name__ == "__main__":
    key = jax.random.PRNGKey(0)
    M, N = 32, 256  # feature dim / number of text bboxes (grid of 2 row tiles)
    k1, k2, k3 = jax.random.split(key, 3)

    edge_feats = jax.random.normal(k1, (1, M, N, N), dtype=jnp.float32)
    # Deterministic synthetic Conv2d(M, 1, kernel_size=1) parameters.
    weight = jax.random.normal(k2, (1, M, 1, 1), dtype=jnp.float32) * 0.1
    bias = jax.random.normal(k3, (1,), dtype=jnp.float32) * 0.1

    out = edge_attention(edge_feats, weight, bias)
    out = jax.block_until_ready(out)

    ref = edge_attention_ref(edge_feats, weight, bias)
    assert out.shape == (1, M, N)
    # approx reciprocal in the softmax -> slightly relaxed tolerance.
    assert jnp.allclose(out, ref, atol=2e-3, rtol=2e-3), (
        float(jnp.max(jnp.abs(out - ref))))

    print("KERNEL_OK")
</pallas_src>

<mosaic_0001>
module attributes {stable_mosaic.version = 11 : i64} {
  func.func @edge_attention_kernel(%arg0: i32, %arg1: memref<32xf32, #tpu.memory_space<smem>>, %arg2: memref<1xf32, #tpu.memory_space<smem>>, %arg3: memref<32x128x256xf32, #tpu.memory_space<vmem>>, %arg4: memref<32x128xf32, #tpu.memory_space<vmem>>) attributes {dimension_semantics = [#tpu.dimension_semantics<parallel>], iteration_bounds = array<i64: 2>, scalar_prefetch = 0 : i64, scratch_operands = 0 : i64, tpu.core_type = #tpu.core_type<tc>, window_params = [{transform_indices = @transform_0, window_bounds = array<i64: 32>}, {transform_indices = @transform_1, window_bounds = array<i64: 1>}, {transform_indices = @transform_2, window_bounds = array<i64: 32, 128, 256>}, {transform_indices = @transform_3, window_bounds = array<i64: 32, 128>}]} {
    %c0 = arith.constant 0 : index
    %0 = memref.load %arg2[%c0] : memref<1xf32, #tpu.memory_space<smem>>
    %1 = vector.broadcast %0 : f32 to vector<128x256xf32>
    %c0_i32 = arith.constant 0 : i32
    %2 = arith.index_cast %c0_i32 : i32 to index
    %3 = memref.load %arg1[%2] : memref<32xf32, #tpu.memory_space<smem>>
    %4 = arith.index_cast %c0_i32 : i32 to index
    %c0_0 = arith.constant 0 : index
    %c0_1 = arith.constant 0 : index
    %5 = vector.load %arg3[%4, %c0_0, %c0_1] : memref<32x128x256xf32, #tpu.memory_space<vmem>>, vector<1x128x256xf32>
    %6 = vector.shape_cast %5 : vector<1x128x256xf32> to vector<128x256xf32>
    %7 = vector.broadcast %3 : f32 to vector<128x256xf32>
    %8 = arith.mulf %7, %6 : vector<128x256xf32>
    %9 = arith.addf %1, %8 : vector<128x256xf32>
    %c1_i32 = arith.constant 1 : i32
    %10 = arith.index_cast %c1_i32 : i32 to index
    %11 = memref.load %arg1[%10] : memref<32xf32, #tpu.memory_space<smem>>
    %12 = arith.index_cast %c1_i32 : i32 to index
    %c0_2 = arith.constant 0 : index
    %c0_3 = arith.constant 0 : index
    %13 = vector.load %arg3[%12, %c0_2, %c0_3] : memref<32x128x256xf32, #tpu.memory_space<vmem>>, vector<1x128x256xf32>
    %14 = vector.shape_cast %13 : vector<1x128x256xf32> to vector<128x256xf32>
    %15 = vector.broadcast %11 : f32 to vector<128x256xf32>
    %16 = arith.mulf %15, %14 : vector<128x256xf32>
    %17 = arith.addf %9, %16 : vector<128x256xf32>
    %c2_i32 = arith.constant 2 : i32
    %18 = arith.index_cast %c2_i32 : i32 to index
    %19 = memref.load %arg1[%18] : memref<32xf32, #tpu.memory_space<smem>>
    %20 = arith.index_cast %c2_i32 : i32 to index
    %c0_4 = arith.constant 0 : index
    %c0_5 = arith.constant 0 : index
    %21 = vector.load %arg3[%20, %c0_4, %c0_5] : memref<32x128x256xf32, #tpu.memory_space<vmem>>, vector<1x128x256xf32>
    %22 = vector.shape_cast %21 : vector<1x128x256xf32> to vector<128x256xf32>
    %23 = vector.broadcast %19 : f32 to vector<128x256xf32>
    %24 = arith.mulf %23, %22 : vector<128x256xf32>
    %25 = arith.addf %17, %24 : vector<128x256xf32>
    %c3_i32 = arith.constant 3 : i32
    %26 = arith.index_cast %c3_i32 : i32 to index
    %27 = memref.load %arg1[%26] : memref<32xf32, #tpu.memory_space<smem>>
    %28 = arith.index_cast %c3_i32 : i32 to index
    %c0_6 = arith.constant 0 : index
    %c0_7 = arith.constant 0 : index
    %29 = vector.load %arg3[%28, %c0_6, %c0_7] : memref<32x128x256xf32, #tpu.memory_space<vmem>>, vector<1x128x256xf32>
    %30 = vector.shape_cast %29 : vector<1x128x256xf32> to vector<128x256xf32>
    %31 = vector.broadcast %27 : f32 to vector<128x256xf32>
    %32 = arith.mulf %31, %30 : vector<128x256xf32>
    %33 = arith.addf %25, %32 : vector<128x256xf32>
    %c4_i32 = arith.constant 4 : i32
    %34 = arith.index_cast %c4_i32 : i32 to index
    %35 = memref.load %arg1[%34] : memref<32xf32, #tpu.memory_space<smem>>
    %36 = arith.index_cast %c4_i32 : i32 to index
    %c0_8 = arith.constant 0 : index
    %c0_9 = arith.constant 0 : index
    %37 = vector.load %arg3[%36, %c0_8, %c0_9] : memref<32x128x256xf32, #tpu.memory_space<vmem>>, vector<1x128x256xf32>
    %38 = vector.shape_cast %37 : vector<1x128x256xf32> to vector<128x256xf32>
    %39 = vector.broadcast %35 : f32 to vector<128x256xf32>
    %40 = arith.mulf %39, %38 : vector<128x256xf32>
    %41 = arith.addf %33, %40 : vector<128x256xf32>
    %c5_i32 = arith.constant 5 : i32
    %42 = arith.index_cast %c5_i32 : i32 to index
    %43 = memref.load %arg1[%42] : memref<32xf32, #tpu.memory_space<smem>>
    %44 = arith.index_cast %c5_i32 : i32 to index
    %c0_10 = arith.constant 0 : index
    %c0_11 = arith.constant 0 : index
    %45 = vector.load %arg3[%44, %c0_10, %c0_11] : memref<32x128x256xf32, #tpu.memory_space<vmem>>, vector<1x128x256xf32>
    %46 = vector.shape_cast %45 : vector<1x128x256xf32> to vector<128x256xf32>
    %47 = vector.broadcast %43 : f32 to vector<128x256xf32>
    %48 = arith.mulf %47, %46 : vector<128x256xf32>
    %49 = arith.addf %41, %48 : vector<128x256xf32>
    %c6_i32 = arith.constant 6 : i32
    %50 = arith.index_cast %c6_i32 : i32 to index
    %51 = memref.load %arg1[%50] : memref<32xf32, #tpu.memory_space<smem>>
    %52 = arith.index_cast %c6_i32 : i32 to index
    %c0_12 = arith.constant 0 : index
    %c0_13 = arith.constant 0 : index
    %53 = vector.load %arg3[%52, %c0_12, %c0_13] : memref<32x128x256xf32, #tpu.memory_space<vmem>>, vector<1x128x256xf32>
    %54 = vector.shape_cast %53 : vector<1x128x256xf32> to vector<128x256xf32>
    %55 = vector.broadcast %51 : f32 to vector<128x256xf32>
    %56 = arith.mulf %55, %54 : vector<128x256xf32>
    %57 = arith.addf %49, %56 : vector<128x256xf32>
    %c7_i32 = arith.constant 7 : i32
    %58 = arith.index_cast %c7_i32 : i32 to index
    %59 = memref.load %arg1[%58] : memref<32xf32, #tpu.memory_space<smem>>
    %60 = arith.index_cast %c7_i32 : i32 to index
    %c0_14 = arith.constant 0 : index
    %c0_15 = arith.constant 0 : index
    %61 = vector.load %arg3[%60, %c0_14, %c0_15] : memref<32x128x256xf32, #tpu.memory_space<vmem>>, vector<1x128x256xf32>
    %62 = vector.shape_cast %61 : vector<1x128x256xf32> to vector<128x256xf32>
    %63 = vector.broadcast %59 : f32 to vector<128x256xf32>
    %64 = arith.mulf %63, %62 : vector<128x256xf32>
    %65 = arith.addf %57, %64 : vector<128x256xf32>
    %c8_i32 = arith.constant 8 : i32
    %66 = arith.index_cast %c8_i32 : i32 to index
    %67 = memref.load %arg1[%66] : memref<32xf32, #tpu.memory_space<smem>>
    %68 = arith.index_cast %c8_i32 : i32 to index
    %c0_16 = arith.constant 0 : index
    %c0_17 = arith.constant 0 : index
    %69 = vector.load %arg3[%68, %c0_16, %c0_17] : memref<32x128x256xf32, #tpu.memory_space<vmem>>, vector<1x128x256xf32>
    %70 = vector.shape_cast %69 : vector<1x128x256xf32> to vector<128x256xf32>
    %71 = vector.broadcast %67 : f32 to vector<128x256xf32>
    %72 = arith.mulf %71, %70 : vector<128x256xf32>
    %73 = arith.addf %65, %72 : vector<128x256xf32>
    %c9_i32 = arith.constant 9 : i32
    %74 = arith.index_cast %c9_i32 : i32 to index
    %75 = memref.load %arg1[%74] : memref<32xf32, #tpu.memory_space<smem>>
    %76 = arith.index_cast %c9_i32 : i32 to index
    %c0_18 = arith.constant 0 : index
    %c0_19 = arith.constant 0 : index
    %77 = vector.load %arg3[%76, %c0_18, %c0_19] : memref<32x128x256xf32, #tpu.memory_space<vmem>>, vector<1x128x256xf32>
    %78 = vector.shape_cast %77 : vector<1x128x256xf32> to vector<128x256xf32>
    %79 = vector.broadcast %75 : f32 to vector<128x256xf32>
    %80 = arith.mulf %79, %78 : vector<128x256xf32>
    %81 = arith.addf %73, %80 : vector<128x256xf32>
    %c10_i32 = arith.constant 10 : i32
    %82 = arith.index_cast %c10_i32 : i32 to index
    %83 = memref.load %arg1[%82] : memref<32xf32, #tpu.memory_space<smem>>
    %84 = arith.index_cast %c10_i32 : i32 to index
    %c0_20 = arith.constant 0 : index
    %c0_21 = arith.constant 0 : index
    %85 = vector.load %arg3[%84, %c0_20, %c0_21] : memref<32x128x256xf32, #tpu.memory_space<vmem>>, vector<1x128x256xf32>
    %86 = vector.shape_cast %85 : vector<1x128x256xf32> to vector<128x256xf32>
    %87 = vector.broadcast %83 : f32 to vector<128x256xf32>
    %88 = arith.mulf %87, %86 : vector<128x256xf32>
    %89 = arith.addf %81, %88 : vector<128x256xf32>
    %c11_i32 = arith.constant 11 : i32
    %90 = arith.index_cast %c11_i32 : i32 to index
    %91 = memref.load %arg1[%90] : memref<32xf32, #tpu.memory_space<smem>>
    %92 = arith.index_cast %c11_i32 : i32 to index
    %c0_22 = arith.constant 0 : index
    %c0_23 = arith.constant 0 : index
    %93 = vector.load %arg3[%92, %c0_22, %c0_23] : memref<32x128x256xf32, #tpu.memory_space<vmem>>, vector<1x128x256xf32>
    %94 = vector.shape_cast %93 : vector<1x128x256xf32> to vector<128x256xf32>
    %95 = vector.broadcast %91 : f32 to vector<128x256xf32>
    %96 = arith.mulf %95, %94 : vector<128x256xf32>
    %97 = arith.addf %89, %96 : vector<128x256xf32>
    %c12_i32 = arith.constant 12 : i32
    %98 = arith.index_cast %c12_i32 : i32 to index
    %99 = memref.load %arg1[%98] : memref<32xf32, #tpu.memory_space<smem>>
    %100 = arith.index_cast %c12_i32 : i32 to index
    %c0_24 = arith.constant 0 : index
    %c0_25 = arith.constant 0 : index
    %101 = vector.load %arg3[%100, %c0_24, %c0_25] : memref<32x128x256xf32, #tpu.memory_space<vmem>>, vector<1x128x256xf32>
    %102 = vector.shape_cast %101 : vector<1x128x256xf32> to vector<128x256xf32>
    %103 = vector.broadcast %99 : f32 to vector<128x256xf32>
    %104 = arith.mulf %103, %102 : vector<128x256xf32>
    %105 = arith.addf %97, %104 : vector<128x256xf32>
    %c13_i32 = arith.constant 13 : i32
    %106 = arith.index_cast %c13_i32 : i32 to index
    %107 = memref.load %arg1[%106] : memref<32xf32, #tpu.memory_space<smem>>
    %108 = arith.index_cast %c13_i32 : i32 to index
    %c0_26 = arith.constant 0 : index
    %c0_27 = arith.constant 0 : index
    %109 = vector.load %arg3[%108, %c0_26, %c0_27] : memref<32x128x256xf32, #tpu.memory_space<vmem>>, vector<1x128x256xf32>
    %110 = vector.shape_cast %109 : vector<1x128x256xf32> to vector<128x256xf32>
    %111 = vector.broadcast %107 : f32 to vector<128x256xf32>
    %112 = arith.mulf %111, %110 : vector<128x256xf32>
    %113 = arith.addf %105, %112 : vector<128x256xf32>
    %c14_i32 = arith.constant 14 : i32
    %114 = arith.index_cast %c14_i32 : i32 to index
    %115 = memref.load %arg1[%114] : memref<32xf32, #tpu.memory_space<smem>>
    %116 = arith.index_cast %c14_i32 : i32 to index
    %c0_28 = arith.constant 0 : index
    %c0_29 = arith.constant 0 : index
    %117 = vector.load %arg3[%116, %c0_28, %c0_29] : memref<32x128x256xf32, #tpu.memory_space<vmem>>, vector<1x128x256xf32>
    %118 = vector.shape_cast %117 : vector<1x128x256xf32> to vector<128x256xf32>
    %119 = vector.broadcast %115 : f32 to vector<128x256xf32>
    %120 = arith.mulf %119, %118 : vector<128x256xf32>
    %121 = arith.addf %113, %120 : vector<128x256xf32>
    %c15_i32 = arith.constant 15 : i32
    %122 = arith.index_cast %c15_i32 : i32 to index
    %123 = memref.load %arg1[%122] : memref<32xf32, #tpu.memory_space<smem>>
    %124 = arith.index_cast %c15_i32 : i32 to index
    %c0_30 = arith.constant 0 : index
    %c0_31 = arith.constant 0 : index
    %125 = vector.load %arg3[%124, %c0_30, %c0_31] : memref<32x128x256xf32, #tpu.memory_space<vmem>>, vector<1x128x256xf32>
    %126 = vector.shape_cast %125 : vector<1x128x256xf32> to vector<128x256xf32>
    %127 = vector.broadcast %123 : f32 to vector<128x256xf32>
    %128 = arith.mulf %127, %126 : vector<128x256xf32>
    %129 = arith.addf %121, %128 : vector<128x256xf32>
    %c16_i32 = arith.constant 16 : i32
    %130 = arith.index_cast %c16_i32 : i32 to index
    %131 = memref.load %arg1[%130] : memref<32xf32, #tpu.memory_space<smem>>
    %132 = arith.index_cast %c16_i32 : i32 to index
    %c0_32 = arith.constant 0 : index
    %c0_33 = arith.constant 0 : index
    %133 = vector.load %arg3[%132, %c0_32, %c0_33] : memref<32x128x256xf32, #tpu.memory_space<vmem>>, vector<1x128x256xf32>
    %134 = vector.shape_cast %133 : vector<1x128x256xf32> to vector<128x256xf32>
    %135 = vector.broadcast %131 : f32 to vector<128x256xf32>
    %136 = arith.mulf %135, %134 : vector<128x256xf32>
    %137 = arith.addf %129, %136 : vector<128x256xf32>
    %c17_i32 = arith.constant 17 : i32
    %138 = arith.index_cast %c17_i32 : i32 to index
    %139 = memref.load %arg1[%138] : memref<32xf32, #tpu.memory_space<smem>>
    %140 = arith.index_cast %c17_i32 : i32 to index
    %c0_34 = arith.constant 0 : index
    %c0_35 = arith.constant 0 : index
    %141 = vector.load %arg3[%140, %c0_34, %c0_35] : memref<32x128x256xf32, #tpu.memory_space<vmem>>, vector<1x128x256xf32>
    %142 = vector.shape_cast %141 : vector<1x128x256xf32> to vector<128x256xf32>
    %143 = vector.broadcast %139 : f32 to vector<128x256xf32>
    %144 = arith.mulf %143, %142 : vector<128x256xf32>
    %145 = arith.addf %137, %144 : vector<128x256xf32>
    %c18_i32 = arith.constant 18 : i32
    %146 = arith.index_cast %c18_i32 : i32 to index
    %147 = memref.load %arg1[%146] : memref<32xf32, #tpu.memory_space<smem>>
    %148 = arith.index_cast %c18_i32 : i32 to index
    %c0_36 = arith.constant 0 : index
    %c0_37 = arith.constant 0 : index
    %149 = vector.load %arg3[%148, %c0_36, %c0_37] : memref<32x128x256xf32, #tpu.memory_space<vmem>>, vector<1x128x256xf32>
    %150 = vector.shape_cast %149 : vector<1x128x256xf32> to vector<128x256xf32>
    %151 = vector.broadcast %147 : f32 to vector<128x256xf32>
    %152 = arith.mulf %151, %150 : vector<128x256xf32>
    %153 = arith.addf %145, %152 : vector<128x256xf32>
    %c19_i32 = arith.constant 19 : i32
    %154 = arith.index_cast %c19_i32 : i32 to index
    %155 = memref.load %arg1[%154] : memref<32xf32, #tpu.memory_space<smem>>
    %156 = arith.index_cast %c19_i32 : i32 to index
    %c0_38 = arith.constant 0 : index
    %c0_39 = arith.constant 0 : index
    %157 = vector.load %arg3[%156, %c0_38, %c0_39] : memref<32x128x256xf32, #tpu.memory_space<vmem>>, vector<1x128x256xf32>
    %158 = vector.shape_cast %157 : vector<1x128x256xf32> to vector<128x256xf32>
    %159 = vector.broadcast %155 : f32 to vector<128x256xf32>
    %160 = arith.mulf %159, %158 : vector<128x256xf32>
    %161 = arith.addf %153, %160 : vector<128x256xf32>
    %c20_i32 = arith.constant 20 : i32
    %162 = arith.index_cast %c20_i32 : i32 to index
    %163 = memref.load %arg1[%162] : memref<32xf32, #tpu.memory_space<smem>>
    %164 = arith.index_cast %c20_i32 : i32 to index
    %c0_40 = arith.constant 0 : index
    %c0_41 = arith.constant 0 : index
    %165 = vector.load %arg3[%164, %c0_40, %c0_41] : memref<32x128x256xf32, #tpu.memory_space<vmem>>, vector<1x128x256xf32>
    %166 = vector.shape_cast %165 : vector<1x128x256xf32> to vector<128x256xf32>
    %167 = vector.broadcast %163 : f32 to vector<128x256xf32>
    %168 = arith.mulf %167, %166 : vector<128x256xf32>
    %169 = arith.addf %161, %168 : vector<128x256xf32>
    %c21_i32 = arith.constant 21 : i32
    %170 = arith.index_cast %c21_i32 : i32 to index
    %171 = memref.load %arg1[%170] : memref<32xf32, #tpu.memory_space<smem>>
    %172 = arith.index_cast %c21_i32 : i32 to index
    %c0_42 = arith.constant 0 : index
    %c0_43 = arith.constant 0 : index
    %173 = vector.load %arg3[%172, %c0_42, %c0_43] : memref<32x128x256xf32, #tpu.memory_space<vmem>>, vector<1x128x256xf32>
    %174 = vector.shape_cast %173 : vector<1x128x256xf32> to vector<128x256xf32>
    %175 = vector.broadcast %171 : f32 to vector<128x256xf32>
    %176 = arith.mulf %175, %174 : vector<128x256xf32>
    %177 = arith.addf %169, %176 : vector<128x256xf32>
    %c22_i32 = arith.constant 22 : i32
    %178 = arith.index_cast %c22_i32 : i32 to index
    %179 = memref.load %arg1[%178] : memref<32xf32, #tpu.memory_space<smem>>
    %180 = arith.index_cast %c22_i32 : i32 to index
    %c0_44 = arith.constant 0 : index
    %c0_45 = arith.constant 0 : index
    %181 = vector.load %arg3[%180, %c0_44, %c0_45] : memref<32x128x256xf32, #tpu.memory_space<vmem>>, vector<1x128x256xf32>
    %182 = vector.shape_cast %181 : vector<1x128x256xf32> to vector<128x256xf32>
    %183 = vector.broadcast %179 : f32 to vector<128x256xf32>
    %184 = arith.mulf %183, %182 : vector<128x256xf32>
    %185 = arith.addf %177, %184 : vector<128x256xf32>
    %c23_i32 = arith.constant 23 : i32
    %186 = arith.index_cast %c23_i32 : i32 to index
    %187 = memref.load %arg1[%186] : memref<32xf32, #tpu.memory_space<smem>>
    %188 = arith.index_cast %c23_i32 : i32 to index
    %c0_46 = arith.constant 0 : index
    %c0_47 = arith.constant 0 : index
    %189 = vector.load %arg3[%188, %c0_46, %c0_47] : memref<32x128x256xf32, #tpu.memory_space<vmem>>, vector<1x128x256xf32>
    %190 = vector.shape_cast %189 : vector<1x128x256xf32> to vector<128x256xf32>
    %191 = vector.broadcast %187 : f32 to vector<128x256xf32>
    %192 = arith.mulf %191, %190 : vector<128x256xf32>
    %193 = arith.addf %185, %192 : vector<128x256xf32>
    %c24_i32 = arith.constant 24 : i32
    %194 = arith.index_cast %c24_i32 : i32 to index
    %195 = memref.load %arg1[%194] : memref<32xf32, #tpu.memory_space<smem>>
    %196 = arith.index_cast %c24_i32 : i32 to index
    %c0_48 = arith.constant 0 : index
    %c0_49 = arith.constant 0 : index
    %197 = vector.load %arg3[%196, %c0_48, %c0_49] : memref<32x128x256xf32, #tpu.memory_space<vmem>>, vector<1x128x256xf32>
    %198 = vector.shape_cast %197 : vector<1x128x256xf32> to vector<128x256xf32>
    %199 = vector.broadcast %195 : f32 to vector<128x256xf32>
    %200 = arith.mulf %199, %198 : vector<128x256xf32>
    %201 = arith.addf %193, %200 : vector<128x256xf32>
    %c25_i32 = arith.constant 25 : i32
    %202 = arith.index_cast %c25_i32 : i32 to index
    %203 = memref.load %arg1[%202] : memref<32xf32, #tpu.memory_space<smem>>
    %204 = arith.index_cast %c25_i32 : i32 to index
    %c0_50 = arith.constant 0 : index
    %c0_51 = arith.constant 0 : index
    %205 = vector.load %arg3[%204, %c0_50, %c0_51] : memref<32x128x256xf32, #tpu.memory_space<vmem>>, vector<1x128x256xf32>
    %206 = vector.shape_cast %205 : vector<1x128x256xf32> to vector<128x256xf32>
    %207 = vector.broadcast %203 : f32 to vector<128x256xf32>
    %208 = arith.mulf %207, %206 : vector<128x256xf32>
    %209 = arith.addf %201, %208 : vector<128x256xf32>
    %c26_i32 = arith.constant 26 : i32
    %210 = arith.index_cast %c26_i32 : i32 to index
    %211 = memref.load %arg1[%210] : memref<32xf32, #tpu.memory_space<smem>>
    %212 = arith.index_cast %c26_i32 : i32 to index
    %c0_52 = arith.constant 0 : index
    %c0_53 = arith.constant 0 : index
    %213 = vector.load %arg3[%212, %c0_52, %c0_53] : memref<32x128x256xf32, #tpu.memory_space<vmem>>, vector<1x128x256xf32>
    %214 = vector.shape_cast %213 : vector<1x128x256xf32> to vector<128x256xf32>
    %215 = vector.broadcast %211 : f32 to vector<128x256xf32>
    %216 = arith.mulf %215, %214 : vector<128x256xf32>
    %217 = arith.addf %209, %216 : vector<128x256xf32>
    %c27_i32 = arith.constant 27 : i32
    %218 = arith.index_cast %c27_i32 : i32 to index
    %219 = memref.load %arg1[%218] : memref<32xf32, #tpu.memory_space<smem>>
    %220 = arith.index_cast %c27_i32 : i32 to index
    %c0_54 = arith.constant 0 : index
    %c0_55 = arith.constant 0 : index
    %221 = vector.load %arg3[%220, %c0_54, %c0_55] : memref<32x128x256xf32, #tpu.memory_space<vmem>>, vector<1x128x256xf32>
    %222 = vector.shape_cast %221 : vector<1x128x256xf32> to vector<128x256xf32>
    %223 = vector.broadcast %219 : f32 to vector<128x256xf32>
    %224 = arith.mulf %223, %222 : vector<128x256xf32>
    %225 = arith.addf %217, %224 : vector<128x256xf32>
    %c28_i32 = arith.constant 28 : i32
    %226 = arith.index_cast %c28_i32 : i32 to index
    %227 = memref.load %arg1[%226] : memref<32xf32, #tpu.memory_space<smem>>
    %228 = arith.index_cast %c28_i32 : i32 to index
    %c0_56 = arith.constant 0 : index
    %c0_57 = arith.constant 0 : index
    %229 = vector.load %arg3[%228, %c0_56, %c0_57] : memref<32x128x256xf32, #tpu.memory_space<vmem>>, vector<1x128x256xf32>
    %230 = vector.shape_cast %229 : vector<1x128x256xf32> to vector<128x256xf32>
    %231 = vector.broadcast %227 : f32 to vector<128x256xf32>
    %232 = arith.mulf %231, %230 : vector<128x256xf32>
    %233 = arith.addf %225, %232 : vector<128x256xf32>
    %c29_i32 = arith.constant 29 : i32
    %234 = arith.index_cast %c29_i32 : i32 to index
    %235 = memref.load %arg1[%234] : memref<32xf32, #tpu.memory_space<smem>>
    %236 = arith.index_cast %c29_i32 : i32 to index
    %c0_58 = arith.constant 0 : index
    %c0_59 = arith.constant 0 : index
    %237 = vector.load %arg3[%236, %c0_58, %c0_59] : memref<32x128x256xf32, #tpu.memory_space<vmem>>, vector<1x128x256xf32>
    %238 = vector.shape_cast %237 : vector<1x128x256xf32> to vector<128x256xf32>
    %239 = vector.broadcast %235 : f32 to vector<128x256xf32>
    %240 = arith.mulf %239, %238 : vector<128x256xf32>
    %241 = arith.addf %233, %240 : vector<128x256xf32>
    %c30_i32 = arith.constant 30 : i32
    %242 = arith.index_cast %c30_i32 : i32 to index
    %243 = memref.load %arg1[%242] : memref<32xf32, #tpu.memory_space<smem>>
    %244 = arith.index_cast %c30_i32 : i32 to index
    %c0_60 = arith.constant 0 : index
    %c0_61 = arith.constant 0 : index
    %245 = vector.load %arg3[%244, %c0_60, %c0_61] : memref<32x128x256xf32, #tpu.memory_space<vmem>>, vector<1x128x256xf32>
    %246 = vector.shape_cast %245 : vector<1x128x256xf32> to vector<128x256xf32>
    %247 = vector.broadcast %243 : f32 to vector<128x256xf32>
    %248 = arith.mulf %247, %246 : vector<128x256xf32>
    %249 = arith.addf %241, %248 : vector<128x256xf32>
    %c31_i32 = arith.constant 31 : i32
    %250 = arith.index_cast %c31_i32 : i32 to index
    %251 = memref.load %arg1[%250] : memref<32xf32, #tpu.memory_space<smem>>
    %252 = arith.index_cast %c31_i32 : i32 to index
    %c0_62 = arith.constant 0 : index
    %c0_63 = arith.constant 0 : index
    %253 = vector.load %arg3[%252, %c0_62, %c0_63] : memref<32x128x256xf32, #tpu.memory_space<vmem>>, vector<1x128x256xf32>
    %254 = vector.shape_cast %253 : vector<1x128x256xf32> to vector<128x256xf32>
    %255 = vector.broadcast %251 : f32 to vector<128x256xf32>
    %256 = arith.mulf %255, %254 : vector<128x256xf32>
    %257 = arith.addf %249, %256 : vector<128x256xf32>
    %c32_i32 = arith.constant 32 : i32
    %cst = arith.constant 0.000000e+00 : f32
    %258 = vector.broadcast %cst : f32 to vector<128x256xf32>
    %259 = arith.cmpf oge, %257, %258 : vector<128x256xf32>
    %cst_64 = arith.constant 0.00999999977 : f32
    %260 = vector.broadcast %cst_64 : f32 to vector<128x256xf32>
    %261 = arith.mulf %260, %257 : vector<128x256xf32>
    %262 = arith.select %259, %257, %261 : vector<128x256xi1>, vector<128x256xf32>
    %cst_65 = arith.constant dense<0xFF800000> : vector<128xf32>
    %263 = vector.multi_reduction <maximumf>, %262, %cst_65 [1] : vector<128x256xf32> to vector<128xf32>
    %264 = vector.shape_cast %263 : vector<128xf32> to vector<128x1xf32>
    %265 = vector.broadcast %264 : vector<128x1xf32> to vector<128x256xf32>
    %266 = arith.subf %262, %265 : vector<128x256xf32>
    %267 = math.exp %266 : vector<128x256xf32>
    %cst_66 = arith.constant dense<0.000000e+00> : vector<128xf32>
    %268 = vector.multi_reduction <add>, %267, %cst_66 [1] : vector<128x256xf32> to vector<128xf32>
    %269 = vector.shape_cast %268 : vector<128xf32> to vector<128x1xf32>
    %270 = tpu.reciprocal %269 {approx = true} : vector<128x1xf32> -> vector<128x1xf32>
    %271 = vector.broadcast %270 : vector<128x1xf32> to vector<128x256xf32>
    %272 = arith.mulf %267, %271 : vector<128x256xf32>
    %c0_i32_67 = arith.constant 0 : i32
    %273 = arith.index_cast %c0_i32_67 : i32 to index
    %c0_68 = arith.constant 0 : index
    %c0_69 = arith.constant 0 : index
    %274 = vector.load %arg3[%273, %c0_68, %c0_69] : memref<32x128x256xf32, #tpu.memory_space<vmem>>, vector<1x128x256xf32>
    %275 = vector.shape_cast %274 : vector<1x128x256xf32> to vector<128x256xf32>
    %276 = arith.mulf %272, %275 : vector<128x256xf32>
    %cst_70 = arith.constant dense<0.000000e+00> : vector<128xf32>
    %277 = vector.multi_reduction <add>, %276, %cst_70 [1] : vector<128x256xf32> to vector<128xf32>
    %278 = arith.index_cast %c0_i32_67 : i32 to index
    %c0_71 = arith.constant 0 : index
    %279 = vector.load %arg4[%278, %c0_71] : memref<32x128xf32, #tpu.memory_space<vmem>>, vector<1x128xf32>
    %280 = vector.shape_cast %279 : vector<1x128xf32> to vector<128xf32>
    %281 = vector.shape_cast %277 : vector<128xf32> to vector<1x128xf32>
    tpu.vector_store %arg4[%278, %c0_71], %281 {strides = array<i32>} : memref<32x128xf32, #tpu.memory_space<vmem>>, vector<1x128xf32>,
    %c1_i32_72 = arith.constant 1 : i32
    %282 = arith.index_cast %c1_i32_72 : i32 to index
    %c0_73 = arith.constant 0 : index
    %c0_74 = arith.constant 0 : index
    %283 = vector.load %arg3[%282, %c0_73, %c0_74] : memref<32x128x256xf32, #tpu.memory_space<vmem>>, vector<1x128x256xf32>
    %284 = vector.shape_cast %283 : vector<1x128x256xf32> to vector<128x256xf32>
    %285 = arith.mulf %272, %284 : vector<128x256xf32>
    %cst_75 = arith.constant dense<0.000000e+00> : vector<128xf32>
    %286 = vector.multi_reduction <add>, %285, %cst_75 [1] : vector<128x256xf32> to vector<128xf32>
    %287 = arith.index_cast %c1_i32_72 : i32 to index
    %c0_76 = arith.constant 0 : index
    %288 = vector.load %arg4[%287, %c0_76] : memref<32x128xf32, #tpu.memory_space<vmem>>, vector<1x128xf32>
    %289 = vector.shape_cast %288 : vector<1x128xf32> to vector<128xf32>
    %290 = vector.shape_cast %286 : vector<128xf32> to vector<1x128xf32>
    tpu.vector_store %arg4[%287, %c0_76], %290 {strides = array<i32>} : memref<32x128xf32, #tpu.memory_space<vmem>>, vector<1x128xf32>,
    %c2_i32_77 = arith.constant 2 : i32
    %291 = arith.index_cast %c2_i32_77 : i32 to index
    %c0_78 = arith.constant 0 : index
    %c0_79 = arith.constant 0 : index
    %292 = vector.load %arg3[%291, %c0_78, %c0_79] : memref<32x128x256xf32, #tpu.memory_space<vmem>>, vector<1x128x256xf32>
    %293 = vector.shape_cast %292 : vector<1x128x256xf32> to vector<128x256xf32>
    %294 = arith.mulf %272, %293 : vector<128x256xf32>
    %cst_80 = arith.constant dense<0.000000e+00> : vector<128xf32>
    %295 = vector.multi_reduction <add>, %294, %cst_80 [1] : vector<128x256xf32> to vector<128xf32>
    %296 = arith.index_cast %c2_i32_77 : i32 to index
    %c0_81 = arith.constant 0 : index
    %297 = vector.load %arg4[%296, %c0_81] : memref<32x128xf32, #tpu.memory_space<vmem>>, vector<1x128xf32>
    %298 = vector.shape_cast %297 : vector<1x128xf32> to vector<128xf32>
    %299 = vector.shape_cast %295 : vector<128xf32> to vector<1x128xf32>
    tpu.vector_store %arg4[%296, %c0_81], %299 {strides = array<i32>} : memref<32x128xf32, #tpu.memory_space<vmem>>, vector<1x128xf32>,
    %c3_i32_82 = arith.constant 3 : i32
    %300 = arith.index_cast %c3_i32_82 : i32 to index
    %c0_83 = arith.constant 0 : index
    %c0_84 = arith.constant 0 : index
    %301 = vector.load %arg3[%300, %c0_83, %c0_84] : memref<32x128x256xf32, #tpu.memory_space<vmem>>, vector<1x128x256xf32>
    %302 = vector.shape_cast %301 : vector<1x128x256xf32> to vector<128x256xf32>
    %303 = arith.mulf %272, %302 : vector<128x256xf32>
    %cst_85 = arith.constant dense<0.000000e+00> : vector<128xf32>
    %304 = vector.multi_reduction <add>, %303, %cst_85 [1] : vector<128x256xf32> to vector<128xf32>
    %305 = arith.index_cast %c3_i32_82 : i32 to index
    %c0_86 = arith.constant 0 : index
    %306 = vector.load %arg4[%305, %c0_86] : memref<32x128xf32, #tpu.memory_space<vmem>>, vector<1x128xf32>
    %307 = vector.shape_cast %306 : vector<1x128xf32> to vector<128xf32>
    %308 = vector.shape_cast %304 : vector<128xf32> to vector<1x128xf32>
    tpu.vector_store %arg4[%305, %c0_86], %308 {strides = array<i32>} : memref<32x128xf32, #tpu.memory_space<vmem>>, vector<1x128xf32>,
    %c4_i32_87 = arith.constant 4 : i32
    %309 = arith.index_cast %c4_i32_87 : i32 to index
    %c0_88 = arith.constant 0 : index
    %c0_89 = arith.constant 0 : index
    %310 = vector.load %arg3[%309, %c0_88, %c0_89] : memref<32x128x256xf32, #tpu.memory_space<vmem>>, vector<1x128x256xf32>
    %311 = vector.shape_cast %310 : vector<1x128x256xf32> to vector<128x256xf32>
    %312 = arith.mulf %272, %311 : vector<128x256xf32>
    %cst_90 = arith.constant dense<0.000000e+00> : vector<128xf32>
    %313 = vector.multi_reduction <add>, %312, %cst_90 [1] : vector<128x256xf32> to vector<128xf32>
    %314 = arith.index_cast %c4_i32_87 : i32 to index
    %c0_91 = arith.constant 0 : index
    %315 = vector.load %arg4[%314, %c0_91] : memref<32x128xf32, #tpu.memory_space<vmem>>, vector<1x128xf32>
    %316 = vector.shape_cast %315 : vector<1x128xf32> to vector<128xf32>
    %317 = vector.shape_cast %313 : vector<128xf32> to vector<1x128xf32>
    tpu.vector_store %arg4[%314, %c0_91], %317 {strides = array<i32>} : memref<32x128xf32, #tpu.memory_space<vmem>>, vector<1x128xf32>,
    %c5_i32_92 = arith.constant 5 : i32
    %318 = arith.index_cast %c5_i32_92 : i32 to index
    %c0_93 = arith.constant 0 : index
    %c0_94 = arith.constant 0 : index
    %319 = vector.load %arg3[%318, %c0_93, %c0_94] : memref<32x128x256xf32, #tpu.memory_space<vmem>>, vector<1x128x256xf32>
    %320 = vector.shape_cast %319 : vector<1x128x256xf32> to vector<128x256xf32>
    %321 = arith.mulf %272, %320 : vector<128x256xf32>
    %cst_95 = arith.constant dense<0.000000e+00> : vector<128xf32>
    %322 = vector.multi_reduction <add>, %321, %cst_95 [1] : vector<128x256xf32> to vector<128xf32>
    %323 = arith.index_cast %c5_i32_92 : i32 to index
    %c0_96 = arith.constant 0 : index
    %324 = vector.load %arg4[%323, %c0_96] : memref<32x128xf32, #tpu.memory_space<vmem>>, vector<1x128xf32>
    %325 = vector.shape_cast %324 : vector<1x128xf32> to vector<128xf32>
    %326 = vector.shape_cast %322 : vector<128xf32> to vector<1x128xf32>
    tpu.vector_store %arg4[%323, %c0_96], %326 {strides = array<i32>} : memref<32x128xf32, #tpu.memory_space<vmem>>, vector<1x128xf32>,
    %c6_i32_97 = arith.constant 6 : i32
    %327 = arith.index_cast %c6_i32_97 : i32 to index
    %c0_98 = arith.constant 0 : index
    %c0_99 = arith.constant 0 : index
    %328 = vector.load %arg3[%327, %c0_98, %c0_99] : memref<32x128x256xf32, #tpu.memory_space<vmem>>, vector<1x128x256xf32>
    %329 = vector.shape_cast %328 : vector<1x128x256xf32> to vector<128x256xf32>
    %330 = arith.mulf %272, %329 : vector<128x256xf32>
    %cst_100 = arith.constant dense<0.000000e+00> : vector<128xf32>
    %331 = vector.multi_reduction <add>, %330, %cst_100 [1] : vector<128x256xf32> to vector<128xf32>
    %332 = arith.index_cast %c6_i32_97 : i32 to index
    %c0_101 = arith.constant 0 : index
    %333 = vector.load %arg4[%332, %c0_101] : memref<32x128xf32, #tpu.memory_space<vmem>>, vector<1x128xf32>
    %334 = vector.shape_cast %333 : vector<1x128xf32> to vector<128xf32>
    %335 = vector.shape_cast %331 : vector<128xf32> to vector<1x128xf32>
    tpu.vector_store %arg4[%332, %c0_101], %335 {strides = array<i32>} : memref<32x128xf32, #tpu.memory_space<vmem>>, vector<1x128xf32>,
    %c7_i32_102 = arith.constant 7 : i32
    %336 = arith.index_cast %c7_i32_102 : i32 to index
    %c0_103 = arith.constant 0 : index
    %c0_104 = arith.constant 0 : index
    %337 = vector.load %arg3[%336, %c0_103, %c0_104] : memref<32x128x256xf32, #tpu.memory_space<vmem>>, vector<1x128x256xf32>
    %338 = vector.shape_cast %337 : vector<1x128x256xf32> to vector<128x256xf32>
    %339 = arith.mulf %272, %338 : vector<128x256xf32>
    %cst_105 = arith.constant dense<0.000000e+00> : vector<128xf32>
    %340 = vector.multi_reduction <add>, %339, %cst_105 [1] : vector<128x256xf32> to vector<128xf32>
    %341 = arith.index_cast %c7_i32_102 : i32 to index
    %c0_106 = arith.constant 0 : index
    %342 = vector.load %arg4[%341, %c0_106] : memref<32x128xf32, #tpu.memory_space<vmem>>, vector<1x128xf32>
    %343 = vector.shape_cast %342 : vector<1x128xf32> to vector<128xf32>
    %344 = vector.shape_cast %340 : vector<128xf32> to vector<1x128xf32>
    tpu.vector_store %arg4[%341, %c0_106], %344 {strides = array<i32>} : memref<32x128xf32, #tpu.memory_space<vmem>>, vector<1x128xf32>,
    %c8_i32_107 = arith.constant 8 : i32
    %345 = arith.index_cast %c8_i32_107 : i32 to index
    %c0_108 = arith.constant 0 : index
    %c0_109 = arith.constant 0 : index
    %346 = vector.load %arg3[%345, %c0_108, %c0_109] : memref<32x128x256xf32, #tpu.memory_space<vmem>>, vector<1x128x256xf32>
    %347 = vector.shape_cast %346 : vector<1x128x256xf32> to vector<128x256xf32>
    %348 = arith.mulf %272, %347 : vector<128x256xf32>
    %cst_110 = arith.constant dense<0.000000e+00> : vector<128xf32>
    %349 = vector.multi_reduction <add>, %348, %cst_110 [1] : vector<128x256xf32> to vector<128xf32>
    %350 = arith.index_cast %c8_i32_107 : i32 to index
    %c0_111 = arith.constant 0 : index
    %351 = vector.load %arg4[%350, %c0_111] : memref<32x128xf32, #tpu.memory_space<vmem>>, vector<1x128xf32>
    %352 = vector.shape_cast %351 : vector<1x128xf32> to vector<128xf32>
    %353 = vector.shape_cast %349 : vector<128xf32> to vector<1x128xf32>
    tpu.vector_store %arg4[%350, %c0_111], %353 {strides = array<i32>} : memref<32x128xf32, #tpu.memory_space<vmem>>, vector<1x128xf32>,
    %c9_i32_112 = arith.constant 9 : i32
    %354 = arith.index_cast %c9_i32_112 : i32 to index
    %c0_113 = arith.constant 0 : index
    %c0_114 = arith.constant 0 : index
    %355 = vector.load %arg3[%354, %c0_113, %c0_114] : memref<32x128x256xf32, #tpu.memory_space<vmem>>, vector<1x128x256xf32>
    %356 = vector.shape_cast %355 : vector<1x128x256xf32> to vector<128x256xf32>
    %357 = arith.mulf %272, %356 : vector<128x256xf32>
    %cst_115 = arith.constant dense<0.000000e+00> : vector<128xf32>
    %358 = vector.multi_reduction <add>, %357, %cst_115 [1] : vector<128x256xf32> to vector<128xf32>
    %359 = arith.index_cast %c9_i32_112 : i32 to index
    %c0_116 = arith.constant 0 : index
    %360 = vector.load %arg4[%359, %c0_116] : memref<32x128xf32, #tpu.memory_space<vmem>>, vector<1x128xf32>
    %361 = vector.shape_cast %360 : vector<1x128xf32> to vector<128xf32>
    %362 = vector.shape_cast %358 : vector<128xf32> to vector<1x128xf32>
    tpu.vector_store %arg4[%359, %c0_116], %362 {strides = array<i32>} : memref<32x128xf32, #tpu.memory_space<vmem>>, vector<1x128xf32>,
    %c10_i32_117 = arith.constant 10 : i32
    %363 = arith.index_cast %c10_i32_117 : i32 to index
    %c0_118 = arith.constant 0 : index
    %c0_119 = arith.constant 0 : index
    %364 = vector.load %arg3[%363, %c0_118, %c0_119] : memref<32x128x256xf32, #tpu.memory_space<vmem>>, vector<1x128x256xf32>
    %365 = vector.shape_cast %364 : vector<1x128x256xf32> to vector<128x256xf32>
    %366 = arith.mulf %272, %365 : vector<128x256xf32>
    %cst_120 = arith.constant dense<0.000000e+00> : vector<128xf32>
    %367 = vector.multi_reduction <add>, %366, %cst_120 [1] : vector<128x256xf32> to vector<128xf32>
    %368 = arith.index_cast %c10_i32_117 : i32 to index
    %c0_121 = arith.constant 0 : index
    %369 = vector.load %arg4[%368, %c0_121] : memref<32x128xf32, #tpu.memory_space<vmem>>, vector<1x128xf32>
    %370 = vector.shape_cast %369 : vector<1x128xf32> to vector<128xf32>
    %371 = vector.shape_cast %367 : vector<128xf32> to vector<1x128xf32>
    tpu.vector_store %arg4[%368, %c0_121], %371 {strides = array<i32>} : memref<32x128xf32, #tpu.memory_space<vmem>>, vector<1x128xf32>,
    %c11_i32_122 = arith.constant 11 : i32
    %372 = arith.index_cast %c11_i32_122 : i32 to index
    %c0_123 = arith.constant 0 : index
    %c0_124 = arith.constant 0 : index
    %373 = vector.load %arg3[%372, %c0_123, %c0_124] : memref<32x128x256xf32, #tpu.memory_space<vmem>>, vector<1x128x256xf32>
    %374 = vector.shape_cast %373 : vector<1x128x256xf32> to vector<128x256xf32>
    %375 = arith.mulf %272, %374 : vector<128x256xf32>
    %cst_125 = arith.constant dense<0.000000e+00> : vector<128xf32>
    %376 = vector.multi_reduction <add>, %375, %cst_125 [1] : vector<128x256xf32> to vector<128xf32>
    %377 = arith.index_cast %c11_i32_122 : i32 to index
    %c0_126 = arith.constant 0 : index
    %378 = vector.load %arg4[%377, %c0_126] : memref<32x128xf32, #tpu.memory_space<vmem>>, vector<1x128xf32>
    %379 = vector.shape_cast %378 : vector<1x128xf32> to vector<128xf32>
    %380 = vector.shape_cast %376 : vector<128xf32> to vector<1x128xf32>
    tpu.vector_store %arg4[%377, %c0_126], %380 {strides = array<i32>} : memref<32x128xf32, #tpu.memory_space<vmem>>, vector<1x128xf32>,
    %c12_i32_127 = arith.constant 12 : i32
    %381 = arith.index_cast %c12_i32_127 : i32 to index
    %c0_128 = arith.constant 0 : index
    %c0_129 = arith.constant 0 : index
    %382 = vector.load %arg3[%381, %c0_128, %c0_129] : memref<32x128x256xf32, #tpu.memory_space<vmem>>, vector<1x128x256xf32>
    %383 = vector.shape_cast %382 : vector<1x128x256xf32> to vector<128x256xf32>
    %384 = arith.mulf %272, %383 : vector<128x256xf32>
    %cst_130 = arith.constant dense<0.000000e+00> : vector<128xf32>
    %385 = vector.multi_reduction <add>, %384, %cst_130 [1] : vector<128x256xf32> to vector<128xf32>
    %386 = arith.index_cast %c12_i32_127 : i32 to index
    %c0_131 = arith.constant 0 : index
    %387 = vector.load %arg4[%386, %c0_131] : memref<32x128xf32, #tpu.memory_space<vmem>>, vector<1x128xf32>
    %388 = vector.shape_cast %387 : vector<1x128xf32> to vector<128xf32>
    %389 = vector.shape_cast %385 : vector<128xf32> to vector<1x128xf32>
    tpu.vector_store %arg4[%386, %c0_131], %389 {strides = array<i32>} : memref<32x128xf32, #tpu.memory_space<vmem>>, vector<1x128xf32>,
    %c13_i32_132 = arith.constant 13 : i32
    %390 = arith.index_cast %c13_i32_132 : i32 to index
    %c0_133 = arith.constant 0 : index
    %c0_134 = arith.constant 0 : index
    %391 = vector.load %arg3[%390, %c0_133, %c0_134] : memref<32x128x256xf32, #tpu.memory_space<vmem>>, vector<1x128x256xf32>
    %392 = vector.shape_cast %391 : vector<1x128x256xf32> to vector<128x256xf32>
    %393 = arith.mulf %272, %392 : vector<128x256xf32>
    %cst_135 = arith.constant dense<0.000000e+00> : vector<128xf32>
    %394 = vector.multi_reduction <add>, %393, %cst_135 [1] : vector<128x256xf32> to vector<128xf32>
    %395 = arith.index_cast %c13_i32_132 : i32 to index
    %c0_136 = arith.constant 0 : index
    %396 = vector.load %arg4[%395, %c0_136] : memref<32x128xf32, #tpu.memory_space<vmem>>, vector<1x128xf32>
    %397 = vector.shape_cast %396 : vector<1x128xf32> to vector<128xf32>
    %398 = vector.shape_cast %394 : vector<128xf32> to vector<1x128xf32>
    tpu.vector_store %arg4[%395, %c0_136], %398 {strides = array<i32>} : memref<32x128xf32, #tpu.memory_space<vmem>>, vector<1x128xf32>,
    %c14_i32_137 = arith.constant 14 : i32
    %399 = arith.index_cast %c14_i32_137 : i32 to index
    %c0_138 = arith.constant 0 : index
    %c0_139 = arith.constant 0 : index
    %400 = vector.load %arg3[%399, %c0_138, %c0_139] : memref<32x128x256xf32, #tpu.memory_space<vmem>>, vector<1x128x256xf32>
    %401 = vector.shape_cast %400 : vector<1x128x256xf32> to vector<128x256xf32>
    %402 = arith.mulf %272, %401 : vector<128x256xf32>
    %cst_140 = arith.constant dense<0.000000e+00> : vector<128xf32>
    %403 = vector.multi_reduction <add>, %402, %cst_140 [1] : vector<128x256xf32> to vector<128xf32>
    %404 = arith.index_cast %c14_i32_137 : i32 to index
    %c0_141 = arith.constant 0 : index
    %405 = vector.load %arg4[%404, %c0_141] : memref<32x128xf32, #tpu.memory_space<vmem>>, vector<1x128xf32>
    %406 = vector.shape_cast %405 : vector<1x128xf32> to vector<128xf32>
    %407 = vector.shape_cast %403 : vector<128xf32> to vector<1x128xf32>
    tpu.vector_store %arg4[%404, %c0_141], %407 {strides = array<i32>} : memref<32x128xf32, #tpu.memory_space<vmem>>, vector<1x128xf32>,
    %c15_i32_142 = arith.constant 15 : i32
    %408 = arith.index_cast %c15_i32_142 : i32 to index
    %c0_143 = arith.constant 0 : index
    %c0_144 = arith.constant 0 : index
    %409 = vector.load %arg3[%408, %c0_143, %c0_144] : memref<32x128x256xf32, #tpu.memory_space<vmem>>, vector<1x128x256xf32>
    %410 = vector.shape_cast %409 : vector<1x128x256xf32> to vector<128x256xf32>
    %411 = arith.mulf %272, %410 : vector<128x256xf32>
    %cst_145 = arith.constant dense<0.000000e+00> : vector<128xf32>
    %412 = vector.multi_reduction <add>, %411, %cst_145 [1] : vector<128x256xf32> to vector<128xf32>
    %413 = arith.index_cast %c15_i32_142 : i32 to index
    %c0_146 = arith.constant 0 : index
    %414 = vector.load %arg4[%413, %c0_146] : memref<32x128xf32, #tpu.memory_space<vmem>>, vector<1x128xf32>
    %415 = vector.shape_cast %414 : vector<1x128xf32> to vector<128xf32>
    %416 = vector.shape_cast %412 : vector<128xf32> to vector<1x128xf32>
    tpu.vector_store %arg4[%413, %c0_146], %416 {strides = array<i32>} : memref<32x128xf32, #tpu.memory_space<vmem>>, vector<1x128xf32>,
    %c16_i32_147 = arith.constant 16 : i32
    %417 = arith.index_cast %c16_i32_147 : i32 to index
    %c0_148 = arith.constant 0 : index
    %c0_149 = arith.constant 0 : index
    %418 = vector.load %arg3[%417, %c0_148, %c0_149] : memref<32x128x256xf32, #tpu.memory_space<vmem>>, vector<1x128x256xf32>
    %419 = vector.shape_cast %418 : vector<1x128x256xf32> to vector<128x256xf32>
    %420 = arith.mulf %272, %419 : vector<128x256xf32>
    %cst_150 = arith.constant dense<0.000000e+00> : vector<128xf32>
    %421 = vector.multi_reduction <add>, %420, %cst_150 [1] : vector<128x256xf32> to vector<128xf32>
    %422 = arith.index_cast %c16_i32_147 : i32 to index
    %c0_151 = arith.constant 0 : index
    %423 = vector.load %arg4[%422, %c0_151] : memref<32x128xf32, #tpu.memory_space<vmem>>, vector<1x128xf32>
    %424 = vector.shape_cast %423 : vector<1x128xf32> to vector<128xf32>
    %425 = vector.shape_cast %421 : vector<128xf32> to vector<1x128xf32>
    tpu.vector_store %arg4[%422, %c0_151], %425 {strides = array<i32>} : memref<32x128xf32, #tpu.memory_space<vmem>>, vector<1x128xf32>,
    %c17_i32_152 = arith.constant 17 : i32
    %426 = arith.index_cast %c17_i32_152 : i32 to index
    %c0_153 = arith.constant 0 : index
    %c0_154 = arith.constant 0 : index
    %427 = vector.load %arg3[%426, %c0_153, %c0_154] : memref<32x128x256xf32, #tpu.memory_space<vmem>>, vector<1x128x256xf32>
    %428 = vector.shape_cast %427 : vector<1x128x256xf32> to vector<128x256xf32>
    %429 = arith.mulf %272, %428 : vector<128x256xf32>
    %cst_155 = arith.constant dense<0.000000e+00> : vector<128xf32>
    %430 = vector.multi_reduction <add>, %429, %cst_155 [1] : vector<128x256xf32> to vector<128xf32>
    %431 = arith.index_cast %c17_i32_152 : i32 to index
    %c0_156 = arith.constant 0 : index
    %432 = vector.load %arg4[%431, %c0_156] : memref<32x128xf32, #tpu.memory_space<vmem>>, vector<1x128xf32>
    %433 = vector.shape_cast %432 : vector<1x128xf32> to vector<128xf32>
    %434 = vector.shape_cast %430 : vector<128xf32> to vector<1x128xf32>
    tpu.vector_store %arg4[%431, %c0_156], %434 {strides = array<i32>} : memref<32x128xf32, #tpu.memory_space<vmem>>, vector<1x128xf32>,
    %c18_i32_157 = arith.constant 18 : i32
    %435 = arith.index_cast %c18_i32_157 : i32 to index
    %c0_158 = arith.constant 0 : index
    %c0_159 = arith.constant 0 : index
    %436 = vector.load %arg3[%435, %c0_158, %c0_159] : memref<32x128x256xf32, #tpu.memory_space<vmem>>, vector<1x128x256xf32>
    %437 = vector.shape_cast %436 : vector<1x128x256xf32> to vector<128x256xf32>
    %438 = arith.mulf %272, %437 : vector<128x256xf32>
    %cst_160 = arith.constant dense<0.000000e+00> : vector<128xf32>
    %439 = vector.multi_reduction <add>, %438, %cst_160 [1] : vector<128x256xf32> to vector<128xf32>
    %440 = arith.index_cast %c18_i32_157 : i32 to index
    %c0_161 = arith.constant 0 : index
    %441 = vector.load %arg4[%440, %c0_161] : memref<32x128xf32, #tpu.memory_space<vmem>>, vector<1x128xf32>
    %442 = vector.shape_cast %441 : vector<1x128xf32> to vector<128xf32>
    %443 = vector.shape_cast %439 : vector<128xf32> to vector<1x128xf32>
    tpu.vector_store %arg4[%440, %c0_161], %443 {strides = array<i32>} : memref<32x128xf32, #tpu.memory_space<vmem>>, vector<1x128xf32>,
    %c19_i32_162 = arith.constant 19 : i32
    %444 = arith.index_cast %c19_i32_162 : i32 to index
    %c0_163 = arith.constant 0 : index
    %c0_164 = arith.constant 0 : index
    %445 = vector.load %arg3[%444, %c0_163, %c0_164] : memref<32x128x256xf32, #tpu.memory_space<vmem>>, vector<1x128x256xf32>
    %446 = vector.shape_cast %445 : vector<1x128x256xf32> to vector<128x256xf32>
    %447 = arith.mulf %272, %446 : vector<128x256xf32>
    %cst_165 = arith.constant dense<0.000000e+00> : vector<128xf32>
    %448 = vector.multi_reduction <add>, %447, %cst_165 [1] : vector<128x256xf32> to vector<128xf32>
    %449 = arith.index_cast %c19_i32_162 : i32 to index
    %c0_166 = arith.constant 0 : index
    %450 = vector.load %arg4[%449, %c0_166] : memref<32x128xf32, #tpu.memory_space<vmem>>, vector<1x128xf32>
    %451 = vector.shape_cast %450 : vector<1x128xf32> to vector<128xf32>
    %452 = vector.shape_cast %448 : vector<128xf32> to vector<1x128xf32>
    tpu.vector_store %arg4[%449, %c0_166], %452 {strides = array<i32>} : memref<32x128xf32, #tpu.memory_space<vmem>>, vector<1x128xf32>,
    %c20_i32_167 = arith.constant 20 : i32
    %453 = arith.index_cast %c20_i32_167 : i32 to index
    %c0_168 = arith.constant 0 : index
    %c0_169 = arith.constant 0 : index
    %454 = vector.load %arg3[%453, %c0_168, %c0_169] : memref<32x128x256xf32, #tpu.memory_space<vmem>>, vector<1x128x256xf32>
    %455 = vector.shape_cast %454 : vector<1x128x256xf32> to vector<128x256xf32>
    %456 = arith.mulf %272, %455 : vector<128x256xf32>
    %cst_170 = arith.constant dense<0.000000e+00> : vector<128xf32>
    %457 = vector.multi_reduction <add>, %456, %cst_170 [1] : vector<128x256xf32> to vector<128xf32>
    %458 = arith.index_cast %c20_i32_167 : i32 to index
    %c0_171 = arith.constant 0 : index
    %459 = vector.load %arg4[%458, %c0_171] : memref<32x128xf32, #tpu.memory_space<vmem>>, vector<1x128xf32>
    %460 = vector.shape_cast %459 : vector<1x128xf32> to vector<128xf32>
    %461 = vector.shape_cast %457 : vector<128xf32> to vector<1x128xf32>
    tpu.vector_store %arg4[%458, %c0_171], %461 {strides = array<i32>} : memref<32x128xf32, #tpu.memory_space<vmem>>, vector<1x128xf32>,
    %c21_i32_172 = arith.constant 21 : i32
    %462 = arith.index_cast %c21_i32_172 : i32 to index
    %c0_173 = arith.constant 0 : index
    %c0_174 = arith.constant 0 : index
    %463 = vector.load %arg3[%462, %c0_173, %c0_174] : memref<32x128x256xf32, #tpu.memory_space<vmem>>, vector<1x128x256xf32>
    %464 = vector.shape_cast %463 : vector<1x128x256xf32> to vector<128x256xf32>
    %465 = arith.mulf %272, %464 : vector<128x256xf32>
    %cst_175 = arith.constant dense<0.000000e+00> : vector<128xf32>
    %466 = vector.multi_reduction <add>, %465, %cst_175 [1] : vector<128x256xf32> to vector<128xf32>
    %467 = arith.index_cast %c21_i32_172 : i32 to index
    %c0_176 = arith.constant 0 : index
    %468 = vector.load %arg4[%467, %c0_176] : memref<32x128xf32, #tpu.memory_space<vmem>>, vector<1x128xf32>
    %469 = vector.shape_cast %468 : vector<1x128xf32> to vector<128xf32>
    %470 = vector.shape_cast %466 : vector<128xf32> to vector<1x128xf32>
    tpu.vector_store %arg4[%467, %c0_176], %470 {strides = array<i32>} : memref<32x128xf32, #tpu.memory_space<vmem>>, vector<1x128xf32>,
    %c22_i32_177 = arith.constant 22 : i32
    %471 = arith.index_cast %c22_i32_177 : i32 to index
    %c0_178 = arith.constant 0 : index
    %c0_179 = arith.constant 0 : index
    %472 = vector.load %arg3[%471, %c0_178, %c0_179] : memref<32x128x256xf32, #tpu.memory_space<vmem>>, vector<1x128x256xf32>
    %473 = vector.shape_cast %472 : vector<1x128x256xf32> to vector<128x256xf32>
    %474 = arith.mulf %272, %473 : vector<128x256xf32>
    %cst_180 = arith.constant dense<0.000000e+00> : vector<128xf32>
    %475 = vector.multi_reduction <add>, %474, %cst_180 [1] : vector<128x256xf32> to vector<128xf32>
    %476 = arith.index_cast %c22_i32_177 : i32 to index
    %c0_181 = arith.constant 0 : index
    %477 = vector.load %arg4[%476, %c0_181] : memref<32x128xf32, #tpu.memory_space<vmem>>, vector<1x128xf32>
    %478 = vector.shape_cast %477 : vector<1x128xf32> to vector<128xf32>
    %479 = vector.shape_cast %475 : vector<128xf32> to vector<1x128xf32>
    tpu.vector_store %arg4[%476, %c0_181], %479 {strides = array<i32>} : memref<32x128xf32, #tpu.memory_space<vmem>>, vector<1x128xf32>,
    %c23_i32_182 = arith.constant 23 : i32
    %480 = arith.index_cast %c23_i32_182 : i32 to index
    %c0_183 = arith.constant 0 : index
    %c0_184 = arith.constant 0 : index
    %481 = vector.load %arg3[%480, %c0_183, %c0_184] : memref<32x128x256xf32, #tpu.memory_space<vmem>>, vector<1x128x256xf32>
    %482 = vector.shape_cast %481 : vector<1x128x256xf32> to vector<128x256xf32>
    %483 = arith.mulf %272, %482 : vector<128x256xf32>
    %cst_185 = arith.constant dense<0.000000e+00> : vector<128xf32>
    %484 = vector.multi_reduction <add>, %483, %cst_185 [1] : vector<128x256xf32> to vector<128xf32>
    %485 = arith.index_cast %c23_i32_182 : i32 to index
    %c0_186 = arith.constant 0 : index
    %486 = vector.load %arg4[%485, %c0_186] : memref<32x128xf32, #tpu.memory_space<vmem>>, vector<1x128xf32>
    %487 = vector.shape_cast %486 : vector<1x128xf32> to vector<128xf32>
    %488 = vector.shape_cast %484 : vector<128xf32> to vector<1x128xf32>
    tpu.vector_store %arg4[%485, %c0_186], %488 {strides = array<i32>} : memref<32x128xf32, #tpu.memory_space<vmem>>, vector<1x128xf32>,
    %c24_i32_187 = arith.constant 24 : i32
    %489 = arith.index_cast %c24_i32_187 : i32 to index
    %c0_188 = arith.constant 0 : index
    %c0_189 = arith.constant 0 : index
    %490 = vector.load %arg3[%489, %c0_188, %c0_189] : memref<32x128x256xf32, #tpu.memory_space<vmem>>, vector<1x128x256xf32>
    %491 = vector.shape_cast %490 : vector<1x128x256xf32> to vector<128x256xf32>
    %492 = arith.mulf %272, %491 : vector<128x256xf32>
    %cst_190 = arith.constant dense<0.000000e+00> : vector<128xf32>
    %493 = vector.multi_reduction <add>, %492, %cst_190 [1] : vector<128x256xf32> to vector<128xf32>
    %494 = arith.index_cast %c24_i32_187 : i32 to index
    %c0_191 = arith.constant 0 : index
    %495 = vector.load %arg4[%494, %c0_191] : memref<32x128xf32, #tpu.memory_space<vmem>>, vector<1x128xf32>
    %496 = vector.shape_cast %495 : vector<1x128xf32> to vector<128xf32>
    %497 = vector.shape_cast %493 : vector<128xf32> to vector<1x128xf32>
    tpu.vector_store %arg4[%494, %c0_191], %497 {strides = array<i32>} : memref<32x128xf32, #tpu.memory_space<vmem>>, vector<1x128xf32>,
    %c25_i32_192 = arith.constant 25 : i32
    %498 = arith.index_cast %c25_i32_192 : i32 to index
    %c0_193 = arith.constant 0 : index
    %c0_194 = arith.constant 0 : index
    %499 = vector.load %arg3[%498, %c0_193, %c0_194] : memref<32x128x256xf32, #tpu.memory_space<vmem>>, vector<1x128x256xf32>
    %500 = vector.shape_cast %499 : vector<1x128x256xf32> to vector<128x256xf32>
    %501 = arith.mulf %272, %500 : vector<128x256xf32>
    %cst_195 = arith.constant dense<0.000000e+00> : vector<128xf32>
    %502 = vector.multi_reduction <add>, %501, %cst_195 [1] : vector<128x256xf32> to vector<128xf32>
    %503 = arith.index_cast %c25_i32_192 : i32 to index
    %c0_196 = arith.constant 0 : index
    %504 = vector.load %arg4[%503, %c0_196] : memref<32x128xf32, #tpu.memory_space<vmem>>, vector<1x128xf32>
    %505 = vector.shape_cast %504 : vector<1x128xf32> to vector<128xf32>
    %506 = vector.shape_cast %502 : vector<128xf32> to vector<1x128xf32>
    tpu.vector_store %arg4[%503, %c0_196], %506 {strides = array<i32>} : memref<32x128xf32, #tpu.memory_space<vmem>>, vector<1x128xf32>,
    %c26_i32_197 = arith.constant 26 : i32
    %507 = arith.index_cast %c26_i32_197 : i32 to index
    %c0_198 = arith.constant 0 : index
    %c0_199 = arith.constant 0 : index
    %508 = vector.load %arg3[%507, %c0_198, %c0_199] : memref<32x128x256xf32, #tpu.memory_space<vmem>>, vector<1x128x256xf32>
    %509 = vector.shape_cast %508 : vector<1x128x256xf32> to vector<128x256xf32>
    %510 = arith.mulf %272, %509 : vector<128x256xf32>
    %cst_200 = arith.constant dense<0.000000e+00> : vector<128xf32>
    %511 = vector.multi_reduction <add>, %510, %cst_200 [1] : vector<128x256xf32> to vector<128xf32>
    %512 = arith.index_cast %c26_i32_197 : i32 to index
    %c0_201 = arith.constant 0 : index
    %513 = vector.load %arg4[%512, %c0_201] : memref<32x128xf32, #tpu.memory_space<vmem>>, vector<1x128xf32>
    %514 = vector.shape_cast %513 : vector<1x128xf32> to vector<128xf32>
    %515 = vector.shape_cast %511 : vector<128xf32> to vector<1x128xf32>
    tpu.vector_store %arg4[%512, %c0_201], %515 {strides = array<i32>} : memref<32x128xf32, #tpu.memory_space<vmem>>, vector<1x128xf32>,
    %c27_i32_202 = arith.constant 27 : i32
    %516 = arith.index_cast %c27_i32_202 : i32 to index
    %c0_203 = arith.constant 0 : index
    %c0_204 = arith.constant 0 : index
    %517 = vector.load %arg3[%516, %c0_203, %c0_204] : memref<32x128x256xf32, #tpu.memory_space<vmem>>, vector<1x128x256xf32>
    %518 = vector.shape_cast %517 : vector<1x128x256xf32> to vector<128x256xf32>
    %519 = arith.mulf %272, %518 : vector<128x256xf32>
    %cst_205 = arith.constant dense<0.000000e+00> : vector<128xf32>
    %520 = vector.multi_reduction <add>, %519, %cst_205 [1] : vector<128x256xf32> to vector<128xf32>
    %521 = arith.index_cast %c27_i32_202 : i32 to index
    %c0_206 = arith.constant 0 : index
    %522 = vector.load %arg4[%521, %c0_206] : memref<32x128xf32, #tpu.memory_space<vmem>>, vector<1x128xf32>
    %523 = vector.shape_cast %522 : vector<1x128xf32> to vector<128xf32>
    %524 = vector.shape_cast %520 : vector<128xf32> to vector<1x128xf32>
    tpu.vector_store %arg4[%521, %c0_206], %524 {strides = array<i32>} : memref<32x128xf32, #tpu.memory_space<vmem>>, vector<1x128xf32>,
    %c28_i32_207 = arith.constant 28 : i32
    %525 = arith.index_cast %c28_i32_207 : i32 to index
    %c0_208 = arith.constant 0 : index
    %c0_209 = arith.constant 0 : index
    %526 = vector.load %arg3[%525, %c0_208, %c0_209] : memref<32x128x256xf32, #tpu.memory_space<vmem>>, vector<1x128x256xf32>
    %527 = vector.shape_cast %526 : vector<1x128x256xf32> to vector<128x256xf32>
    %528 = arith.mulf %272, %527 : vector<128x256xf32>
    %cst_210 = arith.constant dense<0.000000e+00> : vector<128xf32>
    %529 = vector.multi_reduction <add>, %528, %cst_210 [1] : vector<128x256xf32> to vector<128xf32>
    %530 = arith.index_cast %c28_i32_207 : i32 to index
    %c0_211 = arith.constant 0 : index
    %531 = vector.load %arg4[%530, %c0_211] : memref<32x128xf32, #tpu.memory_space<vmem>>, vector<1x128xf32>
    %532 = vector.shape_cast %531 : vector<1x128xf32> to vector<128xf32>
    %533 = vector.shape_cast %529 : vector<128xf32> to vector<1x128xf32>
    tpu.vector_store %arg4[%530, %c0_211], %533 {strides = array<i32>} : memref<32x128xf32, #tpu.memory_space<vmem>>, vector<1x128xf32>,
    %c29_i32_212 = arith.constant 29 : i32
    %534 = arith.index_cast %c29_i32_212 : i32 to index
    %c0_213 = arith.constant 0 : index
    %c0_214 = arith.constant 0 : index
    %535 = vector.load %arg3[%534, %c0_213, %c0_214] : memref<32x128x256xf32, #tpu.memory_space<vmem>>, vector<1x128x256xf32>
    %536 = vector.shape_cast %535 : vector<1x128x256xf32> to vector<128x256xf32>
    %537 = arith.mulf %272, %536 : vector<128x256xf32>
    %cst_215 = arith.constant dense<0.000000e+00> : vector<128xf32>
    %538 = vector.multi_reduction <add>, %537, %cst_215 [1] : vector<128x256xf32> to vector<128xf32>
    %539 = arith.index_cast %c29_i32_212 : i32 to index
    %c0_216 = arith.constant 0 : index
    %540 = vector.load %arg4[%539, %c0_216] : memref<32x128xf32, #tpu.memory_space<vmem>>, vector<1x128xf32>
    %541 = vector.shape_cast %540 : vector<1x128xf32> to vector<128xf32>
    %542 = vector.shape_cast %538 : vector<128xf32> to vector<1x128xf32>
    tpu.vector_store %arg4[%539, %c0_216], %542 {strides = array<i32>} : memref<32x128xf32, #tpu.memory_space<vmem>>, vector<1x128xf32>,
    %c30_i32_217 = arith.constant 30 : i32
    %543 = arith.index_cast %c30_i32_217 : i32 to index
    %c0_218 = arith.constant 0 : index
    %c0_219 = arith.constant 0 : index
    %544 = vector.load %arg3[%543, %c0_218, %c0_219] : memref<32x128x256xf32, #tpu.memory_space<vmem>>, vector<1x128x256xf32>
    %545 = vector.shape_cast %544 : vector<1x128x256xf32> to vector<128x256xf32>
    %546 = arith.mulf %272, %545 : vector<128x256xf32>
    %cst_220 = arith.constant dense<0.000000e+00> : vector<128xf32>
    %547 = vector.multi_reduction <add>, %546, %cst_220 [1] : vector<128x256xf32> to vector<128xf32>
    %548 = arith.index_cast %c30_i32_217 : i32 to index
    %c0_221 = arith.constant 0 : index
    %549 = vector.load %arg4[%548, %c0_221] : memref<32x128xf32, #tpu.memory_space<vmem>>, vector<1x128xf32>
    %550 = vector.shape_cast %549 : vector<1x128xf32> to vector<128xf32>
    %551 = vector.shape_cast %547 : vector<128xf32> to vector<1x128xf32>
    tpu.vector_store %arg4[%548, %c0_221], %551 {strides = array<i32>} : memref<32x128xf32, #tpu.memory_space<vmem>>, vector<1x128xf32>,
    %c31_i32_222 = arith.constant 31 : i32
    %552 = arith.index_cast %c31_i32_222 : i32 to index
    %c0_223 = arith.constant 0 : index
    %c0_224 = arith.constant 0 : index
    %553 = vector.load %arg3[%552, %c0_223, %c0_224] : memref<32x128x256xf32, #tpu.memory_space<vmem>>, vector<1x128x256xf32>
    %554 = vector.shape_cast %553 : vector<1x128x256xf32> to vector<128x256xf32>
    %555 = arith.mulf %272, %554 : vector<128x256xf32>
    %cst_225 = arith.constant dense<0.000000e+00> : vector<128xf32>
    %556 = vector.multi_reduction <add>, %555, %cst_225 [1] : vector<128x256xf32> to vector<128xf32>
    %557 = arith.index_cast %c31_i32_222 : i32 to index
    %c0_226 = arith.constant 0 : index
    %558 = vector.load %arg4[%557, %c0_226] : memref<32x128xf32, #tpu.memory_space<vmem>>, vector<1x128xf32>
    %559 = vector.shape_cast %558 : vector<1x128xf32> to vector<128xf32>
    %560 = vector.shape_cast %556 : vector<128xf32> to vector<1x128xf32>
    tpu.vector_store %arg4[%557, %c0_226], %560 {strides = array<i32>} : memref<32x128xf32, #tpu.memory_space<vmem>>, vector<1x128xf32>,
    %c32_i32_227 = arith.constant 32 : i32
    return
  }
  func.func @transform_0(%arg0: i32) -> i32 {
    %c0_i32 = arith.constant 0 : i32
    %c0_i32_0 = arith.constant 0 : i32
    return %c0_i32 : i32
  }
  func.func @transform_1(%arg0: i32) -> i32 {
    %c0_i32 = arith.constant 0 : i32
    %c0_i32_0 = arith.constant 0 : i32
    return %c0_i32 : i32
  }
  func.func @transform_2(%arg0: i32) -> (i32, i32, i32) {
    %c0_i32 = arith.constant 0 : i32
    %c0_i32_0 = arith.constant 0 : i32
    %c0_i32_1 = arith.constant 0 : i32
    return %c0_i32, %arg0, %c0_i32_0 : i32, i32, i32
  }
  func.func @transform_3(%arg0: i32) -> (i32, i32) {
    %c0_i32 = arith.constant 0 : i32
    %c0_i32_0 = arith.constant 0 : i32
    return %c0_i32, %arg0 : i32, i32
  }
}

</mosaic_0001>

<llo_original>
// kernel: tpu_custom_call.1
$region0: #{tpu_custom_call.1}
  #allocation0 [shape = 'u32[]', space=smem, size = 0x4, offset = 0x4, fixed_abs, tag = 'smem constant byte address 0x4 - core index']
  #allocation1 [shape = 'u32[72,128]{1,0:T(1,128)}', space=vmem, size = 0x9000, scoped, tag = 'internal scratch']
  #allocation2 [shape = 'f32[1]{0:T(128)S(6)}', space=smem, size = 0x200, scoped, tag = 'scoped memory for tpu_custom_call.1']
  #allocation9 [shape = 's32[]', space=sflag, size = 0x4, offset = 0, fixed_abs, tag = 'sflag constant byte address 0x0 - dummy sync flag']
  %s0 = inlined_call_operand.hbm [shape: f32[32], index: 0, kind: input, shape index: {}]
  %s1 = inlined_call_operand.<no memory space> [shape: f32[1], index: 1, kind: input, shape index: {}]
  %s2 = inlined_call_operand.hbm [shape: f32[32,256,256], index: 2, kind: input, shape index: {}]
  %s3 = inlined_call_operand.hbm [shape: f32[32,256], index: 3, kind: output, shape index: {}]
  %s4 = sld [smem:[#allocation0]]
  $region53: #{tpu_custom_call.1} parent=0
    _
  %s6 = ssub.s32 1, %s4
  %s7 = scalar_select 0, %s6, %s4
  %8 = sst [smem:[#allocation2]] %s1
  $region1: #{tpu_custom_call.1} parent=0
    #allocation3 [shape = 'u8[512]{0}', space=smem, size = 0x200, scoped, tag = 'input window, operand 0, single buffered']
    #allocation4 [shape = 's32[2]{0}', space=sflag, size = 0x8, scoped, tag = 'scoped memory for tpu_custom_call.1']
    #allocation5 [shape = 's32[2]{0}', space=sflag, size = 0x8, scoped, tag = 'scoped memory for tpu_custom_call.1']
    #allocation6 [shape = 's32[2]{0}', space=sflag, size = 0x8, scoped, tag = 'scoped memory for tpu_custom_call.1']
    #allocation7 [shape = 'u8[8388608]{0}', space=vmem, size = 0x800000, scoped, tag = 'input window, operand 2']
    #allocation8 [shape = 'u8[32768]{0}', space=vmem, size = 0x8000, scoped, tag = 'output window, operand 0']
    %9 = vsyncpa [#allocation6], 0
    %10 = vsyncpa [#allocation4], 0
    %s11 = scalar_lea.sflag [#allocation4], 1
    %12 = vsyncpa %s11, 0
    %13 = vsyncpa [#allocation5], 0
    %s14 = scalar_lea.sflag [#allocation5], 1
    %15 = vsyncpa %s14, 0
    loop: start=0, step=1, limit=4
    $region2: #{tpu_custom_call.1} parent=1 // loop_pre_header
      _
    $region3: #{tpu_custom_call.1} parent=1 // loop_header
      %s17 = sphi 0, %s21
      %p18 = scmp.ge.s32.totalorder %s17, 4
      %s25 = sphi 0, %s25
      %s27 = sphi 0, %s25
      %s28 = sphi 0, %s27
      %s42 = sphi 0, %s28
      %s46 = sphi 0, %s46
      %s48 = sphi 0, %s46
      %s49 = sphi 0, %s48
      %s63 = sphi 0, %s49
      %s69 = sphi 0, %s71
      %s72 = sphi 0, %s69
      %s73 = sphi 0, %s72
      %s89 = sphi 0, %s73
      %s95 = sphi 0, %s97
      %s98 = sphi 0, %s95
      %s99 = sphi 0, %s98
      %s115 = sphi 0, %s99
    $region4: #{tpu_custom_call.1} parent=1 // loop_header_branch
      %20 = sbr.rel (%p18) target = $region8
    $region5: #{tpu_custom_call.1} parent=1 // loop_body
      %s22 = ssub.s32 %s17, 1
      %s23 = ssub.s32 %s17, 2
      %s24 = sadd.s32 %s17, 1
      %s26 = sadd.s32 %s25, 1
      %p29 = scmp.eq.s32.totalorder %s17, 1
      %p30 = scmp.ne.s32.totalorder %s25, %s27
      %p31 = scmp.eq.s32.totalorder %s17, 0
      %p32 = por %p30, %p31
      %p33 = scmp.ne.s32.totalorder %s25, %s27
      %p34 = scmp.eq.s32.totalorder %s22, 1
      %p35 = por %p33, %p34
      %p36 = scmp.ne.s32.totalorder %s27, %s28
      %p37 = scmp.eq.s32.totalorder %s22, 0
      %p38 = por %p36, %p37
      %p39 = scmp.ne.s32.totalorder %s27, %s28
      %p40 = scmp.eq.s32.totalorder %s23, 1
      %p41 = por %p39, %p40
      %p43 = scmp.ne.s32.totalorder %s28, %s42
      %p44 = scmp.eq.s32.totalorder %s23, 0
      %p45 = por %p43, %p44
      %s47 = sadd.s32 %s46, 1
      %p50 = scmp.eq.s32.totalorder %s17, 1
      %p51 = scmp.ne.s32.totalorder %s46, %s48
      %p52 = scmp.eq.s32.totalorder %s17, 0
      %p53 = por %p51, %p52
      %p54 = scmp.ne.s32.totalorder %s46, %s48
      %p55 = scmp.eq.s32.totalorder %s22, 1
      %p56 = por %p54, %p55
      %p57 = scmp.ne.s32.totalorder %s48, %s49
      %p58 = scmp.eq.s32.totalorder %s22, 0
      %p59 = por %p57, %p58
      %p60 = scmp.ne.s32.totalorder %s48, %s49
      %p61 = scmp.eq.s32.totalorder %s23, 1
      %p62 = por %p60, %p61
      %p64 = scmp.ne.s32.totalorder %s49, %s63
      %p65 = scmp.eq.s32.totalorder %s23, 0
      %p66 = por %p64, %p65
      %s67 = ssub.s32 %s17, %s24
      %p68 = scmp.eq.s32.totalorder %s67, 0
      %s70 = sadd.s32 %s69, 1
      %s71 = scalar_select %p68, %s69, %s70
      %p74 = pneg %p68
      %p75 = scmp.eq.s32.totalorder %s17, 1
      %p76 = por %p74, %p75
      %p77 = scmp.ne.s32.totalorder %s69, %s72
      %p78 = scmp.eq.s32.totalorder %s17, 0
      %p79 = por %p77, %p78
      %p80 = scmp.ne.s32.totalorder %s69, %s72
      %p81 = scmp.eq.s32.totalorder %s22, 1
      %p82 = por %p80, %p81
      %p83 = scmp.ne.s32.totalorder %s72, %s73
      %p84 = scmp.eq.s32.totalorder %s22, 0
      %p85 = por %p83, %p84
      %p86 = scmp.ne.s32.totalorder %s72, %s73
      %p87 = scmp.eq.s32.totalorder %s23, 1
      %p88 = por %p86, %p87
      %p90 = scmp.ne.s32.totalorder %s73, %s89
      %p91 = scmp.eq.s32.totalorder %s23, 0
      %p92 = por %p90, %p91
      %s93 = ssub.s32 %s17, %s24
      %p94 = scmp.eq.s32.totalorder %s93, 0
      %s96 = sadd.s32 %s95, 1
      %s97 = scalar_select %p94, %s95, %s96
      %p100 = pneg %p94
      %p101 = scmp.eq.s32.totalorder %s17, 1
      %p102 = por %p100, %p101
      %p103 = scmp.ne.s32.totalorder %s95, %s98
      %p104 = scmp.eq.s32.totalorder %s17, 0
      %p105 = por %p103, %p104
      %p106 = scmp.ne.s32.totalorder %s95, %s98
      %p107 = scmp.eq.s32.totalorder %s22, 1
      %p108 = por %p106, %p107
      %p109 = scmp.ne.s32.totalorder %s98, %s99
      %p110 = scmp.eq.s32.totalorder %s22, 0
      %p111 = por %p109, %p110
      %p112 = scmp.ne.s32.totalorder %s98, %s99
      %p113 = scmp.eq.s32.totalorder %s23, 1
      %p114 = por %p112, %p113
      %p116 = scmp.ne.s32.totalorder %s99, %s115
      %p117 = scmp.eq.s32.totalorder %s23, 0
      %p118 = por %p116, %p117
      %p119 = scmp.le.s32.totalorder 1, %s17
      %p120 = scmp.lt.s32.totalorder %s17, 3
      %p121 = pnand %p119, %p120
      %p122 = pneg %p121
      // Predicated region
      $region9: #{tpu_custom_call.1} parent=5 // pred_check
        _
      $region10: #{tpu_custom_call.1} parent=5 // pred_check_branch
        %124 = sbr.rel (%p121) target = $region12
      $region11: #{tpu_custom_call.1} parent=5 // pred_region
        %s125 = ssub.s32 %s17, 1
        // Predicated region
        $region13: #{tpu_custom_call.1} parent=11 // pred_check
          %p126 = pneg %p38
        $region14: #{tpu_custom_call.1} parent=11 // pred_check_branch
          %128 = sbr.rel (%p126) target = $region16
        $region15: #{tpu_custom_call.1} parent=11 // pred_region
          %130 = vsyncadd [#allocation6], 0
          %s132 = sshll.u32 %s0, 4
          %s133 = int_to_ptr.hbm [resolvable:$true] %s132
          %135 = dma.hbm_to_smem %s133, 16, [#allocation3], [#allocation6]
        $region16: #{tpu_custom_call.1} parent=11 // pred_fallthru
          _
        // Predicated region
        $region17: #{tpu_custom_call.1} parent=11 // pred_check
          %p136 = pneg %p59
        $region18: #{tpu_custom_call.1} parent=11 // pred_check_branch
          %138 = sbr.rel (%p136) target = $region20
        $region19: #{tpu_custom_call.1} parent=11 // pred_region
          _
        $region20: #{tpu_custom_call.1} parent=11 // pred_fallthru
          _
      $region12: #{tpu_custom_call.1} parent=5 // pred_fallthru
        _
      %p139 = scmp.lt.s32.totalorder %s17, 2
      // Predicated region
      $region21: #{tpu_custom_call.1} parent=5 // pred_check
        %p140 = pneg %p139
      $region22: #{tpu_custom_call.1} parent=5 // pred_check_branch
        %142 = sbr.rel (%p140) target = $region24
      $region23: #{tpu_custom_call.1} parent=5 // pred_region
        // Predicated region
        $region25: #{tpu_custom_call.1} parent=23 // pred_check
          %p143 = pneg %p79
        $region26: #{tpu_custom_call.1} parent=23 // pred_check_branch
          %145 = sbr.rel (%p143) target = $region28
        $region27: #{tpu_custom_call.1} parent=23 // pred_region
          #allocation10 [shape = 'u32[6]{0}', space=smem, size = 0x18, scoped, tag = 'DMA stride descriptor']
          %s146 = sand.u32 %s69, 1
          %s147 = scalar_lea.sflag [#allocation4], %s146
          %s148 = sand.u32 %s69, 1
          %s149 = smul.addr %s148, 8192
          %s150 = scalar_lea.vmem [#allocation7], %s149
          %s151 = smul.u32 16, %s17
          %153 = vsyncadd %s147, 0
          %s154 = smul.addr %s151, 2
          %s155 = smul.addr %s154, 8
          %s156 = scalar_lea.hbm %s2, %s155
          %s158 = sshll.u32 1, 14
          %s159 = sxor.u32 4294967295, %s158
          %s161 = sld [smem:[#allocation0]]
          %s162 = sadd.s32 2, %s161
          %s164 = sshll.u32 7, 26
          %s165 = sxor.u32 4294967295, %s164
          %s166 = sand.u32 0, %s165
          %s167 = sshll.u32 %s162, 26
          %s168 = sor.u32 %s166, %s167
          %s169 = sshll.u32 %s156, 4
          %s170 = int_to_ptr.hbm [resolvable:$true] %s169
          %s171 = sshll.u32 %s150, 4
          %s172 = int_to_ptr.vmem [resolvable:$true] %s171
          %178 = sst [smem:[#allocation10]] 8192
          %s179 = scalar_lea.smem [#allocation10], 1
          %180 = sst [smem:[%s179]] 4096
          %s181 = scalar_lea.smem [#allocation10], 2
          %182 = sst [smem:[%s181]] 16
          %s183 = scalar_lea.smem [#allocation10], 3
          %184 = sst [smem:[%s183]] 256
          %s185 = scalar_lea.smem [#allocation10], 4
          %186 = sst [smem:[%s185]] 256
          %s187 = scalar_lea.smem [#allocation10], 5
          %188 = sst [smem:[%s187]] 16
          %190 = dma.general %s170, 131072, %s172, %s147, [#allocation9], [#allocation10], %s168, 0
        $region28: #{tpu_custom_call.1} parent=23 // pred_fallthru
          _
      $region24: #{tpu_custom_call.1} parent=5 // pred_fallthru
        _
      %p191 = scmp.le.s32.totalorder 1, %s17
      %p192 = scmp.lt.s32.totalorder %s17, 3
      %p193 = pnand %p191, %p192
      %p194 = pneg %p193
      // Predicated region
      $region29: #{tpu_custom_call.1} parent=5 // pred_check
        _
      $region30: #{tpu_custom_call.1} parent=5 // pred_check_branch
        %196 = sbr.rel (%p193) target = $region32
      $region31: #{tpu_custom_call.1} parent=5 // pred_region
        %s197 = ssub.s32 %s17, 1
        // Predicated region
        $region33: #{tpu_custom_call.1} parent=31 // pred_check
          %p198 = pneg %p38
        $region34: #{tpu_custom_call.1} parent=31 // pred_check_branch
          %200 = sbr.rel (%p198) target = $region36
        $region35: #{tpu_custom_call.1} parent=31 // pred_region
          %202 = dma.done [#allocation6], 16
        $region36: #{tpu_custom_call.1} parent=31 // pred_fallthru
          _
        %s203 = sand.u32 %s72, 1
        %s204 = scalar_lea.sflag [#allocation4], %s203
        %s205 = sand.u32 %s72, 1
        %s206 = smul.addr %s205, 8192
        %s207 = scalar_lea.vmem [#allocation7], %s206
        // Predicated region
        $region37: #{tpu_custom_call.1} parent=31 // pred_check
          %p208 = pneg %p85
        $region38: #{tpu_custom_call.1} parent=31 // pred_check_branch
          %210 = sbr.rel (%p208) target = $region40
        $region39: #{tpu_custom_call.1} parent=31 // pred_region
          %212 = dma.done %s204, 131072
        $region40: #{tpu_custom_call.1} parent=31 // pred_fallthru
          _
        %213 = sfence
        %p214 = pneg %p38
        %p215 = pneg %p35
        %p216 = pneg %p59
        %p217 = pneg %p56
        %s218 = sand.u32 %s72, 1
        %s219 = scalar_lea.sflag [#allocation4], %s218
        %s220 = sand.u32 %s72, 1
        %s221 = smul.addr %s220, 8192
        %s222 = scalar_lea.vmem [#allocation7], %s221
        %p223 = pneg %p85
        %p224 = pneg %p82
        %p225 = pneg %p111
        %p226 = pneg %p108
        %s227 = sand.u32 %s98, 1
        %s228 = scalar_lea.sflag [#allocation5], %s227
        %s229 = sand.u32 %s98, 1
        %s230 = smul.addr %s229, 32
        %s231 = scalar_lea.vmem [#allocation8], %s230
        %s232 = smul.u32 16, %s22
        %s233 = sld [smem:[#allocation2]]
        %v234 = vstv %s233
        %s235 = sld [smem:[#allocation3]]
        %v236 = vld [vmem:[%s207] sm:$0xff]
        %v237 = vld [vmem:[%s207 + $0x8] sm:$0xff]
        %v238 = vld [vmem:[%s207 + $0x10] sm:$0xff]
        %v239 = vld [vmem:[%s207 + $0x18] sm:$0xff]
        %v240 = vld [vmem:[%s207 + $0x20] sm:$0xff]
        %v241 = vld [vmem:[%s207 + $0x28] sm:$0xff]
        %v242 = vld [vmem:[%s207 + $0x30] sm:$0xff]
        %v243 = vld [vmem:[%s207 + $0x38] sm:$0xff]
        %v244 = vld [vmem:[%s207 + $0x40] sm:$0xff]
        %v245 = vld [vmem:[%s207 + $0x48] sm:$0xff]
        %v246 = vld [vmem:[%s207 + $0x50] sm:$0xff]
        %v247 = vld [vmem:[%s207 + $0x58] sm:$0xff]
        %v248 = vld [vmem:[%s207 + $0x60] sm:$0xff]
        %v249 = vld [vmem:[%s207 + $0x68] sm:$0xff]
        %v250 = vld [vmem:[%s207 + $0x70] sm:$0xff]
        %v251 = vld [vmem:[%s207 + $0x78] sm:$0xff]
        %v252 = vld [vmem:[%s207 + $0x80] sm:$0xff]
        %v253 = vld [vmem:[%s207 + $0x88] sm:$0xff]
        %v254 = vld [vmem:[%s207 + $0x90] sm:$0xff]
        %v255 = vld [vmem:[%s207 + $0x98] sm:$0xff]
        %v256 = vld [vmem:[%s207 + $0xa0] sm:$0xff]
        %v257 = vld [vmem:[%s207 + $0xa8] sm:$0xff]
        %v258 = vld [vmem:[%s207 + $0xb0] sm:$0xff]
        %v259 = vld [vmem:[%s207 + $0xb8] sm:$0xff]
        %v260 = vld [vmem:[%s207 + $0xc0] sm:$0xff]
        %v261 = vld [vmem:[%s207 + $0xc8] sm:$0xff]
        %v262 = vld [vmem:[%s207 + $0xd0] sm:$0xff]
        %v263 = vld [vmem:[%s207 + $0xd8] sm:$0xff]
        %v264 = vld [vmem:[%s207 + $0xe0] sm:$0xff]
        %v265 = vld [vmem:[%s207 + $0xe8] sm:$0xff]
        %v266 = vld [vmem:[%s207 + $0xf0] sm:$0xff]
        %v267 = vld [vmem:[%s207 + $0xf8] sm:$0xff]
        %v268 = vstv %s235
        %v269 = vmul.f32 %v268, %v236
        %v270 = vmul.f32 %v268, %v237
        %v271 = vmul.f32 %v268, %v238
        %v272 = vmul.f32 %v268, %v239
        %v273 = vmul.f32 %v268, %v240
        %v274 = vmul.f32 %v268, %v241
        %v275 = vmul.f32 %v268, %v242
        %v276 = vmul.f32 %v268, %v243
        %v277 = vmul.f32 %v268, %v244
        %v278 = vmul.f32 %v268, %v245
        %v279 = vmul.f32 %v268, %v246
        %v280 = vmul.f32 %v268, %v247
        %v281 = vmul.f32 %v268, %v248
        %v282 = vmul.f32 %v268, %v249
        %v283 = vmul.f32 %v268, %v250
        %v284 = vmul.f32 %v268, %v251
        %v285 = vmul.f32 %v268, %v252
        %v286 = vmul.f32 %v268, %v253
        %v287 = vmul.f32 %v268, %v254
        %v288 = vmul.f32 %v268, %v255
        %v289 = vmul.f32 %v268, %v256
        %v290 = vmul.f32 %v268, %v257
        %v291 = vmul.f32 %v268, %v258
        %v292 = vmul.f32 %v268, %v259
        %v293 = vmul.f32 %v268, %v260
        %v294 = vmul.f32 %v268, %v261
        %v295 = vmul.f32 %v268, %v262
        %v296 = vmul.f32 %v268, %v263
        %v297 = vmul.f32 %v268, %v264
        %v298 = vmul.f32 %v268, %v265
        %v299 = vmul.f32 %v268, %v266
        %v300 = vmul.f32 %v268, %v267
        %v301 = vadd.f32 %v234, %v269
        %v302 = vadd.f32 %v234, %v270
        %v303 = vadd.f32 %v234, %v271
        %v304 = vadd.f32 %v234, %v272
        %v305 = vadd.f32 %v234, %v273
        %v306 = vadd.f32 %v234, %v274
        %v307 = vadd.f32 %v234, %v275
        %v308 = vadd.f32 %v234, %v276
        %v309 = vadd.f32 %v234, %v277
        %v310 = vadd.f32 %v234, %v278
        %v311 = vadd.f32 %v234, %v279
        %v312 = vadd.f32 %v234, %v280
        %v313 = vadd.f32 %v234, %v281
        %v314 = vadd.f32 %v234, %v282
        %v315 = vadd.f32 %v234, %v283
        %v316 = vadd.f32 %v234, %v284
        %v317 = vadd.f32 %v234, %v285
        %v318 = vadd.f32 %v234, %v286
        %v319 = vadd.f32 %v234, %v287
        %v320 = vadd.f32 %v234, %v288
        %v321 = vadd.f32 %v234, %v289
        %v322 = vadd.f32 %v234, %v290
        %v323 = vadd.f32 %v234, %v291
        %v324 = vadd.f32 %v234, %v292
        %v325 = vadd.f32 %v234, %v293
        %v326 = vadd.f32 %v234, %v294
        %v327 = vadd.f32 %v234, %v295
        %v328 = vadd.f32 %v234, %v296
        %v329 = vadd.f32 %v234, %v297
        %v330 = vadd.f32 %v234, %v298
        %v331 = vadd.f32 %v234, %v299
        %v332 = vadd.f32 %v234, %v300
        %s333 = sld [smem:[#allocation3 + $0x1]]
        %s334 = scalar_lea.vmem %s207, 256 [#allocation7]
        %v335 = vld [vmem:[%s334] sm:$0xff]
        %v336 = vld [vmem:[%s334 + $0x8] sm:$0xff]
        %v337 = vld [vmem:[%s334 + $0x10] sm:$0xff]
        %v338 = vld [vmem:[%s334 + $0x18] sm:$0xff]
        %v339 = vld [vmem:[%s334 + $0x20] sm:$0xff]
        %v340 = vld [vmem:[%s334 + $0x28] sm:$0xff]
        %v341 = vld [vmem:[%s334 + $0x30] sm:$0xff]
        %v342 = vld [vmem:[%s334 + $0x38] sm:$0xff]
        %v343 = vld [vmem:[%s334 + $0x40] sm:$0xff]
        %v344 = vld [vmem:[%s334 + $0x48] sm:$0xff]
        %v345 = vld [vmem:[%s334 + $0x50] sm:$0xff]
        %v346 = vld [vmem:[%s334 + $0x58] sm:$0xff]
        %v347 = vld [vmem:[%s334 + $0x60] sm:$0xff]
        %v348 = vld [vmem:[%s334 + $0x68] sm:$0xff]
        %v349 = vld [vmem:[%s334 + $0x70] sm:$0xff]
        %v350 = vld [vmem:[%s334 + $0x78] sm:$0xff]
        %v351 = vld [vmem:[%s334 + $0x80] sm:$0xff]
        %v352 = vld [vmem:[%s334 + $0x88] sm:$0xff]
        %v353 = vld [vmem:[%s334 + $0x90] sm:$0xff]
        %v354 = vld [vmem:[%s334 + $0x98] sm:$0xff]
        %v355 = vld [vmem:[%s334 + $0xa0] sm:$0xff]
        %v356 = vld [vmem:[%s334 + $0xa8] sm:$0xff]
        %v357 = vld [vmem:[%s334 + $0xb0] sm:$0xff]
        %v358 = vld [vmem:[%s334 + $0xb8] sm:$0xff]
        %v359 = vld [vmem:[%s334 + $0xc0] sm:$0xff]
        %v360 = vld [vmem:[%s334 + $0xc8] sm:$0xff]
        %v361 = vld [vmem:[%s334 + $0xd0] sm:$0xff]
        %v362 = vld [vmem:[%s334 + $0xd8] sm:$0xff]
        %v363 = vld [vmem:[%s334 + $0xe0] sm:$0xff]
        %v364 = vld [vmem:[%s334 + $0xe8] sm:$0xff]
        %v365 = vld [vmem:[%s334 + $0xf0] sm:$0xff]
        %v366 = vld [vmem:[%s334 + $0xf8] sm:$0xff]
        %v367 = vstv %s333
        %v368 = vmul.f32 %v367, %v335
        %v369 = vmul.f32 %v367, %v336
        %v370 = vmul.f32 %v367, %v337
        %v371 = vmul.f32 %v367, %v338
        %v372 = vmul.f32 %v367, %v339
        %v373 = vmul.f32 %v367, %v340
        %v374 = vmul.f32 %v367, %v341
        %v375 = vmul.f32 %v367, %v342
        %v376 = vmul.f32 %v367, %v343
        %v377 = vmul.f32 %v367, %v344
        %v378 = vmul.f32 %v367, %v345
        %v379 = vmul.f32 %v367, %v346
        %v380 = vmul.f32 %v367, %v347
        %v381 = vmul.f32 %v367, %v348
        %v382 = vmul.f32 %v367, %v349
        %v383 = vmul.f32 %v367, %v350
        %v384 = vmul.f32 %v367, %v351
        %v385 = vmul.f32 %v367, %v352
        %v386 = vmul.f32 %v367, %v353
        %v387 = vmul.f32 %v367, %v354
        %v388 = vmul.f32 %v367, %v355
        %v389 = vmul.f32 %v367, %v356
        %v390 = vmul.f32 %v367, %v357
        %v391 = vmul.f32 %v367, %v358
        %v392 = vmul.f32 %v367, %v359
        %v393 = vmul.f32 %v367, %v360
        %v394 = vmul.f32 %v367, %v361
        %v395 = vmul.f32 %v367, %v362
        %v396 = vmul.f32 %v367, %v363
        %v397 = vmul.f32 %v367, %v364
        %v398 = vmul.f32 %v367, %v365
        %v399 = vmul.f32 %v367, %v366
        %v400 = vadd.f32 %v301, %v368
        %v401 = vadd.f32 %v302, %v369
        %v402 = vadd.f32 %v303, %v370
        %v403 = vadd.f32 %v304, %v371
        %v404 = vadd.f32 %v305, %v372
        %v405 = vadd.f32 %v306, %v373
        %v406 = vadd.f32 %v307, %v374
        %v407 = vadd.f32 %v308, %v375
        %v408 = vadd.f32 %v309, %v376
        %v409 = vadd.f32 %v310, %v377
        %v410 = vadd.f32 %v311, %v378
        %v411 = vadd.f32 %v312, %v379
        %v412 = vadd.f32 %v313, %v380
        %v413 = vadd.f32 %v314, %v381
        %v414 = vadd.f32 %v315, %v382
        %v415 = vadd.f32 %v316, %v383
        %v416 = vadd.f32 %v317, %v384
        %v417 = vadd.f32 %v318, %v385
        %v418 = vadd.f32 %v319, %v386
        %v419 = vadd.f32 %v320, %v387
        %v420 = vadd.f32 %v321, %v388
        %v421 = vadd.f32 %v322, %v389
        %v422 = vadd.f32 %v323, %v390
        %v423 = vadd.f32 %v324, %v391
        %v424 = vadd.f32 %v325, %v392
        %v425 = vadd.f32 %v326, %v393
        %v426 = vadd.f32 %v327, %v394
        %v427 = vadd.f32 %v328, %v395
        %v428 = vadd.f32 %v329, %v396
        %v429 = vadd.f32 %v330, %v397
        %v430 = vadd.f32 %v331, %v398
        %v431 = vadd.f32 %v332, %v399
        %s432 = sld [smem:[#allocation3 + $0x2]]
        %s433 = scalar_lea.vmem %s207, 512 [#allocation7]
        %v434 = vld [vmem:[%s433] sm:$0xff]
        %v435 = vld [vmem:[%s433 + $0x8] sm:$0xff]
        %v436 = vld [vmem:[%s433 + $0x10] sm:$0xff]
        %v437 = vld [vmem:[%s433 + $0x18] sm:$0xff]
        %v438 = vld [vmem:[%s433 + $0x20] sm:$0xff]
        %v439 = vld [vmem:[%s433 + $0x28] sm:$0xff]
        %v440 = vld [vmem:[%s433 + $0x30] sm:$0xff]
        %v441 = vld [vmem:[%s433 + $0x38] sm:$0xff]
        %v442 = vld [vmem:[%s433 + $0x40] sm:$0xff]
        %v443 = vld [vmem:[%s433 + $0x48] sm:$0xff]
        %v444 = vld [vmem:[%s433 + $0x50] sm:$0xff]
        %v445 = vld [vmem:[%s433 + $0x58] sm:$0xff]
        %v446 = vld [vmem:[%s433 + $0x60] sm:$0xff]
        %v447 = vld [vmem:[%s433 + $0x68] sm:$0xff]
        %v448 = vld [vmem:[%s433 + $0x70] sm:$0xff]
        %v449 = vld [vmem:[%s433 + $0x78] sm:$0xff]
        %v450 = vld [vmem:[%s433 + $0x80] sm:$0xff]
        %v451 = vld [vmem:[%s433 + $0x88] sm:$0xff]
        %v452 = vld [vmem:[%s433 + $0x90] sm:$0xff]
        %v453 = vld [vmem:[%s433 + $0x98] sm:$0xff]
        %v454 = vld [vmem:[%s433 + $0xa0] sm:$0xff]
        %v455 = vld [vmem:[%s433 + $0xa8] sm:$0xff]
        %v456 = vld [vmem:[%s433 + $0xb0] sm:$0xff]
        %v457 = vld [vmem:[%s433 + $0xb8] sm:$0xff]
        %v458 = vld [vmem:[%s433 + $0xc0] sm:$0xff]
        %v459 = vld [vmem:[%s433 + $0xc8] sm:$0xff]
        %v460 = vld [vmem:[%s433 + $0xd0] sm:$0xff]
        %v461 = vld [vmem:[%s433 + $0xd8] sm:$0xff]
        %v462 = vld [vmem:[%s433 + $0xe0] sm:$0xff]
        %v463 = vld [vmem:[%s433 + $0xe8] sm:$0xff]
        %v464 = vld [vmem:[%s433 + $0xf0] sm:$0xff]
        %v465 = vld [vmem:[%s433 + $0xf8] sm:$0xff]
        %v466 = vstv %s432
        %v467 = vmul.f32 %v466, %v434
        %v468 = vmul.f32 %v466, %v435
        %v469 = vmul.f32 %v466, %v436
        %v470 = vmul.f32 %v466, %v437
        %v471 = vmul.f32 %v466, %v438
        %v472 = vmul.f32 %v466, %v439
        %v473 = vmul.f32 %v466, %v440
        %v474 = vmul.f32 %v466, %v441
        %v475 = vmul.f32 %v466, %v442
        %v476 = vmul.f32 %v466, %v443
        %v477 = vmul.f32 %v466, %v444
        %v478 = vmul.f32 %v466, %v445
        %v479 = vmul.f32 %v466, %v446
        %v480 = vmul.f32 %v466, %v447
        %v481 = vmul.f32 %v466, %v448
        %v482 = vmul.f32 %v466, %v449
        %v483 = vmul.f32 %v466, %v450
        %v484 = vmul.f32 %v466, %v451
        %v485 = vmul.f32 %v466, %v452
        %v486 = vmul.f32 %v466, %v453
        %v487 = vmul.f32 %v466, %v454
        %v488 = vmul.f32 %v466, %v455
        %v489 = vmul.f32 %v466, %v456
        %v490 = vmul.f32 %v466, %v457
        %v491 = vmul.f32 %v466, %v458
        %v492 = vmul.f32 %v466, %v459
        %v493 = vmul.f32 %v466, %v460
        %v494 = vmul.f32 %v466, %v461
        %v495 = vmul.f32 %v466, %v462
        %v496 = vmul.f32 %v466, %v463
        %v497 = vmul.f32 %v466, %v464
        %v498 = vmul.f32 %v466, %v465
        %v499 = vadd.f32 %v400, %v467
        %v500 = vadd.f32 %v401, %v468
        %v501 = vadd.f32 %v402, %v469
        %v502 = vadd.f32 %v403, %v470
        %v503 = vadd.f32 %v404, %v471
        %v504 = vadd.f32 %v405, %v472
        %v505 = vadd.f32 %v406, %v473
        %v506 = vadd.f32 %v407, %v474
        %v507 = vadd.f32 %v408, %v475
        %v508 = vadd.f32 %v409, %v476
        %v509 = vadd.f32 %v410, %v477
        %v510 = vadd.f32 %v411, %v478
        %v511 = vadd.f32 %v412, %v479
        %v512 = vadd.f32 %v413, %v480
        %v513 = vadd.f32 %v414, %v481
        %v514 = vadd.f32 %v415, %v482
        %v515 = vadd.f32 %v416, %v483
        %v516 = vadd.f32 %v417, %v484
        %v517 = vadd.f32 %v418, %v485
        %v518 = vadd.f32 %v419, %v486
        %v519 = vadd.f32 %v420, %v487
        %v520 = vadd.f32 %v421, %v488
        %v521 = vadd.f32 %v422, %v489
        %v522 = vadd.f32 %v423, %v490
        %v523 = vadd.f32 %v424, %v491
        %v524 = vadd.f32 %v425, %v492
        %v525 = vadd.f32 %v426, %v493
        %v526 = vadd.f32 %v427, %v494
        %v527 = vadd.f32 %v428, %v495
        %v528 = vadd.f32 %v429, %v496
        %v529 = vadd.f32 %v430, %v497
        %v530 = vadd.f32 %v431, %v498
        %s531 = sld [smem:[#allocation3 + $0x3]]
        %s532 = scalar_lea.vmem %s207, 768 [#allocation7]
        %v533 = vld [vmem:[%s532] sm:$0xff]
        %v534 = vld [vmem:[%s532 + $0x8] sm:$0xff]
        %v535 = vld [vmem:[%s532 + $0x10] sm:$0xff]
        %v536 = vld [vmem:[%s532 + $0x18] sm:$0xff]
        %v537 = vld [vmem:[%s532 + $0x20] sm:$0xff]
        %v538 = vld [vmem:[%s532 + $0x28] sm:$0xff]
        %v539 = vld [vmem:[%s532 + $0x30] sm:$0xff]
        %v540 = vld [vmem:[%s532 + $0x38] sm:$0xff]
        %v541 = vld [vmem:[%s532 + $0x40] sm:$0xff]
        %v542 = vld [vmem:[%s532 + $0x48] sm:$0xff]
        %v543 = vld [vmem:[%s532 + $0x50] sm:$0xff]
        %v544 = vld [vmem:[%s532 + $0x58] sm:$0xff]
        %v545 = vld [vmem:[%s532 + $0x60] sm:$0xff]
        %v546 = vld [vmem:[%s532 + $0x68] sm:$0xff]
        %v547 = vld [vmem:[%s532 + $0x70] sm:$0xff]
        %v548 = vld [vmem:[%s532 + $0x78] sm:$0xff]
        %v549 = vld [vmem:[%s532 + $0x80] sm:$0xff]
        %v550 = vld [vmem:[%s532 + $0x88] sm:$0xff]
        %v551 = vld [vmem:[%s532 + $0x90] sm:$0xff]
        %v552 = vld [vmem:[%s532 + $0x98] sm:$0xff]
        %v553 = vld [vmem:[%s532 + $0xa0] sm:$0xff]
        %v554 = vld [vmem:[%s532 + $0xa8] sm:$0xff]
        %v555 = vld [vmem:[%s532 + $0xb0] sm:$0xff]
        %v556 = vld [vmem:[%s532 + $0xb8] sm:$0xff]
        %v557 = vld [vmem:[%s532 + $0xc0] sm:$0xff]
        %v558 = vld [vmem:[%s532 + $0xc8] sm:$0xff]
        %v559 = vld [vmem:[%s532 + $0xd0] sm:$0xff]
        %v560 = vld [vmem:[%s532 + $0xd8] sm:$0xff]
        %v561 = vld [vmem:[%s532 + $0xe0] sm:$0xff]
        %v562 = vld [vmem:[%s532 + $0xe8] sm:$0xff]
        %v563 = vld [vmem:[%s532 + $0xf0] sm:$0xff]
        %v564 = vld [vmem:[%s532 + $0xf8] sm:$0xff]
        %v565 = vstv %s531
        %v566 = vmul.f32 %v565, %v533
        %v567 = vmul.f32 %v565, %v534
        %v568 = vmul.f32 %v565, %v535
        %v569 = vmul.f32 %v565, %v536
        %v570 = vmul.f32 %v565, %v537
        %v571 = vmul.f32 %v565, %v538
        %v572 = vmul.f32 %v565, %v539
        %v573 = vmul.f32 %v565, %v540
        %v574 = vmul.f32 %v565, %v541
        %v575 = vmul.f32 %v565, %v542
        %v576 = vmul.f32 %v565, %v543
        %v577 = vmul.f32 %v565, %v544
        %v578 = vmul.f32 %v565, %v545
        %v579 = vmul.f32 %v565, %v546
        %v580 = vmul.f32 %v565, %v547
        %v581 = vmul.f32 %v565, %v548
        %v582 = vmul.f32 %v565, %v549
        %v583 = vmul.f32 %v565, %v550
        %v584 = vmul.f32 %v565, %v551
        %v585 = vmul.f32 %v565, %v552
        %v586 = vmul.f32 %v565, %v553
        %v587 = vmul.f32 %v565, %v554
        %v588 = vmul.f32 %v565, %v555
        %v589 = vmul.f32 %v565, %v556
        %v590 = vmul.f32 %v565, %v557
        %v591 = vmul.f32 %v565, %v558
        %v592 = vmul.f32 %v565, %v559
        %v593 = vmul.f32 %v565, %v560
        %v594 = vmul.f32 %v565, %v561
        %v595 = vmul.f32 %v565, %v562
        %v596 = vmul.f32 %v565, %v563
        %v597 = vmul.f32 %v565, %v564
        %v598 = vadd.f32 %v499, %v566
        %v599 = vadd.f32 %v500, %v567
        %v600 = vadd.f32 %v501, %v568
        %v601 = vadd.f32 %v502, %v569
        %v602 = vadd.f32 %v503, %v570
        %v603 = vadd.f32 %v504, %v571
        %v604 = vadd.f32 %v505, %v572
        %v605 = vadd.f32 %v506, %v573
        %v606 = vadd.f32 %v507, %v574
        %v607 = vadd.f32 %v508, %v575
        %v608 = vadd.f32 %v509, %v576
        %v609 = vadd.f32 %v510, %v577
        %v610 = vadd.f32 %v511, %v578
        %v611 = vadd.f32 %v512, %v579
        %v612 = vadd.f32 %v513, %v580
        %v613 = vadd.f32 %v514, %v581
        %v614 = vadd.f32 %v515, %v582
        %v615 = vadd.f32 %v516, %v583
        %v616 = vadd.f32 %v517, %v584
        %v617 = vadd.f32 %v518, %v585
        %v618 = vadd.f32 %v519, %v586
        %v619 = vadd.f32 %v520, %v587
        %v620 = vadd.f32 %v521, %v588
        %v621 = vadd.f32 %v522, %v589
        %v622 = vadd.f32 %v523, %v590
        %v623 = vadd.f32 %v524, %v591
        %v624 = vadd.f32 %v525, %v592
        %v625 = vadd.f32 %v526, %v593
        %v626 = vadd.f32 %v527, %v594
        %v627 = vadd.f32 %v528, %v595
        %v628 = vadd.f32 %v529, %v596
        %v629 = vadd.f32 %v530, %v597
        %s630 = sld [smem:[#allocation3 + $0x4]]
        %s631 = scalar_lea.vmem %s207, 1024 [#allocation7]
        %v632 = vld [vmem:[%s631] sm:$0xff]
        %v633 = vld [vmem:[%s631 + $0x8] sm:$0xff]
        %v634 = vld [vmem:[%s631 + $0x10] sm:$0xff]
        %v635 = vld [vmem:[%s631 + $0x18] sm:$0xff]
        %v636 = vld [vmem:[%s631 + $0x20] sm:$0xff]
        %v637 = vld [vmem:[%s631 + $0x28] sm:$0xff]
        %v638 = vld [vmem:[%s631 + $0x30] sm:$0xff]
        %v639 = vld [vmem:[%s631 + $0x38] sm:$0xff]
        %v640 = vld [vmem:[%s631 + $0x40] sm:$0xff]
        %v641 = vld [vmem:[%s631 + $0x48] sm:$0xff]
        %v642 = vld [vmem:[%s631 + $0x50] sm:$0xff]
        %v643 = vld [vmem:[%s631 + $0x58] sm:$0xff]
        %v644 = vld [vmem:[%s631 + $0x60] sm:$0xff]
        %v645 = vld [vmem:[%s631 + $0x68] sm:$0xff]
        %v646 = vld [vmem:[%s631 + $0x70] sm:$0xff]
        %v647 = vld [vmem:[%s631 + $0x78] sm:$0xff]
        %v648 = vld [vmem:[%s631 + $0x80] sm:$0xff]
        %v649 = vld [vmem:[%s631 + $0x88] sm:$0xff]
        %v650 = vld [vmem:[%s631 + $0x90] sm:$0xff]
        %v651 = vld [vmem:[%s631 + $0x98] sm:$0xff]
        %v652 = vld [vmem:[%s631 + $0xa0] sm:$0xff]
        %v653 = vld [vmem:[%s631 + $0xa8] sm:$0xff]
        %v654 = vld [vmem:[%s631 + $0xb0] sm:$0xff]
        %v655 = vld [vmem:[%s631 + $0xb8] sm:$0xff]
        %v656 = vld [vmem:[%s631 + $0xc0] sm:$0xff]
        %v657 = vld [vmem:[%s631 + $0xc8] sm:$0xff]
        %v658 = vld [vmem:[%s631 + $0xd0] sm:$0xff]
        %v659 = vld [vmem:[%s631 + $0xd8] sm:$0xff]
        %v660 = vld [vmem:[%s631 + $0xe0] sm:$0xff]
        %v661 = vld [vmem:[%s631 + $0xe8] sm:$0xff]
        %v662 = vld [vmem:[%s631 + $0xf0] sm:$0xff]
        %v663 = vld [vmem:[%s631 + $0xf8] sm:$0xff]
        %v664 = vstv %s630
        %v665 = vmul.f32 %v664, %v632
        %v666 = vmul.f32 %v664, %v633
        %v667 = vmul.f32 %v664, %v634
        %v668 = vmul.f32 %v664, %v635
        %v669 = vmul.f32 %v664, %v636
        %v670 = vmul.f32 %v664, %v637
        %v671 = vmul.f32 %v664, %v638
        %v672 = vmul.f32 %v664, %v639
        %v673 = vmul.f32 %v664, %v640
        %v674 = vmul.f32 %v664, %v641
        %v675 = vmul.f32 %v664, %v642
        %v676 = vmul.f32 %v664, %v643
        %v677 = vmul.f32 %v664, %v644
        %v678 = vmul.f32 %v664, %v645
        %v679 = vmul.f32 %v664, %v646
        %v680 = vmul.f32 %v664, %v647
        %v681 = vmul.f32 %v664, %v648
        %v682 = vmul.f32 %v664, %v649
        %v683 = vmul.f32 %v664, %v650
        %v684 = vmul.f32 %v664, %v651
        %v685 = vmul.f32 %v664, %v652
        %v686 = vmul.f32 %v664, %v653
        %v687 = vmul.f32 %v664, %v654
        %v688 = vmul.f32 %v664, %v655
        %v689 = vmul.f32 %v664, %v656
        %v690 = vmul.f32 %v664, %v657
        %v691 = vmul.f32 %v664, %v658
        %v692 = vmul.f32 %v664, %v659
        %v693 = vmul.f32 %v664, %v660
        %v694 = vmul.f32 %v664, %v661
        %v695 = vmul.f32 %v664, %v662
        %v696 = vmul.f32 %v664, %v663
        %v697 = vadd.f32 %v598, %v665
        %v698 = vadd.f32 %v599, %v666
        %v699 = vadd.f32 %v600, %v667
        %v700 = vadd.f32 %v601, %v668
        %v701 = vadd.f32 %v602, %v669
        %v702 = vadd.f32 %v603, %v670
        %v703 = vadd.f32 %v604, %v671
        %v704 = vadd.f32 %v605, %v672
        %v705 = vadd.f32 %v606, %v673
        %v706 = vadd.f32 %v607, %v674
        %v707 = vadd.f32 %v608, %v675
        %v708 = vadd.f32 %v609, %v676
        %v709 = vadd.f32 %v610, %v677
        %v710 = vadd.f32 %v611, %v678
        %v711 = vadd.f32 %v612, %v679
        %v712 = vadd.f32 %v613, %v680
        %v713 = vadd.f32 %v614, %v681
        %v714 = vadd.f32 %v615, %v682
        %v715 = vadd.f32 %v616, %v683
        %v716 = vadd.f32 %v617, %v684
        %v717 = vadd.f32 %v618, %v685
        %v718 = vadd.f32 %v619, %v686
        %v719 = vadd.f32 %v620, %v687
        %v720 = vadd.f32 %v621, %v688
        %v721 = vadd.f32 %v622, %v689
        %v722 = vadd.f32 %v623, %v690
        %v723 = vadd.f32 %v624, %v691
        %v724 = vadd.f32 %v625, %v692
        %v725 = vadd.f32 %v626, %v693
        %v726 = vadd.f32 %v627, %v694
        %v727 = vadd.f32 %v628, %v695
        %v728 = vadd.f32 %v629, %v696
        %s729 = sld [smem:[#allocation3 + $0x5]]
        %s730 = scalar_lea.vmem %s207, 1280 [#allocation7]
        %v731 = vld [vmem:[%s730] sm:$0xff]
        %v732 = vld [vmem:[%s730 + $0x8] sm:$0xff]
        %v733 = vld [vmem:[%s730 + $0x10] sm:$0xff]
        %v734 = vld [vmem:[%s730 + $0x18] sm:$0xff]
        %v735 = vld [vmem:[%s730 + $0x20] sm:$0xff]
        %v736 = vld [vmem:[%s730 + $0x28] sm:$0xff]
        %v737 = vld [vmem:[%s730 + $0x30] sm:$0xff]
        %v738 = vld [vmem:[%s730 + $0x38] sm:$0xff]
        %v739 = vld [vmem:[%s730 + $0x40] sm:$0xff]
        %v740 = vld [vmem:[%s730 + $0x48] sm:$0xff]
        %v741 = vld [vmem:[%s730 + $0x50] sm:$0xff]
        %v742 = vld [vmem:[%s730 + $0x58] sm:$0xff]
        %v743 = vld [vmem:[%s730 + $0x60] sm:$0xff]
        %v744 = vld [vmem:[%s730 + $0x68] sm:$0xff]
        %v745 = vld [vmem:[%s730 + $0x70] sm:$0xff]
        %v746 = vld [vmem:[%s730 + $0x78] sm:$0xff]
        %v747 = vld [vmem:[%s730 + $0x80] sm:$0xff]
        %v748 = vld [vmem:[%s730 + $0x88] sm:$0xff]
        %v749 = vld [vmem:[%s730 + $0x90] sm:$0xff]
        %v750 = vld [vmem:[%s730 + $0x98] sm:$0xff]
        %v751 = vld [vmem:[%s730 + $0xa0] sm:$0xff]
        %v752 = vld [vmem:[%s730 + $0xa8] sm:$0xff]
        %v753 = vld [vmem:[%s730 + $0xb0] sm:$0xff]
        %v754 = vld [vmem:[%s730 + $0xb8] sm:$0xff]
        %v755 = vld [vmem:[%s730 + $0xc0] sm:$0xff]
        %v756 = vld [vmem:[%s730 + $0xc8] sm:$0xff]
        %v757 = vld [vmem:[%s730 + $0xd0] sm:$0xff]
        %v758 = vld [vmem:[%s730 + $0xd8] sm:$0xff]
        %v759 = vld [vmem:[%s730 + $0xe0] sm:$0xff]
        %v760 = vld [vmem:[%s730 + $0xe8] sm:$0xff]
        %v761 = vld [vmem:[%s730 + $0xf0] sm:$0xff]
        %v762 = vld [vmem:[%s730 + $0xf8] sm:$0xff]
        %v763 = vstv %s729
        %v764 = vmul.f32 %v763, %v731
        %v765 = vmul.f32 %v763, %v732
        %v766 = vmul.f32 %v763, %v733
        %v767 = vmul.f32 %v763, %v734
        %v768 = vmul.f32 %v763, %v735
        %v769 = vmul.f32 %v763, %v736
        %v770 = vmul.f32 %v763, %v737
        %v771 = vmul.f32 %v763, %v738
        %v772 = vmul.f32 %v763, %v739
        %v773 = vmul.f32 %v763, %v740
        %v774 = vmul.f32 %v763, %v741
        %v775 = vmul.f32 %v763, %v742
        %v776 = vmul.f32 %v763, %v743
        %v777 = vmul.f32 %v763, %v744
        %v778 = vmul.f32 %v763, %v745
        %v779 = vmul.f32 %v763, %v746
        %v780 = vmul.f32 %v763, %v747
        %v781 = vmul.f32 %v763, %v748
        %v782 = vmul.f32 %v763, %v749
        %v783 = vmul.f32 %v763, %v750
        %v784 = vmul.f32 %v763, %v751
        %v785 = vmul.f32 %v763, %v752
        %v786 = vmul.f32 %v763, %v753
        %v787 = vmul.f32 %v763, %v754
        %v788 = vmul.f32 %v763, %v755
        %v789 = vmul.f32 %v763, %v756
        %v790 = vmul.f32 %v763, %v757
        %v791 = vmul.f32 %v763, %v758
        %v792 = vmul.f32 %v763, %v759
        %v793 = vmul.f32 %v763, %v760
        %v794 = vmul.f32 %v763, %v761
        %v795 = vmul.f32 %v763, %v762
        %v796 = vadd.f32 %v697, %v764
        %v797 = vadd.f32 %v698, %v765
        %v798 = vadd.f32 %v699, %v766
        %v799 = vadd.f32 %v700, %v767
        %v800 = vadd.f32 %v701, %v768
        %v801 = vadd.f32 %v702, %v769
        %v802 = vadd.f32 %v703, %v770
        %v803 = vadd.f32 %v704, %v771
        %v804 = vadd.f32 %v705, %v772
        %v805 = vadd.f32 %v706, %v773
        %v806 = vadd.f32 %v707, %v774
        %v807 = vadd.f32 %v708, %v775
        %v808 = vadd.f32 %v709, %v776
        %v809 = vadd.f32 %v710, %v777
        %v810 = vadd.f32 %v711, %v778
        %v811 = vadd.f32 %v712, %v779
        %v812 = vadd.f32 %v713, %v780
        %v813 = vadd.f32 %v714, %v781
        %v814 = vadd.f32 %v715, %v782
        %v815 = vadd.f32 %v716, %v783
        %v816 = vadd.f32 %v717, %v784
        %v817 = vadd.f32 %v718, %v785
        %v818 = vadd.f32 %v719, %v786
        %v819 = vadd.f32 %v720, %v787
        %v820 = vadd.f32 %v721, %v788
        %v821 = vadd.f32 %v722, %v789
        %v822 = vadd.f32 %v723, %v790
        %v823 = vadd.f32 %v724, %v791
        %v824 = vadd.f32 %v725, %v792
        %v825 = vadd.f32 %v726, %v793
        %v826 = vadd.f32 %v727, %v794
        %v827 = vadd.f32 %v728, %v795
        %s828 = sld [smem:[#allocation3 + $0x6]]
        %s829 = scalar_lea.vmem %s207, 1536 [#allocation7]
        %v830 = vld [vmem:[%s829] sm:$0xff]
        %v831 = vld [vmem:[%s829 + $0x8] sm:$0xff]
        %v832 = vld [vmem:[%s829 + $0x10] sm:$0xff]
        %v833 = vld [vmem:[%s829 + $0x18] sm:$0xff]
        %v834 = vld [vmem:[%s829 + $0x20] sm:$0xff]
        %v835 = vld [vmem:[%s829 + $0x28] sm:$0xff]
        %v836 = vld [vmem:[%s829 + $0x30] sm:$0xff]
        %v837 = vld [vmem:[%s829 + $0x38] sm:$0xff]
        %v838 = vld [vmem:[%s829 + $0x40] sm:$0xff]
        %v839 = vld [vmem:[%s829 + $0x48] sm:$0xff]
        %v840 = vld [vmem:[%s829 + $0x50] sm:$0xff]
        %v841 = vld [vmem:[%s829 + $0x58] sm:$0xff]
        %v842 = vld [vmem:[%s829 + $0x60] sm:$0xff]
        %v843 = vld [vmem:[%s829 + $0x68] sm:$0xff]
        %v844 = vld [vmem:[%s829 + $0x70] sm:$0xff]
        %v845 = vld [vmem:[%s829 + $0x78] sm:$0xff]
        %v846 = vld [vmem:[%s829 + $0x80] sm:$0xff]
        %v847 = vld [vmem:[%s829 + $0x88] sm:$0xff]
        %v848 = vld [vmem:[%s829 + $0x90] sm:$0xff]
        %v849 = vld [vmem:[%s829 + $0x98] sm:$0xff]
        %v850 = vld [vmem:[%s829 + $0xa0] sm:$0xff]
        %v851 = vld [vmem:[%s829 + $0xa8] sm:$0xff]
        %v852 = vld [vmem:[%s829 + $0xb0] sm:$0xff]
        %v853 = vld [vmem:[%s829 + $0xb8] sm:$0xff]
        %v854 = vld [vmem:[%s829 + $0xc0] sm:$0xff]
        %v855 = vld [vmem:[%s829 + $0xc8] sm:$0xff]
        %v856 = vld [vmem:[%s829 + $0xd0] sm:$0xff]
        %v857 = vld [vmem:[%s829 + $0xd8] sm:$0xff]
        %v858 = vld [vmem:[%s829 + $0xe0] sm:$0xff]
        %v859 = vld [vmem:[%s829 + $0xe8] sm:$0xff]
        %v860 = vld [vmem:[%s829 + $0xf0] sm:$0xff]
        %v861 = vld [vmem:[%s829 + $0xf8] sm:$0xff]
        %v862 = vstv %s828
        %v863 = vmul.f32 %v862, %v830
        %v864 = vmul.f32 %v862, %v831
        %v865 = vmul.f32 %v862, %v832
        %v866 = vmul.f32 %v862, %v833
        %v867 = vmul.f32 %v862, %v834
        %v868 = vmul.f32 %v862, %v835
        %v869 = vmul.f32 %v862, %v836
        %v870 = vmul.f32 %v862, %v837
        %v871 = vmul.f32 %v862, %v838
        %v872 = vmul.f32 %v862, %v839
        %v873 = vmul.f32 %v862, %v840
        %v874 = vmul.f32 %v862, %v841
        %v875 = vmul.f32 %v862, %v842
        %v876 = vmul.f32 %v862, %v843
        %v877 = vmul.f32 %v862, %v844
        %v878 = vmul.f32 %v862, %v845
        %v879 = vmul.f32 %v862, %v846
        %v880 = vmul.f32 %v862, %v847
        %v881 = vmul.f32 %v862, %v848
        %v882 = vmul.f32 %v862, %v849
        %v883 = vmul.f32 %v862, %v850
        %v884 = vmul.f32 %v862, %v851
        %v885 = vmul.f32 %v862, %v852
        %v886 = vmul.f32 %v862, %v853
        %v887 = vmul.f32 %v862, %v854
        %v888 = vmul.f32 %v862, %v855
        %v889 = vmul.f32 %v862, %v856
        %v890 = vmul.f32 %v862, %v857
        %v891 = vmul.f32 %v862, %v858
        %v892 = vmul.f32 %v862, %v859
        %v893 = vmul.f32 %v862, %v860
        %v894 = vmul.f32 %v862, %v861
        %v895 = vadd.f32 %v796, %v863
        %v896 = vadd.f32 %v797, %v864
        %v897 = vadd.f32 %v798, %v865
        %v898 = vadd.f32 %v799, %v866
        %v899 = vadd.f32 %v800, %v867
        %v900 = vadd.f32 %v801, %v868
        %v901 = vadd.f32 %v802, %v869
        %v902 = vadd.f32 %v803, %v870
        %v903 = vadd.f32 %v804, %v871
        %v904 = vadd.f32 %v805, %v872
        %v905 = vadd.f32 %v806, %v873
        %v906 = vadd.f32 %v807, %v874
        %v907 = vadd.f32 %v808, %v875
        %v908 = vadd.f32 %v809, %v876
        %v909 = vadd.f32 %v810, %v877
        %v910 = vadd.f32 %v811, %v878
        %v911 = vadd.f32 %v812, %v879
        %v912 = vadd.f32 %v813, %v880
        %v913 = vadd.f32 %v814, %v881
        %v914 = vadd.f32 %v815, %v882
        %v915 = vadd.f32 %v816, %v883
        %v916 = vadd.f32 %v817, %v884
        %v917 = vadd.f32 %v818, %v885
        %v918 = vadd.f32 %v819, %v886
        %v919 = vadd.f32 %v820, %v887
        %v920 = vadd.f32 %v821, %v888
        %v921 = vadd.f32 %v822, %v889
        %v922 = vadd.f32 %v823, %v890
        %v923 = vadd.f32 %v824, %v891
        %v924 = vadd.f32 %v825, %v892
        %v925 = vadd.f32 %v826, %v893
        %v926 = vadd.f32 %v827, %v894
        %s927 = sld [smem:[#allocation3 + $0x7]]
        %s928 = scalar_lea.vmem %s207, 1792 [#allocation7]
        %v929 = vld [vmem:[%s928] sm:$0xff]
        %v930 = vld [vmem:[%s928 + $0x8] sm:$0xff]
        %v931 = vld [vmem:[%s928 + $0x10] sm:$0xff]
        %v932 = vld [vmem:[%s928 + $0x18] sm:$0xff]
        %v933 = vld [vmem:[%s928 + $0x20] sm:$0xff]
        %v934 = vld [vmem:[%s928 + $0x28] sm:$0xff]
        %v935 = vld [vmem:[%s928 + $0x30] sm:$0xff]
        %v936 = vld [vmem:[%s928 + $0x38] sm:$0xff]
        %v937 = vld [vmem:[%s928 + $0x40] sm:$0xff]
        %v938 = vld [vmem:[%s928 + $0x48] sm:$0xff]
        %v939 = vld [vmem:[%s928 + $0x50] sm:$0xff]
        %v940 = vld [vmem:[%s928 + $0x58] sm:$0xff]
        %v941 = vld [vmem:[%s928 + $0x60] sm:$0xff]
        %v942 = vld [vmem:[%s928 + $0x68] sm:$0xff]
        %v943 = vld [vmem:[%s928 + $0x70] sm:$0xff]
        %v944 = vld [vmem:[%s928 + $0x78] sm:$0xff]
        %v945 = vld [vmem:[%s928 + $0x80] sm:$0xff]
        %v946 = vld [vmem:[%s928 + $0x88] sm:$0xff]
        %v947 = vld [vmem:[%s928 + $0x90] sm:$0xff]
        %v948 = vld [vmem:[%s928 + $0x98] sm:$0xff]
        %v949 = vld [vmem:[%s928 + $0xa0] sm:$0xff]
        %v950 = vld [vmem:[%s928 + $0xa8] sm:$0xff]
        %v951 = vld [vmem:[%s928 + $0xb0] sm:$0xff]
        %v952 = vld [vmem:[%s928 + $0xb8] sm:$0xff]
        %v953 = vld [vmem:[%s928 + $0xc0] sm:$0xff]
        %v954 = vld [vmem:[%s928 + $0xc8] sm:$0xff]
        %v955 = vld [vmem:[%s928 + $0xd0] sm:$0xff]
        %v956 = vld [vmem:[%s928 + $0xd8] sm:$0xff]
        %v957 = vld [vmem:[%s928 + $0xe0] sm:$0xff]
        %v958 = vld [vmem:[%s928 + $0xe8] sm:$0xff]
        %v959 = vld [vmem:[%s928 + $0xf0] sm:$0xff]
        %v960 = vld [vmem:[%s928 + $0xf8] sm:$0xff]
        %v961 = vstv %s927
        %v962 = vmul.f32 %v961, %v929
        %v963 = vmul.f32 %v961, %v930
        %v964 = vmul.f32 %v961, %v931
        %v965 = vmul.f32 %v961, %v932
        %v966 = vmul.f32 %v961, %v933
        %v967 = vmul.f32 %v961, %v934
        %v968 = vmul.f32 %v961, %v935
        %v969 = vmul.f32 %v961, %v936
        %v970 = vmul.f32 %v961, %v937
        %v971 = vmul.f32 %v961, %v938
        %v972 = vmul.f32 %v961, %v939
        %v973 = vmul.f32 %v961, %v940
        %v974 = vmul.f32 %v961, %v941
        %v975 = vmul.f32 %v961, %v942
        %v976 = vmul.f32 %v961, %v943
        %v977 = vmul.f32 %v961, %v944
        %v978 = vmul.f32 %v961, %v945
        %v979 = vmul.f32 %v961, %v946
        %v980 = vmul.f32 %v961, %v947
        %v981 = vmul.f32 %v961, %v948
        %v982 = vmul.f32 %v961, %v949
        %v983 = vmul.f32 %v961, %v950
        %v984 = vmul.f32 %v961, %v951
        %v985 = vmul.f32 %v961, %v952
        %v986 = vmul.f32 %v961, %v953
        %v987 = vmul.f32 %v961, %v954
        %v988 = vmul.f32 %v961, %v955
        %v989 = vmul.f32 %v961, %v956
        %v990 = vmul.f32 %v961, %v957
        %v991 = vmul.f32 %v961, %v958
        %v992 = vmul.f32 %v961, %v959
        %v993 = vmul.f32 %v961, %v960
        %v994 = vadd.f32 %v895, %v962
        %v995 = vadd.f32 %v896, %v963
        %v996 = vadd.f32 %v897, %v964
        %v997 = vadd.f32 %v898, %v965
        %v998 = vadd.f32 %v899, %v966
        %v999 = vadd.f32 %v900, %v967
        %v1000 = vadd.f32 %v901, %v968
        %v1001 = vadd.f32 %v902, %v969
        %v1002 = vadd.f32 %v903, %v970
        %v1003 = vadd.f32 %v904, %v971
        %v1004 = vadd.f32 %v905, %v972
        %v1005 = vadd.f32 %v906, %v973
        %v1006 = vadd.f32 %v907, %v974
        %v1007 = vadd.f32 %v908, %v975
        %v1008 = vadd.f32 %v909, %v976
        %v1009 = vadd.f32 %v910, %v977
        %v1010 = vadd.f32 %v911, %v978
        %v1011 = vadd.f32 %v912, %v979
        %v1012 = vadd.f32 %v913, %v980
        %v1013 = vadd.f32 %v914, %v981
        %v1014 = vadd.f32 %v915, %v982
        %v1015 = vadd.f32 %v916, %v983
        %v1016 = vadd.f32 %v917, %v984
        %v1017 = vadd.f32 %v918, %v985
        %v1018 = vadd.f32 %v919, %v986
        %v1019 = vadd.f32 %v920, %v987
        %v1020 = vadd.f32 %v921, %v988
        %v1021 = vadd.f32 %v922, %v989
        %v1022 = vadd.f32 %v923, %v990
        %v1023 = vadd.f32 %v924, %v991
        %v1024 = vadd.f32 %v925, %v992
        %v1025 = vadd.f32 %v926, %v993
        %s1026 = sld [smem:[#allocation3 + $0x8]]
        %s1027 = scalar_lea.vmem %s207, 2048 [#allocation7]
        %v1028 = vld [vmem:[%s1027] sm:$0xff]
        %v1029 = vld [vmem:[%s1027 + $0x8] sm:$0xff]
        %v1030 = vld [vmem:[%s1027 + $0x10] sm:$0xff]
        %v1031 = vld [vmem:[%s1027 + $0x18] sm:$0xff]
        %v1032 = vld [vmem:[%s1027 + $0x20] sm:$0xff]
        %v1033 = vld [vmem:[%s1027 + $0x28] sm:$0xff]
        %v1034 = vld [vmem:[%s1027 + $0x30] sm:$0xff]
        %v1035 = vld [vmem:[%s1027 + $0x38] sm:$0xff]
        %v1036 = vld [vmem:[%s1027 + $0x40] sm:$0xff]
        %v1037 = vld [vmem:[%s1027 + $0x48] sm:$0xff]
        %v1038 = vld [vmem:[%s1027 + $0x50] sm:$0xff]
        %v1039 = vld [vmem:[%s1027 + $0x58] sm:$0xff]
        %v1040 = vld [vmem:[%s1027 + $0x60] sm:$0xff]
        %v1041 = vld [vmem:[%s1027 + $0x68] sm:$0xff]
        %v1042 = vld [vmem:[%s1027 + $0x70] sm:$0xff]
        %v1043 = vld [vmem:[%s1027 + $0x78] sm:$0xff]
        %v1044 = vld [vmem:[%s1027 + $0x80] sm:$0xff]
        %v1045 = vld [vmem:[%s1027 + $0x88] sm:$0xff]
        %v1046 = vld [vmem:[%s1027 + $0x90] sm:$0xff]
        %v1047 = vld [vmem:[%s1027 + $0x98] sm:$0xff]
        %v1048 = vld [vmem:[%s1027 + $0xa0] sm:$0xff]
        %v1049 = vld [vmem:[%s1027 + $0xa8] sm:$0xff]
        %v1050 = vld [vmem:[%s1027 + $0xb0] sm:$0xff]
        %v1051 = vld [vmem:[%s1027 + $0xb8] sm:$0xff]
        %v1052 = vld [vmem:[%s1027 + $0xc0] sm:$0xff]
        %v1053 = vld [vmem:[%s1027 + $0xc8] sm:$0xff]
        %v1054 = vld [vmem:[%s1027 + $0xd0] sm:$0xff]
        %v1055 = vld [vmem:[%s1027 + $0xd8] sm:$0xff]
        %v1056 = vld [vmem:[%s1027 + $0xe0] sm:$0xff]
        %v1057 = vld [vmem:[%s1027 + $0xe8] sm:$0xff]
        %v1058 = vld [vmem:[%s1027 + $0xf0] sm:$0xff]
        %v1059 = vld [vmem:[%s1027 + $0xf8] sm:$0xff]
        %v1060 = vstv %s1026
        %v1061 = vmul.f32 %v1060, %v1028
        %v1062 = vmul.f32 %v1060, %v1029
        %v1063 = vmul.f32 %v1060, %v1030
        %v1064 = vmul.f32 %v1060, %v1031
        %v1065 = vmul.f32 %v1060, %v1032
        %v1066 = vmul.f32 %v1060, %v1033
        %v1067 = vmul.f32 %v1060, %v1034
        %v1068 = vmul.f32 %v1060, %v1035
        %v1069 = vmul.f32 %v1060, %v1036
        %v1070 = vmul.f32 %v1060, %v1037
        %v1071 = vmul.f32 %v1060, %v1038
        %v1072 = vmul.f32 %v1060, %v1039
        %v1073 = vmul.f32 %v1060, %v1040
        %v1074 = vmul.f32 %v1060, %v1041
        %v1075 = vmul.f32 %v1060, %v1042
        %v1076 = vmul.f32 %v1060, %v1043
        %v1077 = vmul.f32 %v1060, %v1044
        %v1078 = vmul.f32 %v1060, %v1045
        %v1079 = vmul.f32 %v1060, %v1046
        %v1080 = vmul.f32 %v1060, %v1047
        %v1081 = vmul.f32 %v1060, %v1048
        %v1082 = vmul.f32 %v1060, %v1049
        %v1083 = vmul.f32 %v1060, %v1050
        %v1084 = vmul.f32 %v1060, %v1051
        %v1085 = vmul.f32 %v1060, %v1052
        %v1086 = vmul.f32 %v1060, %v1053
        %v1087 = vmul.f32 %v1060, %v1054
        %v1088 = vmul.f32 %v1060, %v1055
        %v1089 = vmul.f32 %v1060, %v1056
        %v1090 = vmul.f32 %v1060, %v1057
        %v1091 = vmul.f32 %v1060, %v1058
        %v1092 = vmul.f32 %v1060, %v1059
        %v1093 = vadd.f32 %v994, %v1061
        %v1094 = vadd.f32 %v995, %v1062
        %v1095 = vadd.f32 %v996, %v1063
        %v1096 = vadd.f32 %v997, %v1064
        %v1097 = vadd.f32 %v998, %v1065
        %v1098 = vadd.f32 %v999, %v1066
        %v1099 = vadd.f32 %v1000, %v1067
        %v1100 = vadd.f32 %v1001, %v1068
        %v1101 = vadd.f32 %v1002, %v1069
        %v1102 = vadd.f32 %v1003, %v1070
        %v1103 = vadd.f32 %v1004, %v1071
        %v1104 = vadd.f32 %v1005, %v1072
        %v1105 = vadd.f32 %v1006, %v1073
        %v1106 = vadd.f32 %v1007, %v1074
        %v1107 = vadd.f32 %v1008, %v1075
        %v1108 = vadd.f32 %v1009, %v1076
        %v1109 = vadd.f32 %v1010, %v1077
        %v1110 = vadd.f32 %v1011, %v1078
        %v1111 = vadd.f32 %v1012, %v1079
        %v1112 = vadd.f32 %v1013, %v1080
        %v1113 = vadd.f32 %v1014, %v1081
        %v1114 = vadd.f32 %v1015, %v1082
        %v1115 = vadd.f32 %v1016, %v1083
        %v1116 = vadd.f32 %v1017, %v1084
        %v1117 = vadd.f32 %v1018, %v1085
        %v1118 = vadd.f32 %v1019, %v1086
        %v1119 = vadd.f32 %v1020, %v1087
        %v1120 = vadd.f32 %v1021, %v1088
        %v1121 = vadd.f32 %v1022, %v1089
        %v1122 = vadd.f32 %v1023, %v1090
        %v1123 = vadd.f32 %v1024, %v1091
        %v1124 = vadd.f32 %v1025, %v1092
        %s1125 = sld [smem:[#allocation3 + $0x9]]
        %s1126 = scalar_lea.vmem %s207, 2304 [#allocation7]
        %v1127 = vld [vmem:[%s1126] sm:$0xff]
        %v1128 = vld [vmem:[%s1126 + $0x8] sm:$0xff]
        %v1129 = vld [vmem:[%s1126 + $0x10] sm:$0xff]
        %v1130 = vld [vmem:[%s1126 + $0x18] sm:$0xff]
        %v1131 = vld [vmem:[%s1126 + $0x20] sm:$0xff]
        %v1132 = vld [vmem:[%s1126 + $0x28] sm:$0xff]
        %v1133 = vld [vmem:[%s1126 + $0x30] sm:$0xff]
        %v1134 = vld [vmem:[%s1126 + $0x38] sm:$0xff]
        %v1135 = vld [vmem:[%s1126 + $0x40] sm:$0xff]
        %v1136 = vld [vmem:[%s1126 + $0x48] sm:$0xff]
        %v1137 = vld [vmem:[%s1126 + $0x50] sm:$0xff]
        %v1138 = vld [vmem:[%s1126 + $0x58] sm:$0xff]
        %v1139 = vld [vmem:[%s1126 + $0x60] sm:$0xff]
        %v1140 = vld [vmem:[%s1126 + $0x68] sm:$0xff]
        %v1141 = vld [vmem:[%s1126 + $0x70] sm:$0xff]
        %v1142 = vld [vmem:[%s1126 + $0x78] sm:$0xff]
        %v1143 = vld [vmem:[%s1126 + $0x80] sm:$0xff]
        %v1144 = vld [vmem:[%s1126 + $0x88] sm:$0xff]
        %v1145 = vld [vmem:[%s1126 + $0x90] sm:$0xff]
        %v1146 = vld [vmem:[%s1126 + $0x98] sm:$0xff]
        %v1147 = vld [vmem:[%s1126 + $0xa0] sm:$0xff]
        %v1148 = vld [vmem:[%s1126 + $0xa8] sm:$0xff]
        %v1149 = vld [vmem:[%s1126 + $0xb0] sm:$0xff]
        %v1150 = vld [vmem:[%s1126 + $0xb8] sm:$0xff]
        %v1151 = vld [vmem:[%s1126 + $0xc0] sm:$0xff]
        %v1152 = vld [vmem:[%s1126 + $0xc8] sm:$0xff]
        %v1153 = vld [vmem:[%s1126 + $0xd0] sm:$0xff]
        %v1154 = vld [vmem:[%s1126 + $0xd8] sm:$0xff]
        %v1155 = vld [vmem:[%s1126 + $0xe0] sm:$0xff]
        %v1156 = vld [vmem:[%s1126 + $0xe8] sm:$0xff]
        %v1157 = vld [vmem:[%s1126 + $0xf0] sm:$0xff]
        %v1158 = vld [vmem:[%s1126 + $0xf8] sm:$0xff]
        %v1159 = vstv %s1125
        %v1160 = vmul.f32 %v1159, %v1127
        %v1161 = vmul.f32 %v1159, %v1128
        %v1162 = vmul.f32 %v1159, %v1129
        %v1163 = vmul.f32 %v1159, %v1130
        %v1164 = vmul.f32 %v1159, %v1131
        %v1165 = vmul.f32 %v1159, %v1132
        %v1166 = vmul.f32 %v1159, %v1133
        %v1167 = vmul.f32 %v1159, %v1134
        %v1168 = vmul.f32 %v1159, %v1135
        %v1169 = vmul.f32 %v1159, %v1136
        %v1170 = vmul.f32 %v1159, %v1137
        %v1171 = vmul.f32 %v1159, %v1138
        %v1172 = vmul.f32 %v1159, %v1139
        %v1173 = vmul.f32 %v1159, %v1140
        %v1174 = vmul.f32 %v1159, %v1141
        %v1175 = vmul.f32 %v1159, %v1142
        %v1176 = vmul.f32 %v1159, %v1143
        %v1177 = vmul.f32 %v1159, %v1144
        %v1178 = vmul.f32 %v1159, %v1145
        %v1179 = vmul.f32 %v1159, %v1146
        %v1180 = vmul.f32 %v1159, %v1147
        %v1181 = vmul.f32 %v1159, %v1148
        %v1182 = vmul.f32 %v1159, %v1149
        %v1183 = vmul.f32 %v1159, %v1150
        %v1184 = vmul.f32 %v1159, %v1151
        %v1185 = vmul.f32 %v1159, %v1152
        %v1186 = vmul.f32 %v1159, %v1153
        %v1187 = vmul.f32 %v1159, %v1154
        %v1188 = vmul.f32 %v1159, %v1155
        %v1189 = vmul.f32 %v1159, %v1156
        %v1190 = vmul.f32 %v1159, %v1157
        %v1191 = vmul.f32 %v1159, %v1158
        %v1192 = vadd.f32 %v1093, %v1160
        %v1193 = vadd.f32 %v1094, %v1161
        %v1194 = vadd.f32 %v1095, %v1162
        %v1195 = vadd.f32 %v1096, %v1163
        %v1196 = vadd.f32 %v1097, %v1164
        %v1197 = vadd.f32 %v1098, %v1165
        %v1198 = vadd.f32 %v1099, %v1166
        %v1199 = vadd.f32 %v1100, %v1167
        %v1200 = vadd.f32 %v1101, %v1168
        %v1201 = vadd.f32 %v1102, %v1169
        %v1202 = vadd.f32 %v1103, %v1170
        %v1203 = vadd.f32 %v1104, %v1171
        %v1204 = vadd.f32 %v1105, %v1172
        %v1205 = vadd.f32 %v1106, %v1173
        %v1206 = vadd.f32 %v1107, %v1174
        %v1207 = vadd.f32 %v1108, %v1175
        %v1208 = vadd.f32 %v1109, %v1176
        %v1209 = vadd.f32 %v1110, %v1177
        %v1210 = vadd.f32 %v1111, %v1178
        %v1211 = vadd.f32 %v1112, %v1179
        %v1212 = vadd.f32 %v1113, %v1180
        %v1213 = vadd.f32 %v1114, %v1181
        %v1214 = vadd.f32 %v1115, %v1182
        %v1215 = vadd.f32 %v1116, %v1183
        %v1216 = vadd.f32 %v1117, %v1184
        %v1217 = vadd.f32 %v1118, %v1185
        %v1218 = vadd.f32 %v1119, %v1186
        %v1219 = vadd.f32 %v1120, %v1187
        %v1220 = vadd.f32 %v1121, %v1188
        %v1221 = vadd.f32 %v1122, %v1189
        %v1222 = vadd.f32 %v1123, %v1190
        %v1223 = vadd.f32 %v1124, %v1191
        %s1224 = sld [smem:[#allocation3 + $0xa]]
        %s1225 = scalar_lea.vmem %s207, 2560 [#allocation7]
        %v1226 = vld [vmem:[%s1225] sm:$0xff]
        %v1227 = vld [vmem:[%s1225 + $0x8] sm:$0xff]
        %v1228 = vld [vmem:[%s1225 + $0x10] sm:$0xff]
        %v1229 = vld [vmem:[%s1225 + $0x18] sm:$0xff]
        %v1230 = vld [vmem:[%s1225 + $0x20] sm:$0xff]
        %v1231 = vld [vmem:[%s1225 + $0x28] sm:$0xff]
        %v1232 = vld [vmem:[%s1225 + $0x30] sm:$0xff]
        %v1233 = vld [vmem:[%s1225 + $0x38] sm:$0xff]
        %v1234 = vld [vmem:[%s1225 + $0x40] sm:$0xff]
        %v1235 = vld [vmem:[%s1225 + $0x48] sm:$0xff]
        %v1236 = vld [vmem:[%s1225 + $0x50] sm:$0xff]
        %v1237 = vld [vmem:[%s1225 + $0x58] sm:$0xff]
        %v1238 = vld [vmem:[%s1225 + $0x60] sm:$0xff]
        %v1239 = vld [vmem:[%s1225 + $0x68] sm:$0xff]
        %v1240 = vld [vmem:[%s1225 + $0x70] sm:$0xff]
        %v1241 = vld [vmem:[%s1225 + $0x78] sm:$0xff]
        %v1242 = vld [vmem:[%s1225 + $0x80] sm:$0xff]
        %v1243 = vld [vmem:[%s1225 + $0x88] sm:$0xff]
        %v1244 = vld [vmem:[%s1225 + $0x90] sm:$0xff]
        %v1245 = vld [vmem:[%s1225 + $0x98] sm:$0xff]
        %v1246 = vld [vmem:[%s1225 + $0xa0] sm:$0xff]
        %v1247 = vld [vmem:[%s1225 + $0xa8] sm:$0xff]
        %v1248 = vld [vmem:[%s1225 + $0xb0] sm:$0xff]
        %v1249 = vld [vmem:[%s1225 + $0xb8] sm:$0xff]
        %v1250 = vld [vmem:[%s1225 + $0xc0] sm:$0xff]
        %v1251 = vld [vmem:[%s1225 + $0xc8] sm:$0xff]
        %v1252 = vld [vmem:[%s1225 + $0xd0] sm:$0xff]
        %v1253 = vld [vmem:[%s1225 + $0xd8] sm:$0xff]
        %v1254 = vld [vmem:[%s1225 + $0xe0] sm:$0xff]
        %v1255 = vld [vmem:[%s1225 + $0xe8] sm:$0xff]
        %v1256 = vld [vmem:[%s1225 + $0xf0] sm:$0xff]
        %v1257 = vld [vmem:[%s1225 + $0xf8] sm:$0xff]
        %v1258 = vstv %s1224
        %v1259 = vmul.f32 %v1258, %v1226
        %v1260 = vmul.f32 %v1258, %v1227
        %v1261 = vmul.f32 %v1258, %v1228
        %v1262 = vmul.f32 %v1258, %v1229
        %v1263 = vmul.f32 %v1258, %v1230
        %v1264 = vmul.f32 %v1258, %v1231
        %v1265 = vmul.f32 %v1258, %v1232
        %v1266 = vmul.f32 %v1258, %v1233
        %v1267 = vmul.f32 %v1258, %v1234
        %v1268 = vmul.f32 %v1258, %v1235
        %v1269 = vmul.f32 %v1258, %v1236
        %v1270 = vmul.f32 %v1258, %v1237
        %v1271 = vmul.f32 %v1258, %v1238
        %v1272 = vmul.f32 %v1258, %v1239
        %v1273 = vmul.f32 %v1258, %v1240
        %v1274 = vmul.f32 %v1258, %v1241
        %v1275 = vmul.f32 %v1258, %v1242
        %v1276 = vmul.f32 %v1258, %v1243
        %v1277 = vmul.f32 %v1258, %v1244
        %v1278 = vmul.f32 %v1258, %v1245
        %v1279 = vmul.f32 %v1258, %v1246
        %v1280 = vmul.f32 %v1258, %v1247
        %v1281 = vmul.f32 %v1258, %v1248
        %v1282 = vmul.f32 %v1258, %v1249
        %v1283 = vmul.f32 %v1258, %v1250
        %v1284 = vmul.f32 %v1258, %v1251
        %v1285 = vmul.f32 %v1258, %v1252
        %v1286 = vmul.f32 %v1258, %v1253
        %v1287 = vmul.f32 %v1258, %v1254
        %v1288 = vmul.f32 %v1258, %v1255
        %v1289 = vmul.f32 %v1258, %v1256
        %v1290 = vmul.f32 %v1258, %v1257
        %v1291 = vadd.f32 %v1192, %v1259
        %v1292 = vadd.f32 %v1193, %v1260
        %v1293 = vadd.f32 %v1194, %v1261
        %v1294 = vadd.f32 %v1195, %v1262
        %v1295 = vadd.f32 %v1196, %v1263
        %v1296 = vadd.f32 %v1197, %v1264
        %v1297 = vadd.f32 %v1198, %v1265
        %v1298 = vadd.f32 %v1199, %v1266
        %v1299 = vadd.f32 %v1200, %v1267
        %v1300 = vadd.f32 %v1201, %v1268
        %v1301 = vadd.f32 %v1202, %v1269
        %v1302 = vadd.f32 %v1203, %v1270
        %v1303 = vadd.f32 %v1204, %v1271
        %v1304 = vadd.f32 %v1205, %v1272
        %v1305 = vadd.f32 %v1206, %v1273
        %v1306 = vadd.f32 %v1207, %v1274
        %v1307 = vadd.f32 %v1208, %v1275
        %v1308 = vadd.f32 %v1209, %v1276
        %v1309 = vadd.f32 %v1210, %v1277
        %v1310 = vadd.f32 %v1211, %v1278
        %v1311 = vadd.f32 %v1212, %v1279
        %v1312 = vadd.f32 %v1213, %v1280
        %v1313 = vadd.f32 %v1214, %v1281
        %v1314 = vadd.f32 %v1215, %v1282
        %v1315 = vadd.f32 %v1216, %v1283
        %v1316 = vadd.f32 %v1217, %v1284
        %v1317 = vadd.f32 %v1218, %v1285
        %v1318 = vadd.f32 %v1219, %v1286
        %v1319 = vadd.f32 %v1220, %v1287
        %v1320 = vadd.f32 %v1221, %v1288
        %v1321 = vadd.f32 %v1222, %v1289
        %v1322 = vadd.f32 %v1223, %v1290
        %s1323 = sld [smem:[#allocation3 + $0xb]]
        %s1324 = scalar_lea.vmem %s207, 2816 [#allocation7]
        %v1325 = vld [vmem:[%s1324] sm:$0xff]
        %v1326 = vld [vmem:[%s1324 + $0x8] sm:$0xff]
        %v1327 = vld [vmem:[%s1324 + $0x10] sm:$0xff]
        %v1328 = vld [vmem:[%s1324 + $0x18] sm:$0xff]
        %v1329 = vld [vmem:[%s1324 + $0x20] sm:$0xff]
        %v1330 = vld [vmem:[%s1324 + $0x28] sm:$0xff]
        %v1331 = vld [vmem:[%s1324 + $0x30] sm:$0xff]
        %v1332 = vld [vmem:[%s1324 + $0x38] sm:$0xff]
        %v1333 = vld [vmem:[%s1324 + $0x40] sm:$0xff]
        %v1334 = vld [vmem:[%s1324 + $0x48] sm:$0xff]
        %v1335 = vld [vmem:[%s1324 + $0x50] sm:$0xff]
        %v1336 = vld [vmem:[%s1324 + $0x58] sm:$0xff]
        %v1337 = vld [vmem:[%s1324 + $0x60] sm:$0xff]
        %v1338 = vld [vmem:[%s1324 + $0x68] sm:$0xff]
        %v1339 = vld [vmem:[%s1324 + $0x70] sm:$0xff]
        %v1340 = vld [vmem:[%s1324 + $0x78] sm:$0xff]
        %v1341 = vld [vmem:[%s1324 + $0x80] sm:$0xff]
        %v1342 = vld [vmem:[%s1324 + $0x88] sm:$0xff]
        %v1343 = vld [vmem:[%s1324 + $0x90] sm:$0xff]
        %v1344 = vld [vmem:[%s1324 + $0x98] sm:$0xff]
        %v1345 = vld [vmem:[%s1324 + $0xa0] sm:$0xff]
        %v1346 = vld [vmem:[%s1324 + $0xa8] sm:$0xff]
        %v1347 = vld [vmem:[%s1324 + $0xb0] sm:$0xff]
        %v1348 = vld [vmem:[%s1324 + $0xb8] sm:$0xff]
        %v1349 = vld [vmem:[%s1324 + $0xc0] sm:$0xff]
        %v1350 = vld [vmem:[%s1324 + $0xc8] sm:$0xff]
        %v1351 = vld [vmem:[%s1324 + $0xd0] sm:$0xff]
        %v1352 = vld [vmem:[%s1324 + $0xd8] sm:$0xff]
        %v1353 = vld [vmem:[%s1324 + $0xe0] sm:$0xff]
        %v1354 = vld [vmem:[%s1324 + $0xe8] sm:$0xff]
        %v1355 = vld [vmem:[%s1324 + $0xf0] sm:$0xff]
        %v1356 = vld [vmem:[%s1324 + $0xf8] sm:$0xff]
        %v1357 = vstv %s1323
        %v1358 = vmul.f32 %v1357, %v1325
        %v1359 = vmul.f32 %v1357, %v1326
        %v1360 = vmul.f32 %v1357, %v1327
        %v1361 = vmul.f32 %v1357, %v1328
        %v1362 = vmul.f32 %v1357, %v1329
        %v1363 = vmul.f32 %v1357, %v1330
        %v1364 = vmul.f32 %v1357, %v1331
        %v1365 = vmul.f32 %v1357, %v1332
        %v1366 = vmul.f32 %v1357, %v1333
        %v1367 = vmul.f32 %v1357, %v1334
        %v1368 = vmul.f32 %v1357, %v1335
        %v1369 = vmul.f32 %v1357, %v1336
        %v1370 = vmul.f32 %v1357, %v1337
        %v1371 = vmul.f32 %v1357, %v1338
        %v1372 = vmul.f32 %v1357, %v1339
        %v1373 = vmul.f32 %v1357, %v1340
        %v1374 = vmul.f32 %v1357, %v1341
        %v1375 = vmul.f32 %v1357, %v1342
        %v1376 = vmul.f32 %v1357, %v1343
        %v1377 = vmul.f32 %v1357, %v1344
        %v1378 = vmul.f32 %v1357, %v1345
        %v1379 = vmul.f32 %v1357, %v1346
        %v1380 = vmul.f32 %v1357, %v1347
        %v1381 = vmul.f32 %v1357, %v1348
        %v1382 = vmul.f32 %v1357, %v1349
        %v1383 = vmul.f32 %v1357, %v1350
        %v1384 = vmul.f32 %v1357, %v1351
        %v1385 = vmul.f32 %v1357, %v1352
        %v1386 = vmul.f32 %v1357, %v1353
        %v1387 = vmul.f32 %v1357, %v1354
        %v1388 = vmul.f32 %v1357, %v1355
        %v1389 = vmul.f32 %v1357, %v1356
        %v1390 = vadd.f32 %v1291, %v1358
        %v1391 = vadd.f32 %v1292, %v1359
        %v1392 = vadd.f32 %v1293, %v1360
        %v1393 = vadd.f32 %v1294, %v1361
        %v1394 = vadd.f32 %v1295, %v1362
        %v1395 = vadd.f32 %v1296, %v1363
        %v1396 = vadd.f32 %v1297, %v1364
        %v1397 = vadd.f32 %v1298, %v1365
        %v1398 = vadd.f32 %v1299, %v1366
        %v1399 = vadd.f32 %v1300, %v1367
        %v1400 = vadd.f32 %v1301, %v1368
        %v1401 = vadd.f32 %v1302, %v1369
        %v1402 = vadd.f32 %v1303, %v1370
        %v1403 = vadd.f32 %v1304, %v1371
        %v1404 = vadd.f32 %v1305, %v1372
        %v1405 = vadd.f32 %v1306, %v1373
        %v1406 = vadd.f32 %v1307, %v1374
        %v1407 = vadd.f32 %v1308, %v1375
        %v1408 = vadd.f32 %v1309, %v1376
        %v1409 = vadd.f32 %v1310, %v1377
        %v1410 = vadd.f32 %v1311, %v1378
        %v1411 = vadd.f32 %v1312, %v1379
        %v1412 = vadd.f32 %v1313, %v1380
        %v1413 = vadd.f32 %v1314, %v1381
        %v1414 = vadd.f32 %v1315, %v1382
        %v1415 = vadd.f32 %v1316, %v1383
        %v1416 = vadd.f32 %v1317, %v1384
        %v1417 = vadd.f32 %v1318, %v1385
        %v1418 = vadd.f32 %v1319, %v1386
        %v1419 = vadd.f32 %v1320, %v1387
        %v1420 = vadd.f32 %v1321, %v1388
        %v1421 = vadd.f32 %v1322, %v1389
        %s1422 = sld [smem:[#allocation3 + $0xc]]
        %s1423 = scalar_lea.vmem %s207, 3072 [#allocation7]
        %v1424 = vld [vmem:[%s1423] sm:$0xff]
        %v1425 = vld [vmem:[%s1423 + $0x8] sm:$0xff]
        %v1426 = vld [vmem:[%s1423 + $0x10] sm:$0xff]
        %v1427 = vld [vmem:[%s1423 + $0x18] sm:$0xff]
        %v1428 = vld [vmem:[%s1423 + $0x20] sm:$0xff]
        %v1429 = vld [vmem:[%s1423 + $0x28] sm:$0xff]
        %v1430 = vld [vmem:[%s1423 + $0x30] sm:$0xff]
        %v1431 = vld [vmem:[%s1423 + $0x38] sm:$0xff]
        %v1432 = vld [vmem:[%s1423 + $0x40] sm:$0xff]
        %v1433 = vld [vmem:[%s1423 + $0x48] sm:$0xff]
        %v1434 = vld [vmem:[%s1423 + $0x50] sm:$0xff]
        %v1435 = vld [vmem:[%s1423 + $0x58] sm:$0xff]
        %v1436 = vld [vmem:[%s1423 + $0x60] sm:$0xff]
        %v1437 = vld [vmem:[%s1423 + $0x68] sm:$0xff]
        %v1438 = vld [vmem:[%s1423 + $0x70] sm:$0xff]
        %v1439 = vld [vmem:[%s1423 + $0x78] sm:$0xff]
        %v1440 = vld [vmem:[%s1423 + $0x80] sm:$0xff]
        %v1441 = vld [vmem:[%s1423 + $0x88] sm:$0xff]
        %v1442 = vld [vmem:[%s1423 + $0x90] sm:$0xff]
        %v1443 = vld [vmem:[%s1423 + $0x98] sm:$0xff]
        %v1444 = vld [vmem:[%s1423 + $0xa0] sm:$0xff]
        %v1445 = vld [vmem:[%s1423 + $0xa8] sm:$0xff]
        %v1446 = vld [vmem:[%s1423 + $0xb0] sm:$0xff]
        %v1447 = vld [vmem:[%s1423 + $0xb8] sm:$0xff]
        %v1448 = vld [vmem:[%s1423 + $0xc0] sm:$0xff]
        %v1449 = vld [vmem:[%s1423 + $0xc8] sm:$0xff]
        %v1450 = vld [vmem:[%s1423 + $0xd0] sm:$0xff]
        %v1451 = vld [vmem:[%s1423 + $0xd8] sm:$0xff]
        %v1452 = vld [vmem:[%s1423 + $0xe0] sm:$0xff]
        %v1453 = vld [vmem:[%s1423 + $0xe8] sm:$0xff]
        %v1454 = vld [vmem:[%s1423 + $0xf0] sm:$0xff]
        %v1455 = vld [vmem:[%s1423 + $0xf8] sm:$0xff]
        %v1456 = vstv %s1422
        %v1457 = vmul.f32 %v1456, %v1424
        %v1458 = vmul.f32 %v1456, %v1425
        %v1459 = vmul.f32 %v1456, %v1426
        %v1460 = vmul.f32 %v1456, %v1427
        %v1461 = vmul.f32 %v1456, %v1428
        %v1462 = vmul.f32 %v1456, %v1429
        %v1463 = vmul.f32 %v1456, %v1430
        %v1464 = vmul.f32 %v1456, %v1431
        %v1465 = vmul.f32 %v1456, %v1432
        %v1466 = vmul.f32 %v1456, %v1433
        %v1467 = vmul.f32 %v1456, %v1434
        %v1468 = vmul.f32 %v1456, %v1435
        %v1469 = vmul.f32 %v1456, %v1436
        %v1470 = vmul.f32 %v1456, %v1437
        %v1471 = vmul.f32 %v1456, %v1438
        %v1472 = vmul.f32 %v1456, %v1439
        %v1473 = vmul.f32 %v1456, %v1440
        %v1474 = vmul.f32 %v1456, %v1441
        %v1475 = vmul.f32 %v1456, %v1442
        %v1476 = vmul.f32 %v1456, %v1443
        %v1477 = vmul.f32 %v1456, %v1444
        %v1478 = vmul.f32 %v1456, %v1445
        %v1479 = vmul.f32 %v1456, %v1446
        %v1480 = vmul.f32 %v1456, %v1447
        %v1481 = vmul.f32 %v1456, %v1448
        %v1482 = vmul.f32 %v1456, %v1449
        %v1483 = vmul.f32 %v1456, %v1450
        %v1484 = vmul.f32 %v1456, %v1451
        %v1485 = vmul.f32 %v1456, %v1452
        %v1486 = vmul.f32 %v1456, %v1453
        %v1487 = vmul.f32 %v1456, %v1454
        %v1488 = vmul.f32 %v1456, %v1455
        %v1489 = vadd.f32 %v1390, %v1457
        %v1490 = vadd.f32 %v1391, %v1458
        %v1491 = vadd.f32 %v1392, %v1459
        %v1492 = vadd.f32 %v1393, %v1460
        %v1493 = vadd.f32 %v1394, %v1461
        %v1494 = vadd.f32 %v1395, %v1462
        %v1495 = vadd.f32 %v1396, %v1463
        %v1496 = vadd.f32 %v1397, %v1464
        %v1497 = vadd.f32 %v1398, %v1465
        %v1498 = vadd.f32 %v1399, %v1466
        %v1499 = vadd.f32 %v1400, %v1467
        %v1500 = vadd.f32 %v1401, %v1468
        %v1501 = vadd.f32 %v1402, %v1469
        %v1502 = vadd.f32 %v1403, %v1470
        %v1503 = vadd.f32 %v1404, %v1471
        %v1504 = vadd.f32 %v1405, %v1472
        %v1505 = vadd.f32 %v1406, %v1473
        %v1506 = vadd.f32 %v1407, %v1474
        %v1507 = vadd.f32 %v1408, %v1475
        %v1508 = vadd.f32 %v1409, %v1476
        %v1509 = vadd.f32 %v1410, %v1477
        %v1510 = vadd.f32 %v1411, %v1478
        %v1511 = vadd.f32 %v1412, %v1479
        %v1512 = vadd.f32 %v1413, %v1480
        %v1513 = vadd.f32 %v1414, %v1481
        %v1514 = vadd.f32 %v1415, %v1482
        %v1515 = vadd.f32 %v1416, %v1483
        %v1516 = vadd.f32 %v1417, %v1484
        %v1517 = vadd.f32 %v1418, %v1485
        %v1518 = vadd.f32 %v1419, %v1486
        %v1519 = vadd.f32 %v1420, %v1487
        %v1520 = vadd.f32 %v1421, %v1488
        %s1521 = sld [smem:[#allocation3 + $0xd]]
        %s1522 = scalar_lea.vmem %s207, 3328 [#allocation7]
        %v1523 = vld [vmem:[%s1522] sm:$0xff]
        %v1524 = vld [vmem:[%s1522 + $0x8] sm:$0xff]
        %v1525 = vld [vmem:[%s1522 + $0x10] sm:$0xff]
        %v1526 = vld [vmem:[%s1522 + $0x18] sm:$0xff]
        %v1527 = vld [vmem:[%s1522 + $0x20] sm:$0xff]
        %v1528 = vld [vmem:[%s1522 + $0x28] sm:$0xff]
        %v1529 = vld [vmem:[%s1522 + $0x30] sm:$0xff]
        %v1530 = vld [vmem:[%s1522 + $0x38] sm:$0xff]
        %v1531 = vld [vmem:[%s1522 + $0x40] sm:$0xff]
        %v1532 = vld [vmem:[%s1522 + $0x48] sm:$0xff]
        %v1533 = vld [vmem:[%s1522 + $0x50] sm:$0xff]
        %v1534 = vld [vmem:[%s1522 + $0x58] sm:$0xff]
        %v1535 = vld [vmem:[%s1522 + $0x60] sm:$0xff]
        %v1536 = vld [vmem:[%s1522 + $0x68] sm:$0xff]
        %v1537 = vld [vmem:[%s1522 + $0x70] sm:$0xff]
        %v1538 = vld [vmem:[%s1522 + $0x78] sm:$0xff]
        %v1539 = vld [vmem:[%s1522 + $0x80] sm:$0xff]
        %v1540 = vld [vmem:[%s1522 + $0x88] sm:$0xff]
        %v1541 = vld [vmem:[%s1522 + $0x90] sm:$0xff]
        %v1542 = vld [vmem:[%s1522 + $0x98] sm:$0xff]
        %v1543 = vld [vmem:[%s1522 + $0xa0] sm:$0xff]
        %v1544 = vld [vmem:[%s1522 + $0xa8] sm:$0xff]
        %v1545 = vld [vmem:[%s1522 + $0xb0] sm:$0xff]
        %v1546 = vld [vmem:[%s1522 + $0xb8] sm:$0xff]
        %v1547 = vld [vmem:[%s1522 + $0xc0] sm:$0xff]
        %v1548 = vld [vmem:[%s1522 + $0xc8] sm:$0xff]
        %v1549 = vld [vmem:[%s1522 + $0xd0] sm:$0xff]
        %v1550 = vld [vmem:[%s1522 + $0xd8] sm:$0xff]
        %v1551 = vld [vmem:[%s1522 + $0xe0] sm:$0xff]
        %v1552 = vld [vmem:[%s1522 + $0xe8] sm:$0xff]
        %v1553 = vld [vmem:[%s1522 + $0xf0] sm:$0xff]
        %v1554 = vld [vmem:[%s1522 + $0xf8] sm:$0xff]
        %v1555 = vstv %s1521
        %v1556 = vmul.f32 %v1555, %v1523
        %v1557 = vmul.f32 %v1555, %v1524
        %v1558 = vmul.f32 %v1555, %v1525
        %v1559 = vmul.f32 %v1555, %v1526
        %v1560 = vmul.f32 %v1555, %v1527
        %v1561 = vmul.f32 %v1555, %v1528
        %v1562 = vmul.f32 %v1555, %v1529
        %v1563 = vmul.f32 %v1555, %v1530
        %v1564 = vmul.f32 %v1555, %v1531
        %v1565 = vmul.f32 %v1555, %v1532
        %v1566 = vmul.f32 %v1555, %v1533
        %v1567 = vmul.f32 %v1555, %v1534
        %v1568 = vmul.f32 %v1555, %v1535
        %v1569 = vmul.f32 %v1555, %v1536
        %v1570 = vmul.f32 %v1555, %v1537
        %v1571 = vmul.f32 %v1555, %v1538
        %v1572 = vmul.f32 %v1555, %v1539
        %v1573 = vmul.f32 %v1555, %v1540
        %v1574 = vmul.f32 %v1555, %v1541
        %v1575 = vmul.f32 %v1555, %v1542
        %v1576 = vmul.f32 %v1555, %v1543
        %v1577 = vmul.f32 %v1555, %v1544
        %v1578 = vmul.f32 %v1555, %v1545
        %v1579 = vmul.f32 %v1555, %v1546
        %v1580 = vmul.f32 %v1555, %v1547
        %v1581 = vmul.f32 %v1555, %v1548
        %v1582 = vmul.f32 %v1555, %v1549
        %v1583 = vmul.f32 %v1555, %v1550
        %v1584 = vmul.f32 %v1555, %v1551
        %v1585 = vmul.f32 %v1555, %v1552
        %v1586 = vmul.f32 %v1555, %v1553
        %v1587 = vmul.f32 %v1555, %v1554
        %v1588 = vadd.f32 %v1489, %v1556
        %v1589 = vadd.f32 %v1490, %v1557
        %v1590 = vadd.f32 %v1491, %v1558
        %v1591 = vadd.f32 %v1492, %v1559
        %v1592 = vadd.f32 %v1493, %v1560
        %v1593 = vadd.f32 %v1494, %v1561
        %v1594 = vadd.f32 %v1495, %v1562
        %v1595 = vadd.f32 %v1496, %v1563
        %v1596 = vadd.f32 %v1497, %v1564
        %v1597 = vadd.f32 %v1498, %v1565
        %v1598 = vadd.f32 %v1499, %v1566
        %v1599 = vadd.f32 %v1500, %v1567
        %v1600 = vadd.f32 %v1501, %v1568
        %v1601 = vadd.f32 %v1502, %v1569
        %v1602 = vadd.f32 %v1503, %v1570
        %v1603 = vadd.f32 %v1504, %v1571
        %v1604 = vadd.f32 %v1505, %v1572
        %v1605 = vadd.f32 %v1506, %v1573
        %v1606 = vadd.f32 %v1507, %v1574
        %v1607 = vadd.f32 %v1508, %v1575
        %v1608 = vadd.f32 %v1509, %v1576
        %v1609 = vadd.f32 %v1510, %v1577
        %v1610 = vadd.f32 %v1511, %v1578
        %v1611 = vadd.f32 %v1512, %v1579
        %v1612 = vadd.f32 %v1513, %v1580
        %v1613 = vadd.f32 %v1514, %v1581
        %v1614 = vadd.f32 %v1515, %v1582
        %v1615 = vadd.f32 %v1516, %v1583
        %v1616 = vadd.f32 %v1517, %v1584
        %v1617 = vadd.f32 %v1518, %v1585
        %v1618 = vadd.f32 %v1519, %v1586
        %v1619 = vadd.f32 %v1520, %v1587
        %s1620 = sld [smem:[#allocation3 + $0xe]]
        %s1621 = scalar_lea.vmem %s207, 3584 [#allocation7]
        %v1622 = vld [vmem:[%s1621] sm:$0xff]
        %v1623 = vld [vmem:[%s1621 + $0x8] sm:$0xff]
        %v1624 = vld [vmem:[%s1621 + $0x10] sm:$0xff]
        %v1625 = vld [vmem:[%s1621 + $0x18] sm:$0xff]
        %v1626 = vld [vmem:[%s1621 + $0x20] sm:$0xff]
        %v1627 = vld [vmem:[%s1621 + $0x28] sm:$0xff]
        %v1628 = vld [vmem:[%s1621 + $0x30] sm:$0xff]
        %v1629 = vld [vmem:[%s1621 + $0x38] sm:$0xff]
        %v1630 = vld [vmem:[%s1621 + $0x40] sm:$0xff]
        %v1631 = vld [vmem:[%s1621 + $0x48] sm:$0xff]
        %v1632 = vld [vmem:[%s1621 + $0x50] sm:$0xff]
        %v1633 = vld [vmem:[%s1621 + $0x58] sm:$0xff]
        %v1634 = vld [vmem:[%s1621 + $0x60] sm:$0xff]
        %v1635 = vld [vmem:[%s1621 + $0x68] sm:$0xff]
        %v1636 = vld [vmem:[%s1621 + $0x70] sm:$0xff]
        %v1637 = vld [vmem:[%s1621 + $0x78] sm:$0xff]
        %v1638 = vld [vmem:[%s1621 + $0x80] sm:$0xff]
        %v1639 = vld [vmem:[%s1621 + $0x88] sm:$0xff]
        %v1640 = vld [vmem:[%s1621 + $0x90] sm:$0xff]
        %v1641 = vld [vmem:[%s1621 + $0x98] sm:$0xff]
        %v1642 = vld [vmem:[%s1621 + $0xa0] sm:$0xff]
        %v1643 = vld [vmem:[%s1621 + $0xa8] sm:$0xff]
        %v1644 = vld [vmem:[%s1621 + $0xb0] sm:$0xff]
        %v1645 = vld [vmem:[%s1621 + $0xb8] sm:$0xff]
        %v1646 = vld [vmem:[%s1621 + $0xc0] sm:$0xff]
        %v1647 = vld [vmem:[%s1621 + $0xc8] sm:$0xff]
        %v1648 = vld [vmem:[%s1621 + $0xd0] sm:$0xff]
        %v1649 = vld [vmem:[%s1621 + $0xd8] sm:$0xff]
        %v1650 = vld [vmem:[%s1621 + $0xe0] sm:$0xff]
        %v1651 = vld [vmem:[%s1621 + $0xe8] sm:$0xff]
        %v1652 = vld [vmem:[%s1621 + $0xf0] sm:$0xff]
        %v1653 = vld [vmem:[%s1621 + $0xf8] sm:$0xff]
        %v1654 = vstv %s1620
        %v1655 = vmul.f32 %v1654, %v1622
        %v1656 = vmul.f32 %v1654, %v1623
        %v1657 = vmul.f32 %v1654, %v1624
        %v1658 = vmul.f32 %v1654, %v1625
        %v1659 = vmul.f32 %v1654, %v1626
        %v1660 = vmul.f32 %v1654, %v1627
        %v1661 = vmul.f32 %v1654, %v1628
        %v1662 = vmul.f32 %v1654, %v1629
        %v1663 = vmul.f32 %v1654, %v1630
        %v1664 = vmul.f32 %v1654, %v1631
        %v1665 = vmul.f32 %v1654, %v1632
        %v1666 = vmul.f32 %v1654, %v1633
        %v1667 = vmul.f32 %v1654, %v1634
        %v1668 = vmul.f32 %v1654, %v1635
        %v1669 = vmul.f32 %v1654, %v1636
        %v1670 = vmul.f32 %v1654, %v1637
        %v1671 = vmul.f32 %v1654, %v1638
        %v1672 = vmul.f32 %v1654, %v1639
        %v1673 = vmul.f32 %v1654, %v1640
        %v1674 = vmul.f32 %v1654, %v1641
        %v1675 = vmul.f32 %v1654, %v1642
        %v1676 = vmul.f32 %v1654, %v1643
        %v1677 = vmul.f32 %v1654, %v1644
        %v1678 = vmul.f32 %v1654, %v1645
        %v1679 = vmul.f32 %v1654, %v1646
        %v1680 = vmul.f32 %v1654, %v1647
        %v1681 = vmul.f32 %v1654, %v1648
        %v1682 = vmul.f32 %v1654, %v1649
        %v1683 = vmul.f32 %v1654, %v1650
        %v1684 = vmul.f32 %v1654, %v1651
        %v1685 = vmul.f32 %v1654, %v1652
        %v1686 = vmul.f32 %v1654, %v1653
        %v1687 = vadd.f32 %v1588, %v1655
        %v1688 = vadd.f32 %v1589, %v1656
        %v1689 = vadd.f32 %v1590, %v1657
        %v1690 = vadd.f32 %v1591, %v1658
        %v1691 = vadd.f32 %v1592, %v1659
        %v1692 = vadd.f32 %v1593, %v1660
        %v1693 = vadd.f32 %v1594, %v1661
        %v1694 = vadd.f32 %v1595, %v1662
        %v1695 = vadd.f32 %v1596, %v1663
        %v1696 = vadd.f32 %v1597, %v1664
        %v1697 = vadd.f32 %v1598, %v1665
        %v1698 = vadd.f32 %v1599, %v1666
        %v1699 = vadd.f32 %v1600, %v1667
        %v1700 = vadd.f32 %v1601, %v1668
        %v1701 = vadd.f32 %v1602, %v1669
        %v1702 = vadd.f32 %v1603, %v1670
        %v1703 = vadd.f32 %v1604, %v1671
        %v1704 = vadd.f32 %v1605, %v1672
        %v1705 = vadd.f32 %v1606, %v1673
        %v1706 = vadd.f32 %v1607, %v1674
        %v1707 = vadd.f32 %v1608, %v1675
        %v1708 = vadd.f32 %v1609, %v1676
        %v1709 = vadd.f32 %v1610, %v1677
        %v1710 = vadd.f32 %v1611, %v1678
        %v1711 = vadd.f32 %v1612, %v1679
        %v1712 = vadd.f32 %v1613, %v1680
        %v1713 = vadd.f32 %v1614, %v1681
        %v1714 = vadd.f32 %v1615, %v1682
        %v1715 = vadd.f32 %v1616, %v1683
        %v1716 = vadd.f32 %v1617, %v1684
        %v1717 = vadd.f32 %v1618, %v1685
        %v1718 = vadd.f32 %v1619, %v1686
        %s1719 = sld [smem:[#allocation3 + $0xf]]
        %s1720 = scalar_lea.vmem %s207, 3840 [#allocation7]
        %v1721 = vld [vmem:[%s1720] sm:$0xff]
        %v1722 = vld [vmem:[%s1720 + $0x8] sm:$0xff]
        %v1723 = vld [vmem:[%s1720 + $0x10] sm:$0xff]
        %v1724 = vld [vmem:[%s1720 + $0x18] sm:$0xff]
        %v1725 = vld [vmem:[%s1720 + $0x20] sm:$0xff]
        %v1726 = vld [vmem:[%s1720 + $0x28] sm:$0xff]
        %v1727 = vld [vmem:[%s1720 + $0x30] sm:$0xff]
        %v1728 = vld [vmem:[%s1720 + $0x38] sm:$0xff]
        %v1729 = vld [vmem:[%s1720 + $0x40] sm:$0xff]
        %v1730 = vld [vmem:[%s1720 + $0x48] sm:$0xff]
        %v1731 = vld [vmem:[%s1720 + $0x50] sm:$0xff]
        %v1732 = vld [vmem:[%s1720 + $0x58] sm:$0xff]
        %v1733 = vld [vmem:[%s1720 + $0x60] sm:$0xff]
        %v1734 = vld [vmem:[%s1720 + $0x68] sm:$0xff]
        %v1735 = vld [vmem:[%s1720 + $0x70] sm:$0xff]
        %v1736 = vld [vmem:[%s1720 + $0x78] sm:$0xff]
        %v1737 = vld [vmem:[%s1720 + $0x80] sm:$0xff]
        %v1738 = vld [vmem:[%s1720 + $0x88] sm:$0xff]
        %v1739 = vld [vmem:[%s1720 + $0x90] sm:$0xff]
        %v1740 = vld [vmem:[%s1720 + $0x98] sm:$0xff]
        %v1741 = vld [vmem:[%s1720 + $0xa0] sm:$0xff]
        %v1742 = vld [vmem:[%s1720 + $0xa8] sm:$0xff]
        %v1743 = vld [vmem:[%s1720 + $0xb0] sm:$0xff]
        %v1744 = vld [vmem:[%s1720 + $0xb8] sm:$0xff]
        %v1745 = vld [vmem:[%s1720 + $0xc0] sm:$0xff]
        %v1746 = vld [vmem:[%s1720 + $0xc8] sm:$0xff]
        %v1747 = vld [vmem:[%s1720 + $0xd0] sm:$0xff]
        %v1748 = vld [vmem:[%s1720 + $0xd8] sm:$0xff]
        %v1749 = vld [vmem:[%s1720 + $0xe0] sm:$0xff]
        %v1750 = vld [vmem:[%s1720 + $0xe8] sm:$0xff]
        %v1751 = vld [vmem:[%s1720 + $0xf0] sm:$0xff]
        %v1752 = vld [vmem:[%s1720 + $0xf8] sm:$0xff]
        %v1753 = vstv %s1719
        %v1754 = vmul.f32 %v1753, %v1721
        %v1755 = vmul.f32 %v1753, %v1722
        %v1756 = vmul.f32 %v1753, %v1723
        %v1757 = vmul.f32 %v1753, %v1724
        %v1758 = vmul.f32 %v1753, %v1725
        %v1759 = vmul.f32 %v1753, %v1726
        %v1760 = vmul.f32 %v1753, %v1727
        %v1761 = vmul.f32 %v1753, %v1728
        %v1762 = vmul.f32 %v1753, %v1729
        %v1763 = vmul.f32 %v1753, %v1730
        %v1764 = vmul.f32 %v1753, %v1731
        %v1765 = vmul.f32 %v1753, %v1732
        %v1766 = vmul.f32 %v1753, %v1733
        %v1767 = vmul.f32 %v1753, %v1734
        %v1768 = vmul.f32 %v1753, %v1735
        %v1769 = vmul.f32 %v1753, %v1736
        %v1770 = vmul.f32 %v1753, %v1737
        %v1771 = vmul.f32 %v1753, %v1738
        %v1772 = vmul.f32 %v1753, %v1739
        %v1773 = vmul.f32 %v1753, %v1740
        %v1774 = vmul.f32 %v1753, %v1741
        %v1775 = vmul.f32 %v1753, %v1742
        %v1776 = vmul.f32 %v1753, %v1743
        %v1777 = vmul.f32 %v1753, %v1744
        %v1778 = vmul.f32 %v1753, %v1745
        %v1779 = vmul.f32 %v1753, %v1746
        %v1780 = vmul.f32 %v1753, %v1747
        %v1781 = vmul.f32 %v1753, %v1748
        %v1782 = vmul.f32 %v1753, %v1749
        %v1783 = vmul.f32 %v1753, %v1750
        %v1784 = vmul.f32 %v1753, %v1751
        %v1785 = vmul.f32 %v1753, %v1752
        %v1786 = vadd.f32 %v1687, %v1754
        %v1787 = vadd.f32 %v1688, %v1755
        %v1788 = vadd.f32 %v1689, %v1756
        %v1789 = vadd.f32 %v1690, %v1757
        %v1790 = vadd.f32 %v1691, %v1758
        %v1791 = vadd.f32 %v1692, %v1759
        %v1792 = vadd.f32 %v1693, %v1760
        %v1793 = vadd.f32 %v1694, %v1761
        %v1794 = vadd.f32 %v1695, %v1762
        %v1795 = vadd.f32 %v1696, %v1763
        %v1796 = vadd.f32 %v1697, %v1764
        %v1797 = vadd.f32 %v1698, %v1765
        %v1798 = vadd.f32 %v1699, %v1766
        %v1799 = vadd.f32 %v1700, %v1767
        %v1800 = vadd.f32 %v1701, %v1768
        %v1801 = vadd.f32 %v1702, %v1769
        %v1802 = vadd.f32 %v1703, %v1770
        %v1803 = vadd.f32 %v1704, %v1771
        %v1804 = vadd.f32 %v1705, %v1772
        %v1805 = vadd.f32 %v1706, %v1773
        %v1806 = vadd.f32 %v1707, %v1774
        %v1807 = vadd.f32 %v1708, %v1775
        %v1808 = vadd.f32 %v1709, %v1776
        %v1809 = vadd.f32 %v1710, %v1777
        %v1810 = vadd.f32 %v1711, %v1778
        %v1811 = vadd.f32 %v1712, %v1779
        %v1812 = vadd.f32 %v1713, %v1780
        %v1813 = vadd.f32 %v1714, %v1781
        %v1814 = vadd.f32 %v1715, %v1782
        %v1815 = vadd.f32 %v1716, %v1783
        %v1816 = vadd.f32 %v1717, %v1784
        %v1817 = vadd.f32 %v1718, %v1785
        %s1818 = sld [smem:[#allocation3 + $0x10]]
        %s1819 = scalar_lea.vmem %s207, 4096 [#allocation7]
        %v1820 = vld [vmem:[%s1819] sm:$0xff]
        %v1821 = vld [vmem:[%s1819 + $0x8] sm:$0xff]
        %v1822 = vld [vmem:[%s1819 + $0x10] sm:$0xff]
        %v1823 = vld [vmem:[%s1819 + $0x18] sm:$0xff]
        %v1824 = vld [vmem:[%s1819 + $0x20] sm:$0xff]
        %v1825 = vld [vmem:[%s1819 + $0x28] sm:$0xff]
        %v1826 = vld [vmem:[%s1819 + $0x30] sm:$0xff]
        %v1827 = vld [vmem:[%s1819 + $0x38] sm:$0xff]
        %v1828 = vld [vmem:[%s1819 + $0x40] sm:$0xff]
        %v1829 = vld [vmem:[%s1819 + $0x48] sm:$0xff]
        %v1830 = vld [vmem:[%s1819 + $0x50] sm:$0xff]
        %v1831 = vld [vmem:[%s1819 + $0x58] sm:$0xff]
        %v1832 = vld [vmem:[%s1819 + $0x60] sm:$0xff]
        %v1833 = vld [vmem:[%s1819 + $0x68] sm:$0xff]
        %v1834 = vld [vmem:[%s1819 + $0x70] sm:$0xff]
        %v1835 = vld [vmem:[%s1819 + $0x78] sm:$0xff]
        %v1836 = vld [vmem:[%s1819 + $0x80] sm:$0xff]
        %v1837 = vld [vmem:[%s1819 + $0x88] sm:$0xff]
        %v1838 = vld [vmem:[%s1819 + $0x90] sm:$0xff]
        %v1839 = vld [vmem:[%s1819 + $0x98] sm:$0xff]
        %v1840 = vld [vmem:[%s1819 + $0xa0] sm:$0xff]
        %v1841 = vld [vmem:[%s1819 + $0xa8] sm:$0xff]
        %v1842 = vld [vmem:[%s1819 + $0xb0] sm:$0xff]
        %v1843 = vld [vmem:[%s1819 + $0xb8] sm:$0xff]
        %v1844 = vld [vmem:[%s1819 + $0xc0] sm:$0xff]
        %v1845 = vld [vmem:[%s1819 + $0xc8] sm:$0xff]
        %v1846 = vld [vmem:[%s1819 + $0xd0] sm:$0xff]
        %v1847 = vld [vmem:[%s1819 + $0xd8] sm:$0xff]
        %v1848 = vld [vmem:[%s1819 + $0xe0] sm:$0xff]
        %v1849 = vld [vmem:[%s1819 + $0xe8] sm:$0xff]
        %v1850 = vld [vmem:[%s1819 + $0xf0] sm:$0xff]
        %v1851 = vld [vmem:[%s1819 + $0xf8] sm:$0xff]
        %v1852 = vstv %s1818
        %v1853 = vmul.f32 %v1852, %v1820
        %v1854 = vmul.f32 %v1852, %v1821
        %v1855 = vmul.f32 %v1852, %v1822
        %v1856 = vmul.f32 %v1852, %v1823
        %v1857 = vmul.f32 %v1852, %v1824
        %v1858 = vmul.f32 %v1852, %v1825
        %v1859 = vmul.f32 %v1852, %v1826
        %v1860 = vmul.f32 %v1852, %v1827
        %v1861 = vmul.f32 %v1852, %v1828
        %v1862 = vmul.f32 %v1852, %v1829
        %v1863 = vmul.f32 %v1852, %v1830
        %v1864 = vmul.f32 %v1852, %v1831
        %v1865 = vmul.f32 %v1852, %v1832
        %v1866 = vmul.f32 %v1852, %v1833
        %v1867 = vmul.f32 %v1852, %v1834
        %v1868 = vmul.f32 %v1852, %v1835
        %v1869 = vmul.f32 %v1852, %v1836
        %v1870 = vmul.f32 %v1852, %v1837
        %v1871 = vmul.f32 %v1852, %v1838
        %v1872 = vmul.f32 %v1852, %v1839
        %v1873 = vmul.f32 %v1852, %v1840
        %v1874 = vmul.f32 %v1852, %v1841
        %v1875 = vmul.f32 %v1852, %v1842
        %v1876 = vmul.f32 %v1852, %v1843
        %v1877 = vmul.f32 %v1852, %v1844
        %v1878 = vmul.f32 %v1852, %v1845
        %v1879 = vmul.f32 %v1852, %v1846
        %v1880 = vmul.f32 %v1852, %v1847
        %v1881 = vmul.f32 %v1852, %v1848
        %v1882 = vmul.f32 %v1852, %v1849
        %v1883 = vmul.f32 %v1852, %v1850
        %v1884 = vmul.f32 %v1852, %v1851
        %v1885 = vadd.f32 %v1786, %v1853
        %v1886 = vadd.f32 %v1787, %v1854
        %v1887 = vadd.f32 %v1788, %v1855
        %v1888 = vadd.f32 %v1789, %v1856
        %v1889 = vadd.f32 %v1790, %v1857
        %v1890 = vadd.f32 %v1791, %v1858
        %v1891 = vadd.f32 %v1792, %v1859
        %v1892 = vadd.f32 %v1793, %v1860
        %v1893 = vadd.f32 %v1794, %v1861
        %v1894 = vadd.f32 %v1795, %v1862
        %v1895 = vadd.f32 %v1796, %v1863
        %v1896 = vadd.f32 %v1797, %v1864
        %v1897 = vadd.f32 %v1798, %v1865
        %v1898 = vadd.f32 %v1799, %v1866
        %v1899 = vadd.f32 %v1800, %v1867
        %v1900 = vadd.f32 %v1801, %v1868
        %v1901 = vadd.f32 %v1802, %v1869
        %v1902 = vadd.f32 %v1803, %v1870
        %v1903 = vadd.f32 %v1804, %v1871
        %v1904 = vadd.f32 %v1805, %v1872
        %v1905 = vadd.f32 %v1806, %v1873
        %v1906 = vadd.f32 %v1807, %v1874
        %v1907 = vadd.f32 %v1808, %v1875
        %v1908 = vadd.f32 %v1809, %v1876
        %v1909 = vadd.f32 %v1810, %v1877
        %v1910 = vadd.f32 %v1811, %v1878
        %v1911 = vadd.f32 %v1812, %v1879
        %v1912 = vadd.f32 %v1813, %v1880
        %v1913 = vadd.f32 %v1814, %v1881
        %v1914 = vadd.f32 %v1815, %v1882
        %v1915 = vadd.f32 %v1816, %v1883
        %v1916 = vadd.f32 %v1817, %v1884
        %s1917 = sld [smem:[#allocation3 + $0x11]]
        %s1918 = scalar_lea.vmem %s207, 4352 [#allocation7]
        %v1919 = vld [vmem:[%s1918] sm:$0xff]
        %v1920 = vld [vmem:[%s1918 + $0x8] sm:$0xff]
        %v1921 = vld [vmem:[%s1918 + $0x10] sm:$0xff]
        %v1922 = vld [vmem:[%s1918 + $0x18] sm:$0xff]
        %v1923 = vld [vmem:[%s1918 + $0x20] sm:$0xff]
        %v1924 = vld [vmem:[%s1918 + $0x28] sm:$0xff]
        %v1925 = vld [vmem:[%s1918 + $0x30] sm:$0xff]
        %v1926 = vld [vmem:[%s1918 + $0x38] sm:$0xff]
        %v1927 = vld [vmem:[%s1918 + $0x40] sm:$0xff]
        %v1928 = vld [vmem:[%s1918 + $0x48] sm:$0xff]
        %v1929 = vld [vmem:[%s1918 + $0x50] sm:$0xff]
        %v1930 = vld [vmem:[%s1918 + $0x58] sm:$0xff]
        %v1931 = vld [vmem:[%s1918 + $0x60] sm:$0xff]
        %v1932 = vld [vmem:[%s1918 + $0x68] sm:$0xff]
        %v1933 = vld [vmem:[%s1918 + $0x70] sm:$0xff]
        %v1934 = vld [vmem:[%s1918 + $0x78] sm:$0xff]
        %v1935 = vld [vmem:[%s1918 + $0x80] sm:$0xff]
        %v1936 = vld [vmem:[%s1918 + $0x88] sm:$0xff]
        %v1937 = vld [vmem:[%s1918 + $0x90] sm:$0xff]
        %v1938 = vld [vmem:[%s1918 + $0x98] sm:$0xff]
        %v1939 = vld [vmem:[%s1918 + $0xa0] sm:$0xff]
        %v1940 = vld [vmem:[%s1918 + $0xa8] sm:$0xff]
        %v1941 = vld [vmem:[%s1918 + $0xb0] sm:$0xff]
        %v1942 = vld [vmem:[%s1918 + $0xb8] sm:$0xff]
        %v1943 = vld [vmem:[%s1918 + $0xc0] sm:$0xff]
        %v1944 = vld [vmem:[%s1918 + $0xc8] sm:$0xff]
        %v1945 = vld [vmem:[%s1918 + $0xd0] sm:$0xff]
        %v1946 = vld [vmem:[%s1918 + $0xd8] sm:$0xff]
        %v1947 = vld [vmem:[%s1918 + $0xe0] sm:$0xff]
        %v1948 = vld [vmem:[%s1918 + $0xe8] sm:$0xff]
        %v1949 = vld [vmem:[%s1918 + $0xf0] sm:$0xff]
        %v1950 = vld [vmem:[%s1918 + $0xf8] sm:$0xff]
        %v1951 = vstv %s1917
        %v1952 = vmul.f32 %v1951, %v1919
        %v1953 = vmul.f32 %v1951, %v1920
        %v1954 = vmul.f32 %v1951, %v1921
        %v1955 = vmul.f32 %v1951, %v1922
        %v1956 = vmul.f32 %v1951, %v1923
        %v1957 = vmul.f32 %v1951, %v1924
        %v1958 = vmul.f32 %v1951, %v1925
        %v1959 = vmul.f32 %v1951, %v1926
        %v1960 = vmul.f32 %v1951, %v1927
        %v1961 = vmul.f32 %v1951, %v1928
        %v1962 = vmul.f32 %v1951, %v1929
        %v1963 = vmul.f32 %v1951, %v1930
        %v1964 = vmul.f32 %v1951, %v1931
        %v1965 = vmul.f32 %v1951, %v1932
        %v1966 = vmul.f32 %v1951, %v1933
        %v1967 = vmul.f32 %v1951, %v1934
        %v1968 = vmul.f32 %v1951, %v1935
        %v1969 = vmul.f32 %v1951, %v1936
        %v1970 = vmul.f32 %v1951, %v1937
        %v1971 = vmul.f32 %v1951, %v1938
        %v1972 = vmul.f32 %v1951, %v1939
        %v1973 = vmul.f32 %v1951, %v1940
        %v1974 = vmul.f32 %v1951, %v1941
        %v1975 = vmul.f32 %v1951, %v1942
        %v1976 = vmul.f32 %v1951, %v1943
        %v1977 = vmul.f32 %v1951, %v1944
        %v1978 = vmul.f32 %v1951, %v1945
        %v1979 = vmul.f32 %v1951, %v1946
        %v1980 = vmul.f32 %v1951, %v1947
        %v1981 = vmul.f32 %v1951, %v1948
        %v1982 = vmul.f32 %v1951, %v1949
        %v1983 = vmul.f32 %v1951, %v1950
        %v1984 = vadd.f32 %v1885, %v1952
        %v1985 = vadd.f32 %v1886, %v1953
        %v1986 = vadd.f32 %v1887, %v1954
        %v1987 = vadd.f32 %v1888, %v1955
        %v1988 = vadd.f32 %v1889, %v1956
        %v1989 = vadd.f32 %v1890, %v1957
        %v1990 = vadd.f32 %v1891, %v1958
        %v1991 = vadd.f32 %v1892, %v1959
        %v1992 = vadd.f32 %v1893, %v1960
        %v1993 = vadd.f32 %v1894, %v1961
        %v1994 = vadd.f32 %v1895, %v1962
        %v1995 = vadd.f32 %v1896, %v1963
        %v1996 = vadd.f32 %v1897, %v1964
        %v1997 = vadd.f32 %v1898, %v1965
        %v1998 = vadd.f32 %v1899, %v1966
        %v1999 = vadd.f32 %v1900, %v1967
        %v2000 = vadd.f32 %v1901, %v1968
        %v2001 = vadd.f32 %v1902, %v1969
        %v2002 = vadd.f32 %v1903, %v1970
        %v2003 = vadd.f32 %v1904, %v1971
        %v2004 = vadd.f32 %v1905, %v1972
        %v2005 = vadd.f32 %v1906, %v1973
        %v2006 = vadd.f32 %v1907, %v1974
        %v2007 = vadd.f32 %v1908, %v1975
        %v2008 = vadd.f32 %v1909, %v1976
        %v2009 = vadd.f32 %v1910, %v1977
        %v2010 = vadd.f32 %v1911, %v1978
        %v2011 = vadd.f32 %v1912, %v1979
        %v2012 = vadd.f32 %v1913, %v1980
        %v2013 = vadd.f32 %v1914, %v1981
        %v2014 = vadd.f32 %v1915, %v1982
        %v2015 = vadd.f32 %v1916, %v1983
        %s2016 = sld [smem:[#allocation3 + $0x12]]
        %s2017 = scalar_lea.vmem %s207, 4608 [#allocation7]
        %v2018 = vld [vmem:[%s2017] sm:$0xff]
        %v2019 = vld [vmem:[%s2017 + $0x8] sm:$0xff]
        %v2020 = vld [vmem:[%s2017 + $0x10] sm:$0xff]
        %v2021 = vld [vmem:[%s2017 + $0x18] sm:$0xff]
        %v2022 = vld [vmem:[%s2017 + $0x20] sm:$0xff]
        %v2023 = vld [vmem:[%s2017 + $0x28] sm:$0xff]
        %v2024 = vld [vmem:[%s2017 + $0x30] sm:$0xff]
        %v2025 = vld [vmem:[%s2017 + $0x38] sm:$0xff]
        %v2026 = vld [vmem:[%s2017 + $0x40] sm:$0xff]
        %v2027 = vld [vmem:[%s2017 + $0x48] sm:$0xff]
        %v2028 = vld [vmem:[%s2017 + $0x50] sm:$0xff]
        %v2029 = vld [vmem:[%s2017 + $0x58] sm:$0xff]
        %v2030 = vld [vmem:[%s2017 + $0x60] sm:$0xff]
        %v2031 = vld [vmem:[%s2017 + $0x68] sm:$0xff]
        %v2032 = vld [vmem:[%s2017 + $0x70] sm:$0xff]
        %v2033 = vld [vmem:[%s2017 + $0x78] sm:$0xff]
        %v2034 = vld [vmem:[%s2017 + $0x80] sm:$0xff]
        %v2035 = vld [vmem:[%s2017 + $0x88] sm:$0xff]
        %v2036 = vld [vmem:[%s2017 + $0x90] sm:$0xff]
        %v2037 = vld [vmem:[%s2017 + $0x98] sm:$0xff]
        %v2038 = vld [vmem:[%s2017 + $0xa0] sm:$0xff]
        %v2039 = vld [vmem:[%s2017 + $0xa8] sm:$0xff]
        %v2040 = vld [vmem:[%s2017 + $0xb0] sm:$0xff]
        %v2041 = vld [vmem:[%s2017 + $0xb8] sm:$0xff]
        %v2042 = vld [vmem:[%s2017 + $0xc0] sm:$0xff]
        %v2043 = vld [vmem:[%s2017 + $0xc8] sm:$0xff]
        %v2044 = vld [vmem:[%s2017 + $0xd0] sm:$0xff]
        %v2045 = vld [vmem:[%s2017 + $0xd8] sm:$0xff]
        %v2046 = vld [vmem:[%s2017 + $0xe0] sm:$0xff]
        %v2047 = vld [vmem:[%s2017 + $0xe8] sm:$0xff]
        %v2048 = vld [vmem:[%s2017 + $0xf0] sm:$0xff]
        %v2049 = vld [vmem:[%s2017 + $0xf8] sm:$0xff]
        %v2050 = vstv %s2016
        %v2051 = vmul.f32 %v2050, %v2018
        %v2052 = vmul.f32 %v2050, %v2019
        %v2053 = vmul.f32 %v2050, %v2020
        %v2054 = vmul.f32 %v2050, %v2021
        %v2055 = vmul.f32 %v2050, %v2022
        %v2056 = vmul.f32 %v2050, %v2023
        %v2057 = vmul.f32 %v2050, %v2024
        %v2058 = vmul.f32 %v2050, %v2025
        %v2059 = vmul.f32 %v2050, %v2026
        %v2060 = vmul.f32 %v2050, %v2027
        %v2061 = vmul.f32 %v2050, %v2028
        %v2062 = vmul.f32 %v2050, %v2029
        %v2063 = vmul.f32 %v2050, %v2030
        %v2064 = vmul.f32 %v2050, %v2031
        %v2065 = vmul.f32 %v2050, %v2032
        %v2066 = vmul.f32 %v2050, %v2033
        %v2067 = vmul.f32 %v2050, %v2034
        %v2068 = vmul.f32 %v2050, %v2035
        %v2069 = vmul.f32 %v2050, %v2036
        %v2070 = vmul.f32 %v2050, %v2037
        %v2071 = vmul.f32 %v2050, %v2038
        %v2072 = vmul.f32 %v2050, %v2039
        %v2073 = vmul.f32 %v2050, %v2040
        %v2074 = vmul.f32 %v2050, %v2041
        %v2075 = vmul.f32 %v2050, %v2042
        %v2076 = vmul.f32 %v2050, %v2043
        %v2077 = vmul.f32 %v2050, %v2044
        %v2078 = vmul.f32 %v2050, %v2045
        %v2079 = vmul.f32 %v2050, %v2046
        %v2080 = vmul.f32 %v2050, %v2047
        %v2081 = vmul.f32 %v2050, %v2048
        %v2082 = vmul.f32 %v2050, %v2049
        %v2083 = vadd.f32 %v1984, %v2051
        %v2084 = vadd.f32 %v1985, %v2052
        %v2085 = vadd.f32 %v1986, %v2053
        %v2086 = vadd.f32 %v1987, %v2054
        %v2087 = vadd.f32 %v1988, %v2055
        %v2088 = vadd.f32 %v1989, %v2056
        %v2089 = vadd.f32 %v1990, %v2057
        %v2090 = vadd.f32 %v1991, %v2058
        %v2091 = vadd.f32 %v1992, %v2059
        %v2092 = vadd.f32 %v1993, %v2060
        %v2093 = vadd.f32 %v1994, %v2061
        %v2094 = vadd.f32 %v1995, %v2062
        %v2095 = vadd.f32 %v1996, %v2063
        %v2096 = vadd.f32 %v1997, %v2064
        %v2097 = vadd.f32 %v1998, %v2065
        %v2098 = vadd.f32 %v1999, %v2066
        %v2099 = vadd.f32 %v2000, %v2067
        %v2100 = vadd.f32 %v2001, %v2068
        %v2101 = vadd.f32 %v2002, %v2069
        %v2102 = vadd.f32 %v2003, %v2070
        %v2103 = vadd.f32 %v2004, %v2071
        %v2104 = vadd.f32 %v2005, %v2072
        %v2105 = vadd.f32 %v2006, %v2073
        %v2106 = vadd.f32 %v2007, %v2074
        %v2107 = vadd.f32 %v2008, %v2075
        %v2108 = vadd.f32 %v2009, %v2076
        %v2109 = vadd.f32 %v2010, %v2077
        %v2110 = vadd.f32 %v2011, %v2078
        %v2111 = vadd.f32 %v2012, %v2079
        %v2112 = vadd.f32 %v2013, %v2080
        %v2113 = vadd.f32 %v2014, %v2081
        %v2114 = vadd.f32 %v2015, %v2082
        %s2115 = sld [smem:[#allocation3 + $0x13]]
        %s2116 = scalar_lea.vmem %s207, 4864 [#allocation7]
        %v2117 = vld [vmem:[%s2116] sm:$0xff]
        %v2118 = vld [vmem:[%s2116 + $0x8] sm:$0xff]
        %v2119 = vld [vmem:[%s2116 + $0x10] sm:$0xff]
        %v2120 = vld [vmem:[%s2116 + $0x18] sm:$0xff]
        %v2121 = vld [vmem:[%s2116 + $0x20] sm:$0xff]
        %v2122 = vld [vmem:[%s2116 + $0x28] sm:$0xff]
        %v2123 = vld [vmem:[%s2116 + $0x30] sm:$0xff]
        %v2124 = vld [vmem:[%s2116 + $0x38] sm:$0xff]
        %v2125 = vld [vmem:[%s2116 + $0x40] sm:$0xff]
        %v2126 = vld [vmem:[%s2116 + $0x48] sm:$0xff]
        %v2127 = vld [vmem:[%s2116 + $0x50] sm:$0xff]
        %v2128 = vld [vmem:[%s2116 + $0x58] sm:$0xff]
        %v2129 = vld [vmem:[%s2116 + $0x60] sm:$0xff]
        %v2130 = vld [vmem:[%s2116 + $0x68] sm:$0xff]
        %v2131 = vld [vmem:[%s2116 + $0x70] sm:$0xff]
        %v2132 = vld [vmem:[%s2116 + $0x78] sm:$0xff]
        %v2133 = vld [vmem:[%s2116 + $0x80] sm:$0xff]
        %v2134 = vld [vmem:[%s2116 + $0x88] sm:$0xff]
        %v2135 = vld [vmem:[%s2116 + $0x90] sm:$0xff]
        %v2136 = vld [vmem:[%s2116 + $0x98] sm:$0xff]
        %v2137 = vld [vmem:[%s2116 + $0xa0] sm:$0xff]
        %v2138 = vld [vmem:[%s2116 + $0xa8] sm:$0xff]
        %v2139 = vld [vmem:[%s2116 + $0xb0] sm:$0xff]
        %v2140 = vld [vmem:[%s2116 + $0xb8] sm:$0xff]
        %v2141 = vld [vmem:[%s2116 + $0xc0] sm:$0xff]
        %v2142 = vld [vmem:[%s2116 + $0xc8] sm:$0xff]
        %v2143 = vld [vmem:[%s2116 + $0xd0] sm:$0xff]
        %v2144 = vld [vmem:[%s2116 + $0xd8] sm:$0xff]
        %v2145 = vld [vmem:[%s2116 + $0xe0] sm:$0xff]
        %v2146 = vld [vmem:[%s2116 + $0xe8] sm:$0xff]
        %v2147 = vld [vmem:[%s2116 + $0xf0] sm:$0xff]
        %v2148 = vld [vmem:[%s2116 + $0xf8] sm:$0xff]
        %v2149 = vstv %s2115
        %v2150 = vmul.f32 %v2149, %v2117
        %v2151 = vmul.f32 %v2149, %v2118
        %v2152 = vmul.f32 %v2149, %v2119
        %v2153 = vmul.f32 %v2149, %v2120
        %v2154 = vmul.f32 %v2149, %v2121
        %v2155 = vmul.f32 %v2149, %v2122
        %v2156 = vmul.f32 %v2149, %v2123
        %v2157 = vmul.f32 %v2149, %v2124
        %v2158 = vmul.f32 %v2149, %v2125
        %v2159 = vmul.f32 %v2149, %v2126
        %v2160 = vmul.f32 %v2149, %v2127
        %v2161 = vmul.f32 %v2149, %v2128
        %v2162 = vmul.f32 %v2149, %v2129
        %v2163 = vmul.f32 %v2149, %v2130
        %v2164 = vmul.f32 %v2149, %v2131
        %v2165 = vmul.f32 %v2149, %v2132
        %v2166 = vmul.f32 %v2149, %v2133
        %v2167 = vmul.f32 %v2149, %v2134
        %v2168 = vmul.f32 %v2149, %v2135
        %v2169 = vmul.f32 %v2149, %v2136
        %v2170 = vmul.f32 %v2149, %v2137
        %v2171 = vmul.f32 %v2149, %v2138
        %v2172 = vmul.f32 %v2149, %v2139
        %v2173 = vmul.f32 %v2149, %v2140
        %v2174 = vmul.f32 %v2149, %v2141
        %v2175 = vmul.f32 %v2149, %v2142
        %v2176 = vmul.f32 %v2149, %v2143
        %v2177 = vmul.f32 %v2149, %v2144
        %v2178 = vmul.f32 %v2149, %v2145
        %v2179 = vmul.f32 %v2149, %v2146
        %v2180 = vmul.f32 %v2149, %v2147
        %v2181 = vmul.f32 %v2149, %v2148
        %v2182 = vadd.f32 %v2083, %v2150
        %v2183 = vadd.f32 %v2084, %v2151
        %v2184 = vadd.f32 %v2085, %v2152
        %v2185 = vadd.f32 %v2086, %v2153
        %v2186 = vadd.f32 %v2087, %v2154
        %v2187 = vadd.f32 %v2088, %v2155
        %v2188 = vadd.f32 %v2089, %v2156
        %v2189 = vadd.f32 %v2090, %v2157
        %v2190 = vadd.f32 %v2091, %v2158
        %v2191 = vadd.f32 %v2092, %v2159
        %v2192 = vadd.f32 %v2093, %v2160
        %v2193 = vadd.f32 %v2094, %v2161
        %v2194 = vadd.f32 %v2095, %v2162
        %v2195 = vadd.f32 %v2096, %v2163
        %v2196 = vadd.f32 %v2097, %v2164
        %v2197 = vadd.f32 %v2098, %v2165
        %v2198 = vadd.f32 %v2099, %v2166
        %v2199 = vadd.f32 %v2100, %v2167
        %v2200 = vadd.f32 %v2101, %v2168
        %v2201 = vadd.f32 %v2102, %v2169
        %v2202 = vadd.f32 %v2103, %v2170
        %v2203 = vadd.f32 %v2104, %v2171
        %v2204 = vadd.f32 %v2105, %v2172
        %v2205 = vadd.f32 %v2106, %v2173
        %v2206 = vadd.f32 %v2107, %v2174
        %v2207 = vadd.f32 %v2108, %v2175
        %v2208 = vadd.f32 %v2109, %v2176
        %v2209 = vadd.f32 %v2110, %v2177
        %v2210 = vadd.f32 %v2111, %v2178
        %v2211 = vadd.f32 %v2112, %v2179
        %v2212 = vadd.f32 %v2113, %v2180
        %v2213 = vadd.f32 %v2114, %v2181
        %s2214 = sld [smem:[#allocation3 + $0x14]]
        %s2215 = scalar_lea.vmem %s207, 5120 [#allocation7]
        %v2216 = vld [vmem:[%s2215] sm:$0xff]
        %v2217 = vld [vmem:[%s2215 + $0x8] sm:$0xff]
        %v2218 = vld [vmem:[%s2215 + $0x10] sm:$0xff]
        %v2219 = vld [vmem:[%s2215 + $0x18] sm:$0xff]
        %v2220 = vld [vmem:[%s2215 + $0x20] sm:$0xff]
        %v2221 = vld [vmem:[%s2215 + $0x28] sm:$0xff]
        %v2222 = vld [vmem:[%s2215 + $0x30] sm:$0xff]
        %v2223 = vld [vmem:[%s2215 + $0x38] sm:$0xff]
        %v2224 = vld [vmem:[%s2215 + $0x40] sm:$0xff]
        %v2225 = vld [vmem:[%s2215 + $0x48] sm:$0xff]
        %v2226 = vld [vmem:[%s2215 + $0x50] sm:$0xff]
        %v2227 = vld [vmem:[%s2215 + $0x58] sm:$0xff]
        %v2228 = vld [vmem:[%s2215 + $0x60] sm:$0xff]
        %v2229 = vld [vmem:[%s2215 + $0x68] sm:$0xff]
        %v2230 = vld [vmem:[%s2215 + $0x70] sm:$0xff]
        %v2231 = vld [vmem:[%s2215 + $0x78] sm:$0xff]
        %v2232 = vld [vmem:[%s2215 + $0x80] sm:$0xff]
        %v2233 = vld [vmem:[%s2215 + $0x88] sm:$0xff]
        %v2234 = vld [vmem:[%s2215 + $0x90] sm:$0xff]
        %v2235 = vld [vmem:[%s2215 + $0x98] sm:$0xff]
        %v2236 = vld [vmem:[%s2215 + $0xa0] sm:$0xff]
        %v2237 = vld [vmem:[%s2215 + $0xa8] sm:$0xff]
        %v2238 = vld [vmem:[%s2215 + $0xb0] sm:$0xff]
        %v2239 = vld [vmem:[%s2215 + $0xb8] sm:$0xff]
        %v2240 = vld [vmem:[%s2215 + $0xc0] sm:$0xff]
        %v2241 = vld [vmem:[%s2215 + $0xc8] sm:$0xff]
        %v2242 = vld [vmem:[%s2215 + $0xd0] sm:$0xff]
        %v2243 = vld [vmem:[%s2215 + $0xd8] sm:$0xff]
        %v2244 = vld [vmem:[%s2215 + $0xe0] sm:$0xff]
        %v2245 = vld [vmem:[%s2215 + $0xe8] sm:$0xff]
        %v2246 = vld [vmem:[%s2215 + $0xf0] sm:$0xff]
        %v2247 = vld [vmem:[%s2215 + $0xf8] sm:$0xff]
        %v2248 = vstv %s2214
        %v2249 = vmul.f32 %v2248, %v2216
        %v2250 = vmul.f32 %v2248, %v2217
        %v2251 = vmul.f32 %v2248, %v2218
        %v2252 = vmul.f32 %v2248, %v2219
        %v2253 = vmul.f32 %v2248, %v2220
        %v2254 = vmul.f32 %v2248, %v2221
        %v2255 = vmul.f32 %v2248, %v2222
        %v2256 = vmul.f32 %v2248, %v2223
        %v2257 = vmul.f32 %v2248, %v2224
        %v2258 = vmul.f32 %v2248, %v2225
        %v2259 = vmul.f32 %v2248, %v2226
        %v2260 = vmul.f32 %v2248, %v2227
        %v2261 = vmul.f32 %v2248, %v2228
        %v2262 = vmul.f32 %v2248, %v2229
        %v2263 = vmul.f32 %v2248, %v2230
        %v2264 = vmul.f32 %v2248, %v2231
        %v2265 = vmul.f32 %v2248, %v2232
        %v2266 = vmul.f32 %v2248, %v2233
        %v2267 = vmul.f32 %v2248, %v2234
        %v2268 = vmul.f32 %v2248, %v2235
        %v2269 = vmul.f32 %v2248, %v2236
        %v2270 = vmul.f32 %v2248, %v2237
        %v2271 = vmul.f32 %v2248, %v2238
        %v2272 = vmul.f32 %v2248, %v2239
        %v2273 = vmul.f32 %v2248, %v2240
        %v2274 = vmul.f32 %v2248, %v2241
        %v2275 = vmul.f32 %v2248, %v2242
        %v2276 = vmul.f32 %v2248, %v2243
        %v2277 = vmul.f32 %v2248, %v2244
        %v2278 = vmul.f32 %v2248, %v2245
        %v2279 = vmul.f32 %v2248, %v2246
        %v2280 = vmul.f32 %v2248, %v2247
        %v2281 = vadd.f32 %v2182, %v2249
        %v2282 = vadd.f32 %v2183, %v2250
        %v2283 = vadd.f32 %v2184, %v2251
        %v2284 = vadd.f32 %v2185, %v2252
        %v2285 = vadd.f32 %v2186, %v2253
        %v2286 = vadd.f32 %v2187, %v2254
        %v2287 = vadd.f32 %v2188, %v2255
        %v2288 = vadd.f32 %v2189, %v2256
        %v2289 = vadd.f32 %v2190, %v2257
        %v2290 = vadd.f32 %v2191, %v2258
        %v2291 = vadd.f32 %v2192, %v2259
        %v2292 = vadd.f32 %v2193, %v2260
        %v2293 = vadd.f32 %v2194, %v2261
        %v2294 = vadd.f32 %v2195, %v2262
        %v2295 = vadd.f32 %v2196, %v2263
        %v2296 = vadd.f32 %v2197, %v2264
        %v2297 = vadd.f32 %v2198, %v2265
        %v2298 = vadd.f32 %v2199, %v2266
        %v2299 = vadd.f32 %v2200, %v2267
        %v2300 = vadd.f32 %v2201, %v2268
        %v2301 = vadd.f32 %v2202, %v2269
        %v2302 = vadd.f32 %v2203, %v2270
        %v2303 = vadd.f32 %v2204, %v2271
        %v2304 = vadd.f32 %v2205, %v2272
        %v2305 = vadd.f32 %v2206, %v2273
        %v2306 = vadd.f32 %v2207, %v2274
        %v2307 = vadd.f32 %v2208, %v2275
        %v2308 = vadd.f32 %v2209, %v2276
        %v2309 = vadd.f32 %v2210, %v2277
        %v2310 = vadd.f32 %v2211, %v2278
        %v2311 = vadd.f32 %v2212, %v2279
        %v2312 = vadd.f32 %v2213, %v2280
        %s2313 = sld [smem:[#allocation3 + $0x15]]
        %s2314 = scalar_lea.vmem %s207, 5376 [#allocation7]
        %v2315 = vld [vmem:[%s2314] sm:$0xff]
        %v2316 = vld [vmem:[%s2314 + $0x8] sm:$0xff]
        %v2317 = vld [vmem:[%s2314 + $0x10] sm:$0xff]
        %v2318 = vld [vmem:[%s2314 + $0x18] sm:$0xff]
        %v2319 = vld [vmem:[%s2314 + $0x20] sm:$0xff]
        %v2320 = vld [vmem:[%s2314 + $0x28] sm:$0xff]
        %v2321 = vld [vmem:[%s2314 + $0x30] sm:$0xff]
        %v2322 = vld [vmem:[%s2314 + $0x38] sm:$0xff]
        %v2323 = vld [vmem:[%s2314 + $0x40] sm:$0xff]
        %v2324 = vld [vmem:[%s2314 + $0x48] sm:$0xff]
        %v2325 = vld [vmem:[%s2314 + $0x50] sm:$0xff]
        %v2326 = vld [vmem:[%s2314 + $0x58] sm:$0xff]
        %v2327 = vld [vmem:[%s2314 + $0x60] sm:$0xff]
        %v2328 = vld [vmem:[%s2314 + $0x68] sm:$0xff]
        %v2329 = vld [vmem:[%s2314 + $0x70] sm:$0xff]
        %v2330 = vld [vmem:[%s2314 + $0x78] sm:$0xff]
        %v2331 = vld [vmem:[%s2314 + $0x80] sm:$0xff]
        %v2332 = vld [vmem:[%s2314 + $0x88] sm:$0xff]
        %v2333 = vld [vmem:[%s2314 + $0x90] sm:$0xff]
        %v2334 = vld [vmem:[%s2314 + $0x98] sm:$0xff]
        %v2335 = vld [vmem:[%s2314 + $0xa0] sm:$0xff]
        %v2336 = vld [vmem:[%s2314 + $0xa8] sm:$0xff]
        %v2337 = vld [vmem:[%s2314 + $0xb0] sm:$0xff]
        %v2338 = vld [vmem:[%s2314 + $0xb8] sm:$0xff]
        %v2339 = vld [vmem:[%s2314 + $0xc0] sm:$0xff]
        %v2340 = vld [vmem:[%s2314 + $0xc8] sm:$0xff]
        %v2341 = vld [vmem:[%s2314 + $0xd0] sm:$0xff]
        %v2342 = vld [vmem:[%s2314 + $0xd8] sm:$0xff]
        %v2343 = vld [vmem:[%s2314 + $0xe0] sm:$0xff]
        %v2344 = vld [vmem:[%s2314 + $0xe8] sm:$0xff]
        %v2345 = vld [vmem:[%s2314 + $0xf0] sm:$0xff]
        %v2346 = vld [vmem:[%s2314 + $0xf8] sm:$0xff]
        %v2347 = vstv %s2313
        %v2348 = vmul.f32 %v2347, %v2315
        %v2349 = vmul.f32 %v2347, %v2316
        %v2350 = vmul.f32 %v2347, %v2317
        %v2351 = vmul.f32 %v2347, %v2318
        %v2352 = vmul.f32 %v2347, %v2319
        %v2353 = vmul.f32 %v2347, %v2320
        %v2354 = vmul.f32 %v2347, %v2321
        %v2355 = vmul.f32 %v2347, %v2322
        %v2356 = vmul.f32 %v2347, %v2323
        %v2357 = vmul.f32 %v2347, %v2324
        %v2358 = vmul.f32 %v2347, %v2325
        %v2359 = vmul.f32 %v2347, %v2326
        %v2360 = vmul.f32 %v2347, %v2327
        %v2361 = vmul.f32 %v2347, %v2328
        %v2362 = vmul.f32 %v2347, %v2329
        %v2363 = vmul.f32 %v2347, %v2330
        %v2364 = vmul.f32 %v2347, %v2331
        %v2365 = vmul.f32 %v2347, %v2332
        %v2366 = vmul.f32 %v2347, %v2333
        %v2367 = vmul.f32 %v2347, %v2334
        %v2368 = vmul.f32 %v2347, %v2335
        %v2369 = vmul.f32 %v2347, %v2336
        %v2370 = vmul.f32 %v2347, %v2337
        %v2371 = vmul.f32 %v2347, %v2338
        %v2372 = vmul.f32 %v2347, %v2339
        %v2373 = vmul.f32 %v2347, %v2340
        %v2374 = vmul.f32 %v2347, %v2341
        %v2375 = vmul.f32 %v2347, %v2342
        %v2376 = vmul.f32 %v2347, %v2343
        %v2377 = vmul.f32 %v2347, %v2344
        %v2378 = vmul.f32 %v2347, %v2345
        %v2379 = vmul.f32 %v2347, %v2346
        %v2380 = vadd.f32 %v2281, %v2348
        %v2381 = vadd.f32 %v2282, %v2349
        %v2382 = vadd.f32 %v2283, %v2350
        %v2383 = vadd.f32 %v2284, %v2351
        %v2384 = vadd.f32 %v2285, %v2352
        %v2385 = vadd.f32 %v2286, %v2353
        %v2386 = vadd.f32 %v2287, %v2354
        %v2387 = vadd.f32 %v2288, %v2355
        %v2388 = vadd.f32 %v2289, %v2356
        %v2389 = vadd.f32 %v2290, %v2357
        %v2390 = vadd.f32 %v2291, %v2358
        %v2391 = vadd.f32 %v2292, %v2359
        %v2392 = vadd.f32 %v2293, %v2360
        %v2393 = vadd.f32 %v2294, %v2361
        %v2394 = vadd.f32 %v2295, %v2362
        %v2395 = vadd.f32 %v2296, %v2363
        %v2396 = vadd.f32 %v2297, %v2364
        %v2397 = vadd.f32 %v2298, %v2365
        %v2398 = vadd.f32 %v2299, %v2366
        %v2399 = vadd.f32 %v2300, %v2367
        %v2400 = vadd.f32 %v2301, %v2368
        %v2401 = vadd.f32 %v2302, %v2369
        %v2402 = vadd.f32 %v2303, %v2370
        %v2403 = vadd.f32 %v2304, %v2371
        %v2404 = vadd.f32 %v2305, %v2372
        %v2405 = vadd.f32 %v2306, %v2373
        %v2406 = vadd.f32 %v2307, %v2374
        %v2407 = vadd.f32 %v2308, %v2375
        %v2408 = vadd.f32 %v2309, %v2376
        %v2409 = vadd.f32 %v2310, %v2377
        %v2410 = vadd.f32 %v2311, %v2378
        %v2411 = vadd.f32 %v2312, %v2379
        %s2412 = sld [smem:[#allocation3 + $0x16]]
        %s2413 = scalar_lea.vmem %s207, 5632 [#allocation7]
        %v2414 = vld [vmem:[%s2413] sm:$0xff]
        %v2415 = vld [vmem:[%s2413 + $0x8] sm:$0xff]
        %v2416 = vld [vmem:[%s2413 + $0x10] sm:$0xff]
        %v2417 = vld [vmem:[%s2413 + $0x18] sm:$0xff]
        %v2418 = vld [vmem:[%s2413 + $0x20] sm:$0xff]
        %v2419 = vld [vmem:[%s2413 + $0x28] sm:$0xff]
        %v2420 = vld [vmem:[%s2413 + $0x30] sm:$0xff]
        %v2421 = vld [vmem:[%s2413 + $0x38] sm:$0xff]
        %v2422 = vld [vmem:[%s2413 + $0x40] sm:$0xff]
        %v2423 = vld [vmem:[%s2413 + $0x48] sm:$0xff]
        %v2424 = vld [vmem:[%s2413 + $0x50] sm:$0xff]
        %v2425 = vld [vmem:[%s2413 + $0x58] sm:$0xff]
        %v2426 = vld [vmem:[%s2413 + $0x60] sm:$0xff]
        %v2427 = vld [vmem:[%s2413 + $0x68] sm:$0xff]
        %v2428 = vld [vmem:[%s2413 + $0x70] sm:$0xff]
        %v2429 = vld [vmem:[%s2413 + $0x78] sm:$0xff]
        %v2430 = vld [vmem:[%s2413 + $0x80] sm:$0xff]
        %v2431 = vld [vmem:[%s2413 + $0x88] sm:$0xff]
        %v2432 = vld [vmem:[%s2413 + $0x90] sm:$0xff]
        %v2433 = vld [vmem:[%s2413 + $0x98] sm:$0xff]
        %v2434 = vld [vmem:[%s2413 + $0xa0] sm:$0xff]
        %v2435 = vld [vmem:[%s2413 + $0xa8] sm:$0xff]
        %v2436 = vld [vmem:[%s2413 + $0xb0] sm:$0xff]
        %v2437 = vld [vmem:[%s2413 + $0xb8] sm:$0xff]
        %v2438 = vld [vmem:[%s2413 + $0xc0] sm:$0xff]
        %v2439 = vld [vmem:[%s2413 + $0xc8] sm:$0xff]
        %v2440 = vld [vmem:[%s2413 + $0xd0] sm:$0xff]
        %v2441 = vld [vmem:[%s2413 + $0xd8] sm:$0xff]
        %v2442 = vld [vmem:[%s2413 + $0xe0] sm:$0xff]
        %v2443 = vld [vmem:[%s2413 + $0xe8] sm:$0xff]
        %v2444 = vld [vmem:[%s2413 + $0xf0] sm:$0xff]
        %v2445 = vld [vmem:[%s2413 + $0xf8] sm:$0xff]
        %v2446 = vstv %s2412
        %v2447 = vmul.f32 %v2446, %v2414
        %v2448 = vmul.f32 %v2446, %v2415
        %v2449 = vmul.f32 %v2446, %v2416
        %v2450 = vmul.f32 %v2446, %v2417
        %v2451 = vmul.f32 %v2446, %v2418
        %v2452 = vmul.f32 %v2446, %v2419
        %v2453 = vmul.f32 %v2446, %v2420
        %v2454 = vmul.f32 %v2446, %v2421
        %v2455 = vmul.f32 %v2446, %v2422
        %v2456 = vmul.f32 %v2446, %v2423
        %v2457 = vmul.f32 %v2446, %v2424
        %v2458 = vmul.f32 %v2446, %v2425
        %v2459 = vmul.f32 %v2446, %v2426
        %v2460 = vmul.f32 %v2446, %v2427
        %v2461 = vmul.f32 %v2446, %v2428
        %v2462 = vmul.f32 %v2446, %v2429
        %v2463 = vmul.f32 %v2446, %v2430
        %v2464 = vmul.f32 %v2446, %v2431
        %v2465 = vmul.f32 %v2446, %v2432
        %v2466 = vmul.f32 %v2446, %v2433
        %v2467 = vmul.f32 %v2446, %v2434
        %v2468 = vmul.f32 %v2446, %v2435
        %v2469 = vmul.f32 %v2446, %v2436
        %v2470 = vmul.f32 %v2446, %v2437
        %v2471 = vmul.f32 %v2446, %v2438
        %v2472 = vmul.f32 %v2446, %v2439
        %v2473 = vmul.f32 %v2446, %v2440
        %v2474 = vmul.f32 %v2446, %v2441
        %v2475 = vmul.f32 %v2446, %v2442
        %v2476 = vmul.f32 %v2446, %v2443
        %v2477 = vmul.f32 %v2446, %v2444
        %v2478 = vmul.f32 %v2446, %v2445
        %v2479 = vadd.f32 %v2380, %v2447
        %v2480 = vadd.f32 %v2381, %v2448
        %v2481 = vadd.f32 %v2382, %v2449
        %v2482 = vadd.f32 %v2383, %v2450
        %v2483 = vadd.f32 %v2384, %v2451
        %v2484 = vadd.f32 %v2385, %v2452
        %v2485 = vadd.f32 %v2386, %v2453
        %v2486 = vadd.f32 %v2387, %v2454
        %v2487 = vadd.f32 %v2388, %v2455
        %v2488 = vadd.f32 %v2389, %v2456
        %v2489 = vadd.f32 %v2390, %v2457
        %v2490 = vadd.f32 %v2391, %v2458
        %v2491 = vadd.f32 %v2392, %v2459
        %v2492 = vadd.f32 %v2393, %v2460
        %v2493 = vadd.f32 %v2394, %v2461
        %v2494 = vadd.f32 %v2395, %v2462
        %v2495 = vadd.f32 %v2396, %v2463
        %v2496 = vadd.f32 %v2397, %v2464
        %v2497 = vadd.f32 %v2398, %v2465
        %v2498 = vadd.f32 %v2399, %v2466
        %v2499 = vadd.f32 %v2400, %v2467
        %v2500 = vadd.f32 %v2401, %v2468
        %v2501 = vadd.f32 %v2402, %v2469
        %v2502 = vadd.f32 %v2403, %v2470
        %v2503 = vadd.f32 %v2404, %v2471
        %v2504 = vadd.f32 %v2405, %v2472
        %v2505 = vadd.f32 %v2406, %v2473
        %v2506 = vadd.f32 %v2407, %v2474
        %v2507 = vadd.f32 %v2408, %v2475
        %v2508 = vadd.f32 %v2409, %v2476
        %v2509 = vadd.f32 %v2410, %v2477
        %v2510 = vadd.f32 %v2411, %v2478
        %s2511 = sld [smem:[#allocation3 + $0x17]]
        %s2512 = scalar_lea.vmem %s207, 5888 [#allocation7]
        %v2513 = vld [vmem:[%s2512] sm:$0xff]
        %v2514 = vld [vmem:[%s2512 + $0x8] sm:$0xff]
        %v2515 = vld [vmem:[%s2512 + $0x10] sm:$0xff]
        %v2516 = vld [vmem:[%s2512 + $0x18] sm:$0xff]
        %v2517 = vld [vmem:[%s2512 + $0x20] sm:$0xff]
        %v2518 = vld [vmem:[%s2512 + $0x28] sm:$0xff]
        %v2519 = vld [vmem:[%s2512 + $0x30] sm:$0xff]
        %v2520 = vld [vmem:[%s2512 + $0x38] sm:$0xff]
        %v2521 = vld [vmem:[%s2512 + $0x40] sm:$0xff]
        %v2522 = vld [vmem:[%s2512 + $0x48] sm:$0xff]
        %v2523 = vld [vmem:[%s2512 + $0x50] sm:$0xff]
        %v2524 = vld [vmem:[%s2512 + $0x58] sm:$0xff]
        %v2525 = vld [vmem:[%s2512 + $0x60] sm:$0xff]
        %v2526 = vld [vmem:[%s2512 + $0x68] sm:$0xff]
        %v2527 = vld [vmem:[%s2512 + $0x70] sm:$0xff]
        %v2528 = vld [vmem:[%s2512 + $0x78] sm:$0xff]
        %v2529 = vld [vmem:[%s2512 + $0x80] sm:$0xff]
        %v2530 = vld [vmem:[%s2512 + $0x88] sm:$0xff]
        %v2531 = vld [vmem:[%s2512 + $0x90] sm:$0xff]
        %v2532 = vld [vmem:[%s2512 + $0x98] sm:$0xff]
        %v2533 = vld [vmem:[%s2512 + $0xa0] sm:$0xff]
        %v2534 = vld [vmem:[%s2512 + $0xa8] sm:$0xff]
        %v2535 = vld [vmem:[%s2512 + $0xb0] sm:$0xff]
        %v2536 = vld [vmem:[%s2512 + $0xb8] sm:$0xff]
        %v2537 = vld [vmem:[%s2512 + $0xc0] sm:$0xff]
        %v2538 = vld [vmem:[%s2512 + $0xc8] sm:$0xff]
        %v2539 = vld [vmem:[%s2512 + $0xd0] sm:$0xff]
        %v2540 = vld [vmem:[%s2512 + $0xd8] sm:$0xff]
        %v2541 = vld [vmem:[%s2512 + $0xe0] sm:$0xff]
        %v2542 = vld [vmem:[%s2512 + $0xe8] sm:$0xff]
        %v2543 = vld [vmem:[%s2512 + $0xf0] sm:$0xff]
        %v2544 = vld [vmem:[%s2512 + $0xf8] sm:$0xff]
        %v2545 = vstv %s2511
        %v2546 = vmul.f32 %v2545, %v2513
        %v2547 = vmul.f32 %v2545, %v2514
        %v2548 = vmul.f32 %v2545, %v2515
        %v2549 = vmul.f32 %v2545, %v2516
        %v2550 = vmul.f32 %v2545, %v2517
        %v2551 = vmul.f32 %v2545, %v2518
        %v2552 = vmul.f32 %v2545, %v2519
        %v2553 = vmul.f32 %v2545, %v2520
        %v2554 = vmul.f32 %v2545, %v2521
        %v2555 = vmul.f32 %v2545, %v2522
        %v2556 = vmul.f32 %v2545, %v2523
        %v2557 = vmul.f32 %v2545, %v2524
        %v2558 = vmul.f32 %v2545, %v2525
        %v2559 = vmul.f32 %v2545, %v2526
        %v2560 = vmul.f32 %v2545, %v2527
        %v2561 = vmul.f32 %v2545, %v2528
        %v2562 = vmul.f32 %v2545, %v2529
        %v2563 = vmul.f32 %v2545, %v2530
        %v2564 = vmul.f32 %v2545, %v2531
        %v2565 = vmul.f32 %v2545, %v2532
        %v2566 = vmul.f32 %v2545, %v2533
        %v2567 = vmul.f32 %v2545, %v2534
        %v2568 = vmul.f32 %v2545, %v2535
        %v2569 = vmul.f32 %v2545, %v2536
        %v2570 = vmul.f32 %v2545, %v2537
        %v2571 = vmul.f32 %v2545, %v2538
        %v2572 = vmul.f32 %v2545, %v2539
        %v2573 = vmul.f32 %v2545, %v2540
        %v2574 = vmul.f32 %v2545, %v2541
        %v2575 = vmul.f32 %v2545, %v2542
        %v2576 = vmul.f32 %v2545, %v2543
        %v2577 = vmul.f32 %v2545, %v2544
        %v2578 = vadd.f32 %v2479, %v2546
        %v2579 = vadd.f32 %v2480, %v2547
        %v2580 = vadd.f32 %v2481, %v2548
        %v2581 = vadd.f32 %v2482, %v2549
        %v2582 = vadd.f32 %v2483, %v2550
        %v2583 = vadd.f32 %v2484, %v2551
        %v2584 = vadd.f32 %v2485, %v2552
        %v2585 = vadd.f32 %v2486, %v2553
        %v2586 = vadd.f32 %v2487, %v2554
        %v2587 = vadd.f32 %v2488, %v2555
        %v2588 = vadd.f32 %v2489, %v2556
        %v2589 = vadd.f32 %v2490, %v2557
        %v2590 = vadd.f32 %v2491, %v2558
        %v2591 = vadd.f32 %v2492, %v2559
        %v2592 = vadd.f32 %v2493, %v2560
        %v2593 = vadd.f32 %v2494, %v2561
        %v2594 = vadd.f32 %v2495, %v2562
        %v2595 = vadd.f32 %v2496, %v2563
        %v2596 = vadd.f32 %v2497, %v2564
        %v2597 = vadd.f32 %v2498, %v2565
        %v2598 = vadd.f32 %v2499, %v2566
        %v2599 = vadd.f32 %v2500, %v2567
        %v2600 = vadd.f32 %v2501, %v2568
        %v2601 = vadd.f32 %v2502, %v2569
        %v2602 = vadd.f32 %v2503, %v2570
        %v2603 = vadd.f32 %v2504, %v2571
        %v2604 = vadd.f32 %v2505, %v2572
        %v2605 = vadd.f32 %v2506, %v2573
        %v2606 = vadd.f32 %v2507, %v2574
        %v2607 = vadd.f32 %v2508, %v2575
        %v2608 = vadd.f32 %v2509, %v2576
        %v2609 = vadd.f32 %v2510, %v2577
        %s2610 = sld [smem:[#allocation3 + $0x18]]
        %s2611 = scalar_lea.vmem %s207, 6144 [#allocation7]
        %v2612 = vld [vmem:[%s2611] sm:$0xff]
        %v2613 = vld [vmem:[%s2611 + $0x8] sm:$0xff]
        %v2614 = vld [vmem:[%s2611 + $0x10] sm:$0xff]
        %v2615 = vld [vmem:[%s2611 + $0x18] sm:$0xff]
        %v2616 = vld [vmem:[%s2611 + $0x20] sm:$0xff]
        %v2617 = vld [vmem:[%s2611 + $0x28] sm:$0xff]
        %v2618 = vld [vmem:[%s2611 + $0x30] sm:$0xff]
        %v2619 = vld [vmem:[%s2611 + $0x38] sm:$0xff]
        %v2620 = vld [vmem:[%s2611 + $0x40] sm:$0xff]
        %v2621 = vld [vmem:[%s2611 + $0x48] sm:$0xff]
        %v2622 = vld [vmem:[%s2611 + $0x50] sm:$0xff]
        %v2623 = vld [vmem:[%s2611 + $0x58] sm:$0xff]
        %v2624 = vld [vmem:[%s2611 + $0x60] sm:$0xff]
        %v2625 = vld [vmem:[%s2611 + $0x68] sm:$0xff]
        %v2626 = vld [vmem:[%s2611 + $0x70] sm:$0xff]
        %v2627 = vld [vmem:[%s2611 + $0x78] sm:$0xff]
        %v2628 = vld [vmem:[%s2611 + $0x80] sm:$0xff]
        %v2629 = vld [vmem:[%s2611 + $0x88] sm:$0xff]
        %v2630 = vld [vmem:[%s2611 + $0x90] sm:$0xff]
        %v2631 = vld [vmem:[%s2611 + $0x98] sm:$0xff]
        %v2632 = vld [vmem:[%s2611 + $0xa0] sm:$0xff]
        %v2633 = vld [vmem:[%s2611 + $0xa8] sm:$0xff]
        %v2634 = vld [vmem:[%s2611 + $0xb0] sm:$0xff]
        %v2635 = vld [vmem:[%s2611 + $0xb8] sm:$0xff]
        %v2636 = vld [vmem:[%s2611 + $0xc0] sm:$0xff]
        %v2637 = vld [vmem:[%s2611 + $0xc8] sm:$0xff]
        %v2638 = vld [vmem:[%s2611 + $0xd0] sm:$0xff]
        %v2639 = vld [vmem:[%s2611 + $0xd8] sm:$0xff]
        %v2640 = vld [vmem:[%s2611 + $0xe0] sm:$0xff]
        %v2641 = vld [vmem:[%s2611 + $0xe8] sm:$0xff]
        %v2642 = vld [vmem:[%s2611 + $0xf0] sm:$0xff]
        %v2643 = vld [vmem:[%s2611 + $0xf8] sm:$0xff]
        %v2644 = vstv %s2610
        %v2645 = vmul.f32 %v2644, %v2612
        %v2646 = vmul.f32 %v2644, %v2613
        %v2647 = vmul.f32 %v2644, %v2614
        %v2648 = vmul.f32 %v2644, %v2615
        %v2649 = vmul.f32 %v2644, %v2616
        %v2650 = vmul.f32 %v2644, %v2617
        %v2651 = vmul.f32 %v2644, %v2618
        %v2652 = vmul.f32 %v2644, %v2619
        %v2653 = vmul.f32 %v2644, %v2620
        %v2654 = vmul.f32 %v2644, %v2621
        %v2655 = vmul.f32 %v2644, %v2622
        %v2656 = vmul.f32 %v2644, %v2623
        %v2657 = vmul.f32 %v2644, %v2624
        %v2658 = vmul.f32 %v2644, %v2625
        %v2659 = vmul.f32 %v2644, %v2626
        %v2660 = vmul.f32 %v2644, %v2627
        %v2661 = vmul.f32 %v2644, %v2628
        %v2662 = vmul.f32 %v2644, %v2629
        %v2663 = vmul.f32 %v2644, %v2630
        %v2664 = vmul.f32 %v2644, %v2631
        %v2665 = vmul.f32 %v2644, %v2632
        %v2666 = vmul.f32 %v2644, %v2633
        %v2667 = vmul.f32 %v2644, %v2634
        %v2668 = vmul.f32 %v2644, %v2635
        %v2669 = vmul.f32 %v2644, %v2636
        %v2670 = vmul.f32 %v2644, %v2637
        %v2671 = vmul.f32 %v2644, %v2638
        %v2672 = vmul.f32 %v2644, %v2639
        %v2673 = vmul.f32 %v2644, %v2640
        %v2674 = vmul.f32 %v2644, %v2641
        %v2675 = vmul.f32 %v2644, %v2642
        %v2676 = vmul.f32 %v2644, %v2643
        %v2677 = vadd.f32 %v2578, %v2645
        %v2678 = vadd.f32 %v2579, %v2646
        %v2679 = vadd.f32 %v2580, %v2647
        %v2680 = vadd.f32 %v2581, %v2648
        %v2681 = vadd.f32 %v2582, %v2649
        %v2682 = vadd.f32 %v2583, %v2650
        %v2683 = vadd.f32 %v2584, %v2651
        %v2684 = vadd.f32 %v2585, %v2652
        %v2685 = vadd.f32 %v2586, %v2653
        %v2686 = vadd.f32 %v2587, %v2654
        %v2687 = vadd.f32 %v2588, %v2655
        %v2688 = vadd.f32 %v2589, %v2656
        %v2689 = vadd.f32 %v2590, %v2657
        %v2690 = vadd.f32 %v2591, %v2658
        %v2691 = vadd.f32 %v2592, %v2659
        %v2692 = vadd.f32 %v2593, %v2660
        %v2693 = vadd.f32 %v2594, %v2661
        %v2694 = vadd.f32 %v2595, %v2662
        %v2695 = vadd.f32 %v2596, %v2663
        %v2696 = vadd.f32 %v2597, %v2664
        %v2697 = vadd.f32 %v2598, %v2665
        %v2698 = vadd.f32 %v2599, %v2666
        %v2699 = vadd.f32 %v2600, %v2667
        %v2700 = vadd.f32 %v2601, %v2668
        %v2701 = vadd.f32 %v2602, %v2669
        %v2702 = vadd.f32 %v2603, %v2670
        %v2703 = vadd.f32 %v2604, %v2671
        %v2704 = vadd.f32 %v2605, %v2672
        %v2705 = vadd.f32 %v2606, %v2673
        %v2706 = vadd.f32 %v2607, %v2674
        %v2707 = vadd.f32 %v2608, %v2675
        %v2708 = vadd.f32 %v2609, %v2676
        %s2709 = sld [smem:[#allocation3 + $0x19]]
        %s2710 = scalar_lea.vmem %s207, 6400 [#allocation7]
        %v2711 = vld [vmem:[%s2710] sm:$0xff]
        %v2712 = vld [vmem:[%s2710 + $0x8] sm:$0xff]
        %v2713 = vld [vmem:[%s2710 + $0x10] sm:$0xff]
        %v2714 = vld [vmem:[%s2710 + $0x18] sm:$0xff]
        %v2715 = vld [vmem:[%s2710 + $0x20] sm:$0xff]
        %v2716 = vld [vmem:[%s2710 + $0x28] sm:$0xff]
        %v2717 = vld [vmem:[%s2710 + $0x30] sm:$0xff]
        %v2718 = vld [vmem:[%s2710 + $0x38] sm:$0xff]
        %v2719 = vld [vmem:[%s2710 + $0x40] sm:$0xff]
        %v2720 = vld [vmem:[%s2710 + $0x48] sm:$0xff]
        %v2721 = vld [vmem:[%s2710 + $0x50] sm:$0xff]
        %v2722 = vld [vmem:[%s2710 + $0x58] sm:$0xff]
        %v2723 = vld [vmem:[%s2710 + $0x60] sm:$0xff]
        %v2724 = vld [vmem:[%s2710 + $0x68] sm:$0xff]
        %v2725 = vld [vmem:[%s2710 + $0x70] sm:$0xff]
        %v2726 = vld [vmem:[%s2710 + $0x78] sm:$0xff]
        %v2727 = vld [vmem:[%s2710 + $0x80] sm:$0xff]
        %v2728 = vld [vmem:[%s2710 + $0x88] sm:$0xff]
        %v2729 = vld [vmem:[%s2710 + $0x90] sm:$0xff]
        %v2730 = vld [vmem:[%s2710 + $0x98] sm:$0xff]
        %v2731 = vld [vmem:[%s2710 + $0xa0] sm:$0xff]
        %v2732 = vld [vmem:[%s2710 + $0xa8] sm:$0xff]
        %v2733 = vld [vmem:[%s2710 + $0xb0] sm:$0xff]
        %v2734 = vld [vmem:[%s2710 + $0xb8] sm:$0xff]
        %v2735 = vld [vmem:[%s2710 + $0xc0] sm:$0xff]
        %v2736 = vld [vmem:[%s2710 + $0xc8] sm:$0xff]
        %v2737 = vld [vmem:[%s2710 + $0xd0] sm:$0xff]
        %v2738 = vld [vmem:[%s2710 + $0xd8] sm:$0xff]
        %v2739 = vld [vmem:[%s2710 + $0xe0] sm:$0xff]
        %v2740 = vld [vmem:[%s2710 + $0xe8] sm:$0xff]
        %v2741 = vld [vmem:[%s2710 + $0xf0] sm:$0xff]
        %v2742 = vld [vmem:[%s2710 + $0xf8] sm:$0xff]
        %v2743 = vstv %s2709
        %v2744 = vmul.f32 %v2743, %v2711
        %v2745 = vmul.f32 %v2743, %v2712
        %v2746 = vmul.f32 %v2743, %v2713
        %v2747 = vmul.f32 %v2743, %v2714
        %v2748 = vmul.f32 %v2743, %v2715
        %v2749 = vmul.f32 %v2743, %v2716
        %v2750 = vmul.f32 %v2743, %v2717
        %v2751 = vmul.f32 %v2743, %v2718
        %v2752 = vmul.f32 %v2743, %v2719
        %v2753 = vmul.f32 %v2743, %v2720
        %v2754 = vmul.f32 %v2743, %v2721
        %v2755 = vmul.f32 %v2743, %v2722
        %v2756 = vmul.f32 %v2743, %v2723
        %v2757 = vmul.f32 %v2743, %v2724
        %v2758 = vmul.f32 %v2743, %v2725
        %v2759 = vmul.f32 %v2743, %v2726
        %v2760 = vmul.f32 %v2743, %v2727
        %v2761 = vmul.f32 %v2743, %v2728
        %v2762 = vmul.f32 %v2743, %v2729
        %v2763 = vmul.f32 %v2743, %v2730
        %v2764 = vmul.f32 %v2743, %v2731
        %v2765 = vmul.f32 %v2743, %v2732
        %v2766 = vmul.f32 %v2743, %v2733
        %v2767 = vmul.f32 %v2743, %v2734
        %v2768 = vmul.f32 %v2743, %v2735
        %v2769 = vmul.f32 %v2743, %v2736
        %v2770 = vmul.f32 %v2743, %v2737
        %v2771 = vmul.f32 %v2743, %v2738
        %v2772 = vmul.f32 %v2743, %v2739
        %v2773 = vmul.f32 %v2743, %v2740
        %v2774 = vmul.f32 %v2743, %v2741
        %v2775 = vmul.f32 %v2743, %v2742
        %v2776 = vadd.f32 %v2677, %v2744
        %v2777 = vadd.f32 %v2678, %v2745
        %v2778 = vadd.f32 %v2679, %v2746
        %v2779 = vadd.f32 %v2680, %v2747
        %v2780 = vadd.f32 %v2681, %v2748
        %v2781 = vadd.f32 %v2682, %v2749
        %v2782 = vadd.f32 %v2683, %v2750
        %v2783 = vadd.f32 %v2684, %v2751
        %v2784 = vadd.f32 %v2685, %v2752
        %v2785 = vadd.f32 %v2686, %v2753
        %v2786 = vadd.f32 %v2687, %v2754
        %v2787 = vadd.f32 %v2688, %v2755
        %v2788 = vadd.f32 %v2689, %v2756
        %v2789 = vadd.f32 %v2690, %v2757
        %v2790 = vadd.f32 %v2691, %v2758
        %v2791 = vadd.f32 %v2692, %v2759
        %v2792 = vadd.f32 %v2693, %v2760
        %v2793 = vadd.f32 %v2694, %v2761
        %v2794 = vadd.f32 %v2695, %v2762
        %v2795 = vadd.f32 %v2696, %v2763
        %v2796 = vadd.f32 %v2697, %v2764
        %v2797 = vadd.f32 %v2698, %v2765
        %v2798 = vadd.f32 %v2699, %v2766
        %v2799 = vadd.f32 %v2700, %v2767
        %v2800 = vadd.f32 %v2701, %v2768
        %v2801 = vadd.f32 %v2702, %v2769
        %v2802 = vadd.f32 %v2703, %v2770
        %v2803 = vadd.f32 %v2704, %v2771
        %v2804 = vadd.f32 %v2705, %v2772
        %v2805 = vadd.f32 %v2706, %v2773
        %v2806 = vadd.f32 %v2707, %v2774
        %v2807 = vadd.f32 %v2708, %v2775
        %s2808 = sld [smem:[#allocation3 + $0x1a]]
        %s2809 = scalar_lea.vmem %s207, 6656 [#allocation7]
        %v2810 = vld [vmem:[%s2809] sm:$0xff]
        %v2811 = vld [vmem:[%s2809 + $0x8] sm:$0xff]
        %v2812 = vld [vmem:[%s2809 + $0x10] sm:$0xff]
        %v2813 = vld [vmem:[%s2809 + $0x18] sm:$0xff]
        %v2814 = vld [vmem:[%s2809 + $0x20] sm:$0xff]
        %v2815 = vld [vmem:[%s2809 + $0x28] sm:$0xff]
        %v2816 = vld [vmem:[%s2809 + $0x30] sm:$0xff]
        %v2817 = vld [vmem:[%s2809 + $0x38] sm:$0xff]
        %v2818 = vld [vmem:[%s2809 + $0x40] sm:$0xff]
        %v2819 = vld [vmem:[%s2809 + $0x48] sm:$0xff]
        %v2820 = vld [vmem:[%s2809 + $0x50] sm:$0xff]
        %v2821 = vld [vmem:[%s2809 + $0x58] sm:$0xff]
        %v2822 = vld [vmem:[%s2809 + $0x60] sm:$0xff]
        %v2823 = vld [vmem:[%s2809 + $0x68] sm:$0xff]
        %v2824 = vld [vmem:[%s2809 + $0x70] sm:$0xff]
        %v2825 = vld [vmem:[%s2809 + $0x78] sm:$0xff]
        %v2826 = vld [vmem:[%s2809 + $0x80] sm:$0xff]
        %v2827 = vld [vmem:[%s2809 + $0x88] sm:$0xff]
        %v2828 = vld [vmem:[%s2809 + $0x90] sm:$0xff]
        %v2829 = vld [vmem:[%s2809 + $0x98] sm:$0xff]
        %v2830 = vld [vmem:[%s2809 + $0xa0] sm:$0xff]
        %v2831 = vld [vmem:[%s2809 + $0xa8] sm:$0xff]
        %v2832 = vld [vmem:[%s2809 + $0xb0] sm:$0xff]
        %v2833 = vld [vmem:[%s2809 + $0xb8] sm:$0xff]
        %v2834 = vld [vmem:[%s2809 + $0xc0] sm:$0xff]
        %v2835 = vld [vmem:[%s2809 + $0xc8] sm:$0xff]
        %v2836 = vld [vmem:[%s2809 + $0xd0] sm:$0xff]
        %v2837 = vld [vmem:[%s2809 + $0xd8] sm:$0xff]
        %v2838 = vld [vmem:[%s2809 + $0xe0] sm:$0xff]
        %v2839 = vld [vmem:[%s2809 + $0xe8] sm:$0xff]
        %v2840 = vld [vmem:[%s2809 + $0xf0] sm:$0xff]
        %v2841 = vld [vmem:[%s2809 + $0xf8] sm:$0xff]
        %v2842 = vstv %s2808
        %v2843 = vmul.f32 %v2842, %v2810
        %v2844 = vmul.f32 %v2842, %v2811
        %v2845 = vmul.f32 %v2842, %v2812
        %v2846 = vmul.f32 %v2842, %v2813
        %v2847 = vmul.f32 %v2842, %v2814
        %v2848 = vmul.f32 %v2842, %v2815
        %v2849 = vmul.f32 %v2842, %v2816
        %v2850 = vmul.f32 %v2842, %v2817
        %v2851 = vmul.f32 %v2842, %v2818
        %v2852 = vmul.f32 %v2842, %v2819
        %v2853 = vmul.f32 %v2842, %v2820
        %v2854 = vmul.f32 %v2842, %v2821
        %v2855 = vmul.f32 %v2842, %v2822
        %v2856 = vmul.f32 %v2842, %v2823
        %v2857 = vmul.f32 %v2842, %v2824
        %v2858 = vmul.f32 %v2842, %v2825
        %v2859 = vmul.f32 %v2842, %v2826
        %v2860 = vmul.f32 %v2842, %v2827
        %v2861 = vmul.f32 %v2842, %v2828
        %v2862 = vmul.f32 %v2842, %v2829
        %v2863 = vmul.f32 %v2842, %v2830
        %v2864 = vmul.f32 %v2842, %v2831
        %v2865 = vmul.f32 %v2842, %v2832
        %v2866 = vmul.f32 %v2842, %v2833
        %v2867 = vmul.f32 %v2842, %v2834
        %v2868 = vmul.f32 %v2842, %v2835
        %v2869 = vmul.f32 %v2842, %v2836
        %v2870 = vmul.f32 %v2842, %v2837
        %v2871 = vmul.f32 %v2842, %v2838
        %v2872 = vmul.f32 %v2842, %v2839
        %v2873 = vmul.f32 %v2842, %v2840
        %v2874 = vmul.f32 %v2842, %v2841
        %v2875 = vadd.f32 %v2776, %v2843
        %v2876 = vadd.f32 %v2777, %v2844
        %v2877 = vadd.f32 %v2778, %v2845
        %v2878 = vadd.f32 %v2779, %v2846
        %v2879 = vadd.f32 %v2780, %v2847
        %v2880 = vadd.f32 %v2781, %v2848
        %v2881 = vadd.f32 %v2782, %v2849
        %v2882 = vadd.f32 %v2783, %v2850
        %v2883 = vadd.f32 %v2784, %v2851
        %v2884 = vadd.f32 %v2785, %v2852
        %v2885 = vadd.f32 %v2786, %v2853
        %v2886 = vadd.f32 %v2787, %v2854
        %v2887 = vadd.f32 %v2788, %v2855
        %v2888 = vadd.f32 %v2789, %v2856
        %v2889 = vadd.f32 %v2790, %v2857
        %v2890 = vadd.f32 %v2791, %v2858
        %v2891 = vadd.f32 %v2792, %v2859
        %v2892 = vadd.f32 %v2793, %v2860
        %v2893 = vadd.f32 %v2794, %v2861
        %v2894 = vadd.f32 %v2795, %v2862
        %v2895 = vadd.f32 %v2796, %v2863
        %v2896 = vadd.f32 %v2797, %v2864
        %v2897 = vadd.f32 %v2798, %v2865
        %v2898 = vadd.f32 %v2799, %v2866
        %v2899 = vadd.f32 %v2800, %v2867
        %v2900 = vadd.f32 %v2801, %v2868
        %v2901 = vadd.f32 %v2802, %v2869
        %v2902 = vadd.f32 %v2803, %v2870
        %v2903 = vadd.f32 %v2804, %v2871
        %v2904 = vadd.f32 %v2805, %v2872
        %v2905 = vadd.f32 %v2806, %v2873
        %v2906 = vadd.f32 %v2807, %v2874
        %s2907 = sld [smem:[#allocation3 + $0x1b]]
        %s2908 = scalar_lea.vmem %s207, 6912 [#allocation7]
        %v2909 = vld [vmem:[%s2908] sm:$0xff]
        %v2910 = vld [vmem:[%s2908 + $0x8] sm:$0xff]
        %v2911 = vld [vmem:[%s2908 + $0x10] sm:$0xff]
        %v2912 = vld [vmem:[%s2908 + $0x18] sm:$0xff]
        %v2913 = vld [vmem:[%s2908 + $0x20] sm:$0xff]
        %v2914 = vld [vmem:[%s2908 + $0x28] sm:$0xff]
        %v2915 = vld [vmem:[%s2908 + $0x30] sm:$0xff]
        %v2916 = vld [vmem:[%s2908 + $0x38] sm:$0xff]
        %v2917 = vld [vmem:[%s2908 + $0x40] sm:$0xff]
        %v2918 = vld [vmem:[%s2908 + $0x48] sm:$0xff]
        %v2919 = vld [vmem:[%s2908 + $0x50] sm:$0xff]
        %v2920 = vld [vmem:[%s2908 + $0x58] sm:$0xff]
        %v2921 = vld [vmem:[%s2908 + $0x60] sm:$0xff]
        %v2922 = vld [vmem:[%s2908 + $0x68] sm:$0xff]
        %v2923 = vld [vmem:[%s2908 + $0x70] sm:$0xff]
        %v2924 = vld [vmem:[%s2908 + $0x78] sm:$0xff]
        %v2925 = vld [vmem:[%s2908 + $0x80] sm:$0xff]
        %v2926 = vld [vmem:[%s2908 + $0x88] sm:$0xff]
        %v2927 = vld [vmem:[%s2908 + $0x90] sm:$0xff]
        %v2928 = vld [vmem:[%s2908 + $0x98] sm:$0xff]
        %v2929 = vld [vmem:[%s2908 + $0xa0] sm:$0xff]
        %v2930 = vld [vmem:[%s2908 + $0xa8] sm:$0xff]
        %v2931 = vld [vmem:[%s2908 + $0xb0] sm:$0xff]
        %v2932 = vld [vmem:[%s2908 + $0xb8] sm:$0xff]
        %v2933 = vld [vmem:[%s2908 + $0xc0] sm:$0xff]
        %v2934 = vld [vmem:[%s2908 + $0xc8] sm:$0xff]
        %v2935 = vld [vmem:[%s2908 + $0xd0] sm:$0xff]
        %v2936 = vld [vmem:[%s2908 + $0xd8] sm:$0xff]
        %v2937 = vld [vmem:[%s2908 + $0xe0] sm:$0xff]
        %v2938 = vld [vmem:[%s2908 + $0xe8] sm:$0xff]
        %v2939 = vld [vmem:[%s2908 + $0xf0] sm:$0xff]
        %v2940 = vld [vmem:[%s2908 + $0xf8] sm:$0xff]
        %v2941 = vstv %s2907
        %v2942 = vmul.f32 %v2941, %v2909
        %v2943 = vmul.f32 %v2941, %v2910
        %v2944 = vmul.f32 %v2941, %v2911
        %v2945 = vmul.f32 %v2941, %v2912
        %v2946 = vmul.f32 %v2941, %v2913
        %v2947 = vmul.f32 %v2941, %v2914
        %v2948 = vmul.f32 %v2941, %v2915
        %v2949 = vmul.f32 %v2941, %v2916
        %v2950 = vmul.f32 %v2941, %v2917
        %v2951 = vmul.f32 %v2941, %v2918
        %v2952 = vmul.f32 %v2941, %v2919
        %v2953 = vmul.f32 %v2941, %v2920
        %v2954 = vmul.f32 %v2941, %v2921
        %v2955 = vmul.f32 %v2941, %v2922
        %v2956 = vmul.f32 %v2941, %v2923
        %v2957 = vmul.f32 %v2941, %v2924
        %v2958 = vmul.f32 %v2941, %v2925
        %v2959 = vmul.f32 %v2941, %v2926
        %v2960 = vmul.f32 %v2941, %v2927
        %v2961 = vmul.f32 %v2941, %v2928
        %v2962 = vmul.f32 %v2941, %v2929
        %v2963 = vmul.f32 %v2941, %v2930
        %v2964 = vmul.f32 %v2941, %v2931
        %v2965 = vmul.f32 %v2941, %v2932
        %v2966 = vmul.f32 %v2941, %v2933
        %v2967 = vmul.f32 %v2941, %v2934
        %v2968 = vmul.f32 %v2941, %v2935
        %v2969 = vmul.f32 %v2941, %v2936
        %v2970 = vmul.f32 %v2941, %v2937
        %v2971 = vmul.f32 %v2941, %v2938
        %v2972 = vmul.f32 %v2941, %v2939
        %v2973 = vmul.f32 %v2941, %v2940
        %v2974 = vadd.f32 %v2875, %v2942
        %v2975 = vadd.f32 %v2876, %v2943
        %v2976 = vadd.f32 %v2877, %v2944
        %v2977 = vadd.f32 %v2878, %v2945
        %v2978 = vadd.f32 %v2879, %v2946
        %v2979 = vadd.f32 %v2880, %v2947
        %v2980 = vadd.f32 %v2881, %v2948
        %v2981 = vadd.f32 %v2882, %v2949
        %v2982 = vadd.f32 %v2883, %v2950
        %v2983 = vadd.f32 %v2884, %v2951
        %v2984 = vadd.f32 %v2885, %v2952
        %v2985 = vadd.f32 %v2886, %v2953
        %v2986 = vadd.f32 %v2887, %v2954
        %v2987 = vadd.f32 %v2888, %v2955
        %v2988 = vadd.f32 %v2889, %v2956
        %v2989 = vadd.f32 %v2890, %v2957
        %v2990 = vadd.f32 %v2891, %v2958
        %v2991 = vadd.f32 %v2892, %v2959
        %v2992 = vadd.f32 %v2893, %v2960
        %v2993 = vadd.f32 %v2894, %v2961
        %v2994 = vadd.f32 %v2895, %v2962
        %v2995 = vadd.f32 %v2896, %v2963
        %v2996 = vadd.f32 %v2897, %v2964
        %v2997 = vadd.f32 %v2898, %v2965
        %v2998 = vadd.f32 %v2899, %v2966
        %v2999 = vadd.f32 %v2900, %v2967
        %v3000 = vadd.f32 %v2901, %v2968
        %v3001 = vadd.f32 %v2902, %v2969
        %v3002 = vadd.f32 %v2903, %v2970
        %v3003 = vadd.f32 %v2904, %v2971
        %v3004 = vadd.f32 %v2905, %v2972
        %v3005 = vadd.f32 %v2906, %v2973
        %s3006 = sld [smem:[#allocation3 + $0x1c]]
        %s3007 = scalar_lea.vmem %s207, 7168 [#allocation7]
        %v3008 = vld [vmem:[%s3007] sm:$0xff]
        %v3009 = vld [vmem:[%s3007 + $0x8] sm:$0xff]
        %v3010 = vld [vmem:[%s3007 + $0x10] sm:$0xff]
        %v3011 = vld [vmem:[%s3007 + $0x18] sm:$0xff]
        %v3012 = vld [vmem:[%s3007 + $0x20] sm:$0xff]
        %v3013 = vld [vmem:[%s3007 + $0x28] sm:$0xff]
        %v3014 = vld [vmem:[%s3007 + $0x30] sm:$0xff]
        %v3015 = vld [vmem:[%s3007 + $0x38] sm:$0xff]
        %v3016 = vld [vmem:[%s3007 + $0x40] sm:$0xff]
        %v3017 = vld [vmem:[%s3007 + $0x48] sm:$0xff]
        %v3018 = vld [vmem:[%s3007 + $0x50] sm:$0xff]
        %v3019 = vld [vmem:[%s3007 + $0x58] sm:$0xff]
        %v3020 = vld [vmem:[%s3007 + $0x60] sm:$0xff]
        %v3021 = vld [vmem:[%s3007 + $0x68] sm:$0xff]
        %v3022 = vld [vmem:[%s3007 + $0x70] sm:$0xff]
        %v3023 = vld [vmem:[%s3007 + $0x78] sm:$0xff]
        %v3024 = vld [vmem:[%s3007 + $0x80] sm:$0xff]
        %v3025 = vld [vmem:[%s3007 + $0x88] sm:$0xff]
        %v3026 = vld [vmem:[%s3007 + $0x90] sm:$0xff]
        %v3027 = vld [vmem:[%s3007 + $0x98] sm:$0xff]
        %v3028 = vld [vmem:[%s3007 + $0xa0] sm:$0xff]
        %v3029 = vld [vmem:[%s3007 + $0xa8] sm:$0xff]
        %v3030 = vld [vmem:[%s3007 + $0xb0] sm:$0xff]
        %v3031 = vld [vmem:[%s3007 + $0xb8] sm:$0xff]
        %v3032 = vld [vmem:[%s3007 + $0xc0] sm:$0xff]
        %v3033 = vld [vmem:[%s3007 + $0xc8] sm:$0xff]
        %v3034 = vld [vmem:[%s3007 + $0xd0] sm:$0xff]
        %v3035 = vld [vmem:[%s3007 + $0xd8] sm:$0xff]
        %v3036 = vld [vmem:[%s3007 + $0xe0] sm:$0xff]
        %v3037 = vld [vmem:[%s3007 + $0xe8] sm:$0xff]
        %v3038 = vld [vmem:[%s3007 + $0xf0] sm:$0xff]
        %v3039 = vld [vmem:[%s3007 + $0xf8] sm:$0xff]
        %v3040 = vstv %s3006
        %v3041 = vmul.f32 %v3040, %v3008
        %v3042 = vmul.f32 %v3040, %v3009
        %v3043 = vmul.f32 %v3040, %v3010
        %v3044 = vmul.f32 %v3040, %v3011
        %v3045 = vmul.f32 %v3040, %v3012
        %v3046 = vmul.f32 %v3040, %v3013
        %v3047 = vmul.f32 %v3040, %v3014
        %v3048 = vmul.f32 %v3040, %v3015
        %v3049 = vmul.f32 %v3040, %v3016
        %v3050 = vmul.f32 %v3040, %v3017
        %v3051 = vmul.f32 %v3040, %v3018
        %v3052 = vmul.f32 %v3040, %v3019
        %v3053 = vmul.f32 %v3040, %v3020
        %v3054 = vmul.f32 %v3040, %v3021
        %v3055 = vmul.f32 %v3040, %v3022
        %v3056 = vmul.f32 %v3040, %v3023
        %v3057 = vmul.f32 %v3040, %v3024
        %v3058 = vmul.f32 %v3040, %v3025
        %v3059 = vmul.f32 %v3040, %v3026
        %v3060 = vmul.f32 %v3040, %v3027
        %v3061 = vmul.f32 %v3040, %v3028
        %v3062 = vmul.f32 %v3040, %v3029
        %v3063 = vmul.f32 %v3040, %v3030
        %v3064 = vmul.f32 %v3040, %v3031
        %v3065 = vmul.f32 %v3040, %v3032
        %v3066 = vmul.f32 %v3040, %v3033
        %v3067 = vmul.f32 %v3040, %v3034
        %v3068 = vmul.f32 %v3040, %v3035
        %v3069 = vmul.f32 %v3040, %v3036
        %v3070 = vmul.f32 %v3040, %v3037
        %v3071 = vmul.f32 %v3040, %v3038
        %v3072 = vmul.f32 %v3040, %v3039
        %v3073 = vadd.f32 %v2974, %v3041
        %v3074 = vadd.f32 %v2975, %v3042
        %v3075 = vadd.f32 %v2976, %v3043
        %v3076 = vadd.f32 %v2977, %v3044
        %v3077 = vadd.f32 %v2978, %v3045
        %v3078 = vadd.f32 %v2979, %v3046
        %v3079 = vadd.f32 %v2980, %v3047
        %v3080 = vadd.f32 %v2981, %v3048
        %v3081 = vadd.f32 %v2982, %v3049
        %v3082 = vadd.f32 %v2983, %v3050
        %v3083 = vadd.f32 %v2984, %v3051
        %v3084 = vadd.f32 %v2985, %v3052
        %v3085 = vadd.f32 %v2986, %v3053
        %v3086 = vadd.f32 %v2987, %v3054
        %v3087 = vadd.f32 %v2988, %v3055
        %v3088 = vadd.f32 %v2989, %v3056
        %v3089 = vadd.f32 %v2990, %v3057
        %v3090 = vadd.f32 %v2991, %v3058
        %v3091 = vadd.f32 %v2992, %v3059
        %v3092 = vadd.f32 %v2993, %v3060
        %v3093 = vadd.f32 %v2994, %v3061
        %v3094 = vadd.f32 %v2995, %v3062
        %v3095 = vadd.f32 %v2996, %v3063
        %v3096 = vadd.f32 %v2997, %v3064
        %v3097 = vadd.f32 %v2998, %v3065
        %v3098 = vadd.f32 %v2999, %v3066
        %v3099 = vadd.f32 %v3000, %v3067
        %v3100 = vadd.f32 %v3001, %v3068
        %v3101 = vadd.f32 %v3002, %v3069
        %v3102 = vadd.f32 %v3003, %v3070
        %v3103 = vadd.f32 %v3004, %v3071
        %v3104 = vadd.f32 %v3005, %v3072
        %s3105 = sld [smem:[#allocation3 + $0x1d]]
        %s3106 = scalar_lea.vmem %s207, 7424 [#allocation7]
        %v3107 = vld [vmem:[%s3106] sm:$0xff]
        %v3108 = vld [vmem:[%s3106 + $0x8] sm:$0xff]
        %v3109 = vld [vmem:[%s3106 + $0x10] sm:$0xff]
        %v3110 = vld [vmem:[%s3106 + $0x18] sm:$0xff]
        %v3111 = vld [vmem:[%s3106 + $0x20] sm:$0xff]
        %v3112 = vld [vmem:[%s3106 + $0x28] sm:$0xff]
        %v3113 = vld [vmem:[%s3106 + $0x30] sm:$0xff]
        %v3114 = vld [vmem:[%s3106 + $0x38] sm:$0xff]
        %v3115 = vld [vmem:[%s3106 + $0x40] sm:$0xff]
        %v3116 = vld [vmem:[%s3106 + $0x48] sm:$0xff]
        %v3117 = vld [vmem:[%s3106 + $0x50] sm:$0xff]
        %v3118 = vld [vmem:[%s3106 + $0x58] sm:$0xff]
        %v3119 = vld [vmem:[%s3106 + $0x60] sm:$0xff]
        %v3120 = vld [vmem:[%s3106 + $0x68] sm:$0xff]
        %v3121 = vld [vmem:[%s3106 + $0x70] sm:$0xff]
        %v3122 = vld [vmem:[%s3106 + $0x78] sm:$0xff]
        %v3123 = vld [vmem:[%s3106 + $0x80] sm:$0xff]
        %v3124 = vld [vmem:[%s3106 + $0x88] sm:$0xff]
        %v3125 = vld [vmem:[%s3106 + $0x90] sm:$0xff]
        %v3126 = vld [vmem:[%s3106 + $0x98] sm:$0xff]
        %v3127 = vld [vmem:[%s3106 + $0xa0] sm:$0xff]
        %v3128 = vld [vmem:[%s3106 + $0xa8] sm:$0xff]
        %v3129 = vld [vmem:[%s3106 + $0xb0] sm:$0xff]
        %v3130 = vld [vmem:[%s3106 + $0xb8] sm:$0xff]
        %v3131 = vld [vmem:[%s3106 + $0xc0] sm:$0xff]
        %v3132 = vld [vmem:[%s3106 + $0xc8] sm:$0xff]
        %v3133 = vld [vmem:[%s3106 + $0xd0] sm:$0xff]
        %v3134 = vld [vmem:[%s3106 + $0xd8] sm:$0xff]
        %v3135 = vld [vmem:[%s3106 + $0xe0] sm:$0xff]
        %v3136 = vld [vmem:[%s3106 + $0xe8] sm:$0xff]
        %v3137 = vld [vmem:[%s3106 + $0xf0] sm:$0xff]
        %v3138 = vld [vmem:[%s3106 + $0xf8] sm:$0xff]
        %v3139 = vstv %s3105
        %v3140 = vmul.f32 %v3139, %v3107
        %v3141 = vmul.f32 %v3139, %v3108
        %v3142 = vmul.f32 %v3139, %v3109
        %v3143 = vmul.f32 %v3139, %v3110
        %v3144 = vmul.f32 %v3139, %v3111
        %v3145 = vmul.f32 %v3139, %v3112
        %v3146 = vmul.f32 %v3139, %v3113
        %v3147 = vmul.f32 %v3139, %v3114
        %v3148 = vmul.f32 %v3139, %v3115
        %v3149 = vmul.f32 %v3139, %v3116
        %v3150 = vmul.f32 %v3139, %v3117
        %v3151 = vmul.f32 %v3139, %v3118
        %v3152 = vmul.f32 %v3139, %v3119
        %v3153 = vmul.f32 %v3139, %v3120
        %v3154 = vmul.f32 %v3139, %v3121
        %v3155 = vmul.f32 %v3139, %v3122
        %v3156 = vmul.f32 %v3139, %v3123
        %v3157 = vmul.f32 %v3139, %v3124
        %v3158 = vmul.f32 %v3139, %v3125
        %v3159 = vmul.f32 %v3139, %v3126
        %v3160 = vmul.f32 %v3139, %v3127
        %v3161 = vmul.f32 %v3139, %v3128
        %v3162 = vmul.f32 %v3139, %v3129
        %v3163 = vmul.f32 %v3139, %v3130
        %v3164 = vmul.f32 %v3139, %v3131
        %v3165 = vmul.f32 %v3139, %v3132
        %v3166 = vmul.f32 %v3139, %v3133
        %v3167 = vmul.f32 %v3139, %v3134
        %v3168 = vmul.f32 %v3139, %v3135
        %v3169 = vmul.f32 %v3139, %v3136
        %v3170 = vmul.f32 %v3139, %v3137
        %v3171 = vmul.f32 %v3139, %v3138
        %v3172 = vadd.f32 %v3073, %v3140
        %v3173 = vadd.f32 %v3074, %v3141
        %v3174 = vadd.f32 %v3075, %v3142
        %v3175 = vadd.f32 %v3076, %v3143
        %v3176 = vadd.f32 %v3077, %v3144
        %v3177 = vadd.f32 %v3078, %v3145
        %v3178 = vadd.f32 %v3079, %v3146
        %v3179 = vadd.f32 %v3080, %v3147
        %v3180 = vadd.f32 %v3081, %v3148
        %v3181 = vadd.f32 %v3082, %v3149
        %v3182 = vadd.f32 %v3083, %v3150
        %v3183 = vadd.f32 %v3084, %v3151
        %v3184 = vadd.f32 %v3085, %v3152
        %v3185 = vadd.f32 %v3086, %v3153
        %v3186 = vadd.f32 %v3087, %v3154
        %v3187 = vadd.f32 %v3088, %v3155
        %v3188 = vadd.f32 %v3089, %v3156
        %v3189 = vadd.f32 %v3090, %v3157
        %v3190 = vadd.f32 %v3091, %v3158
        %v3191 = vadd.f32 %v3092, %v3159
        %v3192 = vadd.f32 %v3093, %v3160
        %v3193 = vadd.f32 %v3094, %v3161
        %v3194 = vadd.f32 %v3095, %v3162
        %v3195 = vadd.f32 %v3096, %v3163
        %v3196 = vadd.f32 %v3097, %v3164
        %v3197 = vadd.f32 %v3098, %v3165
        %v3198 = vadd.f32 %v3099, %v3166
        %v3199 = vadd.f32 %v3100, %v3167
        %v3200 = vadd.f32 %v3101, %v3168
        %v3201 = vadd.f32 %v3102, %v3169
        %v3202 = vadd.f32 %v3103, %v3170
        %v3203 = vadd.f32 %v3104, %v3171
        %s3204 = sld [smem:[#allocation3 + $0x1e]]
        %s3205 = scalar_lea.vmem %s207, 7680 [#allocation7]
        %v3206 = vld [vmem:[%s3205] sm:$0xff]
        %v3207 = vld [vmem:[%s3205 + $0x8] sm:$0xff]
        %v3208 = vld [vmem:[%s3205 + $0x10] sm:$0xff]
        %v3209 = vld [vmem:[%s3205 + $0x18] sm:$0xff]
        %v3210 = vld [vmem:[%s3205 + $0x20] sm:$0xff]
        %v3211 = vld [vmem:[%s3205 + $0x28] sm:$0xff]
        %v3212 = vld [vmem:[%s3205 + $0x30] sm:$0xff]
        %v3213 = vld [vmem:[%s3205 + $0x38] sm:$0xff]
        %v3214 = vld [vmem:[%s3205 + $0x40] sm:$0xff]
        %v3215 = vld [vmem:[%s3205 + $0x48] sm:$0xff]
        %v3216 = vld [vmem:[%s3205 + $0x50] sm:$0xff]
        %v3217 = vld [vmem:[%s3205 + $0x58] sm:$0xff]
        %v3218 = vld [vmem:[%s3205 + $0x60] sm:$0xff]
        %v3219 = vld [vmem:[%s3205 + $0x68] sm:$0xff]
        %v3220 = vld [vmem:[%s3205 + $0x70] sm:$0xff]
        %v3221 = vld [vmem:[%s3205 + $0x78] sm:$0xff]
        %v3222 = vld [vmem:[%s3205 + $0x80] sm:$0xff]
        %v3223 = vld [vmem:[%s3205 + $0x88] sm:$0xff]
        %v3224 = vld [vmem:[%s3205 + $0x90] sm:$0xff]
        %v3225 = vld [vmem:[%s3205 + $0x98] sm:$0xff]
        %v3226 = vld [vmem:[%s3205 + $0xa0] sm:$0xff]
        %v3227 = vld [vmem:[%s3205 + $0xa8] sm:$0xff]
        %v3228 = vld [vmem:[%s3205 + $0xb0] sm:$0xff]
        %v3229 = vld [vmem:[%s3205 + $0xb8] sm:$0xff]
        %v3230 = vld [vmem:[%s3205 + $0xc0] sm:$0xff]
        %v3231 = vld [vmem:[%s3205 + $0xc8] sm:$0xff]
        %v3232 = vld [vmem:[%s3205 + $0xd0] sm:$0xff]
        %v3233 = vld [vmem:[%s3205 + $0xd8] sm:$0xff]
        %v3234 = vld [vmem:[%s3205 + $0xe0] sm:$0xff]
        %v3235 = vld [vmem:[%s3205 + $0xe8] sm:$0xff]
        %v3236 = vld [vmem:[%s3205 + $0xf0] sm:$0xff]
        %v3237 = vld [vmem:[%s3205 + $0xf8] sm:$0xff]
        %v3238 = vstv %s3204
        %v3239 = vmul.f32 %v3238, %v3206
        %v3240 = vmul.f32 %v3238, %v3207
        %v3241 = vmul.f32 %v3238, %v3208
        %v3242 = vmul.f32 %v3238, %v3209
        %v3243 = vmul.f32 %v3238, %v3210
        %v3244 = vmul.f32 %v3238, %v3211
        %v3245 = vmul.f32 %v3238, %v3212
        %v3246 = vmul.f32 %v3238, %v3213
        %v3247 = vmul.f32 %v3238, %v3214
        %v3248 = vmul.f32 %v3238, %v3215
        %v3249 = vmul.f32 %v3238, %v3216
        %v3250 = vmul.f32 %v3238, %v3217
        %v3251 = vmul.f32 %v3238, %v3218
        %v3252 = vmul.f32 %v3238, %v3219
        %v3253 = vmul.f32 %v3238, %v3220
        %v3254 = vmul.f32 %v3238, %v3221
        %v3255 = vmul.f32 %v3238, %v3222
        %v3256 = vmul.f32 %v3238, %v3223
        %v3257 = vmul.f32 %v3238, %v3224
        %v3258 = vmul.f32 %v3238, %v3225
        %v3259 = vmul.f32 %v3238, %v3226
        %v3260 = vmul.f32 %v3238, %v3227
        %v3261 = vmul.f32 %v3238, %v3228
        %v3262 = vmul.f32 %v3238, %v3229
        %v3263 = vmul.f32 %v3238, %v3230
        %v3264 = vmul.f32 %v3238, %v3231
        %v3265 = vmul.f32 %v3238, %v3232
        %v3266 = vmul.f32 %v3238, %v3233
        %v3267 = vmul.f32 %v3238, %v3234
        %v3268 = vmul.f32 %v3238, %v3235
        %v3269 = vmul.f32 %v3238, %v3236
        %v3270 = vmul.f32 %v3238, %v3237
        %v3271 = vadd.f32 %v3172, %v3239
        %v3272 = vadd.f32 %v3173, %v3240
        %v3273 = vadd.f32 %v3174, %v3241
        %v3274 = vadd.f32 %v3175, %v3242
        %v3275 = vadd.f32 %v3176, %v3243
        %v3276 = vadd.f32 %v3177, %v3244
        %v3277 = vadd.f32 %v3178, %v3245
        %v3278 = vadd.f32 %v3179, %v3246
        %v3279 = vadd.f32 %v3180, %v3247
        %v3280 = vadd.f32 %v3181, %v3248
        %v3281 = vadd.f32 %v3182, %v3249
        %v3282 = vadd.f32 %v3183, %v3250
        %v3283 = vadd.f32 %v3184, %v3251
        %v3284 = vadd.f32 %v3185, %v3252
        %v3285 = vadd.f32 %v3186, %v3253
        %v3286 = vadd.f32 %v3187, %v3254
        %v3287 = vadd.f32 %v3188, %v3255
        %v3288 = vadd.f32 %v3189, %v3256
        %v3289 = vadd.f32 %v3190, %v3257
        %v3290 = vadd.f32 %v3191, %v3258
        %v3291 = vadd.f32 %v3192, %v3259
        %v3292 = vadd.f32 %v3193, %v3260
        %v3293 = vadd.f32 %v3194, %v3261
        %v3294 = vadd.f32 %v3195, %v3262
        %v3295 = vadd.f32 %v3196, %v3263
        %v3296 = vadd.f32 %v3197, %v3264
        %v3297 = vadd.f32 %v3198, %v3265
        %v3298 = vadd.f32 %v3199, %v3266
        %v3299 = vadd.f32 %v3200, %v3267
        %v3300 = vadd.f32 %v3201, %v3268
        %v3301 = vadd.f32 %v3202, %v3269
        %v3302 = vadd.f32 %v3203, %v3270
        %s3303 = sld [smem:[#allocation3 + $0x1f]]
        %s3304 = scalar_lea.vmem %s207, 7936 [#allocation7]
        %v3305 = vld [vmem:[%s3304] sm:$0xff]
        %v3306 = vld [vmem:[%s3304 + $0x8] sm:$0xff]
        %v3307 = vld [vmem:[%s3304 + $0x10] sm:$0xff]
        %v3308 = vld [vmem:[%s3304 + $0x18] sm:$0xff]
        %v3309 = vld [vmem:[%s3304 + $0x20] sm:$0xff]
        %v3310 = vld [vmem:[%s3304 + $0x28] sm:$0xff]
        %v3311 = vld [vmem:[%s3304 + $0x30] sm:$0xff]
        %v3312 = vld [vmem:[%s3304 + $0x38] sm:$0xff]
        %v3313 = vld [vmem:[%s3304 + $0x40] sm:$0xff]
        %v3314 = vld [vmem:[%s3304 + $0x48] sm:$0xff]
        %v3315 = vld [vmem:[%s3304 + $0x50] sm:$0xff]
        %v3316 = vld [vmem:[%s3304 + $0x58] sm:$0xff]
        %v3317 = vld [vmem:[%s3304 + $0x60] sm:$0xff]
        %v3318 = vld [vmem:[%s3304 + $0x68] sm:$0xff]
        %v3319 = vld [vmem:[%s3304 + $0x70] sm:$0xff]
        %v3320 = vld [vmem:[%s3304 + $0x78] sm:$0xff]
        %v3321 = vld [vmem:[%s3304 + $0x80] sm:$0xff]
        %v3322 = vld [vmem:[%s3304 + $0x88] sm:$0xff]
        %v3323 = vld [vmem:[%s3304 + $0x90] sm:$0xff]
        %v3324 = vld [vmem:[%s3304 + $0x98] sm:$0xff]
        %v3325 = vld [vmem:[%s3304 + $0xa0] sm:$0xff]
        %v3326 = vld [vmem:[%s3304 + $0xa8] sm:$0xff]
        %v3327 = vld [vmem:[%s3304 + $0xb0] sm:$0xff]
        %v3328 = vld [vmem:[%s3304 + $0xb8] sm:$0xff]
        %v3329 = vld [vmem:[%s3304 + $0xc0] sm:$0xff]
        %v3330 = vld [vmem:[%s3304 + $0xc8] sm:$0xff]
        %v3331 = vld [vmem:[%s3304 + $0xd0] sm:$0xff]
        %v3332 = vld [vmem:[%s3304 + $0xd8] sm:$0xff]
        %v3333 = vld [vmem:[%s3304 + $0xe0] sm:$0xff]
        %v3334 = vld [vmem:[%s3304 + $0xe8] sm:$0xff]
        %v3335 = vld [vmem:[%s3304 + $0xf0] sm:$0xff]
        %v3336 = vld [vmem:[%s3304 + $0xf8] sm:$0xff]
        %v3337 = vstv %s3303
        %v3338 = vmul.f32 %v3337, %v3305
        %v3339 = vmul.f32 %v3337, %v3306
        %v3340 = vmul.f32 %v3337, %v3307
        %v3341 = vmul.f32 %v3337, %v3308
        %v3342 = vmul.f32 %v3337, %v3309
        %v3343 = vmul.f32 %v3337, %v3310
        %v3344 = vmul.f32 %v3337, %v3311
        %v3345 = vmul.f32 %v3337, %v3312
        %v3346 = vmul.f32 %v3337, %v3313
        %v3347 = vmul.f32 %v3337, %v3314
        %v3348 = vmul.f32 %v3337, %v3315
        %v3349 = vmul.f32 %v3337, %v3316
        %v3350 = vmul.f32 %v3337, %v3317
        %v3351 = vmul.f32 %v3337, %v3318
        %v3352 = vmul.f32 %v3337, %v3319
        %v3353 = vmul.f32 %v3337, %v3320
        %v3354 = vmul.f32 %v3337, %v3321
        %v3355 = vmul.f32 %v3337, %v3322
        %v3356 = vmul.f32 %v3337, %v3323
        %v3357 = vmul.f32 %v3337, %v3324
        %v3358 = vmul.f32 %v3337, %v3325
        %v3359 = vmul.f32 %v3337, %v3326
        %v3360 = vmul.f32 %v3337, %v3327
        %v3361 = vmul.f32 %v3337, %v3328
        %v3362 = vmul.f32 %v3337, %v3329
        %v3363 = vmul.f32 %v3337, %v3330
        %v3364 = vmul.f32 %v3337, %v3331
        %v3365 = vmul.f32 %v3337, %v3332
        %v3366 = vmul.f32 %v3337, %v3333
        %v3367 = vmul.f32 %v3337, %v3334
        %v3368 = vmul.f32 %v3337, %v3335
        %v3369 = vmul.f32 %v3337, %v3336
        %v3370 = vadd.f32 %v3271, %v3338
        %v3371 = vadd.f32 %v3272, %v3339
        %v3372 = vadd.f32 %v3273, %v3340
        %v3373 = vadd.f32 %v3274, %v3341
        %v3374 = vadd.f32 %v3275, %v3342
        %v3375 = vadd.f32 %v3276, %v3343
        %v3376 = vadd.f32 %v3277, %v3344
        %v3377 = vadd.f32 %v3278, %v3345
        %v3378 = vadd.f32 %v3279, %v3346
        %v3379 = vadd.f32 %v3280, %v3347
        %v3380 = vadd.f32 %v3281, %v3348
        %v3381 = vadd.f32 %v3282, %v3349
        %v3382 = vadd.f32 %v3283, %v3350
        %v3383 = vadd.f32 %v3284, %v3351
        %v3384 = vadd.f32 %v3285, %v3352
        %v3385 = vadd.f32 %v3286, %v3353
        %v3386 = vadd.f32 %v3287, %v3354
        %v3387 = vadd.f32 %v3288, %v3355
        %v3388 = vadd.f32 %v3289, %v3356
        %v3389 = vadd.f32 %v3290, %v3357
        %v3390 = vadd.f32 %v3291, %v3358
        %v3391 = vadd.f32 %v3292, %v3359
        %v3392 = vadd.f32 %v3293, %v3360
        %v3393 = vadd.f32 %v3294, %v3361
        %v3394 = vadd.f32 %v3295, %v3362
        %v3395 = vadd.f32 %v3296, %v3363
        %v3396 = vadd.f32 %v3297, %v3364
        %v3397 = vadd.f32 %v3298, %v3365
        %v3398 = vadd.f32 %v3299, %v3366
        %v3399 = vadd.f32 %v3300, %v3367
        %v3400 = vadd.f32 %v3301, %v3368
        %v3401 = vadd.f32 %v3302, %v3369
        %vm3402 = vcmp.ge.f32.partialorder %v3370, 0.0
        %vm3403 = vcmp.ge.f32.partialorder %v3371, 0.0
        %vm3404 = vcmp.ge.f32.partialorder %v3372, 0.0
        %vm3405 = vcmp.ge.f32.partialorder %v3373, 0.0
        %vm3406 = vcmp.ge.f32.partialorder %v3374, 0.0
        %vm3407 = vcmp.ge.f32.partialorder %v3375, 0.0
        %vm3408 = vcmp.ge.f32.partialorder %v3376, 0.0
        %vm3409 = vcmp.ge.f32.partialorder %v3377, 0.0
        %vm3410 = vcmp.ge.f32.partialorder %v3378, 0.0
        %vm3411 = vcmp.ge.f32.partialorder %v3379, 0.0
        %vm3412 = vcmp.ge.f32.partialorder %v3380, 0.0
        %vm3413 = vcmp.ge.f32.partialorder %v3381, 0.0
        %vm3414 = vcmp.ge.f32.partialorder %v3382, 0.0
        %vm3415 = vcmp.ge.f32.partialorder %v3383, 0.0
        %vm3416 = vcmp.ge.f32.partialorder %v3384, 0.0
        %vm3417 = vcmp.ge.f32.partialorder %v3385, 0.0
        %vm3418 = vcmp.ge.f32.partialorder %v3386, 0.0
        %vm3419 = vcmp.ge.f32.partialorder %v3387, 0.0
        %vm3420 = vcmp.ge.f32.partialorder %v3388, 0.0
        %vm3421 = vcmp.ge.f32.partialorder %v3389, 0.0
        %vm3422 = vcmp.ge.f32.partialorder %v3390, 0.0
        %vm3423 = vcmp.ge.f32.partialorder %v3391, 0.0
        %vm3424 = vcmp.ge.f32.partialorder %v3392, 0.0
        %vm3425 = vcmp.ge.f32.partialorder %v3393, 0.0
        %vm3426 = vcmp.ge.f32.partialorder %v3394, 0.0
        %vm3427 = vcmp.ge.f32.partialorder %v3395, 0.0
        %vm3428 = vcmp.ge.f32.partialorder %v3396, 0.0
        %vm3429 = vcmp.ge.f32.partialorder %v3397, 0.0
        %vm3430 = vcmp.ge.f32.partialorder %v3398, 0.0
        %vm3431 = vcmp.ge.f32.partialorder %v3399, 0.0
        %vm3432 = vcmp.ge.f32.partialorder %v3400, 0.0
        %vm3433 = vcmp.ge.f32.partialorder %v3401, 0.0
        %v3434 = vmul.f32 %v3370, 0.01
        %v3435 = vmul.f32 %v3371, 0.01
        %v3436 = vmul.f32 %v3372, 0.01
        %v3437 = vmul.f32 %v3373, 0.01
        %v3438 = vmul.f32 %v3374, 0.01
        %v3439 = vmul.f32 %v3375, 0.01
        %v3440 = vmul.f32 %v3376, 0.01
        %v3441 = vmul.f32 %v3377, 0.01
        %v3442 = vmul.f32 %v3378, 0.01
        %v3443 = vmul.f32 %v3379, 0.01
        %v3444 = vmul.f32 %v3380, 0.01
        %v3445 = vmul.f32 %v3381, 0.01
        %v3446 = vmul.f32 %v3382, 0.01
        %v3447 = vmul.f32 %v3383, 0.01
        %v3448 = vmul.f32 %v3384, 0.01
        %v3449 = vmul.f32 %v3385, 0.01
        %v3450 = vmul.f32 %v3386, 0.01
        %v3451 = vmul.f32 %v3387, 0.01
        %v3452 = vmul.f32 %v3388, 0.01
        %v3453 = vmul.f32 %v3389, 0.01
        %v3454 = vmul.f32 %v3390, 0.01
        %v3455 = vmul.f32 %v3391, 0.01
        %v3456 = vmul.f32 %v3392, 0.01
        %v3457 = vmul.f32 %v3393, 0.01
        %v3458 = vmul.f32 %v3394, 0.01
        %v3459 = vmul.f32 %v3395, 0.01
        %v3460 = vmul.f32 %v3396, 0.01
        %v3461 = vmul.f32 %v3397, 0.01
        %v3462 = vmul.f32 %v3398, 0.01
        %v3463 = vmul.f32 %v3399, 0.01
        %v3464 = vmul.f32 %v3400, 0.01
        %v3465 = vmul.f32 %v3401, 0.01
        %v3466 = vsel %vm3402, %v3370, %v3434
        %v3467 = vsel %vm3403, %v3371, %v3435
        %v3468 = vsel %vm3404, %v3372, %v3436
        %v3469 = vsel %vm3405, %v3373, %v3437
        %v3470 = vsel %vm3406, %v3374, %v3438
        %v3471 = vsel %vm3407, %v3375, %v3439
        %v3472 = vsel %vm3408, %v3376, %v3440
        %v3473 = vsel %vm3409, %v3377, %v3441
        %v3474 = vsel %vm3410, %v3378, %v3442
        %v3475 = vsel %vm3411, %v3379, %v3443
        %v3476 = vsel %vm3412, %v3380, %v3444
        %v3477 = vsel %vm3413, %v3381, %v3445
        %v3478 = vsel %vm3414, %v3382, %v3446
        %v3479 = vsel %vm3415, %v3383, %v3447
        %v3480 = vsel %vm3416, %v3384, %v3448
        %v3481 = vsel %vm3417, %v3385, %v3449
        %v3482 = vsel %vm3418, %v3386, %v3450
        %v3483 = vsel %vm3419, %v3387, %v3451
        %v3484 = vsel %vm3420, %v3388, %v3452
        %v3485 = vsel %vm3421, %v3389, %v3453
        %v3486 = vsel %vm3422, %v3390, %v3454
        %v3487 = vsel %vm3423, %v3391, %v3455
        %v3488 = vsel %vm3424, %v3392, %v3456
        %v3489 = vsel %vm3425, %v3393, %v3457
        %v3490 = vsel %vm3426, %v3394, %v3458
        %v3491 = vsel %vm3427, %v3395, %v3459
        %v3492 = vsel %vm3428, %v3396, %v3460
        %v3493 = vsel %vm3429, %v3397, %v3461
        %v3494 = vsel %vm3430, %v3398, %v3462
        %v3495 = vsel %vm3431, %v3399, %v3463
        %v3496 = vsel %vm3432, %v3400, %v3464
        %v3497 = vsel %vm3433, %v3401, %v3465
        %v3498 = vmax.f32 %v3466, %v3467
        %3499 = vmax.xlane.f32.xlu0 %v3498
        %v3500 = vpop.xlane.xlu0 %3499
        %v3501 = vmax.f32 %v3468, %v3469
        %3502 = vmax.xlane.f32.xlu0 %v3501
        %v3503 = vpop.xlane.xlu0 %3502
        %v3504 = vmax.f32 %v3470, %v3471
        %3505 = vmax.xlane.f32.xlu0 %v3504
        %v3506 = vpop.xlane.xlu0 %3505
        %v3507 = vmax.f32 %v3472, %v3473
        %3508 = vmax.xlane.f32.xlu0 %v3507
        %v3509 = vpop.xlane.xlu0 %3508
        %v3510 = vmax.f32 %v3474, %v3475
        %3511 = vmax.xlane.f32.xlu0 %v3510
        %v3512 = vpop.xlane.xlu0 %3511
        %v3513 = vmax.f32 %v3476, %v3477
        %3514 = vmax.xlane.f32.xlu0 %v3513
        %v3515 = vpop.xlane.xlu0 %3514
        %v3516 = vmax.f32 %v3478, %v3479
        %3517 = vmax.xlane.f32.xlu0 %v3516
        %v3518 = vpop.xlane.xlu0 %3517
        %v3519 = vmax.f32 %v3480, %v3481
        %3520 = vmax.xlane.f32.xlu0 %v3519
        %v3521 = vpop.xlane.xlu0 %3520
        %v3522 = vmax.f32 %v3482, %v3483
        %3523 = vmax.xlane.f32.xlu0 %v3522
        %v3524 = vpop.xlane.xlu0 %3523
        %v3525 = vmax.f32 %v3484, %v3485
        %3526 = vmax.xlane.f32.xlu0 %v3525
        %v3527 = vpop.xlane.xlu0 %3526
        %v3528 = vmax.f32 %v3486, %v3487
        %3529 = vmax.xlane.f32.xlu0 %v3528
        %v3530 = vpop.xlane.xlu0 %3529
        %v3531 = vmax.f32 %v3488, %v3489
        %3532 = vmax.xlane.f32.xlu0 %v3531
        %v3533 = vpop.xlane.xlu0 %3532
        %v3534 = vmax.f32 %v3490, %v3491
        %3535 = vmax.xlane.f32.xlu0 %v3534
        %v3536 = vpop.xlane.xlu0 %3535
        %v3537 = vmax.f32 %v3492, %v3493
        %3538 = vmax.xlane.f32.xlu0 %v3537
        %v3539 = vpop.xlane.xlu0 %3538
        %v3540 = vmax.f32 %v3494, %v3495
        %3541 = vmax.xlane.f32.xlu0 %v3540
        %v3542 = vpop.xlane.xlu0 %3541
        %v3543 = vmax.f32 %v3496, %v3497
        %3544 = vmax.xlane.f32.xlu0 %v3543
        %v3545 = vpop.xlane.xlu0 %3544
        %v3546 = vsub.f32 %v3466, %v3500
        %v3547 = vsub.f32 %v3467, %v3500
        %v3548 = vsub.f32 %v3468, %v3503
        %v3549 = vsub.f32 %v3469, %v3503
        %v3550 = vsub.f32 %v3470, %v3506
        %v3551 = vsub.f32 %v3471, %v3506
        %v3552 = vsub.f32 %v3472, %v3509
        %v3553 = vsub.f32 %v3473, %v3509
        %v3554 = vsub.f32 %v3474, %v3512
        %v3555 = vsub.f32 %v3475, %v3512
        %v3556 = vsub.f32 %v3476, %v3515
        %v3557 = vsub.f32 %v3477, %v3515
        %v3558 = vsub.f32 %v3478, %v3518
        %v3559 = vsub.f32 %v3479, %v3518
        %v3560 = vsub.f32 %v3480, %v3521
        %v3561 = vsub.f32 %v3481, %v3521
        %v3562 = vsub.f32 %v3482, %v3524
        %v3563 = vsub.f32 %v3483, %v3524
        %v3564 = vsub.f32 %v3484, %v3527
        %v3565 = vsub.f32 %v3485, %v3527
        %v3566 = vsub.f32 %v3486, %v3530
        %v3567 = vsub.f32 %v3487, %v3530
        %v3568 = vsub.f32 %v3488, %v3533
        %v3569 = vsub.f32 %v3489, %v3533
        %v3570 = vsub.f32 %v3490, %v3536
        %v3571 = vsub.f32 %v3491, %v3536
        %v3572 = vsub.f32 %v3492, %v3539
        %v3573 = vsub.f32 %v3493, %v3539
        %v3574 = vsub.f32 %v3494, %v3542
        %v3575 = vsub.f32 %v3495, %v3542
        %v3576 = vsub.f32 %v3496, %v3545
        %v3577 = vsub.f32 %v3497, %v3545
        %v3578 = vmul.f32 %v3546, 1.442695
        %v3579 = vpow.pop %v3578
        %v3580 = vmul.f32 %v3547, 1.442695
        %v3581 = vpow.pop %v3580
        %v3582 = vmul.f32 %v3548, 1.442695
        %v3583 = vpow.pop %v3582
        %v3584 = vmul.f32 %v3549, 1.442695
        %v3585 = vpow.pop %v3584
        %v3586 = vmul.f32 %v3550, 1.442695
        %v3587 = vpow.pop %v3586
        %v3588 = vmul.f32 %v3551, 1.442695
        %v3589 = vpow.pop %v3588
        %v3590 = vmul.f32 %v3552, 1.442695
        %v3591 = vpow.pop %v3590
        %v3592 = vmul.f32 %v3553, 1.442695
        %v3593 = vpow.pop %v3592
        %v3594 = vmul.f32 %v3554, 1.442695
        %v3595 = vpow.pop %v3594
        %v3596 = vmul.f32 %v3555, 1.442695
        %v3597 = vpow.pop %v3596
        %v3598 = vmul.f32 %v3556, 1.442695
        %v3599 = vpow.pop %v3598
        %v3600 = vmul.f32 %v3557, 1.442695
        %v3601 = vpow.pop %v3600
        %v3602 = vmul.f32 %v3558, 1.442695
        %v3603 = vpow.pop %v3602
        %v3604 = vmul.f32 %v3559, 1.442695
        %v3605 = vpow.pop %v3604
        %v3606 = vmul.f32 %v3560, 1.442695
        %v3607 = vpow.pop %v3606
        %v3608 = vmul.f32 %v3561, 1.442695
        %v3609 = vpow.pop %v3608
        %v3610 = vmul.f32 %v3562, 1.442695
        %v3611 = vpow.pop %v3610
        %v3612 = vmul.f32 %v3563, 1.442695
        %v3613 = vpow.pop %v3612
        %v3614 = vmul.f32 %v3564, 1.442695
        %v3615 = vpow.pop %v3614
        %v3616 = vmul.f32 %v3565, 1.442695
        %v3617 = vpow.pop %v3616
        %v3618 = vmul.f32 %v3566, 1.442695
        %v3619 = vpow.pop %v3618
        %v3620 = vmul.f32 %v3567, 1.442695
        %v3621 = vpow.pop %v3620
        %v3622 = vmul.f32 %v3568, 1.442695
        %v3623 = vpow.pop %v3622
        %v3624 = vmul.f32 %v3569, 1.442695
        %v3625 = vpow.pop %v3624
        %v3626 = vmul.f32 %v3570, 1.442695
        %v3627 = vpow.pop %v3626
        %v3628 = vmul.f32 %v3571, 1.442695
        %v3629 = vpow.pop %v3628
        %v3630 = vmul.f32 %v3572, 1.442695
        %v3631 = vpow.pop %v3630
        %v3632 = vmul.f32 %v3573, 1.442695
        %v3633 = vpow.pop %v3632
        %v3634 = vmul.f32 %v3574, 1.442695
        %v3635 = vpow.pop %v3634
        %v3636 = vmul.f32 %v3575, 1.442695
        %v3637 = vpow.pop %v3636
        %v3638 = vmul.f32 %v3576, 1.442695
        %v3639 = vpow.pop %v3638
        %v3640 = vmul.f32 %v3577, 1.442695
        %v3641 = vpow.pop %v3640
        %v3642 = vadd.f32 %v3579, %v3581
        %3643 = vadd.xlane.f32.xlu0 %v3642
        %v3644 = vpop.xlane.xlu0 %3643
        %v3645 = vadd.f32 %v3583, %v3585
        %3646 = vadd.xlane.f32.xlu0 %v3645
        %v3647 = vpop.xlane.xlu0 %3646
        %v3648 = vadd.f32 %v3587, %v3589
        %3649 = vadd.xlane.f32.xlu0 %v3648
        %v3650 = vpop.xlane.xlu0 %3649
        %v3651 = vadd.f32 %v3591, %v3593
        %3652 = vadd.xlane.f32.xlu0 %v3651
        %v3653 = vpop.xlane.xlu0 %3652
        %v3654 = vadd.f32 %v3595, %v3597
        %3655 = vadd.xlane.f32.xlu0 %v3654
        %v3656 = vpop.xlane.xlu0 %3655
        %v3657 = vadd.f32 %v3599, %v3601
        %3658 = vadd.xlane.f32.xlu0 %v3657
        %v3659 = vpop.xlane.xlu0 %3658
        %v3660 = vadd.f32 %v3603, %v3605
        %3661 = vadd.xlane.f32.xlu0 %v3660
        %v3662 = vpop.xlane.xlu0 %3661
        %v3663 = vadd.f32 %v3607, %v3609
        %3664 = vadd.xlane.f32.xlu0 %v3663
        %v3665 = vpop.xlane.xlu0 %3664
        %v3666 = vadd.f32 %v3611, %v3613
        %3667 = vadd.xlane.f32.xlu0 %v3666
        %v3668 = vpop.xlane.xlu0 %3667
        %v3669 = vadd.f32 %v3615, %v3617
        %3670 = vadd.xlane.f32.xlu0 %v3669
        %v3671 = vpop.xlane.xlu0 %3670
        %v3672 = vadd.f32 %v3619, %v3621
        %3673 = vadd.xlane.f32.xlu0 %v3672
        %v3674 = vpop.xlane.xlu0 %3673
        %v3675 = vadd.f32 %v3623, %v3625
        %3676 = vadd.xlane.f32.xlu0 %v3675
        %v3677 = vpop.xlane.xlu0 %3676
        %v3678 = vadd.f32 %v3627, %v3629
        %3679 = vadd.xlane.f32.xlu0 %v3678
        %v3680 = vpop.xlane.xlu0 %3679
        %v3681 = vadd.f32 %v3631, %v3633
        %3682 = vadd.xlane.f32.xlu0 %v3681
        %v3683 = vpop.xlane.xlu0 %3682
        %v3684 = vadd.f32 %v3635, %v3637
        %3685 = vadd.xlane.f32.xlu0 %v3684
        %v3686 = vpop.xlane.xlu0 %3685
        %v3687 = vadd.f32 %v3639, %v3641
        %3688 = vadd.xlane.f32.xlu0 %v3687
        %v3689 = vpop.xlane.xlu0 %3688
        %v3690 = vrcp.pop %v3644
        %v3691 = vrcp.pop %v3647
        %v3692 = vrcp.pop %v3650
        %v3693 = vrcp.pop %v3653
        %v3694 = vrcp.pop %v3656
        %v3695 = vrcp.pop %v3659
        %v3696 = vrcp.pop %v3662
        %v3697 = vrcp.pop %v3665
        %v3698 = vrcp.pop %v3668
        %v3699 = vrcp.pop %v3671
        %v3700 = vrcp.pop %v3674
        %v3701 = vrcp.pop %v3677
        %v3702 = vrcp.pop %v3680
        %v3703 = vrcp.pop %v3683
        %v3704 = vrcp.pop %v3686
        %v3705 = vrcp.pop %v3689
        %v3706 = vmul.f32 %v3579, %v3690
        %v3707 = vmul.f32 %v3581, %v3690
        %v3708 = vmul.f32 %v3583, %v3691
        %v3709 = vmul.f32 %v3585, %v3691
        %v3710 = vmul.f32 %v3587, %v3692
        %v3711 = vmul.f32 %v3589, %v3692
        %v3712 = vmul.f32 %v3591, %v3693
        %v3713 = vmul.f32 %v3593, %v3693
        %v3714 = vmul.f32 %v3595, %v3694
        %v3715 = vmul.f32 %v3597, %v3694
        %v3716 = vmul.f32 %v3599, %v3695
        %v3717 = vmul.f32 %v3601, %v3695
        %v3718 = vmul.f32 %v3603, %v3696
        %v3719 = vmul.f32 %v3605, %v3696
        %v3720 = vmul.f32 %v3607, %v3697
        %v3721 = vmul.f32 %v3609, %v3697
        %v3722 = vmul.f32 %v3611, %v3698
        %v3723 = vmul.f32 %v3613, %v3698
        %v3724 = vmul.f32 %v3615, %v3699
        %v3725 = vmul.f32 %v3617, %v3699
        %v3726 = vmul.f32 %v3619, %v3700
        %v3727 = vmul.f32 %v3621, %v3700
        %v3728 = vmul.f32 %v3623, %v3701
        %v3729 = vmul.f32 %v3625, %v3701
        %v3730 = vmul.f32 %v3627, %v3702
        %v3731 = vmul.f32 %v3629, %v3702
        %v3732 = vmul.f32 %v3631, %v3703
        %v3733 = vmul.f32 %v3633, %v3703
        %v3734 = vmul.f32 %v3635, %v3704
        %v3735 = vmul.f32 %v3637, %v3704
        %v3736 = vmul.f32 %v3639, %v3705
        %v3737 = vmul.f32 %v3641, %v3705
        %v3738 = vmul.f32 %v3706, %v236
        %v3739 = vmul.f32 %v3707, %v237
        %v3740 = vmul.f32 %v3708, %v238
        %v3741 = vmul.f32 %v3709, %v239
        %v3742 = vmul.f32 %v3710, %v240
        %v3743 = vmul.f32 %v3711, %v241
        %v3744 = vmul.f32 %v3712, %v242
        %v3745 = vmul.f32 %v3713, %v243
        %v3746 = vmul.f32 %v3714, %v244
        %v3747 = vmul.f32 %v3715, %v245
        %v3748 = vmul.f32 %v3716, %v246
        %v3749 = vmul.f32 %v3717, %v247
        %v3750 = vmul.f32 %v3718, %v248
        %v3751 = vmul.f32 %v3719, %v249
        %v3752 = vmul.f32 %v3720, %v250
        %v3753 = vmul.f32 %v3721, %v251
        %v3754 = vmul.f32 %v3722, %v252
        %v3755 = vmul.f32 %v3723, %v253
        %v3756 = vmul.f32 %v3724, %v254
        %v3757 = vmul.f32 %v3725, %v255
        %v3758 = vmul.f32 %v3726, %v256
        %v3759 = vmul.f32 %v3727, %v257
        %v3760 = vmul.f32 %v3728, %v258
        %v3761 = vmul.f32 %v3729, %v259
        %v3762 = vmul.f32 %v3730, %v260
        %v3763 = vmul.f32 %v3731, %v261
        %v3764 = vmul.f32 %v3732, %v262
        %v3765 = vmul.f32 %v3733, %v263
        %v3766 = vmul.f32 %v3734, %v264
        %v3767 = vmul.f32 %v3735, %v265
        %v3768 = vmul.f32 %v3736, %v266
        %v3769 = vmul.f32 %v3737, %v267
        %v3770 = vadd.f32 %v3738, %v3739
        %3771 = vadd.xlane.f32.xlu0 %v3770
        %v3772 = vpop.xlane.xlu0 %3771
        %v3773 = vadd.f32 %v3740, %v3741
        %3774 = vadd.xlane.f32.xlu0 %v3773
        %v3775 = vpop.xlane.xlu0 %3774
        %v3776 = vadd.f32 %v3742, %v3743
        %3777 = vadd.xlane.f32.xlu0 %v3776
        %v3778 = vpop.xlane.xlu0 %3777
        %v3779 = vadd.f32 %v3744, %v3745
        %3780 = vadd.xlane.f32.xlu0 %v3779
        %v3781 = vpop.xlane.xlu0 %3780
        %v3782 = vadd.f32 %v3746, %v3747
        %3783 = vadd.xlane.f32.xlu0 %v3782
        %v3784 = vpop.xlane.xlu0 %3783
        %v3785 = vadd.f32 %v3748, %v3749
        %3786 = vadd.xlane.f32.xlu0 %v3785
        %v3787 = vpop.xlane.xlu0 %3786
        %v3788 = vadd.f32 %v3750, %v3751
        %3789 = vadd.xlane.f32.xlu0 %v3788
        %v3790 = vpop.xlane.xlu0 %3789
        %v3791 = vadd.f32 %v3752, %v3753
        %3792 = vadd.xlane.f32.xlu0 %v3791
        %v3793 = vpop.xlane.xlu0 %3792
        %v3794 = vadd.f32 %v3754, %v3755
        %3795 = vadd.xlane.f32.xlu0 %v3794
        %v3796 = vpop.xlane.xlu0 %3795
        %v3797 = vadd.f32 %v3756, %v3757
        %3798 = vadd.xlane.f32.xlu0 %v3797
        %v3799 = vpop.xlane.xlu0 %3798
        %v3800 = vadd.f32 %v3758, %v3759
        %3801 = vadd.xlane.f32.xlu0 %v3800
        %v3802 = vpop.xlane.xlu0 %3801
        %v3803 = vadd.f32 %v3760, %v3761
        %3804 = vadd.xlane.f32.xlu0 %v3803
        %v3805 = vpop.xlane.xlu0 %3804
        %v3806 = vadd.f32 %v3762, %v3763
        %3807 = vadd.xlane.f32.xlu0 %v3806
        %v3808 = vpop.xlane.xlu0 %3807
        %v3809 = vadd.f32 %v3764, %v3765
        %3810 = vadd.xlane.f32.xlu0 %v3809
        %v3811 = vpop.xlane.xlu0 %3810
        %v3812 = vadd.f32 %v3766, %v3767
        %3813 = vadd.xlane.f32.xlu0 %v3812
        %v3814 = vpop.xlane.xlu0 %3813
        %v3815 = vadd.f32 %v3768, %v3769
        %3816 = vadd.xlane.f32.xlu0 %v3815
        %v3817 = vpop.xlane.xlu0 %3816
        %v3834 = vlaneseq
        %v3835 = vand.u32 %v3834, 127
        %v3836 = vperm.slane %v3772, %v3835
        %v3837 = vadd.s32 %v3835, 4294967288
        %v3838 = vperm.slane %v3775, %v3837
        %vm3839 = vcmask 130112
        %v3840 = vsel %vm3839, %v3838, %v3836
        %v3841 = vadd.s32 %v3835, 4294967280
        %v3842 = vperm.slane %v3778, %v3841
        %vm3843 = vcmask 195712
        %v3844 = vsel %vm3843, %v3842, %v3840
        %v3845 = vadd.s32 %v3835, 4294967272
        %v3846 = vperm.slane %v3781, %v3845
        %vm3847 = vcmask 261312
        %v3848 = vsel %vm3847, %v3846, %v3844
        %v3849 = vadd.s32 %v3835, 4294967264
        %v3850 = vperm.slane %v3784, %v3849
        %vm3851 = vcmask 326912
        %v3852 = vsel %vm3851, %v3850, %v3848
        %v3853 = vadd.s32 %v3835, 4294967256
        %v3854 = vperm.slane %v3787, %v3853
        %vm3855 = vcmask 392512
        %v3856 = vsel %vm3855, %v3854, %v3852
        %v3857 = vadd.s32 %v3835, 4294967248
        %v3858 = vperm.slane %v3790, %v3857
        %vm3859 = vcmask 458112
        %v3860 = vsel %vm3859, %v3858, %v3856
        %v3861 = vadd.s32 %v3835, 4294967240
        %v3862 = vperm.slane %v3793, %v3861
        %vm3863 = vcmask 523712
        %v3864 = vsel %vm3863, %v3862, %v3860
        %v3865 = vadd.s32 %v3835, 4294967232
        %v3866 = vperm.slane %v3796, %v3865
        %vm3867 = vcmask 589312
        %v3868 = vsel %vm3867, %v3866, %v3864
        %v3869 = vadd.s32 %v3835, 4294967224
        %v3870 = vperm.slane %v3799, %v3869
        %vm3871 = vcmask 654912
        %v3872 = vsel %vm3871, %v3870, %v3868
        %v3873 = vadd.s32 %v3835, 4294967216
        %v3874 = vperm.slane %v3802, %v3873
        %vm3875 = vcmask 720512
        %v3876 = vsel %vm3875, %v3874, %v3872
        %v3877 = vadd.s32 %v3835, 4294967208
        %v3878 = vperm.slane %v3805, %v3877
        %vm3879 = vcmask 786112
        %v3880 = vsel %vm3879, %v3878, %v3876
        %v3881 = vadd.s32 %v3835, 4294967200
        %v3882 = vperm.slane %v3808, %v3881
        %vm3883 = vcmask 851712
        %v3884 = vsel %vm3883, %v3882, %v3880
        %v3885 = vadd.s32 %v3835, 4294967192
        %v3886 = vperm.slane %v3811, %v3885
        %vm3887 = vcmask 917312
        %v3888 = vsel %vm3887, %v3886, %v3884
        %v3889 = vadd.s32 %v3835, 4294967184
        %v3890 = vperm.slane %v3814, %v3889
        %vm3891 = vcmask 982912
        %v3892 = vsel %vm3891, %v3890, %v3888
        %v3893 = vadd.s32 %v3835, 4294967176
        %v3894 = vperm.slane %v3817, %v3893
        %vm3895 = vcmask 1048512
        %v3896 = vsel %vm3895, %v3894, %v3892
        %3898 = vst [vmem:[%s231] sm:$0x1] %v3896
        %v3899 = vld [vmem:[%s334] sm:$0xff]
        %v3900 = vld [vmem:[%s334 + $0x8] sm:$0xff]
        %v3901 = vld [vmem:[%s334 + $0x10] sm:$0xff]
        %v3902 = vld [vmem:[%s334 + $0x18] sm:$0xff]
        %v3903 = vld [vmem:[%s334 + $0x20] sm:$0xff]
        %v3904 = vld [vmem:[%s334 + $0x28] sm:$0xff]
        %v3905 = vld [vmem:[%s334 + $0x30] sm:$0xff]
        %v3906 = vld [vmem:[%s334 + $0x38] sm:$0xff]
        %v3907 = vld [vmem:[%s334 + $0x40] sm:$0xff]
        %v3908 = vld [vmem:[%s334 + $0x48] sm:$0xff]
        %v3909 = vld [vmem:[%s334 + $0x50] sm:$0xff]
        %v3910 = vld [vmem:[%s334 + $0x58] sm:$0xff]
        %v3911 = vld [vmem:[%s334 + $0x60] sm:$0xff]
        %v3912 = vld [vmem:[%s334 + $0x68] sm:$0xff]
        %v3913 = vld [vmem:[%s334 + $0x70] sm:$0xff]
        %v3914 = vld [vmem:[%s334 + $0x78] sm:$0xff]
        %v3915 = vld [vmem:[%s334 + $0x80] sm:$0xff]
        %v3916 = vld [vmem:[%s334 + $0x88] sm:$0xff]
        %v3917 = vld [vmem:[%s334 + $0x90] sm:$0xff]
        %v3918 = vld [vmem:[%s334 + $0x98] sm:$0xff]
        %v3919 = vld [vmem:[%s334 + $0xa0] sm:$0xff]
        %v3920 = vld [vmem:[%s334 + $0xa8] sm:$0xff]
        %v3921 = vld [vmem:[%s334 + $0xb0] sm:$0xff]
        %v3922 = vld [vmem:[%s334 + $0xb8] sm:$0xff]
        %v3923 = vld [vmem:[%s334 + $0xc0] sm:$0xff]
        %v3924 = vld [vmem:[%s334 + $0xc8] sm:$0xff]
        %v3925 = vld [vmem:[%s334 + $0xd0] sm:$0xff]
        %v3926 = vld [vmem:[%s334 + $0xd8] sm:$0xff]
        %v3927 = vld [vmem:[%s334 + $0xe0] sm:$0xff]
        %v3928 = vld [vmem:[%s334 + $0xe8] sm:$0xff]
        %v3929 = vld [vmem:[%s334 + $0xf0] sm:$0xff]
        %v3930 = vld [vmem:[%s334 + $0xf8] sm:$0xff]
        %v3931 = vmul.f32 %v3706, %v3899
        %v3932 = vmul.f32 %v3707, %v3900
        %v3933 = vmul.f32 %v3708, %v3901
        %v3934 = vmul.f32 %v3709, %v3902
        %v3935 = vmul.f32 %v3710, %v3903
        %v3936 = vmul.f32 %v3711, %v3904
        %v3937 = vmul.f32 %v3712, %v3905
        %v3938 = vmul.f32 %v3713, %v3906
        %v3939 = vmul.f32 %v3714, %v3907
        %v3940 = vmul.f32 %v3715, %v3908
        %v3941 = vmul.f32 %v3716, %v3909
        %v3942 = vmul.f32 %v3717, %v3910
        %v3943 = vmul.f32 %v3718, %v3911
        %v3944 = vmul.f32 %v3719, %v3912
        %v3945 = vmul.f32 %v3720, %v3913
        %v3946 = vmul.f32 %v3721, %v3914
        %v3947 = vmul.f32 %v3722, %v3915
        %v3948 = vmul.f32 %v3723, %v3916
        %v3949 = vmul.f32 %v3724, %v3917
        %v3950 = vmul.f32 %v3725, %v3918
        %v3951 = vmul.f32 %v3726, %v3919
        %v3952 = vmul.f32 %v3727, %v3920
        %v3953 = vmul.f32 %v3728, %v3921
        %v3954 = vmul.f32 %v3729, %v3922
        %v3955 = vmul.f32 %v3730, %v3923
        %v3956 = vmul.f32 %v3731, %v3924
        %v3957 = vmul.f32 %v3732, %v3925
        %v3958 = vmul.f32 %v3733, %v3926
        %v3959 = vmul.f32 %v3734, %v3927
        %v3960 = vmul.f32 %v3735, %v3928
        %v3961 = vmul.f32 %v3736, %v3929
        %v3962 = vmul.f32 %v3737, %v3930
        %v3963 = vadd.f32 %v3931, %v3932
        %3964 = vadd.xlane.f32.xlu0 %v3963
        %v3965 = vpop.xlane.xlu0 %3964
        %v3966 = vadd.f32 %v3933, %v3934
        %3967 = vadd.xlane.f32.xlu0 %v3966
        %v3968 = vpop.xlane.xlu0 %3967
        %v3969 = vadd.f32 %v3935, %v3936
        %3970 = vadd.xlane.f32.xlu0 %v3969
        %v3971 = vpop.xlane.xlu0 %3970
        %v3972 = vadd.f32 %v3937, %v3938
        %3973 = vadd.xlane.f32.xlu0 %v3972
        %v3974 = vpop.xlane.xlu0 %3973
        %v3975 = vadd.f32 %v3939, %v3940
        %3976 = vadd.xlane.f32.xlu0 %v3975
        %v3977 = vpop.xlane.xlu0 %3976
        %v3978 = vadd.f32 %v3941, %v3942
        %3979 = vadd.xlane.f32.xlu0 %v3978
        %v3980 = vpop.xlane.xlu0 %3979
        %v3981 = vadd.f32 %v3943, %v3944
        %3982 = vadd.xlane.f32.xlu0 %v3981
        %v3983 = vpop.xlane.xlu0 %3982
        %v3984 = vadd.f32 %v3945, %v3946
        %3985 = vadd.xlane.f32.xlu0 %v3984
        %v3986 = vpop.xlane.xlu0 %3985
        %v3987 = vadd.f32 %v3947, %v3948
        %3988 = vadd.xlane.f32.xlu0 %v3987
        %v3989 = vpop.xlane.xlu0 %3988
        %v3990 = vadd.f32 %v3949, %v3950
        %3991 = vadd.xlane.f32.xlu0 %v3990
        %v3992 = vpop.xlane.xlu0 %3991
        %v3993 = vadd.f32 %v3951, %v3952
        %3994 = vadd.xlane.f32.xlu0 %v3993
        %v3995 = vpop.xlane.xlu0 %3994
        %v3996 = vadd.f32 %v3953, %v3954
        %3997 = vadd.xlane.f32.xlu0 %v3996
        %v3998 = vpop.xlane.xlu0 %3997
        %v3999 = vadd.f32 %v3955, %v3956
        %4000 = vadd.xlane.f32.xlu0 %v3999
        %v4001 = vpop.xlane.xlu0 %4000
        %v4002 = vadd.f32 %v3957, %v3958
        %4003 = vadd.xlane.f32.xlu0 %v4002
        %v4004 = vpop.xlane.xlu0 %4003
        %v4005 = vadd.f32 %v3959, %v3960
        %4006 = vadd.xlane.f32.xlu0 %v4005
        %v4007 = vpop.xlane.xlu0 %4006
        %v4008 = vadd.f32 %v3961, %v3962
        %4009 = vadd.xlane.f32.xlu0 %v4008
        %v4010 = vpop.xlane.xlu0 %4009
        %v4027 = vperm.slane %v3965, %v3835
        %v4028 = vperm.slane %v3968, %v3837
        %v4029 = vsel %vm3839, %v4028, %v4027
        %v4030 = vperm.slane %v3971, %v3841
        %v4031 = vsel %vm3843, %v4030, %v4029
        %v4032 = vperm.slane %v3974, %v3845
        %v4033 = vsel %vm3847, %v4032, %v4031
        %v4034 = vperm.slane %v3977, %v3849
        %v4035 = vsel %vm3851, %v4034, %v4033
        %v4036 = vperm.slane %v3980, %v3853
        %v4037 = vsel %vm3855, %v4036, %v4035
        %v4038 = vperm.slane %v3983, %v3857
        %v4039 = vsel %vm3859, %v4038, %v4037
        %v4040 = vperm.slane %v3986, %v3861
        %v4041 = vsel %vm3863, %v4040, %v4039
        %v4042 = vperm.slane %v3989, %v3865
        %v4043 = vsel %vm3867, %v4042, %v4041
        %v4044 = vperm.slane %v3992, %v3869
        %v4045 = vsel %vm3871, %v4044, %v4043
        %v4046 = vperm.slane %v3995, %v3873
        %v4047 = vsel %vm3875, %v4046, %v4045
        %v4048 = vperm.slane %v3998, %v3877
        %v4049 = vsel %vm3879, %v4048, %v4047
        %v4050 = vperm.slane %v4001, %v3881
        %v4051 = vsel %vm3883, %v4050, %v4049
        %v4052 = vperm.slane %v4004, %v3885
        %v4053 = vsel %vm3887, %v4052, %v4051
        %v4054 = vperm.slane %v4007, %v3889
        %v4055 = vsel %vm3891, %v4054, %v4053
        %v4056 = vperm.slane %v4010, %v3893
        %v4057 = vsel %vm3895, %v4056, %v4055
        %4059 = vst [vmem:[%s231 + $0x1] sm:$0x1] %v4057
        %v4060 = vld [vmem:[%s433] sm:$0xff]
        %v4061 = vld [vmem:[%s433 + $0x8] sm:$0xff]
        %v4062 = vld [vmem:[%s433 + $0x10] sm:$0xff]
        %v4063 = vld [vmem:[%s433 + $0x18] sm:$0xff]
        %v4064 = vld [vmem:[%s433 + $0x20] sm:$0xff]
        %v4065 = vld [vmem:[%s433 + $0x28] sm:$0xff]
        %v4066 = vld [vmem:[%s433 + $0x30] sm:$0xff]
        %v4067 = vld [vmem:[%s433 + $0x38] sm:$0xff]
        %v4068 = vld [vmem:[%s433 + $0x40] sm:$0xff]
        %v4069 = vld [vmem:[%s433 + $0x48] sm:$0xff]
        %v4070 = vld [vmem:[%s433 + $0x50] sm:$0xff]
        %v4071 = vld [vmem:[%s433 + $0x58] sm:$0xff]
        %v4072 = vld [vmem:[%s433 + $0x60] sm:$0xff]
        %v4073 = vld [vmem:[%s433 + $0x68] sm:$0xff]
        %v4074 = vld [vmem:[%s433 + $0x70] sm:$0xff]
        %v4075 = vld [vmem:[%s433 + $0x78] sm:$0xff]
        %v4076 = vld [vmem:[%s433 + $0x80] sm:$0xff]
        %v4077 = vld [vmem:[%s433 + $0x88] sm:$0xff]
        %v4078 = vld [vmem:[%s433 + $0x90] sm:$0xff]
        %v4079 = vld [vmem:[%s433 + $0x98] sm:$0xff]
        %v4080 = vld [vmem:[%s433 + $0xa0] sm:$0xff]
        %v4081 = vld [vmem:[%s433 + $0xa8] sm:$0xff]
        %v4082 = vld [vmem:[%s433 + $0xb0] sm:$0xff]
        %v4083 = vld [vmem:[%s433 + $0xb8] sm:$0xff]
        %v4084 = vld [vmem:[%s433 + $0xc0] sm:$0xff]
        %v4085 = vld [vmem:[%s433 + $0xc8] sm:$0xff]
        %v4086 = vld [vmem:[%s433 + $0xd0] sm:$0xff]
        %v4087 = vld [vmem:[%s433 + $0xd8] sm:$0xff]
        %v4088 = vld [vmem:[%s433 + $0xe0] sm:$0xff]
        %v4089 = vld [vmem:[%s433 + $0xe8] sm:$0xff]
        %v4090 = vld [vmem:[%s433 + $0xf0] sm:$0xff]
        %v4091 = vld [vmem:[%s433 + $0xf8] sm:$0xff]
        %v4092 = vmul.f32 %v3706, %v4060
        %v4093 = vmul.f32 %v3707, %v4061
        %v4094 = vmul.f32 %v3708, %v4062
        %v4095 = vmul.f32 %v3709, %v4063
        %v4096 = vmul.f32 %v3710, %v4064
        %v4097 = vmul.f32 %v3711, %v4065
        %v4098 = vmul.f32 %v3712, %v4066
        %v4099 = vmul.f32 %v3713, %v4067
        %v4100 = vmul.f32 %v3714, %v4068
        %v4101 = vmul.f32 %v3715, %v4069
        %v4102 = vmul.f32 %v3716, %v4070
        %v4103 = vmul.f32 %v3717, %v4071
        %v4104 = vmul.f32 %v3718, %v4072
        %v4105 = vmul.f32 %v3719, %v4073
        %v4106 = vmul.f32 %v3720, %v4074
        %v4107 = vmul.f32 %v3721, %v4075
        %v4108 = vmul.f32 %v3722, %v4076
        %v4109 = vmul.f32 %v3723, %v4077
        %v4110 = vmul.f32 %v3724, %v4078
        %v4111 = vmul.f32 %v3725, %v4079
        %v4112 = vmul.f32 %v3726, %v4080
        %v4113 = vmul.f32 %v3727, %v4081
        %v4114 = vmul.f32 %v3728, %v4082
        %v4115 = vmul.f32 %v3729, %v4083
        %v4116 = vmul.f32 %v3730, %v4084
        %v4117 = vmul.f32 %v3731, %v4085
        %v4118 = vmul.f32 %v3732, %v4086
        %v4119 = vmul.f32 %v3733, %v4087
        %v4120 = vmul.f32 %v3734, %v4088
        %v4121 = vmul.f32 %v3735, %v4089
        %v4122 = vmul.f32 %v3736, %v4090
        %v4123 = vmul.f32 %v3737, %v4091
        %v4124 = vadd.f32 %v4092, %v4093
        %4125 = vadd.xlane.f32.xlu0 %v4124
        %v4126 = vpop.xlane.xlu0 %4125
        %v4127 = vadd.f32 %v4094, %v4095
        %4128 = vadd.xlane.f32.xlu0 %v4127
        %v4129 = vpop.xlane.xlu0 %4128
        %v4130 = vadd.f32 %v4096, %v4097
        %4131 = vadd.xlane.f32.xlu0 %v4130
        %v4132 = vpop.xlane.xlu0 %4131
        %v4133 = vadd.f32 %v4098, %v4099
        %4134 = vadd.xlane.f32.xlu0 %v4133
        %v4135 = vpop.xlane.xlu0 %4134
        %v4136 = vadd.f32 %v4100, %v4101
        %4137 = vadd.xlane.f32.xlu0 %v4136
        %v4138 = vpop.xlane.xlu0 %4137
        %v4139 = vadd.f32 %v4102, %v4103
        %4140 = vadd.xlane.f32.xlu0 %v4139
        %v4141 = vpop.xlane.xlu0 %4140
        %v4142 = vadd.f32 %v4104, %v4105
        %4143 = vadd.xlane.f32.xlu0 %v4142
        %v4144 = vpop.xlane.xlu0 %4143
        %v4145 = vadd.f32 %v4106, %v4107
        %4146 = vadd.xlane.f32.xlu0 %v4145
        %v4147 = vpop.xlane.xlu0 %4146
        %v4148 = vadd.f32 %v4108, %v4109
        %4149 = vadd.xlane.f32.xlu0 %v4148
        %v4150 = vpop.xlane.xlu0 %4149
        %v4151 = vadd.f32 %v4110, %v4111
        %4152 = vadd.xlane.f32.xlu0 %v4151
        %v4153 = vpop.xlane.xlu0 %4152
        %v4154 = vadd.f32 %v4112, %v4113
        %4155 = vadd.xlane.f32.xlu0 %v4154
        %v4156 = vpop.xlane.xlu0 %4155
        %v4157 = vadd.f32 %v4114, %v4115
        %4158 = vadd.xlane.f32.xlu0 %v4157
        %v4159 = vpop.xlane.xlu0 %4158
        %v4160 = vadd.f32 %v4116, %v4117
        %4161 = vadd.xlane.f32.xlu0 %v4160
        %v4162 = vpop.xlane.xlu0 %4161
        %v4163 = vadd.f32 %v4118, %v4119
        %4164 = vadd.xlane.f32.xlu0 %v4163
        %v4165 = vpop.xlane.xlu0 %4164
        %v4166 = vadd.f32 %v4120, %v4121
        %4167 = vadd.xlane.f32.xlu0 %v4166
        %v4168 = vpop.xlane.xlu0 %4167
        %v4169 = vadd.f32 %v4122, %v4123
        %4170 = vadd.xlane.f32.xlu0 %v4169
        %v4171 = vpop.xlane.xlu0 %4170
        %v4188 = vperm.slane %v4126, %v3835
        %v4189 = vperm.slane %v4129, %v3837
        %v4190 = vsel %vm3839, %v4189, %v4188
        %v4191 = vperm.slane %v4132, %v3841
        %v4192 = vsel %vm3843, %v4191, %v4190
        %v4193 = vperm.slane %v4135, %v3845
        %v4194 = vsel %vm3847, %v4193, %v4192
        %v4195 = vperm.slane %v4138, %v3849
        %v4196 = vsel %vm3851, %v4195, %v4194
        %v4197 = vperm.slane %v4141, %v3853
        %v4198 = vsel %vm3855, %v4197, %v4196
        %v4199 = vperm.slane %v4144, %v3857
        %v4200 = vsel %vm3859, %v4199, %v4198
        %v4201 = vperm.slane %v4147, %v3861
        %v4202 = vsel %vm3863, %v4201, %v4200
        %v4203 = vperm.slane %v4150, %v3865
        %v4204 = vsel %vm3867, %v4203, %v4202
        %v4205 = vperm.slane %v4153, %v3869
        %v4206 = vsel %vm3871, %v4205, %v4204
        %v4207 = vperm.slane %v4156, %v3873
        %v4208 = vsel %vm3875, %v4207, %v4206
        %v4209 = vperm.slane %v4159, %v3877
        %v4210 = vsel %vm3879, %v4209, %v4208
        %v4211 = vperm.slane %v4162, %v3881
        %v4212 = vsel %vm3883, %v4211, %v4210
        %v4213 = vperm.slane %v4165, %v3885
        %v4214 = vsel %vm3887, %v4213, %v4212
        %v4215 = vperm.slane %v4168, %v3889
        %v4216 = vsel %vm3891, %v4215, %v4214
        %v4217 = vperm.slane %v4171, %v3893
        %v4218 = vsel %vm3895, %v4217, %v4216
        %4220 = vst [vmem:[%s231 + $0x2] sm:$0x1] %v4218
        %v4221 = vld [vmem:[%s532] sm:$0xff]
        %v4222 = vld [vmem:[%s532 + $0x8] sm:$0xff]
        %v4223 = vld [vmem:[%s532 + $0x10] sm:$0xff]
        %v4224 = vld [vmem:[%s532 + $0x18] sm:$0xff]
        %v4225 = vld [vmem:[%s532 + $0x20] sm:$0xff]
        %v4226 = vld [vmem:[%s532 + $0x28] sm:$0xff]
        %v4227 = vld [vmem:[%s532 + $0x30] sm:$0xff]
        %v4228 = vld [vmem:[%s532 + $0x38] sm:$0xff]
        %v4229 = vld [vmem:[%s532 + $0x40] sm:$0xff]
        %v4230 = vld [vmem:[%s532 + $0x48] sm:$0xff]
        %v4231 = vld [vmem:[%s532 + $0x50] sm:$0xff]
        %v4232 = vld [vmem:[%s532 + $0x58] sm:$0xff]
        %v4233 = vld [vmem:[%s532 + $0x60] sm:$0xff]
        %v4234 = vld [vmem:[%s532 + $0x68] sm:$0xff]
        %v4235 = vld [vmem:[%s532 + $0x70] sm:$0xff]
        %v4236 = vld [vmem:[%s532 + $0x78] sm:$0xff]
        %v4237 = vld [vmem:[%s532 + $0x80] sm:$0xff]
        %v4238 = vld [vmem:[%s532 + $0x88] sm:$0xff]
        %v4239 = vld [vmem:[%s532 + $0x90] sm:$0xff]
        %v4240 = vld [vmem:[%s532 + $0x98] sm:$0xff]
        %v4241 = vld [vmem:[%s532 + $0xa0] sm:$0xff]
        %v4242 = vld [vmem:[%s532 + $0xa8] sm:$0xff]
        %v4243 = vld [vmem:[%s532 + $0xb0] sm:$0xff]
        %v4244 = vld [vmem:[%s532 + $0xb8] sm:$0xff]
        %v4245 = vld [vmem:[%s532 + $0xc0] sm:$0xff]
        %v4246 = vld [vmem:[%s532 + $0xc8] sm:$0xff]
        %v4247 = vld [vmem:[%s532 + $0xd0] sm:$0xff]
        %v4248 = vld [vmem:[%s532 + $0xd8] sm:$0xff]
        %v4249 = vld [vmem:[%s532 + $0xe0] sm:$0xff]
        %v4250 = vld [vmem:[%s532 + $0xe8] sm:$0xff]
        %v4251 = vld [vmem:[%s532 + $0xf0] sm:$0xff]
        %v4252 = vld [vmem:[%s532 + $0xf8] sm:$0xff]
        %v4253 = vmul.f32 %v3706, %v4221
        %v4254 = vmul.f32 %v3707, %v4222
        %v4255 = vmul.f32 %v3708, %v4223
        %v4256 = vmul.f32 %v3709, %v4224
        %v4257 = vmul.f32 %v3710, %v4225
        %v4258 = vmul.f32 %v3711, %v4226
        %v4259 = vmul.f32 %v3712, %v4227
        %v4260 = vmul.f32 %v3713, %v4228
        %v4261 = vmul.f32 %v3714, %v4229
        %v4262 = vmul.f32 %v3715, %v4230
        %v4263 = vmul.f32 %v3716, %v4231
        %v4264 = vmul.f32 %v3717, %v4232
        %v4265 = vmul.f32 %v3718, %v4233
        %v4266 = vmul.f32 %v3719, %v4234
        %v4267 = vmul.f32 %v3720, %v4235
        %v4268 = vmul.f32 %v3721, %v4236
        %v4269 = vmul.f32 %v3722, %v4237
        %v4270 = vmul.f32 %v3723, %v4238
        %v4271 = vmul.f32 %v3724, %v4239
        %v4272 = vmul.f32 %v3725, %v4240
        %v4273 = vmul.f32 %v3726, %v4241
        %v4274 = vmul.f32 %v3727, %v4242
        %v4275 = vmul.f32 %v3728, %v4243
        %v4276 = vmul.f32 %v3729, %v4244
        %v4277 = vmul.f32 %v3730, %v4245
        %v4278 = vmul.f32 %v3731, %v4246
        %v4279 = vmul.f32 %v3732, %v4247
        %v4280 = vmul.f32 %v3733, %v4248
        %v4281 = vmul.f32 %v3734, %v4249
        %v4282 = vmul.f32 %v3735, %v4250
        %v4283 = vmul.f32 %v3736, %v4251
        %v4284 = vmul.f32 %v3737, %v4252
        %v4285 = vadd.f32 %v4253, %v4254
        %4286 = vadd.xlane.f32.xlu0 %v4285
        %v4287 = vpop.xlane.xlu0 %4286
        %v4288 = vadd.f32 %v4255, %v4256
        %4289 = vadd.xlane.f32.xlu0 %v4288
        %v4290 = vpop.xlane.xlu0 %4289
        %v4291 = vadd.f32 %v4257, %v4258
        %4292 = vadd.xlane.f32.xlu0 %v4291
        %v4293 = vpop.xlane.xlu0 %4292
        %v4294 = vadd.f32 %v4259, %v4260
        %4295 = vadd.xlane.f32.xlu0 %v4294
        %v4296 = vpop.xlane.xlu0 %4295
        %v4297 = vadd.f32 %v4261, %v4262
        %4298 = vadd.xlane.f32.xlu0 %v4297
        %v4299 = vpop.xlane.xlu0 %4298
        %v4300 = vadd.f32 %v4263, %v4264
        %4301 = vadd.xlane.f32.xlu0 %v4300
        %v4302 = vpop.xlane.xlu0 %4301
        %v4303 = vadd.f32 %v4265, %v4266
        %4304 = vadd.xlane.f32.xlu0 %v4303
        %v4305 = vpop.xlane.xlu0 %4304
        %v4306 = vadd.f32 %v4267, %v4268
        %4307 = vadd.xlane.f32.xlu0 %v4306
        %v4308 = vpop.xlane.xlu0 %4307
        %v4309 = vadd.f32 %v4269, %v4270
        %4310 = vadd.xlane.f32.xlu0 %v4309
        %v4311 = vpop.xlane.xlu0 %4310
        %v4312 = vadd.f32 %v4271, %v4272
        %4313 = vadd.xlane.f32.xlu0 %v4312
        %v4314 = vpop.xlane.xlu0 %4313
        %v4315 = vadd.f32 %v4273, %v4274
        %4316 = vadd.xlane.f32.xlu0 %v4315
        %v4317 = vpop.xlane.xlu0 %4316
        %v4318 = vadd.f32 %v4275, %v4276
        %4319 = vadd.xlane.f32.xlu0 %v4318
        %v4320 = vpop.xlane.xlu0 %4319
        %v4321 = vadd.f32 %v4277, %v4278
        %4322 = vadd.xlane.f32.xlu0 %v4321
        %v4323 = vpop.xlane.xlu0 %4322
        %v4324 = vadd.f32 %v4279, %v4280
        %4325 = vadd.xlane.f32.xlu0 %v4324
        %v4326 = vpop.xlane.xlu0 %4325
        %v4327 = vadd.f32 %v4281, %v4282
        %4328 = vadd.xlane.f32.xlu0 %v4327
        %v4329 = vpop.xlane.xlu0 %4328
        %v4330 = vadd.f32 %v4283, %v4284
        %4331 = vadd.xlane.f32.xlu0 %v4330
        %v4332 = vpop.xlane.xlu0 %4331
        %v4349 = vperm.slane %v4287, %v3835
        %v4350 = vperm.slane %v4290, %v3837
        %v4351 = vsel %vm3839, %v4350, %v4349
        %v4352 = vperm.slane %v4293, %v3841
        %v4353 = vsel %vm3843, %v4352, %v4351
        %v4354 = vperm.slane %v4296, %v3845
        %v4355 = vsel %vm3847, %v4354, %v4353
        %v4356 = vperm.slane %v4299, %v3849
        %v4357 = vsel %vm3851, %v4356, %v4355
        %v4358 = vperm.slane %v4302, %v3853
        %v4359 = vsel %vm3855, %v4358, %v4357
        %v4360 = vperm.slane %v4305, %v3857
        %v4361 = vsel %vm3859, %v4360, %v4359
        %v4362 = vperm.slane %v4308, %v3861
        %v4363 = vsel %vm3863, %v4362, %v4361
        %v4364 = vperm.slane %v4311, %v3865
        %v4365 = vsel %vm3867, %v4364, %v4363
        %v4366 = vperm.slane %v4314, %v3869
        %v4367 = vsel %vm3871, %v4366, %v4365
        %v4368 = vperm.slane %v4317, %v3873
        %v4369 = vsel %vm3875, %v4368, %v4367
        %v4370 = vperm.slane %v4320, %v3877
        %v4371 = vsel %vm3879, %v4370, %v4369
        %v4372 = vperm.slane %v4323, %v3881
        %v4373 = vsel %vm3883, %v4372, %v4371
        %v4374 = vperm.slane %v4326, %v3885
        %v4375 = vsel %vm3887, %v4374, %v4373
        %v4376 = vperm.slane %v4329, %v3889
        %v4377 = vsel %vm3891, %v4376, %v4375
        %v4378 = vperm.slane %v4332, %v3893
        %v4379 = vsel %vm3895, %v4378, %v4377
        %4381 = vst [vmem:[%s231 + $0x3] sm:$0x1] %v4379
        %v4382 = vld [vmem:[%s631] sm:$0xff]
        %v4383 = vld [vmem:[%s631 + $0x8] sm:$0xff]
        %v4384 = vld [vmem:[%s631 + $0x10] sm:$0xff]
        %v4385 = vld [vmem:[%s631 + $0x18] sm:$0xff]
        %v4386 = vld [vmem:[%s631 + $0x20] sm:$0xff]
        %v4387 = vld [vmem:[%s631 + $0x28] sm:$0xff]
        %v4388 = vld [vmem:[%s631 + $0x30] sm:$0xff]
        %v4389 = vld [vmem:[%s631 + $0x38] sm:$0xff]
        %v4390 = vld [vmem:[%s631 + $0x40] sm:$0xff]
        %v4391 = vld [vmem:[%s631 + $0x48] sm:$0xff]
        %v4392 = vld [vmem:[%s631 + $0x50] sm:$0xff]
        %v4393 = vld [vmem:[%s631 + $0x58] sm:$0xff]
        %v4394 = vld [vmem:[%s631 + $0x60] sm:$0xff]
        %v4395 = vld [vmem:[%s631 + $0x68] sm:$0xff]
        %v4396 = vld [vmem:[%s631 + $0x70] sm:$0xff]
        %v4397 = vld [vmem:[%s631 + $0x78] sm:$0xff]
        %v4398 = vld [vmem:[%s631 + $0x80] sm:$0xff]
        %v4399 = vld [vmem:[%s631 + $0x88] sm:$0xff]
        %v4400 = vld [vmem:[%s631 + $0x90] sm:$0xff]
        %v4401 = vld [vmem:[%s631 + $0x98] sm:$0xff]
        %v4402 = vld [vmem:[%s631 + $0xa0] sm:$0xff]
        %v4403 = vld [vmem:[%s631 + $0xa8] sm:$0xff]
        %v4404 = vld [vmem:[%s631 + $0xb0] sm:$0xff]
        %v4405 = vld [vmem:[%s631 + $0xb8] sm:$0xff]
        %v4406 = vld [vmem:[%s631 + $0xc0] sm:$0xff]
        %v4407 = vld [vmem:[%s631 + $0xc8] sm:$0xff]
        %v4408 = vld [vmem:[%s631 + $0xd0] sm:$0xff]
        %v4409 = vld [vmem:[%s631 + $0xd8] sm:$0xff]
        %v4410 = vld [vmem:[%s631 + $0xe0] sm:$0xff]
        %v4411 = vld [vmem:[%s631 + $0xe8] sm:$0xff]
        %v4412 = vld [vmem:[%s631 + $0xf0] sm:$0xff]
        %v4413 = vld [vmem:[%s631 + $0xf8] sm:$0xff]
        %v4414 = vmul.f32 %v3706, %v4382
        %v4415 = vmul.f32 %v3707, %v4383
        %v4416 = vmul.f32 %v3708, %v4384
        %v4417 = vmul.f32 %v3709, %v4385
        %v4418 = vmul.f32 %v3710, %v4386
        %v4419 = vmul.f32 %v3711, %v4387
        %v4420 = vmul.f32 %v3712, %v4388
        %v4421 = vmul.f32 %v3713, %v4389
        %v4422 = vmul.f32 %v3714, %v4390
        %v4423 = vmul.f32 %v3715, %v4391
        %v4424 = vmul.f32 %v3716, %v4392
        %v4425 = vmul.f32 %v3717, %v4393
        %v4426 = vmul.f32 %v3718, %v4394
        %v4427 = vmul.f32 %v3719, %v4395
        %v4428 = vmul.f32 %v3720, %v4396
        %v4429 = vmul.f32 %v3721, %v4397
        %v4430 = vmul.f32 %v3722, %v4398
        %v4431 = vmul.f32 %v3723, %v4399
        %v4432 = vmul.f32 %v3724, %v4400
        %v4433 = vmul.f32 %v3725, %v4401
        %v4434 = vmul.f32 %v3726, %v4402
        %v4435 = vmul.f32 %v3727, %v4403
        %v4436 = vmul.f32 %v3728, %v4404
        %v4437 = vmul.f32 %v3729, %v4405
        %v4438 = vmul.f32 %v3730, %v4406
        %v4439 = vmul.f32 %v3731, %v4407
        %v4440 = vmul.f32 %v3732, %v4408
        %v4441 = vmul.f32 %v3733, %v4409
        %v4442 = vmul.f32 %v3734, %v4410
        %v4443 = vmul.f32 %v3735, %v4411
        %v4444 = vmul.f32 %v3736, %v4412
        %v4445 = vmul.f32 %v3737, %v4413
        %v4446 = vadd.f32 %v4414, %v4415
        %4447 = vadd.xlane.f32.xlu0 %v4446
        %v4448 = vpop.xlane.xlu0 %4447
        %v4449 = vadd.f32 %v4416, %v4417
        %4450 = vadd.xlane.f32.xlu0 %v4449
        %v4451 = vpop.xlane.xlu0 %4450
        %v4452 = vadd.f32 %v4418, %v4419
        %4453 = vadd.xlane.f32.xlu0 %v4452
        %v4454 = vpop.xlane.xlu0 %4453
        %v4455 = vadd.f32 %v4420, %v4421
        %4456 = vadd.xlane.f32.xlu0 %v4455
        %v4457 = vpop.xlane.xlu0 %4456
        %v4458 = vadd.f32 %v4422, %v4423
        %4459 = vadd.xlane.f32.xlu0 %v4458
        %v4460 = vpop.xlane.xlu0 %4459
        %v4461 = vadd.f32 %v4424, %v4425
        %4462 = vadd.xlane.f32.xlu0 %v4461
        %v4463 = vpop.xlane.xlu0 %4462
        %v4464 = vadd.f32 %v4426, %v4427
        %4465 = vadd.xlane.f32.xlu0 %v4464
        %v4466 = vpop.xlane.xlu0 %4465
        %v4467 = vadd.f32 %v4428, %v4429
        %4468 = vadd.xlane.f32.xlu0 %v4467
        %v4469 = vpop.xlane.xlu0 %4468
        %v4470 = vadd.f32 %v4430, %v4431
        %4471 = vadd.xlane.f32.xlu0 %v4470
        %v4472 = vpop.xlane.xlu0 %4471
        %v4473 = vadd.f32 %v4432, %v4433
        %4474 = vadd.xlane.f32.xlu0 %v4473
        %v4475 = vpop.xlane.xlu0 %4474
        %v4476 = vadd.f32 %v4434, %v4435
        %4477 = vadd.xlane.f32.xlu0 %v4476
        %v4478 = vpop.xlane.xlu0 %4477
        %v4479 = vadd.f32 %v4436, %v4437
        %4480 = vadd.xlane.f32.xlu0 %v4479
        %v4481 = vpop.xlane.xlu0 %4480
        %v4482 = vadd.f32 %v4438, %v4439
        %4483 = vadd.xlane.f32.xlu0 %v4482
        %v4484 = vpop.xlane.xlu0 %4483
        %v4485 = vadd.f32 %v4440, %v4441
        %4486 = vadd.xlane.f32.xlu0 %v4485
        %v4487 = vpop.xlane.xlu0 %4486
        %v4488 = vadd.f32 %v4442, %v4443
        %4489 = vadd.xlane.f32.xlu0 %v4488
        %v4490 = vpop.xlane.xlu0 %4489
        %v4491 = vadd.f32 %v4444, %v4445
        %4492 = vadd.xlane.f32.xlu0 %v4491
        %v4493 = vpop.xlane.xlu0 %4492
        %v4510 = vperm.slane %v4448, %v3835
        %v4511 = vperm.slane %v4451, %v3837
        %v4512 = vsel %vm3839, %v4511, %v4510
        %v4513 = vperm.slane %v4454, %v3841
        %v4514 = vsel %vm3843, %v4513, %v4512
        %v4515 = vperm.slane %v4457, %v3845
        %v4516 = vsel %vm3847, %v4515, %v4514
        %v4517 = vperm.slane %v4460, %v3849
        %v4518 = vsel %vm3851, %v4517, %v4516
        %v4519 = vperm.slane %v4463, %v3853
        %v4520 = vsel %vm3855, %v4519, %v4518
        %v4521 = vperm.slane %v4466, %v3857
        %v4522 = vsel %vm3859, %v4521, %v4520
        %v4523 = vperm.slane %v4469, %v3861
        %v4524 = vsel %vm3863, %v4523, %v4522
        %v4525 = vperm.slane %v4472, %v3865
        %v4526 = vsel %vm3867, %v4525, %v4524
        %v4527 = vperm.slane %v4475, %v3869
        %v4528 = vsel %vm3871, %v4527, %v4526
        %v4529 = vperm.slane %v4478, %v3873
        %v4530 = vsel %vm3875, %v4529, %v4528
        %v4531 = vperm.slane %v4481, %v3877
        %v4532 = vsel %vm3879, %v4531, %v4530
        %v4533 = vperm.slane %v4484, %v3881
        %v4534 = vsel %vm3883, %v4533, %v4532
        %v4535 = vperm.slane %v4487, %v3885
        %v4536 = vsel %vm3887, %v4535, %v4534
        %v4537 = vperm.slane %v4490, %v3889
        %v4538 = vsel %vm3891, %v4537, %v4536
        %v4539 = vperm.slane %v4493, %v3893
        %v4540 = vsel %vm3895, %v4539, %v4538
        %4542 = vst [vmem:[%s231 + $0x4] sm:$0x1] %v4540
        %v4543 = vld [vmem:[%s730] sm:$0xff]
        %v4544 = vld [vmem:[%s730 + $0x8] sm:$0xff]
        %v4545 = vld [vmem:[%s730 + $0x10] sm:$0xff]
        %v4546 = vld [vmem:[%s730 + $0x18] sm:$0xff]
        %v4547 = vld [vmem:[%s730 + $0x20] sm:$0xff]
        %v4548 = vld [vmem:[%s730 + $0x28] sm:$0xff]
        %v4549 = vld [vmem:[%s730 + $0x30] sm:$0xff]
        %v4550 = vld [vmem:[%s730 + $0x38] sm:$0xff]
        %v4551 = vld [vmem:[%s730 + $0x40] sm:$0xff]
        %v4552 = vld [vmem:[%s730 + $0x48] sm:$0xff]
        %v4553 = vld [vmem:[%s730 + $0x50] sm:$0xff]
        %v4554 = vld [vmem:[%s730 + $0x58] sm:$0xff]
        %v4555 = vld [vmem:[%s730 + $0x60] sm:$0xff]
        %v4556 = vld [vmem:[%s730 + $0x68] sm:$0xff]
        %v4557 = vld [vmem:[%s730 + $0x70] sm:$0xff]
        %v4558 = vld [vmem:[%s730 + $0x78] sm:$0xff]
        %v4559 = vld [vmem:[%s730 + $0x80] sm:$0xff]
        %v4560 = vld [vmem:[%s730 + $0x88] sm:$0xff]
        %v4561 = vld [vmem:[%s730 + $0x90] sm:$0xff]
        %v4562 = vld [vmem:[%s730 + $0x98] sm:$0xff]
        %v4563 = vld [vmem:[%s730 + $0xa0] sm:$0xff]
        %v4564 = vld [vmem:[%s730 + $0xa8] sm:$0xff]
        %v4565 = vld [vmem:[%s730 + $0xb0] sm:$0xff]
        %v4566 = vld [vmem:[%s730 + $0xb8] sm:$0xff]
        %v4567 = vld [vmem:[%s730 + $0xc0] sm:$0xff]
        %v4568 = vld [vmem:[%s730 + $0xc8] sm:$0xff]
        %v4569 = vld [vmem:[%s730 + $0xd0] sm:$0xff]
        %v4570 = vld [vmem:[%s730 + $0xd8] sm:$0xff]
        %v4571 = vld [vmem:[%s730 + $0xe0] sm:$0xff]
        %v4572 = vld [vmem:[%s730 + $0xe8] sm:$0xff]
        %v4573 = vld [vmem:[%s730 + $0xf0] sm:$0xff]
        %v4574 = vld [vmem:[%s730 + $0xf8] sm:$0xff]
        %v4575 = vmul.f32 %v3706, %v4543
        %v4576 = vmul.f32 %v3707, %v4544
        %v4577 = vmul.f32 %v3708, %v4545
        %v4578 = vmul.f32 %v3709, %v4546
        %v4579 = vmul.f32 %v3710, %v4547
        %v4580 = vmul.f32 %v3711, %v4548
        %v4581 = vmul.f32 %v3712, %v4549
        %v4582 = vmul.f32 %v3713, %v4550
        %v4583 = vmul.f32 %v3714, %v4551
        %v4584 = vmul.f32 %v3715, %v4552
        %v4585 = vmul.f32 %v3716, %v4553
        %v4586 = vmul.f32 %v3717, %v4554
        %v4587 = vmul.f32 %v3718, %v4555
        %v4588 = vmul.f32 %v3719, %v4556
        %v4589 = vmul.f32 %v3720, %v4557
        %v4590 = vmul.f32 %v3721, %v4558
        %v4591 = vmul.f32 %v3722, %v4559
        %v4592 = vmul.f32 %v3723, %v4560
        %v4593 = vmul.f32 %v3724, %v4561
        %v4594 = vmul.f32 %v3725, %v4562
        %v4595 = vmul.f32 %v3726, %v4563
        %v4596 = vmul.f32 %v3727, %v4564
        %v4597 = vmul.f32 %v3728, %v4565
        %v4598 = vmul.f32 %v3729, %v4566
        %v4599 = vmul.f32 %v3730, %v4567
        %v4600 = vmul.f32 %v3731, %v4568
        %v4601 = vmul.f32 %v3732, %v4569
        %v4602 = vmul.f32 %v3733, %v4570
        %v4603 = vmul.f32 %v3734, %v4571
        %v4604 = vmul.f32 %v3735, %v4572
        %v4605 = vmul.f32 %v3736, %v4573
        %v4606 = vmul.f32 %v3737, %v4574
        %v4607 = vadd.f32 %v4575, %v4576
        %4608 = vadd.xlane.f32.xlu0 %v4607
        %v4609 = vpop.xlane.xlu0 %4608
        %v4610 = vadd.f32 %v4577, %v4578
        %4611 = vadd.xlane.f32.xlu0 %v4610
        %v4612 = vpop.xlane.xlu0 %4611
        %v4613 = vadd.f32 %v4579, %v4580
        %4614 = vadd.xlane.f32.xlu0 %v4613
        %v4615 = vpop.xlane.xlu0 %4614
        %v4616 = vadd.f32 %v4581, %v4582
        %4617 = vadd.xlane.f32.xlu0 %v4616
        %v4618 = vpop.xlane.xlu0 %4617
        %v4619 = vadd.f32 %v4583, %v4584
        %4620 = vadd.xlane.f32.xlu0 %v4619
        %v4621 = vpop.xlane.xlu0 %4620
        %v4622 = vadd.f32 %v4585, %v4586
        %4623 = vadd.xlane.f32.xlu0 %v4622
        %v4624 = vpop.xlane.xlu0 %4623
        %v4625 = vadd.f32 %v4587, %v4588
        %4626 = vadd.xlane.f32.xlu0 %v4625
        %v4627 = vpop.xlane.xlu0 %4626
        %v4628 = vadd.f32 %v4589, %v4590
        %4629 = vadd.xlane.f32.xlu0 %v4628
        %v4630 = vpop.xlane.xlu0 %4629
        %v4631 = vadd.f32 %v4591, %v4592
        %4632 = vadd.xlane.f32.xlu0 %v4631
        %v4633 = vpop.xlane.xlu0 %4632
        %v4634 = vadd.f32 %v4593, %v4594
        %4635 = vadd.xlane.f32.xlu0 %v4634
        %v4636 = vpop.xlane.xlu0 %4635
        %v4637 = vadd.f32 %v4595, %v4596
        %4638 = vadd.xlane.f32.xlu0 %v4637
        %v4639 = vpop.xlane.xlu0 %4638
        %v4640 = vadd.f32 %v4597, %v4598
        %4641 = vadd.xlane.f32.xlu0 %v4640
        %v4642 = vpop.xlane.xlu0 %4641
        %v4643 = vadd.f32 %v4599, %v4600
        %4644 = vadd.xlane.f32.xlu0 %v4643
        %v4645 = vpop.xlane.xlu0 %4644
        %v4646 = vadd.f32 %v4601, %v4602
        %4647 = vadd.xlane.f32.xlu0 %v4646
        %v4648 = vpop.xlane.xlu0 %4647
        %v4649 = vadd.f32 %v4603, %v4604
        %4650 = vadd.xlane.f32.xlu0 %v4649
        %v4651 = vpop.xlane.xlu0 %4650
        %v4652 = vadd.f32 %v4605, %v4606
        %4653 = vadd.xlane.f32.xlu0 %v4652
        %v4654 = vpop.xlane.xlu0 %4653
        %v4671 = vperm.slane %v4609, %v3835
        %v4672 = vperm.slane %v4612, %v3837
        %v4673 = vsel %vm3839, %v4672, %v4671
        %v4674 = vperm.slane %v4615, %v3841
        %v4675 = vsel %vm3843, %v4674, %v4673
        %v4676 = vperm.slane %v4618, %v3845
        %v4677 = vsel %vm3847, %v4676, %v4675
        %v4678 = vperm.slane %v4621, %v3849
        %v4679 = vsel %vm3851, %v4678, %v4677
        %v4680 = vperm.slane %v4624, %v3853
        %v4681 = vsel %vm3855, %v4680, %v4679
        %v4682 = vperm.slane %v4627, %v3857
        %v4683 = vsel %vm3859, %v4682, %v4681
        %v4684 = vperm.slane %v4630, %v3861
        %v4685 = vsel %vm3863, %v4684, %v4683
        %v4686 = vperm.slane %v4633, %v3865
        %v4687 = vsel %vm3867, %v4686, %v4685
        %v4688 = vperm.slane %v4636, %v3869
        %v4689 = vsel %vm3871, %v4688, %v4687
        %v4690 = vperm.slane %v4639, %v3873
        %v4691 = vsel %vm3875, %v4690, %v4689
        %v4692 = vperm.slane %v4642, %v3877
        %v4693 = vsel %vm3879, %v4692, %v4691
        %v4694 = vperm.slane %v4645, %v3881
        %v4695 = vsel %vm3883, %v4694, %v4693
        %v4696 = vperm.slane %v4648, %v3885
        %v4697 = vsel %vm3887, %v4696, %v4695
        %v4698 = vperm.slane %v4651, %v3889
        %v4699 = vsel %vm3891, %v4698, %v4697
        %v4700 = vperm.slane %v4654, %v3893
        %v4701 = vsel %vm3895, %v4700, %v4699
        %4703 = vst [vmem:[%s231 + $0x5] sm:$0x1] %v4701
        %v4704 = vld [vmem:[%s829] sm:$0xff]
        %v4705 = vld [vmem:[%s829 + $0x8] sm:$0xff]
        %v4706 = vld [vmem:[%s829 + $0x10] sm:$0xff]
        %v4707 = vld [vmem:[%s829 + $0x18] sm:$0xff]
        %v4708 = vld [vmem:[%s829 + $0x20] sm:$0xff]
        %v4709 = vld [vmem:[%s829 + $0x28] sm:$0xff]
        %v4710 = vld [vmem:[%s829 + $0x30] sm:$0xff]
        %v4711 = vld [vmem:[%s829 + $0x38] sm:$0xff]
        %v4712 = vld [vmem:[%s829 + $0x40] sm:$0xff]
        %v4713 = vld [vmem:[%s829 + $0x48] sm:$0xff]
        %v4714 = vld [vmem:[%s829 + $0x50] sm:$0xff]
        %v4715 = vld [vmem:[%s829 + $0x58] sm:$0xff]
        %v4716 = vld [vmem:[%s829 + $0x60] sm:$0xff]
        %v4717 = vld [vmem:[%s829 + $0x68] sm:$0xff]
        %v4718 = vld [vmem:[%s829 + $0x70] sm:$0xff]
        %v4719 = vld [vmem:[%s829 + $0x78] sm:$0xff]
        %v4720 = vld [vmem:[%s829 + $0x80] sm:$0xff]
        %v4721 = vld [vmem:[%s829 + $0x88] sm:$0xff]
        %v4722 = vld [vmem:[%s829 + $0x90] sm:$0xff]
        %v4723 = vld [vmem:[%s829 + $0x98] sm:$0xff]
        %v4724 = vld [vmem:[%s829 + $0xa0] sm:$0xff]
        %v4725 = vld [vmem:[%s829 + $0xa8] sm:$0xff]
        %v4726 = vld [vmem:[%s829 + $0xb0] sm:$0xff]
        %v4727 = vld [vmem:[%s829 + $0xb8] sm:$0xff]
        %v4728 = vld [vmem:[%s829 + $0xc0] sm:$0xff]
        %v4729 = vld [vmem:[%s829 + $0xc8] sm:$0xff]
        %v4730 = vld [vmem:[%s829 + $0xd0] sm:$0xff]
        %v4731 = vld [vmem:[%s829 + $0xd8] sm:$0xff]
        %v4732 = vld [vmem:[%s829 + $0xe0] sm:$0xff]
        %v4733 = vld [vmem:[%s829 + $0xe8] sm:$0xff]
        %v4734 = vld [vmem:[%s829 + $0xf0] sm:$0xff]
        %v4735 = vld [vmem:[%s829 + $0xf8] sm:$0xff]
        %v4736 = vmul.f32 %v3706, %v4704
        %v4737 = vmul.f32 %v3707, %v4705
        %v4738 = vmul.f32 %v3708, %v4706
        %v4739 = vmul.f32 %v3709, %v4707
        %v4740 = vmul.f32 %v3710, %v4708
        %v4741 = vmul.f32 %v3711, %v4709
        %v4742 = vmul.f32 %v3712, %v4710
        %v4743 = vmul.f32 %v3713, %v4711
        %v4744 = vmul.f32 %v3714, %v4712
        %v4745 = vmul.f32 %v3715, %v4713
        %v4746 = vmul.f32 %v3716, %v4714
        %v4747 = vmul.f32 %v3717, %v4715
        %v4748 = vmul.f32 %v3718, %v4716
        %v4749 = vmul.f32 %v3719, %v4717
        %v4750 = vmul.f32 %v3720, %v4718
        %v4751 = vmul.f32 %v3721, %v4719
        %v4752 = vmul.f32 %v3722, %v4720
        %v4753 = vmul.f32 %v3723, %v4721
        %v4754 = vmul.f32 %v3724, %v4722
        %v4755 = vmul.f32 %v3725, %v4723
        %v4756 = vmul.f32 %v3726, %v4724
        %v4757 = vmul.f32 %v3727, %v4725
        %v4758 = vmul.f32 %v3728, %v4726
        %v4759 = vmul.f32 %v3729, %v4727
        %v4760 = vmul.f32 %v3730, %v4728
        %v4761 = vmul.f32 %v3731, %v4729
        %v4762 = vmul.f32 %v3732, %v4730
        %v4763 = vmul.f32 %v3733, %v4731
        %v4764 = vmul.f32 %v3734, %v4732
        %v4765 = vmul.f32 %v3735, %v4733
        %v4766 = vmul.f32 %v3736, %v4734
        %v4767 = vmul.f32 %v3737, %v4735
        %v4768 = vadd.f32 %v4736, %v4737
        %4769 = vadd.xlane.f32.xlu0 %v4768
        %v4770 = vpop.xlane.xlu0 %4769
        %v4771 = vadd.f32 %v4738, %v4739
        %4772 = vadd.xlane.f32.xlu0 %v4771
        %v4773 = vpop.xlane.xlu0 %4772
        %v4774 = vadd.f32 %v4740, %v4741
        %4775 = vadd.xlane.f32.xlu0 %v4774
        %v4776 = vpop.xlane.xlu0 %4775
        %v4777 = vadd.f32 %v4742, %v4743
        %4778 = vadd.xlane.f32.xlu0 %v4777
        %v4779 = vpop.xlane.xlu0 %4778
        %v4780 = vadd.f32 %v4744, %v4745
        %4781 = vadd.xlane.f32.xlu0 %v4780
        %v4782 = vpop.xlane.xlu0 %4781
        %v4783 = vadd.f32 %v4746, %v4747
        %4784 = vadd.xlane.f32.xlu0 %v4783
        %v4785 = vpop.xlane.xlu0 %4784
        %v4786 = vadd.f32 %v4748, %v4749
        %4787 = vadd.xlane.f32.xlu0 %v4786
        %v4788 = vpop.xlane.xlu0 %4787
        %v4789 = vadd.f32 %v4750, %v4751
        %4790 = vadd.xlane.f32.xlu0 %v4789
        %v4791 = vpop.xlane.xlu0 %4790
        %v4792 = vadd.f32 %v4752, %v4753
        %4793 = vadd.xlane.f32.xlu0 %v4792
        %v4794 = vpop.xlane.xlu0 %4793
        %v4795 = vadd.f32 %v4754, %v4755
        %4796 = vadd.xlane.f32.xlu0 %v4795
        %v4797 = vpop.xlane.xlu0 %4796
        %v4798 = vadd.f32 %v4756, %v4757
        %4799 = vadd.xlane.f32.xlu0 %v4798
        %v4800 = vpop.xlane.xlu0 %4799
        %v4801 = vadd.f32 %v4758, %v4759
        %4802 = vadd.xlane.f32.xlu0 %v4801
        %v4803 = vpop.xlane.xlu0 %4802
        %v4804 = vadd.f32 %v4760, %v4761
        %4805 = vadd.xlane.f32.xlu0 %v4804
        %v4806 = vpop.xlane.xlu0 %4805
        %v4807 = vadd.f32 %v4762, %v4763
        %4808 = vadd.xlane.f32.xlu0 %v4807
        %v4809 = vpop.xlane.xlu0 %4808
        %v4810 = vadd.f32 %v4764, %v4765
        %4811 = vadd.xlane.f32.xlu0 %v4810
        %v4812 = vpop.xlane.xlu0 %4811
        %v4813 = vadd.f32 %v4766, %v4767
        %4814 = vadd.xlane.f32.xlu0 %v4813
        %v4815 = vpop.xlane.xlu0 %4814
        %v4832 = vperm.slane %v4770, %v3835
        %v4833 = vperm.slane %v4773, %v3837
        %v4834 = vsel %vm3839, %v4833, %v4832
        %v4835 = vperm.slane %v4776, %v3841
        %v4836 = vsel %vm3843, %v4835, %v4834
        %v4837 = vperm.slane %v4779, %v3845
        %v4838 = vsel %vm3847, %v4837, %v4836
        %v4839 = vperm.slane %v4782, %v3849
        %v4840 = vsel %vm3851, %v4839, %v4838
        %v4841 = vperm.slane %v4785, %v3853
        %v4842 = vsel %vm3855, %v4841, %v4840
        %v4843 = vperm.slane %v4788, %v3857
        %v4844 = vsel %vm3859, %v4843, %v4842
        %v4845 = vperm.slane %v4791, %v3861
        %v4846 = vsel %vm3863, %v4845, %v4844
        %v4847 = vperm.slane %v4794, %v3865
        %v4848 = vsel %vm3867, %v4847, %v4846
        %v4849 = vperm.slane %v4797, %v3869
        %v4850 = vsel %vm3871, %v4849, %v4848
        %v4851 = vperm.slane %v4800, %v3873
        %v4852 = vsel %vm3875, %v4851, %v4850
        %v4853 = vperm.slane %v4803, %v3877
        %v4854 = vsel %vm3879, %v4853, %v4852
        %v4855 = vperm.slane %v4806, %v3881
        %v4856 = vsel %vm3883, %v4855, %v4854
        %v4857 = vperm.slane %v4809, %v3885
        %v4858 = vsel %vm3887, %v4857, %v4856
        %v4859 = vperm.slane %v4812, %v3889
        %v4860 = vsel %vm3891, %v4859, %v4858
        %v4861 = vperm.slane %v4815, %v3893
        %v4862 = vsel %vm3895, %v4861, %v4860
        %4864 = vst [vmem:[%s231 + $0x6] sm:$0x1] %v4862
        %v4865 = vld [vmem:[%s928] sm:$0xff]
        %v4866 = vld [vmem:[%s928 + $0x8] sm:$0xff]
        %v4867 = vld [vmem:[%s928 + $0x10] sm:$0xff]
        %v4868 = vld [vmem:[%s928 + $0x18] sm:$0xff]
        %v4869 = vld [vmem:[%s928 + $0x20] sm:$0xff]
        %v4870 = vld [vmem:[%s928 + $0x28] sm:$0xff]
        %v4871 = vld [vmem:[%s928 + $0x30] sm:$0xff]
        %v4872 = vld [vmem:[%s928 + $0x38] sm:$0xff]
        %v4873 = vld [vmem:[%s928 + $0x40] sm:$0xff]
        %v4874 = vld [vmem:[%s928 + $0x48] sm:$0xff]
        %v4875 = vld [vmem:[%s928 + $0x50] sm:$0xff]
        %v4876 = vld [vmem:[%s928 + $0x58] sm:$0xff]
        %v4877 = vld [vmem:[%s928 + $0x60] sm:$0xff]
        %v4878 = vld [vmem:[%s928 + $0x68] sm:$0xff]
        %v4879 = vld [vmem:[%s928 + $0x70] sm:$0xff]
        %v4880 = vld [vmem:[%s928 + $0x78] sm:$0xff]
        %v4881 = vld [vmem:[%s928 + $0x80] sm:$0xff]
        %v4882 = vld [vmem:[%s928 + $0x88] sm:$0xff]
        %v4883 = vld [vmem:[%s928 + $0x90] sm:$0xff]
        %v4884 = vld [vmem:[%s928 + $0x98] sm:$0xff]
        %v4885 = vld [vmem:[%s928 + $0xa0] sm:$0xff]
        %v4886 = vld [vmem:[%s928 + $0xa8] sm:$0xff]
        %v4887 = vld [vmem:[%s928 + $0xb0] sm:$0xff]
        %v4888 = vld [vmem:[%s928 + $0xb8] sm:$0xff]
        %v4889 = vld [vmem:[%s928 + $0xc0] sm:$0xff]
        %v4890 = vld [vmem:[%s928 + $0xc8] sm:$0xff]
        %v4891 = vld [vmem:[%s928 + $0xd0] sm:$0xff]
        %v4892 = vld [vmem:[%s928 + $0xd8] sm:$0xff]
        %v4893 = vld [vmem:[%s928 + $0xe0] sm:$0xff]
        %v4894 = vld [vmem:[%s928 + $0xe8] sm:$0xff]
        %v4895 = vld [vmem:[%s928 + $0xf0] sm:$0xff]
        %v4896 = vld [vmem:[%s928 + $0xf8] sm:$0xff]
        %v4897 = vmul.f32 %v3706, %v4865
        %v4898 = vmul.f32 %v3707, %v4866
        %v4899 = vmul.f32 %v3708, %v4867
        %v4900 = vmul.f32 %v3709, %v4868
        %v4901 = vmul.f32 %v3710, %v4869
        %v4902 = vmul.f32 %v3711, %v4870
        %v4903 = vmul.f32 %v3712, %v4871
        %v4904 = vmul.f32 %v3713, %v4872
        %v4905 = vmul.f32 %v3714, %v4873
        %v4906 = vmul.f32 %v3715, %v4874
        %v4907 = vmul.f32 %v3716, %v4875
        %v4908 = vmul.f32 %v3717, %v4876
        %v4909 = vmul.f32 %v3718, %v4877
        %v4910 = vmul.f32 %v3719, %v4878
        %v4911 = vmul.f32 %v3720, %v4879
        %v4912 = vmul.f32 %v3721, %v4880
        %v4913 = vmul.f32 %v3722, %v4881
        %v4914 = vmul.f32 %v3723, %v4882
        %v4915 = vmul.f32 %v3724, %v4883
        %v4916 = vmul.f32 %v3725, %v4884
        %v4917 = vmul.f32 %v3726, %v4885
        %v4918 = vmul.f32 %v3727, %v4886
        %v4919 = vmul.f32 %v3728, %v4887
        %v4920 = vmul.f32 %v3729, %v4888
        %v4921 = vmul.f32 %v3730, %v4889
        %v4922 = vmul.f32 %v3731, %v4890
        %v4923 = vmul.f32 %v3732, %v4891
        %v4924 = vmul.f32 %v3733, %v4892
        %v4925 = vmul.f32 %v3734, %v4893
        %v4926 = vmul.f32 %v3735, %v4894
        %v4927 = vmul.f32 %v3736, %v4895
        %v4928 = vmul.f32 %v3737, %v4896
        %v4929 = vadd.f32 %v4897, %v4898
        %4930 = vadd.xlane.f32.xlu0 %v4929
        %v4931 = vpop.xlane.xlu0 %4930
        %v4932 = vadd.f32 %v4899, %v4900
        %4933 = vadd.xlane.f32.xlu0 %v4932
        %v4934 = vpop.xlane.xlu0 %4933
        %v4935 = vadd.f32 %v4901, %v4902
        %4936 = vadd.xlane.f32.xlu0 %v4935
        %v4937 = vpop.xlane.xlu0 %4936
        %v4938 = vadd.f32 %v4903, %v4904
        %4939 = vadd.xlane.f32.xlu0 %v4938
        %v4940 = vpop.xlane.xlu0 %4939
        %v4941 = vadd.f32 %v4905, %v4906
        %4942 = vadd.xlane.f32.xlu0 %v4941
        %v4943 = vpop.xlane.xlu0 %4942
        %v4944 = vadd.f32 %v4907, %v4908
        %4945 = vadd.xlane.f32.xlu0 %v4944
        %v4946 = vpop.xlane.xlu0 %4945
        %v4947 = vadd.f32 %v4909, %v4910
        %4948 = vadd.xlane.f32.xlu0 %v4947
        %v4949 = vpop.xlane.xlu0 %4948
        %v4950 = vadd.f32 %v4911, %v4912
        %4951 = vadd.xlane.f32.xlu0 %v4950
        %v4952 = vpop.xlane.xlu0 %4951
        %v4953 = vadd.f32 %v4913, %v4914
        %4954 = vadd.xlane.f32.xlu0 %v4953
        %v4955 = vpop.xlane.xlu0 %4954
        %v4956 = vadd.f32 %v4915, %v4916
        %4957 = vadd.xlane.f32.xlu0 %v4956
        %v4958 = vpop.xlane.xlu0 %4957
        %v4959 = vadd.f32 %v4917, %v4918
        %4960 = vadd.xlane.f32.xlu0 %v4959
        %v4961 = vpop.xlane.xlu0 %4960
        %v4962 = vadd.f32 %v4919, %v4920
        %4963 = vadd.xlane.f32.xlu0 %v4962
        %v4964 = vpop.xlane.xlu0 %4963
        %v4965 = vadd.f32 %v4921, %v4922
        %4966 = vadd.xlane.f32.xlu0 %v4965
        %v4967 = vpop.xlane.xlu0 %4966
        %v4968 = vadd.f32 %v4923, %v4924
        %4969 = vadd.xlane.f32.xlu0 %v4968
        %v4970 = vpop.xlane.xlu0 %4969
        %v4971 = vadd.f32 %v4925, %v4926
        %4972 = vadd.xlane.f32.xlu0 %v4971
        %v4973 = vpop.xlane.xlu0 %4972
        %v4974 = vadd.f32 %v4927, %v4928
        %4975 = vadd.xlane.f32.xlu0 %v4974
        %v4976 = vpop.xlane.xlu0 %4975
        %v4993 = vperm.slane %v4931, %v3835
        %v4994 = vperm.slane %v4934, %v3837
        %v4995 = vsel %vm3839, %v4994, %v4993
        %v4996 = vperm.slane %v4937, %v3841
        %v4997 = vsel %vm3843, %v4996, %v4995
        %v4998 = vperm.slane %v4940, %v3845
        %v4999 = vsel %vm3847, %v4998, %v4997
        %v5000 = vperm.slane %v4943, %v3849
        %v5001 = vsel %vm3851, %v5000, %v4999
        %v5002 = vperm.slane %v4946, %v3853
        %v5003 = vsel %vm3855, %v5002, %v5001
        %v5004 = vperm.slane %v4949, %v3857
        %v5005 = vsel %vm3859, %v5004, %v5003
        %v5006 = vperm.slane %v4952, %v3861
        %v5007 = vsel %vm3863, %v5006, %v5005
        %v5008 = vperm.slane %v4955, %v3865
        %v5009 = vsel %vm3867, %v5008, %v5007
        %v5010 = vperm.slane %v4958, %v3869
        %v5011 = vsel %vm3871, %v5010, %v5009
        %v5012 = vperm.slane %v4961, %v3873
        %v5013 = vsel %vm3875, %v5012, %v5011
        %v5014 = vperm.slane %v4964, %v3877
        %v5015 = vsel %vm3879, %v5014, %v5013
        %v5016 = vperm.slane %v4967, %v3881
        %v5017 = vsel %vm3883, %v5016, %v5015
        %v5018 = vperm.slane %v4970, %v3885
        %v5019 = vsel %vm3887, %v5018, %v5017
        %v5020 = vperm.slane %v4973, %v3889
        %v5021 = vsel %vm3891, %v5020, %v5019
        %v5022 = vperm.slane %v4976, %v3893
        %v5023 = vsel %vm3895, %v5022, %v5021
        %5025 = vst [vmem:[%s231 + $0x7] sm:$0x1] %v5023
        %v5026 = vld [vmem:[%s1027] sm:$0xff]
        %v5027 = vld [vmem:[%s1027 + $0x8] sm:$0xff]
        %v5028 = vld [vmem:[%s1027 + $0x10] sm:$0xff]
        %v5029 = vld [vmem:[%s1027 + $0x18] sm:$0xff]
        %v5030 = vld [vmem:[%s1027 + $0x20] sm:$0xff]
        %v5031 = vld [vmem:[%s1027 + $0x28] sm:$0xff]
        %v5032 = vld [vmem:[%s1027 + $0x30] sm:$0xff]
        %v5033 = vld [vmem:[%s1027 + $0x38] sm:$0xff]
        %v5034 = vld [vmem:[%s1027 + $0x40] sm:$0xff]
        %v5035 = vld [vmem:[%s1027 + $0x48] sm:$0xff]
        %v5036 = vld [vmem:[%s1027 + $0x50] sm:$0xff]
        %v5037 = vld [vmem:[%s1027 + $0x58] sm:$0xff]
        %v5038 = vld [vmem:[%s1027 + $0x60] sm:$0xff]
        %v5039 = vld [vmem:[%s1027 + $0x68] sm:$0xff]
        %v5040 = vld [vmem:[%s1027 + $0x70] sm:$0xff]
        %v5041 = vld [vmem:[%s1027 + $0x78] sm:$0xff]
        %v5042 = vld [vmem:[%s1027 + $0x80] sm:$0xff]
        %v5043 = vld [vmem:[%s1027 + $0x88] sm:$0xff]
        %v5044 = vld [vmem:[%s1027 + $0x90] sm:$0xff]
        %v5045 = vld [vmem:[%s1027 + $0x98] sm:$0xff]
        %v5046 = vld [vmem:[%s1027 + $0xa0] sm:$0xff]
        %v5047 = vld [vmem:[%s1027 + $0xa8] sm:$0xff]
        %v5048 = vld [vmem:[%s1027 + $0xb0] sm:$0xff]
        %v5049 = vld [vmem:[%s1027 + $0xb8] sm:$0xff]
        %v5050 = vld [vmem:[%s1027 + $0xc0] sm:$0xff]
        %v5051 = vld [vmem:[%s1027 + $0xc8] sm:$0xff]
        %v5052 = vld [vmem:[%s1027 + $0xd0] sm:$0xff]
        %v5053 = vld [vmem:[%s1027 + $0xd8] sm:$0xff]
        %v5054 = vld [vmem:[%s1027 + $0xe0] sm:$0xff]
        %v5055 = vld [vmem:[%s1027 + $0xe8] sm:$0xff]
        %v5056 = vld [vmem:[%s1027 + $0xf0] sm:$0xff]
        %v5057 = vld [vmem:[%s1027 + $0xf8] sm:$0xff]
        %v5058 = vmul.f32 %v3706, %v5026
        %v5059 = vmul.f32 %v3707, %v5027
        %v5060 = vmul.f32 %v3708, %v5028
        %v5061 = vmul.f32 %v3709, %v5029
        %v5062 = vmul.f32 %v3710, %v5030
        %v5063 = vmul.f32 %v3711, %v5031
        %v5064 = vmul.f32 %v3712, %v5032
        %v5065 = vmul.f32 %v3713, %v5033
        %v5066 = vmul.f32 %v3714, %v5034
        %v5067 = vmul.f32 %v3715, %v5035
        %v5068 = vmul.f32 %v3716, %v5036
        %v5069 = vmul.f32 %v3717, %v5037
        %v5070 = vmul.f32 %v3718, %v5038
        %v5071 = vmul.f32 %v3719, %v5039
        %v5072 = vmul.f32 %v3720, %v5040
        %v5073 = vmul.f32 %v3721, %v5041
        %v5074 = vmul.f32 %v3722, %v5042
        %v5075 = vmul.f32 %v3723, %v5043
        %v5076 = vmul.f32 %v3724, %v5044
        %v5077 = vmul.f32 %v3725, %v5045
        %v5078 = vmul.f32 %v3726, %v5046
        %v5079 = vmul.f32 %v3727, %v5047
        %v5080 = vmul.f32 %v3728, %v5048
        %v5081 = vmul.f32 %v3729, %v5049
        %v5082 = vmul.f32 %v3730, %v5050
        %v5083 = vmul.f32 %v3731, %v5051
        %v5084 = vmul.f32 %v3732, %v5052
        %v5085 = vmul.f32 %v3733, %v5053
        %v5086 = vmul.f32 %v3734, %v5054
        %v5087 = vmul.f32 %v3735, %v5055
        %v5088 = vmul.f32 %v3736, %v5056
        %v5089 = vmul.f32 %v3737, %v5057
        %v5090 = vadd.f32 %v5058, %v5059
        %5091 = vadd.xlane.f32.xlu0 %v5090
        %v5092 = vpop.xlane.xlu0 %5091
        %v5093 = vadd.f32 %v5060, %v5061
        %5094 = vadd.xlane.f32.xlu0 %v5093
        %v5095 = vpop.xlane.xlu0 %5094
        %v5096 = vadd.f32 %v5062, %v5063
        %5097 = vadd.xlane.f32.xlu0 %v5096
        %v5098 = vpop.xlane.xlu0 %5097
        %v5099 = vadd.f32 %v5064, %v5065
        %5100 = vadd.xlane.f32.xlu0 %v5099
        %v5101 = vpop.xlane.xlu0 %5100
        %v5102 = vadd.f32 %v5066, %v5067
        %5103 = vadd.xlane.f32.xlu0 %v5102
        %v5104 = vpop.xlane.xlu0 %5103
        %v5105 = vadd.f32 %v5068, %v5069
        %5106 = vadd.xlane.f32.xlu0 %v5105
        %v5107 = vpop.xlane.xlu0 %5106
        %v5108 = vadd.f32 %v5070, %v5071
        %5109 = vadd.xlane.f32.xlu0 %v5108
        %v5110 = vpop.xlane.xlu0 %5109
        %v5111 = vadd.f32 %v5072, %v5073
        %5112 = vadd.xlane.f32.xlu0 %v5111
        %v5113 = vpop.xlane.xlu0 %5112
        %v5114 = vadd.f32 %v5074, %v5075
        %5115 = vadd.xlane.f32.xlu0 %v5114
        %v5116 = vpop.xlane.xlu0 %5115
        %v5117 = vadd.f32 %v5076, %v5077
        %5118 = vadd.xlane.f32.xlu0 %v5117
        %v5119 = vpop.xlane.xlu0 %5118
        %v5120 = vadd.f32 %v5078, %v5079
        %5121 = vadd.xlane.f32.xlu0 %v5120
        %v5122 = vpop.xlane.xlu0 %5121
        %v5123 = vadd.f32 %v5080, %v5081
        %5124 = vadd.xlane.f32.xlu0 %v5123
        %v5125 = vpop.xlane.xlu0 %5124
        %v5126 = vadd.f32 %v5082, %v5083
        %5127 = vadd.xlane.f32.xlu0 %v5126
        %v5128 = vpop.xlane.xlu0 %5127
        %v5129 = vadd.f32 %v5084, %v5085
        %5130 = vadd.xlane.f32.xlu0 %v5129
        %v5131 = vpop.xlane.xlu0 %5130
        %v5132 = vadd.f32 %v5086, %v5087
        %5133 = vadd.xlane.f32.xlu0 %v5132
        %v5134 = vpop.xlane.xlu0 %5133
        %v5135 = vadd.f32 %v5088, %v5089
        %5136 = vadd.xlane.f32.xlu0 %v5135
        %v5137 = vpop.xlane.xlu0 %5136
        %v5154 = vperm.slane %v5092, %v3835
        %v5155 = vperm.slane %v5095, %v3837
        %v5156 = vsel %vm3839, %v5155, %v5154
        %v5157 = vperm.slane %v5098, %v3841
        %v5158 = vsel %vm3843, %v5157, %v5156
        %v5159 = vperm.slane %v5101, %v3845
        %v5160 = vsel %vm3847, %v5159, %v5158
        %v5161 = vperm.slane %v5104, %v3849
        %v5162 = vsel %vm3851, %v5161, %v5160
        %v5163 = vperm.slane %v5107, %v3853
        %v5164 = vsel %vm3855, %v5163, %v5162
        %v5165 = vperm.slane %v5110, %v3857
        %v5166 = vsel %vm3859, %v5165, %v5164
        %v5167 = vperm.slane %v5113, %v3861
        %v5168 = vsel %vm3863, %v5167, %v5166
        %v5169 = vperm.slane %v5116, %v3865
        %v5170 = vsel %vm3867, %v5169, %v5168
        %v5171 = vperm.slane %v5119, %v3869
        %v5172 = vsel %vm3871, %v5171, %v5170
        %v5173 = vperm.slane %v5122, %v3873
        %v5174 = vsel %vm3875, %v5173, %v5172
        %v5175 = vperm.slane %v5125, %v3877
        %v5176 = vsel %vm3879, %v5175, %v5174
        %v5177 = vperm.slane %v5128, %v3881
        %v5178 = vsel %vm3883, %v5177, %v5176
        %v5179 = vperm.slane %v5131, %v3885
        %v5180 = vsel %vm3887, %v5179, %v5178
        %v5181 = vperm.slane %v5134, %v3889
        %v5182 = vsel %vm3891, %v5181, %v5180
        %v5183 = vperm.slane %v5137, %v3893
        %v5184 = vsel %vm3895, %v5183, %v5182
        %5186 = vst [vmem:[%s231 + $0x8] sm:$0x1] %v5184
        %v5187 = vld [vmem:[%s1126] sm:$0xff]
        %v5188 = vld [vmem:[%s1126 + $0x8] sm:$0xff]
        %v5189 = vld [vmem:[%s1126 + $0x10] sm:$0xff]
        %v5190 = vld [vmem:[%s1126 + $0x18] sm:$0xff]
        %v5191 = vld [vmem:[%s1126 + $0x20] sm:$0xff]
        %v5192 = vld [vmem:[%s1126 + $0x28] sm:$0xff]
        %v5193 = vld [vmem:[%s1126 + $0x30] sm:$0xff]
        %v5194 = vld [vmem:[%s1126 + $0x38] sm:$0xff]
        %v5195 = vld [vmem:[%s1126 + $0x40] sm:$0xff]
        %v5196 = vld [vmem:[%s1126 + $0x48] sm:$0xff]
        %v5197 = vld [vmem:[%s1126 + $0x50] sm:$0xff]
        %v5198 = vld [vmem:[%s1126 + $0x58] sm:$0xff]
        %v5199 = vld [vmem:[%s1126 + $0x60] sm:$0xff]
        %v5200 = vld [vmem:[%s1126 + $0x68] sm:$0xff]
        %v5201 = vld [vmem:[%s1126 + $0x70] sm:$0xff]
        %v5202 = vld [vmem:[%s1126 + $0x78] sm:$0xff]
        %v5203 = vld [vmem:[%s1126 + $0x80] sm:$0xff]
        %v5204 = vld [vmem:[%s1126 + $0x88] sm:$0xff]
        %v5205 = vld [vmem:[%s1126 + $0x90] sm:$0xff]
        %v5206 = vld [vmem:[%s1126 + $0x98] sm:$0xff]
        %v5207 = vld [vmem:[%s1126 + $0xa0] sm:$0xff]
        %v5208 = vld [vmem:[%s1126 + $0xa8] sm:$0xff]
        %v5209 = vld [vmem:[%s1126 + $0xb0] sm:$0xff]
        %v5210 = vld [vmem:[%s1126 + $0xb8] sm:$0xff]
        %v5211 = vld [vmem:[%s1126 + $0xc0] sm:$0xff]
        %v5212 = vld [vmem:[%s1126 + $0xc8] sm:$0xff]
        %v5213 = vld [vmem:[%s1126 + $0xd0] sm:$0xff]
        %v5214 = vld [vmem:[%s1126 + $0xd8] sm:$0xff]
        %v5215 = vld [vmem:[%s1126 + $0xe0] sm:$0xff]
        %v5216 = vld [vmem:[%s1126 + $0xe8] sm:$0xff]
        %v5217 = vld [vmem:[%s1126 + $0xf0] sm:$0xff]
        %v5218 = vld [vmem:[%s1126 + $0xf8] sm:$0xff]
        %v5219 = vmul.f32 %v3706, %v5187
        %v5220 = vmul.f32 %v3707, %v5188
        %v5221 = vmul.f32 %v3708, %v5189
        %v5222 = vmul.f32 %v3709, %v5190
        %v5223 = vmul.f32 %v3710, %v5191
        %v5224 = vmul.f32 %v3711, %v5192
        %v5225 = vmul.f32 %v3712, %v5193
        %v5226 = vmul.f32 %v3713, %v5194
        %v5227 = vmul.f32 %v3714, %v5195
        %v5228 = vmul.f32 %v3715, %v5196
        %v5229 = vmul.f32 %v3716, %v5197
        %v5230 = vmul.f32 %v3717, %v5198
        %v5231 = vmul.f32 %v3718, %v5199
        %v5232 = vmul.f32 %v3719, %v5200
        %v5233 = vmul.f32 %v3720, %v5201
        %v5234 = vmul.f32 %v3721, %v5202
        %v5235 = vmul.f32 %v3722, %v5203
        %v5236 = vmul.f32 %v3723, %v5204
        %v5237 = vmul.f32 %v3724, %v5205
        %v5238 = vmul.f32 %v3725, %v5206
        %v5239 = vmul.f32 %v3726, %v5207
        %v5240 = vmul.f32 %v3727, %v5208
        %v5241 = vmul.f32 %v3728, %v5209
        %v5242 = vmul.f32 %v3729, %v5210
        %v5243 = vmul.f32 %v3730, %v5211
        %v5244 = vmul.f32 %v3731, %v5212
        %v5245 = vmul.f32 %v3732, %v5213
        %v5246 = vmul.f32 %v3733, %v5214
        %v5247 = vmul.f32 %v3734, %v5215
        %v5248 = vmul.f32 %v3735, %v5216
        %v5249 = vmul.f32 %v3736, %v5217
        %v5250 = vmul.f32 %v3737, %v5218
        %v5251 = vadd.f32 %v5219, %v5220
        %5252 = vadd.xlane.f32.xlu0 %v5251
        %v5253 = vpop.xlane.xlu0 %5252
        %v5254 = vadd.f32 %v5221, %v5222
        %5255 = vadd.xlane.f32.xlu0 %v5254
        %v5256 = vpop.xlane.xlu0 %5255
        %v5257 = vadd.f32 %v5223, %v5224
        %5258 = vadd.xlane.f32.xlu0 %v5257
        %v5259 = vpop.xlane.xlu0 %5258
        %v5260 = vadd.f32 %v5225, %v5226
        %5261 = vadd.xlane.f32.xlu0 %v5260
        %v5262 = vpop.xlane.xlu0 %5261
        %v5263 = vadd.f32 %v5227, %v5228
        %5264 = vadd.xlane.f32.xlu0 %v5263
        %v5265 = vpop.xlane.xlu0 %5264
        %v5266 = vadd.f32 %v5229, %v5230
        %5267 = vadd.xlane.f32.xlu0 %v5266
        %v5268 = vpop.xlane.xlu0 %5267
        %v5269 = vadd.f32 %v5231, %v5232
        %5270 = vadd.xlane.f32.xlu0 %v5269
        %v5271 = vpop.xlane.xlu0 %5270
        %v5272 = vadd.f32 %v5233, %v5234
        %5273 = vadd.xlane.f32.xlu0 %v5272
        %v5274 = vpop.xlane.xlu0 %5273
        %v5275 = vadd.f32 %v5235, %v5236
        %5276 = vadd.xlane.f32.xlu0 %v5275
        %v5277 = vpop.xlane.xlu0 %5276
        %v5278 = vadd.f32 %v5237, %v5238
        %5279 = vadd.xlane.f32.xlu0 %v5278
        %v5280 = vpop.xlane.xlu0 %5279
        %v5281 = vadd.f32 %v5239, %v5240
        %5282 = vadd.xlane.f32.xlu0 %v5281
        %v5283 = vpop.xlane.xlu0 %5282
        %v5284 = vadd.f32 %v5241, %v5242
        %5285 = vadd.xlane.f32.xlu0 %v5284
        %v5286 = vpop.xlane.xlu0 %5285
        %v5287 = vadd.f32 %v5243, %v5244
        %5288 = vadd.xlane.f32.xlu0 %v5287
        %v5289 = vpop.xlane.xlu0 %5288
        %v5290 = vadd.f32 %v5245, %v5246
        %5291 = vadd.xlane.f32.xlu0 %v5290
        %v5292 = vpop.xlane.xlu0 %5291
        %v5293 = vadd.f32 %v5247, %v5248
        %5294 = vadd.xlane.f32.xlu0 %v5293
        %v5295 = vpop.xlane.xlu0 %5294
        %v5296 = vadd.f32 %v5249, %v5250
        %5297 = vadd.xlane.f32.xlu0 %v5296
        %v5298 = vpop.xlane.xlu0 %5297
        %v5315 = vperm.slane %v5253, %v3835
        %v5316 = vperm.slane %v5256, %v3837
        %v5317 = vsel %vm3839, %v5316, %v5315
        %v5318 = vperm.slane %v5259, %v3841
        %v5319 = vsel %vm3843, %v5318, %v5317
        %v5320 = vperm.slane %v5262, %v3845
        %v5321 = vsel %vm3847, %v5320, %v5319
        %v5322 = vperm.slane %v5265, %v3849
        %v5323 = vsel %vm3851, %v5322, %v5321
        %v5324 = vperm.slane %v5268, %v3853
        %v5325 = vsel %vm3855, %v5324, %v5323
        %v5326 = vperm.slane %v5271, %v3857
        %v5327 = vsel %vm3859, %v5326, %v5325
        %v5328 = vperm.slane %v5274, %v3861
        %v5329 = vsel %vm3863, %v5328, %v5327
        %v5330 = vperm.slane %v5277, %v3865
        %v5331 = vsel %vm3867, %v5330, %v5329
        %v5332 = vperm.slane %v5280, %v3869
        %v5333 = vsel %vm3871, %v5332, %v5331
        %v5334 = vperm.slane %v5283, %v3873
        %v5335 = vsel %vm3875, %v5334, %v5333
        %v5336 = vperm.slane %v5286, %v3877
        %v5337 = vsel %vm3879, %v5336, %v5335
        %v5338 = vperm.slane %v5289, %v3881
        %v5339 = vsel %vm3883, %v5338, %v5337
        %v5340 = vperm.slane %v5292, %v3885
        %v5341 = vsel %vm3887, %v5340, %v5339
        %v5342 = vperm.slane %v5295, %v3889
        %v5343 = vsel %vm3891, %v5342, %v5341
        %v5344 = vperm.slane %v5298, %v3893
        %v5345 = vsel %vm3895, %v5344, %v5343
        %5347 = vst [vmem:[%s231 + $0x9] sm:$0x1] %v5345
        %v5348 = vld [vmem:[%s1225] sm:$0xff]
        %v5349 = vld [vmem:[%s1225 + $0x8] sm:$0xff]
        %v5350 = vld [vmem:[%s1225 + $0x10] sm:$0xff]
        %v5351 = vld [vmem:[%s1225 + $0x18] sm:$0xff]
        %v5352 = vld [vmem:[%s1225 + $0x20] sm:$0xff]
        %v5353 = vld [vmem:[%s1225 + $0x28] sm:$0xff]
        %v5354 = vld [vmem:[%s1225 + $0x30] sm:$0xff]
        %v5355 = vld [vmem:[%s1225 + $0x38] sm:$0xff]
        %v5356 = vld [vmem:[%s1225 + $0x40] sm:$0xff]
        %v5357 = vld [vmem:[%s1225 + $0x48] sm:$0xff]
        %v5358 = vld [vmem:[%s1225 + $0x50] sm:$0xff]
        %v5359 = vld [vmem:[%s1225 + $0x58] sm:$0xff]
        %v5360 = vld [vmem:[%s1225 + $0x60] sm:$0xff]
        %v5361 = vld [vmem:[%s1225 + $0x68] sm:$0xff]
        %v5362 = vld [vmem:[%s1225 + $0x70] sm:$0xff]
        %v5363 = vld [vmem:[%s1225 + $0x78] sm:$0xff]
        %v5364 = vld [vmem:[%s1225 + $0x80] sm:$0xff]
        %v5365 = vld [vmem:[%s1225 + $0x88] sm:$0xff]
        %v5366 = vld [vmem:[%s1225 + $0x90] sm:$0xff]
        %v5367 = vld [vmem:[%s1225 + $0x98] sm:$0xff]
        %v5368 = vld [vmem:[%s1225 + $0xa0] sm:$0xff]
        %v5369 = vld [vmem:[%s1225 + $0xa8] sm:$0xff]
        %v5370 = vld [vmem:[%s1225 + $0xb0] sm:$0xff]
        %v5371 = vld [vmem:[%s1225 + $0xb8] sm:$0xff]
        %v5372 = vld [vmem:[%s1225 + $0xc0] sm:$0xff]
        %v5373 = vld [vmem:[%s1225 + $0xc8] sm:$0xff]
        %v5374 = vld [vmem:[%s1225 + $0xd0] sm:$0xff]
        %v5375 = vld [vmem:[%s1225 + $0xd8] sm:$0xff]
        %v5376 = vld [vmem:[%s1225 + $0xe0] sm:$0xff]
        %v5377 = vld [vmem:[%s1225 + $0xe8] sm:$0xff]
        %v5378 = vld [vmem:[%s1225 + $0xf0] sm:$0xff]
        %v5379 = vld [vmem:[%s1225 + $0xf8] sm:$0xff]
        %v5380 = vmul.f32 %v3706, %v5348
        %v5381 = vmul.f32 %v3707, %v5349
        %v5382 = vmul.f32 %v3708, %v5350
        %v5383 = vmul.f32 %v3709, %v5351
        %v5384 = vmul.f32 %v3710, %v5352
        %v5385 = vmul.f32 %v3711, %v5353
        %v5386 = vmul.f32 %v3712, %v5354
        %v5387 = vmul.f32 %v3713, %v5355
        %v5388 = vmul.f32 %v3714, %v5356
        %v5389 = vmul.f32 %v3715, %v5357
        %v5390 = vmul.f32 %v3716, %v5358
        %v5391 = vmul.f32 %v3717, %v5359
        %v5392 = vmul.f32 %v3718, %v5360
        %v5393 = vmul.f32 %v3719, %v5361
        %v5394 = vmul.f32 %v3720, %v5362
        %v5395 = vmul.f32 %v3721, %v5363
        %v5396 = vmul.f32 %v3722, %v5364
        %v5397 = vmul.f32 %v3723, %v5365
        %v5398 = vmul.f32 %v3724, %v5366
        %v5399 = vmul.f32 %v3725, %v5367
        %v5400 = vmul.f32 %v3726, %v5368
        %v5401 = vmul.f32 %v3727, %v5369
        %v5402 = vmul.f32 %v3728, %v5370
        %v5403 = vmul.f32 %v3729, %v5371
        %v5404 = vmul.f32 %v3730, %v5372
        %v5405 = vmul.f32 %v3731, %v5373
        %v5406 = vmul.f32 %v3732, %v5374
        %v5407 = vmul.f32 %v3733, %v5375
        %v5408 = vmul.f32 %v3734, %v5376
        %v5409 = vmul.f32 %v3735, %v5377
        %v5410 = vmul.f32 %v3736, %v5378
        %v5411 = vmul.f32 %v3737, %v5379
        %v5412 = vadd.f32 %v5380, %v5381
        %5413 = vadd.xlane.f32.xlu0 %v5412
        %v5414 = vpop.xlane.xlu0 %5413
        %v5415 = vadd.f32 %v5382, %v5383
        %5416 = vadd.xlane.f32.xlu0 %v5415
        %v5417 = vpop.xlane.xlu0 %5416
        %v5418 = vadd.f32 %v5384, %v5385
        %5419 = vadd.xlane.f32.xlu0 %v5418
        %v5420 = vpop.xlane.xlu0 %5419
        %v5421 = vadd.f32 %v5386, %v5387
        %5422 = vadd.xlane.f32.xlu0 %v5421
        %v5423 = vpop.xlane.xlu0 %5422
        %v5424 = vadd.f32 %v5388, %v5389
        %5425 = vadd.xlane.f32.xlu0 %v5424
        %v5426 = vpop.xlane.xlu0 %5425
        %v5427 = vadd.f32 %v5390, %v5391
        %5428 = vadd.xlane.f32.xlu0 %v5427
        %v5429 = vpop.xlane.xlu0 %5428
        %v5430 = vadd.f32 %v5392, %v5393
        %5431 = vadd.xlane.f32.xlu0 %v5430
        %v5432 = vpop.xlane.xlu0 %5431
        %v5433 = vadd.f32 %v5394, %v5395
        %5434 = vadd.xlane.f32.xlu0 %v5433
        %v5435 = vpop.xlane.xlu0 %5434
        %v5436 = vadd.f32 %v5396, %v5397
        %5437 = vadd.xlane.f32.xlu0 %v5436
        %v5438 = vpop.xlane.xlu0 %5437
        %v5439 = vadd.f32 %v5398, %v5399
        %5440 = vadd.xlane.f32.xlu0 %v5439
        %v5441 = vpop.xlane.xlu0 %5440
        %v5442 = vadd.f32 %v5400, %v5401
        %5443 = vadd.xlane.f32.xlu0 %v5442
        %v5444 = vpop.xlane.xlu0 %5443
        %v5445 = vadd.f32 %v5402, %v5403
        %5446 = vadd.xlane.f32.xlu0 %v5445
        %v5447 = vpop.xlane.xlu0 %5446
        %v5448 = vadd.f32 %v5404, %v5405
        %5449 = vadd.xlane.f32.xlu0 %v5448
        %v5450 = vpop.xlane.xlu0 %5449
        %v5451 = vadd.f32 %v5406, %v5407
        %5452 = vadd.xlane.f32.xlu0 %v5451
        %v5453 = vpop.xlane.xlu0 %5452
        %v5454 = vadd.f32 %v5408, %v5409
        %5455 = vadd.xlane.f32.xlu0 %v5454
        %v5456 = vpop.xlane.xlu0 %5455
        %v5457 = vadd.f32 %v5410, %v5411
        %5458 = vadd.xlane.f32.xlu0 %v5457
        %v5459 = vpop.xlane.xlu0 %5458
        %v5476 = vperm.slane %v5414, %v3835
        %v5477 = vperm.slane %v5417, %v3837
        %v5478 = vsel %vm3839, %v5477, %v5476
        %v5479 = vperm.slane %v5420, %v3841
        %v5480 = vsel %vm3843, %v5479, %v5478
        %v5481 = vperm.slane %v5423, %v3845
        %v5482 = vsel %vm3847, %v5481, %v5480
        %v5483 = vperm.slane %v5426, %v3849
        %v5484 = vsel %vm3851, %v5483, %v5482
        %v5485 = vperm.slane %v5429, %v3853
        %v5486 = vsel %vm3855, %v5485, %v5484
        %v5487 = vperm.slane %v5432, %v3857
        %v5488 = vsel %vm3859, %v5487, %v5486
        %v5489 = vperm.slane %v5435, %v3861
        %v5490 = vsel %vm3863, %v5489, %v5488
        %v5491 = vperm.slane %v5438, %v3865
        %v5492 = vsel %vm3867, %v5491, %v5490
        %v5493 = vperm.slane %v5441, %v3869
        %v5494 = vsel %vm3871, %v5493, %v5492
        %v5495 = vperm.slane %v5444, %v3873
        %v5496 = vsel %vm3875, %v5495, %v5494
        %v5497 = vperm.slane %v5447, %v3877
        %v5498 = vsel %vm3879, %v5497, %v5496
        %v5499 = vperm.slane %v5450, %v3881
        %v5500 = vsel %vm3883, %v5499, %v5498
        %v5501 = vperm.slane %v5453, %v3885
        %v5502 = vsel %vm3887, %v5501, %v5500
        %v5503 = vperm.slane %v5456, %v3889
        %v5504 = vsel %vm3891, %v5503, %v5502
        %v5505 = vperm.slane %v5459, %v3893
        %v5506 = vsel %vm3895, %v5505, %v5504
        %5508 = vst [vmem:[%s231 + $0xa] sm:$0x1] %v5506
        %v5509 = vld [vmem:[%s1324] sm:$0xff]
        %v5510 = vld [vmem:[%s1324 + $0x8] sm:$0xff]
        %v5511 = vld [vmem:[%s1324 + $0x10] sm:$0xff]
        %v5512 = vld [vmem:[%s1324 + $0x18] sm:$0xff]
        %v5513 = vld [vmem:[%s1324 + $0x20] sm:$0xff]
        %v5514 = vld [vmem:[%s1324 + $0x28] sm:$0xff]
        %v5515 = vld [vmem:[%s1324 + $0x30] sm:$0xff]
        %v5516 = vld [vmem:[%s1324 + $0x38] sm:$0xff]
        %v5517 = vld [vmem:[%s1324 + $0x40] sm:$0xff]
        %v5518 = vld [vmem:[%s1324 + $0x48] sm:$0xff]
        %v5519 = vld [vmem:[%s1324 + $0x50] sm:$0xff]
        %v5520 = vld [vmem:[%s1324 + $0x58] sm:$0xff]
        %v5521 = vld [vmem:[%s1324 + $0x60] sm:$0xff]
        %v5522 = vld [vmem:[%s1324 + $0x68] sm:$0xff]
        %v5523 = vld [vmem:[%s1324 + $0x70] sm:$0xff]
        %v5524 = vld [vmem:[%s1324 + $0x78] sm:$0xff]
        %v5525 = vld [vmem:[%s1324 + $0x80] sm:$0xff]
        %v5526 = vld [vmem:[%s1324 + $0x88] sm:$0xff]
        %v5527 = vld [vmem:[%s1324 + $0x90] sm:$0xff]
        %v5528 = vld [vmem:[%s1324 + $0x98] sm:$0xff]
        %v5529 = vld [vmem:[%s1324 + $0xa0] sm:$0xff]
        %v5530 = vld [vmem:[%s1324 + $0xa8] sm:$0xff]
        %v5531 = vld [vmem:[%s1324 + $0xb0] sm:$0xff]
        %v5532 = vld [vmem:[%s1324 + $0xb8] sm:$0xff]
        %v5533 = vld [vmem:[%s1324 + $0xc0] sm:$0xff]
        %v5534 = vld [vmem:[%s1324 + $0xc8] sm:$0xff]
        %v5535 = vld [vmem:[%s1324 + $0xd0] sm:$0xff]
        %v5536 = vld [vmem:[%s1324 + $0xd8] sm:$0xff]
        %v5537 = vld [vmem:[%s1324 + $0xe0] sm:$0xff]
        %v5538 = vld [vmem:[%s1324 + $0xe8] sm:$0xff]
        %v5539 = vld [vmem:[%s1324 + $0xf0] sm:$0xff]
        %v5540 = vld [vmem:[%s1324 + $0xf8] sm:$0xff]
        %v5541 = vmul.f32 %v3706, %v5509
        %v5542 = vmul.f32 %v3707, %v5510
        %v5543 = vmul.f32 %v3708, %v5511
        %v5544 = vmul.f32 %v3709, %v5512
        %v5545 = vmul.f32 %v3710, %v5513
        %v5546 = vmul.f32 %v3711, %v5514
        %v5547 = vmul.f32 %v3712, %v5515
        %v5548 = vmul.f32 %v3713, %v5516
        %v5549 = vmul.f32 %v3714, %v5517
        %v5550 = vmul.f32 %v3715, %v5518
        %v5551 = vmul.f32 %v3716, %v5519
        %v5552 = vmul.f32 %v3717, %v5520
        %v5553 = vmul.f32 %v3718, %v5521
        %v5554 = vmul.f32 %v3719, %v5522
        %v5555 = vmul.f32 %v3720, %v5523
        %v5556 = vmul.f32 %v3721, %v5524
        %v5557 = vmul.f32 %v3722, %v5525
        %v5558 = vmul.f32 %v3723, %v5526
        %v5559 = vmul.f32 %v3724, %v5527
        %v5560 = vmul.f32 %v3725, %v5528
        %v5561 = vmul.f32 %v3726, %v5529
        %v5562 = vmul.f32 %v3727, %v5530
        %v5563 = vmul.f32 %v3728, %v5531
        %v5564 = vmul.f32 %v3729, %v5532
        %v5565 = vmul.f32 %v3730, %v5533
        %v5566 = vmul.f32 %v3731, %v5534
        %v5567 = vmul.f32 %v3732, %v5535
        %v5568 = vmul.f32 %v3733, %v5536
        %v5569 = vmul.f32 %v3734, %v5537
        %v5570 = vmul.f32 %v3735, %v5538
        %v5571 = vmul.f32 %v3736, %v5539
        %v5572 = vmul.f32 %v3737, %v5540
        %v5573 = vadd.f32 %v5541, %v5542
        %5574 = vadd.xlane.f32.xlu0 %v5573
        %v5575 = vpop.xlane.xlu0 %5574
        %v5576 = vadd.f32 %v5543, %v5544
        %5577 = vadd.xlane.f32.xlu0 %v5576
        %v5578 = vpop.xlane.xlu0 %5577
        %v5579 = vadd.f32 %v5545, %v5546
        %5580 = vadd.xlane.f32.xlu0 %v5579
        %v5581 = vpop.xlane.xlu0 %5580
        %v5582 = vadd.f32 %v5547, %v5548
        %5583 = vadd.xlane.f32.xlu0 %v5582
        %v5584 = vpop.xlane.xlu0 %5583
        %v5585 = vadd.f32 %v5549, %v5550
        %5586 = vadd.xlane.f32.xlu0 %v5585
        %v5587 = vpop.xlane.xlu0 %5586
        %v5588 = vadd.f32 %v5551, %v5552
        %5589 = vadd.xlane.f32.xlu0 %v5588
        %v5590 = vpop.xlane.xlu0 %5589
        %v5591 = vadd.f32 %v5553, %v5554
        %5592 = vadd.xlane.f32.xlu0 %v5591
        %v5593 = vpop.xlane.xlu0 %5592
        %v5594 = vadd.f32 %v5555, %v5556
        %5595 = vadd.xlane.f32.xlu0 %v5594
        %v5596 = vpop.xlane.xlu0 %5595
        %v5597 = vadd.f32 %v5557, %v5558
        %5598 = vadd.xlane.f32.xlu0 %v5597
        %v5599 = vpop.xlane.xlu0 %5598
        %v5600 = vadd.f32 %v5559, %v5560
        %5601 = vadd.xlane.f32.xlu0 %v5600
        %v5602 = vpop.xlane.xlu0 %5601
        %v5603 = vadd.f32 %v5561, %v5562
        %5604 = vadd.xlane.f32.xlu0 %v5603
        %v5605 = vpop.xlane.xlu0 %5604
        %v5606 = vadd.f32 %v5563, %v5564
        %5607 = vadd.xlane.f32.xlu0 %v5606
        %v5608 = vpop.xlane.xlu0 %5607
        %v5609 = vadd.f32 %v5565, %v5566
        %5610 = vadd.xlane.f32.xlu0 %v5609
        %v5611 = vpop.xlane.xlu0 %5610
        %v5612 = vadd.f32 %v5567, %v5568
        %5613 = vadd.xlane.f32.xlu0 %v5612
        %v5614 = vpop.xlane.xlu0 %5613
        %v5615 = vadd.f32 %v5569, %v5570
        %5616 = vadd.xlane.f32.xlu0 %v5615
        %v5617 = vpop.xlane.xlu0 %5616
        %v5618 = vadd.f32 %v5571, %v5572
        %5619 = vadd.xlane.f32.xlu0 %v5618
        %v5620 = vpop.xlane.xlu0 %5619
        %v5637 = vperm.slane %v5575, %v3835
        %v5638 = vperm.slane %v5578, %v3837
        %v5639 = vsel %vm3839, %v5638, %v5637
        %v5640 = vperm.slane %v5581, %v3841
        %v5641 = vsel %vm3843, %v5640, %v5639
        %v5642 = vperm.slane %v5584, %v3845
        %v5643 = vsel %vm3847, %v5642, %v5641
        %v5644 = vperm.slane %v5587, %v3849
        %v5645 = vsel %vm3851, %v5644, %v5643
        %v5646 = vperm.slane %v5590, %v3853
        %v5647 = vsel %vm3855, %v5646, %v5645
        %v5648 = vperm.slane %v5593, %v3857
        %v5649 = vsel %vm3859, %v5648, %v5647
        %v5650 = vperm.slane %v5596, %v3861
        %v5651 = vsel %vm3863, %v5650, %v5649
        %v5652 = vperm.slane %v5599, %v3865
        %v5653 = vsel %vm3867, %v5652, %v5651
        %v5654 = vperm.slane %v5602, %v3869
        %v5655 = vsel %vm3871, %v5654, %v5653
        %v5656 = vperm.slane %v5605, %v3873
        %v5657 = vsel %vm3875, %v5656, %v5655
        %v5658 = vperm.slane %v5608, %v3877
        %v5659 = vsel %vm3879, %v5658, %v5657
        %v5660 = vperm.slane %v5611, %v3881
        %v5661 = vsel %vm3883, %v5660, %v5659
        %v5662 = vperm.slane %v5614, %v3885
        %v5663 = vsel %vm3887, %v5662, %v5661
        %v5664 = vperm.slane %v5617, %v3889
        %v5665 = vsel %vm3891, %v5664, %v5663
        %v5666 = vperm.slane %v5620, %v3893
        %v5667 = vsel %vm3895, %v5666, %v5665
        %5669 = vst [vmem:[%s231 + $0xb] sm:$0x1] %v5667
        %v5670 = vld [vmem:[%s1423] sm:$0xff]
        %v5671 = vld [vmem:[%s1423 + $0x8] sm:$0xff]
        %v5672 = vld [vmem:[%s1423 + $0x10] sm:$0xff]
        %v5673 = vld [vmem:[%s1423 + $0x18] sm:$0xff]
        %v5674 = vld [vmem:[%s1423 + $0x20] sm:$0xff]
        %v5675 = vld [vmem:[%s1423 + $0x28] sm:$0xff]
        %v5676 = vld [vmem:[%s1423 + $0x30] sm:$0xff]
        %v5677 = vld [vmem:[%s1423 + $0x38] sm:$0xff]
        %v5678 = vld [vmem:[%s1423 + $0x40] sm:$0xff]
        %v5679 = vld [vmem:[%s1423 + $0x48] sm:$0xff]
        %v5680 = vld [vmem:[%s1423 + $0x50] sm:$0xff]
        %v5681 = vld [vmem:[%s1423 + $0x58] sm:$0xff]
        %v5682 = vld [vmem:[%s1423 + $0x60] sm:$0xff]
        %v5683 = vld [vmem:[%s1423 + $0x68] sm:$0xff]
        %v5684 = vld [vmem:[%s1423 + $0x70] sm:$0xff]
        %v5685 = vld [vmem:[%s1423 + $0x78] sm:$0xff]
        %v5686 = vld [vmem:[%s1423 + $0x80] sm:$0xff]
        %v5687 = vld [vmem:[%s1423 + $0x88] sm:$0xff]
        %v5688 = vld [vmem:[%s1423 + $0x90] sm:$0xff]
        %v5689 = vld [vmem:[%s1423 + $0x98] sm:$0xff]
        %v5690 = vld [vmem:[%s1423 + $0xa0] sm:$0xff]
        %v5691 = vld [vmem:[%s1423 + $0xa8] sm:$0xff]
        %v5692 = vld [vmem:[%s1423 + $0xb0] sm:$0xff]
        %v5693 = vld [vmem:[%s1423 + $0xb8] sm:$0xff]
        %v5694 = vld [vmem:[%s1423 + $0xc0] sm:$0xff]
        %v5695 = vld [vmem:[%s1423 + $0xc8] sm:$0xff]
        %v5696 = vld [vmem:[%s1423 + $0xd0] sm:$0xff]
        %v5697 = vld [vmem:[%s1423 + $0xd8] sm:$0xff]
        %v5698 = vld [vmem:[%s1423 + $0xe0] sm:$0xff]
        %v5699 = vld [vmem:[%s1423 + $0xe8] sm:$0xff]
        %v5700 = vld [vmem:[%s1423 + $0xf0] sm:$0xff]
        %v5701 = vld [vmem:[%s1423 + $0xf8] sm:$0xff]
        %v5702 = vmul.f32 %v3706, %v5670
        %v5703 = vmul.f32 %v3707, %v5671
        %v5704 = vmul.f32 %v3708, %v5672
        %v5705 = vmul.f32 %v3709, %v5673
        %v5706 = vmul.f32 %v3710, %v5674
        %v5707 = vmul.f32 %v3711, %v5675
        %v5708 = vmul.f32 %v3712, %v5676
        %v5709 = vmul.f32 %v3713, %v5677
        %v5710 = vmul.f32 %v3714, %v5678
        %v5711 = vmul.f32 %v3715, %v5679
        %v5712 = vmul.f32 %v3716, %v5680
        %v5713 = vmul.f32 %v3717, %v5681
        %v5714 = vmul.f32 %v3718, %v5682
        %v5715 = vmul.f32 %v3719, %v5683
        %v5716 = vmul.f32 %v3720, %v5684
        %v5717 = vmul.f32 %v3721, %v5685
        %v5718 = vmul.f32 %v3722, %v5686
        %v5719 = vmul.f32 %v3723, %v5687
        %v5720 = vmul.f32 %v3724, %v5688
        %v5721 = vmul.f32 %v3725, %v5689
        %v5722 = vmul.f32 %v3726, %v5690
        %v5723 = vmul.f32 %v3727, %v5691
        %v5724 = vmul.f32 %v3728, %v5692
        %v5725 = vmul.f32 %v3729, %v5693
        %v5726 = vmul.f32 %v3730, %v5694
        %v5727 = vmul.f32 %v3731, %v5695
        %v5728 = vmul.f32 %v3732, %v5696
        %v5729 = vmul.f32 %v3733, %v5697
        %v5730 = vmul.f32 %v3734, %v5698
        %v5731 = vmul.f32 %v3735, %v5699
        %v5732 = vmul.f32 %v3736, %v5700
        %v5733 = vmul.f32 %v3737, %v5701
        %v5734 = vadd.f32 %v5702, %v5703
        %5735 = vadd.xlane.f32.xlu0 %v5734
        %v5736 = vpop.xlane.xlu0 %5735
        %v5737 = vadd.f32 %v5704, %v5705
        %5738 = vadd.xlane.f32.xlu0 %v5737
        %v5739 = vpop.xlane.xlu0 %5738
        %v5740 = vadd.f32 %v5706, %v5707
        %5741 = vadd.xlane.f32.xlu0 %v5740
        %v5742 = vpop.xlane.xlu0 %5741
        %v5743 = vadd.f32 %v5708, %v5709
        %5744 = vadd.xlane.f32.xlu0 %v5743
        %v5745 = vpop.xlane.xlu0 %5744
        %v5746 = vadd.f32 %v5710, %v5711
        %5747 = vadd.xlane.f32.xlu0 %v5746
        %v5748 = vpop.xlane.xlu0 %5747
        %v5749 = vadd.f32 %v5712, %v5713
        %5750 = vadd.xlane.f32.xlu0 %v5749
        %v5751 = vpop.xlane.xlu0 %5750
        %v5752 = vadd.f32 %v5714, %v5715
        %5753 = vadd.xlane.f32.xlu0 %v5752
        %v5754 = vpop.xlane.xlu0 %5753
        %v5755 = vadd.f32 %v5716, %v5717
        %5756 = vadd.xlane.f32.xlu0 %v5755
        %v5757 = vpop.xlane.xlu0 %5756
        %v5758 = vadd.f32 %v5718, %v5719
        %5759 = vadd.xlane.f32.xlu0 %v5758
        %v5760 = vpop.xlane.xlu0 %5759
        %v5761 = vadd.f32 %v5720, %v5721
        %5762 = vadd.xlane.f32.xlu0 %v5761
        %v5763 = vpop.xlane.xlu0 %5762
        %v5764 = vadd.f32 %v5722, %v5723
        %5765 = vadd.xlane.f32.xlu0 %v5764
        %v5766 = vpop.xlane.xlu0 %5765
        %v5767 = vadd.f32 %v5724, %v5725
        %5768 = vadd.xlane.f32.xlu0 %v5767
        %v5769 = vpop.xlane.xlu0 %5768
        %v5770 = vadd.f32 %v5726, %v5727
        %5771 = vadd.xlane.f32.xlu0 %v5770
        %v5772 = vpop.xlane.xlu0 %5771
        %v5773 = vadd.f32 %v5728, %v5729
        %5774 = vadd.xlane.f32.xlu0 %v5773
        %v5775 = vpop.xlane.xlu0 %5774
        %v5776 = vadd.f32 %v5730, %v5731
        %5777 = vadd.xlane.f32.xlu0 %v5776
        %v5778 = vpop.xlane.xlu0 %5777
        %v5779 = vadd.f32 %v5732, %v5733
        %5780 = vadd.xlane.f32.xlu0 %v5779
        %v5781 = vpop.xlane.xlu0 %5780
        %v5798 = vperm.slane %v5736, %v3835
        %v5799 = vperm.slane %v5739, %v3837
        %v5800 = vsel %vm3839, %v5799, %v5798
        %v5801 = vperm.slane %v5742, %v3841
        %v5802 = vsel %vm3843, %v5801, %v5800
        %v5803 = vperm.slane %v5745, %v3845
        %v5804 = vsel %vm3847, %v5803, %v5802
        %v5805 = vperm.slane %v5748, %v3849
        %v5806 = vsel %vm3851, %v5805, %v5804
        %v5807 = vperm.slane %v5751, %v3853
        %v5808 = vsel %vm3855, %v5807, %v5806
        %v5809 = vperm.slane %v5754, %v3857
        %v5810 = vsel %vm3859, %v5809, %v5808
        %v5811 = vperm.slane %v5757, %v3861
        %v5812 = vsel %vm3863, %v5811, %v5810
        %v5813 = vperm.slane %v5760, %v3865
        %v5814 = vsel %vm3867, %v5813, %v5812
        %v5815 = vperm.slane %v5763, %v3869
        %v5816 = vsel %vm3871, %v5815, %v5814
        %v5817 = vperm.slane %v5766, %v3873
        %v5818 = vsel %vm3875, %v5817, %v5816
        %v5819 = vperm.slane %v5769, %v3877
        %v5820 = vsel %vm3879, %v5819, %v5818
        %v5821 = vperm.slane %v5772, %v3881
        %v5822 = vsel %vm3883, %v5821, %v5820
        %v5823 = vperm.slane %v5775, %v3885
        %v5824 = vsel %vm3887, %v5823, %v5822
        %v5825 = vperm.slane %v5778, %v3889
        %v5826 = vsel %vm3891, %v5825, %v5824
        %v5827 = vperm.slane %v5781, %v3893
        %v5828 = vsel %vm3895, %v5827, %v5826
        %5830 = vst [vmem:[%s231 + $0xc] sm:$0x1] %v5828
        %v5831 = vld [vmem:[%s1522] sm:$0xff]
        %v5832 = vld [vmem:[%s1522 + $0x8] sm:$0xff]
        %v5833 = vld [vmem:[%s1522 + $0x10] sm:$0xff]
        %v5834 = vld [vmem:[%s1522 + $0x18] sm:$0xff]
        %v5835 = vld [vmem:[%s1522 + $0x20] sm:$0xff]
        %v5836 = vld [vmem:[%s1522 + $0x28] sm:$0xff]
        %v5837 = vld [vmem:[%s1522 + $0x30] sm:$0xff]
        %v5838 = vld [vmem:[%s1522 + $0x38] sm:$0xff]
        %v5839 = vld [vmem:[%s1522 + $0x40] sm:$0xff]
        %v5840 = vld [vmem:[%s1522 + $0x48] sm:$0xff]
        %v5841 = vld [vmem:[%s1522 + $0x50] sm:$0xff]
        %v5842 = vld [vmem:[%s1522 + $0x58] sm:$0xff]
        %v5843 = vld [vmem:[%s1522 + $0x60] sm:$0xff]
        %v5844 = vld [vmem:[%s1522 + $0x68] sm:$0xff]
        %v5845 = vld [vmem:[%s1522 + $0x70] sm:$0xff]
        %v5846 = vld [vmem:[%s1522 + $0x78] sm:$0xff]
        %v5847 = vld [vmem:[%s1522 + $0x80] sm:$0xff]
        %v5848 = vld [vmem:[%s1522 + $0x88] sm:$0xff]
        %v5849 = vld [vmem:[%s1522 + $0x90] sm:$0xff]
        %v5850 = vld [vmem:[%s1522 + $0x98] sm:$0xff]
        %v5851 = vld [vmem:[%s1522 + $0xa0] sm:$0xff]
        %v5852 = vld [vmem:[%s1522 + $0xa8] sm:$0xff]
        %v5853 = vld [vmem:[%s1522 + $0xb0] sm:$0xff]
        %v5854 = vld [vmem:[%s1522 + $0xb8] sm:$0xff]
        %v5855 = vld [vmem:[%s1522 + $0xc0] sm:$0xff]
        %v5856 = vld [vmem:[%s1522 + $0xc8] sm:$0xff]
        %v5857 = vld [vmem:[%s1522 + $0xd0] sm:$0xff]
        %v5858 = vld [vmem:[%s1522 + $0xd8] sm:$0xff]
        %v5859 = vld [vmem:[%s1522 + $0xe0] sm:$0xff]
        %v5860 = vld [vmem:[%s1522 + $0xe8] sm:$0xff]
        %v5861 = vld [vmem:[%s1522 + $0xf0] sm:$0xff]
        %v5862 = vld [vmem:[%s1522 + $0xf8] sm:$0xff]
        %v5863 = vmul.f32 %v3706, %v5831
        %v5864 = vmul.f32 %v3707, %v5832
        %v5865 = vmul.f32 %v3708, %v5833
        %v5866 = vmul.f32 %v3709, %v5834
        %v5867 = vmul.f32 %v3710, %v5835
        %v5868 = vmul.f32 %v3711, %v5836
        %v5869 = vmul.f32 %v3712, %v5837
        %v5870 = vmul.f32 %v3713, %v5838
        %v5871 = vmul.f32 %v3714, %v5839
        %v5872 = vmul.f32 %v3715, %v5840
        %v5873 = vmul.f32 %v3716, %v5841
        %v5874 = vmul.f32 %v3717, %v5842
        %v5875 = vmul.f32 %v3718, %v5843
        %v5876 = vmul.f32 %v3719, %v5844
        %v5877 = vmul.f32 %v3720, %v5845
        %v5878 = vmul.f32 %v3721, %v5846
        %v5879 = vmul.f32 %v3722, %v5847
        %v5880 = vmul.f32 %v3723, %v5848
        %v5881 = vmul.f32 %v3724, %v5849
        %v5882 = vmul.f32 %v3725, %v5850
        %v5883 = vmul.f32 %v3726, %v5851
        %v5884 = vmul.f32 %v3727, %v5852
        %v5885 = vmul.f32 %v3728, %v5853
        %v5886 = vmul.f32 %v3729, %v5854
        %v5887 = vmul.f32 %v3730, %v5855
        %v5888 = vmul.f32 %v3731, %v5856
        %v5889 = vmul.f32 %v3732, %v5857
        %v5890 = vmul.f32 %v3733, %v5858
        %v5891 = vmul.f32 %v3734, %v5859
        %v5892 = vmul.f32 %v3735, %v5860
        %v5893 = vmul.f32 %v3736, %v5861
        %v5894 = vmul.f32 %v3737, %v5862
        %v5895 = vadd.f32 %v5863, %v5864
        %5896 = vadd.xlane.f32.xlu0 %v5895
        %v5897 = vpop.xlane.xlu0 %5896
        %v5898 = vadd.f32 %v5865, %v5866
        %5899 = vadd.xlane.f32.xlu0 %v5898
        %v5900 = vpop.xlane.xlu0 %5899
        %v5901 = vadd.f32 %v5867, %v5868
        %5902 = vadd.xlane.f32.xlu0 %v5901
        %v5903 = vpop.xlane.xlu0 %5902
        %v5904 = vadd.f32 %v5869, %v5870
        %5905 = vadd.xlane.f32.xlu0 %v5904
        %v5906 = vpop.xlane.xlu0 %5905
        %v5907 = vadd.f32 %v5871, %v5872
        %5908 = vadd.xlane.f32.xlu0 %v5907
        %v5909 = vpop.xlane.xlu0 %5908
        %v5910 = vadd.f32 %v5873, %v5874
        %5911 = vadd.xlane.f32.xlu0 %v5910
        %v5912 = vpop.xlane.xlu0 %5911
        %v5913 = vadd.f32 %v5875, %v5876
        %5914 = vadd.xlane.f32.xlu0 %v5913
        %v5915 = vpop.xlane.xlu0 %5914
        %v5916 = vadd.f32 %v5877, %v5878
        %5917 = vadd.xlane.f32.xlu0 %v5916
        %v5918 = vpop.xlane.xlu0 %5917
        %v5919 = vadd.f32 %v5879, %v5880
        %5920 = vadd.xlane.f32.xlu0 %v5919
        %v5921 = vpop.xlane.xlu0 %5920
        %v5922 = vadd.f32 %v5881, %v5882
        %5923 = vadd.xlane.f32.xlu0 %v5922
        %v5924 = vpop.xlane.xlu0 %5923
        %v5925 = vadd.f32 %v5883, %v5884
        %5926 = vadd.xlane.f32.xlu0 %v5925
        %v5927 = vpop.xlane.xlu0 %5926
        %v5928 = vadd.f32 %v5885, %v5886
        %5929 = vadd.xlane.f32.xlu0 %v5928
        %v5930 = vpop.xlane.xlu0 %5929
        %v5931 = vadd.f32 %v5887, %v5888
        %5932 = vadd.xlane.f32.xlu0 %v5931
        %v5933 = vpop.xlane.xlu0 %5932
        %v5934 = vadd.f32 %v5889, %v5890
        %5935 = vadd.xlane.f32.xlu0 %v5934
        %v5936 = vpop.xlane.xlu0 %5935
        %v5937 = vadd.f32 %v5891, %v5892
        %5938 = vadd.xlane.f32.xlu0 %v5937
        %v5939 = vpop.xlane.xlu0 %5938
        %v5940 = vadd.f32 %v5893, %v5894
        %5941 = vadd.xlane.f32.xlu0 %v5940
        %v5942 = vpop.xlane.xlu0 %5941
        %v5959 = vperm.slane %v5897, %v3835
        %v5960 = vperm.slane %v5900, %v3837
        %v5961 = vsel %vm3839, %v5960, %v5959
        %v5962 = vperm.slane %v5903, %v3841
        %v5963 = vsel %vm3843, %v5962, %v5961
        %v5964 = vperm.slane %v5906, %v3845
        %v5965 = vsel %vm3847, %v5964, %v5963
        %v5966 = vperm.slane %v5909, %v3849
        %v5967 = vsel %vm3851, %v5966, %v5965
        %v5968 = vperm.slane %v5912, %v3853
        %v5969 = vsel %vm3855, %v5968, %v5967
        %v5970 = vperm.slane %v5915, %v3857
        %v5971 = vsel %vm3859, %v5970, %v5969
        %v5972 = vperm.slane %v5918, %v3861
        %v5973 = vsel %vm3863, %v5972, %v5971
        %v5974 = vperm.slane %v5921, %v3865
        %v5975 = vsel %vm3867, %v5974, %v5973
        %v5976 = vperm.slane %v5924, %v3869
        %v5977 = vsel %vm3871, %v5976, %v5975
        %v5978 = vperm.slane %v5927, %v3873
        %v5979 = vsel %vm3875, %v5978, %v5977
        %v5980 = vperm.slane %v5930, %v3877
        %v5981 = vsel %vm3879, %v5980, %v5979
        %v5982 = vperm.slane %v5933, %v3881
        %v5983 = vsel %vm3883, %v5982, %v5981
        %v5984 = vperm.slane %v5936, %v3885
        %v5985 = vsel %vm3887, %v5984, %v5983
        %v5986 = vperm.slane %v5939, %v3889
        %v5987 = vsel %vm3891, %v5986, %v5985
        %v5988 = vperm.slane %v5942, %v3893
        %v5989 = vsel %vm3895, %v5988, %v5987
        %5991 = vst [vmem:[%s231 + $0xd] sm:$0x1] %v5989
        %v5992 = vld [vmem:[%s1621] sm:$0xff]
        %v5993 = vld [vmem:[%s1621 + $0x8] sm:$0xff]
        %v5994 = vld [vmem:[%s1621 + $0x10] sm:$0xff]
        %v5995 = vld [vmem:[%s1621 + $0x18] sm:$0xff]
        %v5996 = vld [vmem:[%s1621 + $0x20] sm:$0xff]
        %v5997 = vld [vmem:[%s1621 + $0x28] sm:$0xff]
        %v5998 = vld [vmem:[%s1621 + $0x30] sm:$0xff]
        %v5999 = vld [vmem:[%s1621 + $0x38] sm:$0xff]
        %v6000 = vld [vmem:[%s1621 + $0x40] sm:$0xff]
        %v6001 = vld [vmem:[%s1621 + $0x48] sm:$0xff]
        %v6002 = vld [vmem:[%s1621 + $0x50] sm:$0xff]
        %v6003 = vld [vmem:[%s1621 + $0x58] sm:$0xff]
        %v6004 = vld [vmem:[%s1621 + $0x60] sm:$0xff]
        %v6005 = vld [vmem:[%s1621 + $0x68] sm:$0xff]
        %v6006 = vld [vmem:[%s1621 + $0x70] sm:$0xff]
        %v6007 = vld [vmem:[%s1621 + $0x78] sm:$0xff]
        %v6008 = vld [vmem:[%s1621 + $0x80] sm:$0xff]
        %v6009 = vld [vmem:[%s1621 + $0x88] sm:$0xff]
        %v6010 = vld [vmem:[%s1621 + $0x90] sm:$0xff]
        %v6011 = vld [vmem:[%s1621 + $0x98] sm:$0xff]
        %v6012 = vld [vmem:[%s1621 + $0xa0] sm:$0xff]
        %v6013 = vld [vmem:[%s1621 + $0xa8] sm:$0xff]
        %v6014 = vld [vmem:[%s1621 + $0xb0] sm:$0xff]
        %v6015 = vld [vmem:[%s1621 + $0xb8] sm:$0xff]
        %v6016 = vld [vmem:[%s1621 + $0xc0] sm:$0xff]
        %v6017 = vld [vmem:[%s1621 + $0xc8] sm:$0xff]
        %v6018 = vld [vmem:[%s1621 + $0xd0] sm:$0xff]
        %v6019 = vld [vmem:[%s1621 + $0xd8] sm:$0xff]
        %v6020 = vld [vmem:[%s1621 + $0xe0] sm:$0xff]
        %v6021 = vld [vmem:[%s1621 + $0xe8] sm:$0xff]
        %v6022 = vld [vmem:[%s1621 + $0xf0] sm:$0xff]
        %v6023 = vld [vmem:[%s1621 + $0xf8] sm:$0xff]
        %v6024 = vmul.f32 %v3706, %v5992
        %v6025 = vmul.f32 %v3707, %v5993
        %v6026 = vmul.f32 %v3708, %v5994
        %v6027 = vmul.f32 %v3709, %v5995
        %v6028 = vmul.f32 %v3710, %v5996
        %v6029 = vmul.f32 %v3711, %v5997
        %v6030 = vmul.f32 %v3712, %v5998
        %v6031 = vmul.f32 %v3713, %v5999
        %v6032 = vmul.f32 %v3714, %v6000
        %v6033 = vmul.f32 %v3715, %v6001
        %v6034 = vmul.f32 %v3716, %v6002
        %v6035 = vmul.f32 %v3717, %v6003
        %v6036 = vmul.f32 %v3718, %v6004
        %v6037 = vmul.f32 %v3719, %v6005
        %v6038 = vmul.f32 %v3720, %v6006
        %v6039 = vmul.f32 %v3721, %v6007
        %v6040 = vmul.f32 %v3722, %v6008
        %v6041 = vmul.f32 %v3723, %v6009
        %v6042 = vmul.f32 %v3724, %v6010
        %v6043 = vmul.f32 %v3725, %v6011
        %v6044 = vmul.f32 %v3726, %v6012
        %v6045 = vmul.f32 %v3727, %v6013
        %v6046 = vmul.f32 %v3728, %v6014
        %v6047 = vmul.f32 %v3729, %v6015
        %v6048 = vmul.f32 %v3730, %v6016
        %v6049 = vmul.f32 %v3731, %v6017
        %v6050 = vmul.f32 %v3732, %v6018
        %v6051 = vmul.f32 %v3733, %v6019
        %v6052 = vmul.f32 %v3734, %v6020
        %v6053 = vmul.f32 %v3735, %v6021
        %v6054 = vmul.f32 %v3736, %v6022
        %v6055 = vmul.f32 %v3737, %v6023
        %v6056 = vadd.f32 %v6024, %v6025
        %6057 = vadd.xlane.f32.xlu0 %v6056
        %v6058 = vpop.xlane.xlu0 %6057
        %v6059 = vadd.f32 %v6026, %v6027
        %6060 = vadd.xlane.f32.xlu0 %v6059
        %v6061 = vpop.xlane.xlu0 %6060
        %v6062 = vadd.f32 %v6028, %v6029
        %6063 = vadd.xlane.f32.xlu0 %v6062
        %v6064 = vpop.xlane.xlu0 %6063
        %v6065 = vadd.f32 %v6030, %v6031
        %6066 = vadd.xlane.f32.xlu0 %v6065
        %v6067 = vpop.xlane.xlu0 %6066
        %v6068 = vadd.f32 %v6032, %v6033
        %6069 = vadd.xlane.f32.xlu0 %v6068
        %v6070 = vpop.xlane.xlu0 %6069
        %v6071 = vadd.f32 %v6034, %v6035
        %6072 = vadd.xlane.f32.xlu0 %v6071
        %v6073 = vpop.xlane.xlu0 %6072
        %v6074 = vadd.f32 %v6036, %v6037
        %6075 = vadd.xlane.f32.xlu0 %v6074
        %v6076 = vpop.xlane.xlu0 %6075
        %v6077 = vadd.f32 %v6038, %v6039
        %6078 = vadd.xlane.f32.xlu0 %v6077
        %v6079 = vpop.xlane.xlu0 %6078
        %v6080 = vadd.f32 %v6040, %v6041
        %6081 = vadd.xlane.f32.xlu0 %v6080
        %v6082 = vpop.xlane.xlu0 %6081
        %v6083 = vadd.f32 %v6042, %v6043
        %6084 = vadd.xlane.f32.xlu0 %v6083
        %v6085 = vpop.xlane.xlu0 %6084
        %v6086 = vadd.f32 %v6044, %v6045
        %6087 = vadd.xlane.f32.xlu0 %v6086
        %v6088 = vpop.xlane.xlu0 %6087
        %v6089 = vadd.f32 %v6046, %v6047
        %6090 = vadd.xlane.f32.xlu0 %v6089
        %v6091 = vpop.xlane.xlu0 %6090
        %v6092 = vadd.f32 %v6048, %v6049
        %6093 = vadd.xlane.f32.xlu0 %v6092
        %v6094 = vpop.xlane.xlu0 %6093
        %v6095 = vadd.f32 %v6050, %v6051
        %6096 = vadd.xlane.f32.xlu0 %v6095
        %v6097 = vpop.xlane.xlu0 %6096
        %v6098 = vadd.f32 %v6052, %v6053
        %6099 = vadd.xlane.f32.xlu0 %v6098
        %v6100 = vpop.xlane.xlu0 %6099
        %v6101 = vadd.f32 %v6054, %v6055
        %6102 = vadd.xlane.f32.xlu0 %v6101
        %v6103 = vpop.xlane.xlu0 %6102
        %v6120 = vperm.slane %v6058, %v3835
        %v6121 = vperm.slane %v6061, %v3837
        %v6122 = vsel %vm3839, %v6121, %v6120
        %v6123 = vperm.slane %v6064, %v3841
        %v6124 = vsel %vm3843, %v6123, %v6122
        %v6125 = vperm.slane %v6067, %v3845
        %v6126 = vsel %vm3847, %v6125, %v6124
        %v6127 = vperm.slane %v6070, %v3849
        %v6128 = vsel %vm3851, %v6127, %v6126
        %v6129 = vperm.slane %v6073, %v3853
        %v6130 = vsel %vm3855, %v6129, %v6128
        %v6131 = vperm.slane %v6076, %v3857
        %v6132 = vsel %vm3859, %v6131, %v6130
        %v6133 = vperm.slane %v6079, %v3861
        %v6134 = vsel %vm3863, %v6133, %v6132
        %v6135 = vperm.slane %v6082, %v3865
        %v6136 = vsel %vm3867, %v6135, %v6134
        %v6137 = vperm.slane %v6085, %v3869
        %v6138 = vsel %vm3871, %v6137, %v6136
        %v6139 = vperm.slane %v6088, %v3873
        %v6140 = vsel %vm3875, %v6139, %v6138
        %v6141 = vperm.slane %v6091, %v3877
        %v6142 = vsel %vm3879, %v6141, %v6140
        %v6143 = vperm.slane %v6094, %v3881
        %v6144 = vsel %vm3883, %v6143, %v6142
        %v6145 = vperm.slane %v6097, %v3885
        %v6146 = vsel %vm3887, %v6145, %v6144
        %v6147 = vperm.slane %v6100, %v3889
        %v6148 = vsel %vm3891, %v6147, %v6146
        %v6149 = vperm.slane %v6103, %v3893
        %v6150 = vsel %vm3895, %v6149, %v6148
        %6152 = vst [vmem:[%s231 + $0xe] sm:$0x1] %v6150
        %v6153 = vld [vmem:[%s1720] sm:$0xff]
        %v6154 = vld [vmem:[%s1720 + $0x8] sm:$0xff]
        %v6155 = vld [vmem:[%s1720 + $0x10] sm:$0xff]
        %v6156 = vld [vmem:[%s1720 + $0x18] sm:$0xff]
        %v6157 = vld [vmem:[%s1720 + $0x20] sm:$0xff]
        %v6158 = vld [vmem:[%s1720 + $0x28] sm:$0xff]
        %v6159 = vld [vmem:[%s1720 + $0x30] sm:$0xff]
        %v6160 = vld [vmem:[%s1720 + $0x38] sm:$0xff]
        %v6161 = vld [vmem:[%s1720 + $0x40] sm:$0xff]
        %v6162 = vld [vmem:[%s1720 + $0x48] sm:$0xff]
        %v6163 = vld [vmem:[%s1720 + $0x50] sm:$0xff]
        %v6164 = vld [vmem:[%s1720 + $0x58] sm:$0xff]
        %v6165 = vld [vmem:[%s1720 + $0x60] sm:$0xff]
        %v6166 = vld [vmem:[%s1720 + $0x68] sm:$0xff]
        %v6167 = vld [vmem:[%s1720 + $0x70] sm:$0xff]
        %v6168 = vld [vmem:[%s1720 + $0x78] sm:$0xff]
        %v6169 = vld [vmem:[%s1720 + $0x80] sm:$0xff]
        %v6170 = vld [vmem:[%s1720 + $0x88] sm:$0xff]
        %v6171 = vld [vmem:[%s1720 + $0x90] sm:$0xff]
        %v6172 = vld [vmem:[%s1720 + $0x98] sm:$0xff]
        %v6173 = vld [vmem:[%s1720 + $0xa0] sm:$0xff]
        %v6174 = vld [vmem:[%s1720 + $0xa8] sm:$0xff]
        %v6175 = vld [vmem:[%s1720 + $0xb0] sm:$0xff]
        %v6176 = vld [vmem:[%s1720 + $0xb8] sm:$0xff]
        %v6177 = vld [vmem:[%s1720 + $0xc0] sm:$0xff]
        %v6178 = vld [vmem:[%s1720 + $0xc8] sm:$0xff]
        %v6179 = vld [vmem:[%s1720 + $0xd0] sm:$0xff]
        %v6180 = vld [vmem:[%s1720 + $0xd8] sm:$0xff]
        %v6181 = vld [vmem:[%s1720 + $0xe0] sm:$0xff]
        %v6182 = vld [vmem:[%s1720 + $0xe8] sm:$0xff]
        %v6183 = vld [vmem:[%s1720 + $0xf0] sm:$0xff]
        %v6184 = vld [vmem:[%s1720 + $0xf8] sm:$0xff]
        %v6185 = vmul.f32 %v3706, %v6153
        %v6186 = vmul.f32 %v3707, %v6154
        %v6187 = vmul.f32 %v3708, %v6155
        %v6188 = vmul.f32 %v3709, %v6156
        %v6189 = vmul.f32 %v3710, %v6157
        %v6190 = vmul.f32 %v3711, %v6158
        %v6191 = vmul.f32 %v3712, %v6159
        %v6192 = vmul.f32 %v3713, %v6160
        %v6193 = vmul.f32 %v3714, %v6161
        %v6194 = vmul.f32 %v3715, %v6162
        %v6195 = vmul.f32 %v3716, %v6163
        %v6196 = vmul.f32 %v3717, %v6164
        %v6197 = vmul.f32 %v3718, %v6165
        %v6198 = vmul.f32 %v3719, %v6166
        %v6199 = vmul.f32 %v3720, %v6167
        %v6200 = vmul.f32 %v3721, %v6168
        %v6201 = vmul.f32 %v3722, %v6169
        %v6202 = vmul.f32 %v3723, %v6170
        %v6203 = vmul.f32 %v3724, %v6171
        %v6204 = vmul.f32 %v3725, %v6172
        %v6205 = vmul.f32 %v3726, %v6173
        %v6206 = vmul.f32 %v3727, %v6174
        %v6207 = vmul.f32 %v3728, %v6175
        %v6208 = vmul.f32 %v3729, %v6176
        %v6209 = vmul.f32 %v3730, %v6177
        %v6210 = vmul.f32 %v3731, %v6178
        %v6211 = vmul.f32 %v3732, %v6179
        %v6212 = vmul.f32 %v3733, %v6180
        %v6213 = vmul.f32 %v3734, %v6181
        %v6214 = vmul.f32 %v3735, %v6182
        %v6215 = vmul.f32 %v3736, %v6183
        %v6216 = vmul.f32 %v3737, %v6184
        %v6217 = vadd.f32 %v6185, %v6186
        %6218 = vadd.xlane.f32.xlu0 %v6217
        %v6219 = vpop.xlane.xlu0 %6218
        %v6220 = vadd.f32 %v6187, %v6188
        %6221 = vadd.xlane.f32.xlu0 %v6220
        %v6222 = vpop.xlane.xlu0 %6221
        %v6223 = vadd.f32 %v6189, %v6190
        %6224 = vadd.xlane.f32.xlu0 %v6223
        %v6225 = vpop.xlane.xlu0 %6224
        %v6226 = vadd.f32 %v6191, %v6192
        %6227 = vadd.xlane.f32.xlu0 %v6226
        %v6228 = vpop.xlane.xlu0 %6227
        %v6229 = vadd.f32 %v6193, %v6194
        %6230 = vadd.xlane.f32.xlu0 %v6229
        %v6231 = vpop.xlane.xlu0 %6230
        %v6232 = vadd.f32 %v6195, %v6196
        %6233 = vadd.xlane.f32.xlu0 %v6232
        %v6234 = vpop.xlane.xlu0 %6233
        %v6235 = vadd.f32 %v6197, %v6198
        %6236 = vadd.xlane.f32.xlu0 %v6235
        %v6237 = vpop.xlane.xlu0 %6236
        %v6238 = vadd.f32 %v6199, %v6200
        %6239 = vadd.xlane.f32.xlu0 %v6238
        %v6240 = vpop.xlane.xlu0 %6239
        %v6241 = vadd.f32 %v6201, %v6202
        %6242 = vadd.xlane.f32.xlu0 %v6241
        %v6243 = vpop.xlane.xlu0 %6242
        %v6244 = vadd.f32 %v6203, %v6204
        %6245 = vadd.xlane.f32.xlu0 %v6244
        %v6246 = vpop.xlane.xlu0 %6245
        %v6247 = vadd.f32 %v6205, %v6206
        %6248 = vadd.xlane.f32.xlu0 %v6247
        %v6249 = vpop.xlane.xlu0 %6248
        %v6250 = vadd.f32 %v6207, %v6208
        %6251 = vadd.xlane.f32.xlu0 %v6250
        %v6252 = vpop.xlane.xlu0 %6251
        %v6253 = vadd.f32 %v6209, %v6210
        %6254 = vadd.xlane.f32.xlu0 %v6253
        %v6255 = vpop.xlane.xlu0 %6254
        %v6256 = vadd.f32 %v6211, %v6212
        %6257 = vadd.xlane.f32.xlu0 %v6256
        %v6258 = vpop.xlane.xlu0 %6257
        %v6259 = vadd.f32 %v6213, %v6214
        %6260 = vadd.xlane.f32.xlu0 %v6259
        %v6261 = vpop.xlane.xlu0 %6260
        %v6262 = vadd.f32 %v6215, %v6216
        %6263 = vadd.xlane.f32.xlu0 %v6262
        %v6264 = vpop.xlane.xlu0 %6263
        %v6281 = vperm.slane %v6219, %v3835
        %v6282 = vperm.slane %v6222, %v3837
        %v6283 = vsel %vm3839, %v6282, %v6281
        %v6284 = vperm.slane %v6225, %v3841
        %v6285 = vsel %vm3843, %v6284, %v6283
        %v6286 = vperm.slane %v6228, %v3845
        %v6287 = vsel %vm3847, %v6286, %v6285
        %v6288 = vperm.slane %v6231, %v3849
        %v6289 = vsel %vm3851, %v6288, %v6287
        %v6290 = vperm.slane %v6234, %v3853
        %v6291 = vsel %vm3855, %v6290, %v6289
        %v6292 = vperm.slane %v6237, %v3857
        %v6293 = vsel %vm3859, %v6292, %v6291
        %v6294 = vperm.slane %v6240, %v3861
        %v6295 = vsel %vm3863, %v6294, %v6293
        %v6296 = vperm.slane %v6243, %v3865
        %v6297 = vsel %vm3867, %v6296, %v6295
        %v6298 = vperm.slane %v6246, %v3869
        %v6299 = vsel %vm3871, %v6298, %v6297
        %v6300 = vperm.slane %v6249, %v3873
        %v6301 = vsel %vm3875, %v6300, %v6299
        %v6302 = vperm.slane %v6252, %v3877
        %v6303 = vsel %vm3879, %v6302, %v6301
        %v6304 = vperm.slane %v6255, %v3881
        %v6305 = vsel %vm3883, %v6304, %v6303
        %v6306 = vperm.slane %v6258, %v3885
        %v6307 = vsel %vm3887, %v6306, %v6305
        %v6308 = vperm.slane %v6261, %v3889
        %v6309 = vsel %vm3891, %v6308, %v6307
        %v6310 = vperm.slane %v6264, %v3893
        %v6311 = vsel %vm3895, %v6310, %v6309
        %6313 = vst [vmem:[%s231 + $0xf] sm:$0x1] %v6311
        %v6314 = vld [vmem:[%s1819] sm:$0xff]
        %v6315 = vld [vmem:[%s1819 + $0x8] sm:$0xff]
        %v6316 = vld [vmem:[%s1819 + $0x10] sm:$0xff]
        %v6317 = vld [vmem:[%s1819 + $0x18] sm:$0xff]
        %v6318 = vld [vmem:[%s1819 + $0x20] sm:$0xff]
        %v6319 = vld [vmem:[%s1819 + $0x28] sm:$0xff]
        %v6320 = vld [vmem:[%s1819 + $0x30] sm:$0xff]
        %v6321 = vld [vmem:[%s1819 + $0x38] sm:$0xff]
        %v6322 = vld [vmem:[%s1819 + $0x40] sm:$0xff]
        %v6323 = vld [vmem:[%s1819 + $0x48] sm:$0xff]
        %v6324 = vld [vmem:[%s1819 + $0x50] sm:$0xff]
        %v6325 = vld [vmem:[%s1819 + $0x58] sm:$0xff]
        %v6326 = vld [vmem:[%s1819 + $0x60] sm:$0xff]
        %v6327 = vld [vmem:[%s1819 + $0x68] sm:$0xff]
        %v6328 = vld [vmem:[%s1819 + $0x70] sm:$0xff]
        %v6329 = vld [vmem:[%s1819 + $0x78] sm:$0xff]
        %v6330 = vld [vmem:[%s1819 + $0x80] sm:$0xff]
        %v6331 = vld [vmem:[%s1819 + $0x88] sm:$0xff]
        %v6332 = vld [vmem:[%s1819 + $0x90] sm:$0xff]
        %v6333 = vld [vmem:[%s1819 + $0x98] sm:$0xff]
        %v6334 = vld [vmem:[%s1819 + $0xa0] sm:$0xff]
        %v6335 = vld [vmem:[%s1819 + $0xa8] sm:$0xff]
        %v6336 = vld [vmem:[%s1819 + $0xb0] sm:$0xff]
        %v6337 = vld [vmem:[%s1819 + $0xb8] sm:$0xff]
        %v6338 = vld [vmem:[%s1819 + $0xc0] sm:$0xff]
        %v6339 = vld [vmem:[%s1819 + $0xc8] sm:$0xff]
        %v6340 = vld [vmem:[%s1819 + $0xd0] sm:$0xff]
        %v6341 = vld [vmem:[%s1819 + $0xd8] sm:$0xff]
        %v6342 = vld [vmem:[%s1819 + $0xe0] sm:$0xff]
        %v6343 = vld [vmem:[%s1819 + $0xe8] sm:$0xff]
        %v6344 = vld [vmem:[%s1819 + $0xf0] sm:$0xff]
        %v6345 = vld [vmem:[%s1819 + $0xf8] sm:$0xff]
        %v6346 = vmul.f32 %v3706, %v6314
        %v6347 = vmul.f32 %v3707, %v6315
        %v6348 = vmul.f32 %v3708, %v6316
        %v6349 = vmul.f32 %v3709, %v6317
        %v6350 = vmul.f32 %v3710, %v6318
        %v6351 = vmul.f32 %v3711, %v6319
        %v6352 = vmul.f32 %v3712, %v6320
        %v6353 = vmul.f32 %v3713, %v6321
        %v6354 = vmul.f32 %v3714, %v6322
        %v6355 = vmul.f32 %v3715, %v6323
        %v6356 = vmul.f32 %v3716, %v6324
        %v6357 = vmul.f32 %v3717, %v6325
        %v6358 = vmul.f32 %v3718, %v6326
        %v6359 = vmul.f32 %v3719, %v6327
        %v6360 = vmul.f32 %v3720, %v6328
        %v6361 = vmul.f32 %v3721, %v6329
        %v6362 = vmul.f32 %v3722, %v6330
        %v6363 = vmul.f32 %v3723, %v6331
        %v6364 = vmul.f32 %v3724, %v6332
        %v6365 = vmul.f32 %v3725, %v6333
        %v6366 = vmul.f32 %v3726, %v6334
        %v6367 = vmul.f32 %v3727, %v6335
        %v6368 = vmul.f32 %v3728, %v6336
        %v6369 = vmul.f32 %v3729, %v6337
        %v6370 = vmul.f32 %v3730, %v6338
        %v6371 = vmul.f32 %v3731, %v6339
        %v6372 = vmul.f32 %v3732, %v6340
        %v6373 = vmul.f32 %v3733, %v6341
        %v6374 = vmul.f32 %v3734, %v6342
        %v6375 = vmul.f32 %v3735, %v6343
        %v6376 = vmul.f32 %v3736, %v6344
        %v6377 = vmul.f32 %v3737, %v6345
        %v6378 = vadd.f32 %v6346, %v6347
        %6379 = vadd.xlane.f32.xlu0 %v6378
        %v6380 = vpop.xlane.xlu0 %6379
        %v6381 = vadd.f32 %v6348, %v6349
        %6382 = vadd.xlane.f32.xlu0 %v6381
        %v6383 = vpop.xlane.xlu0 %6382
        %v6384 = vadd.f32 %v6350, %v6351
        %6385 = vadd.xlane.f32.xlu0 %v6384
        %v6386 = vpop.xlane.xlu0 %6385
        %v6387 = vadd.f32 %v6352, %v6353
        %6388 = vadd.xlane.f32.xlu0 %v6387
        %v6389 = vpop.xlane.xlu0 %6388
        %v6390 = vadd.f32 %v6354, %v6355
        %6391 = vadd.xlane.f32.xlu0 %v6390
        %v6392 = vpop.xlane.xlu0 %6391
        %v6393 = vadd.f32 %v6356, %v6357
        %6394 = vadd.xlane.f32.xlu0 %v6393
        %v6395 = vpop.xlane.xlu0 %6394
        %v6396 = vadd.f32 %v6358, %v6359
        %6397 = vadd.xlane.f32.xlu0 %v6396
        %v6398 = vpop.xlane.xlu0 %6397
        %v6399 = vadd.f32 %v6360, %v6361
        %6400 = vadd.xlane.f32.xlu0 %v6399
        %v6401 = vpop.xlane.xlu0 %6400
        %v6402 = vadd.f32 %v6362, %v6363
        %6403 = vadd.xlane.f32.xlu0 %v6402
        %v6404 = vpop.xlane.xlu0 %6403
        %v6405 = vadd.f32 %v6364, %v6365
        %6406 = vadd.xlane.f32.xlu0 %v6405
        %v6407 = vpop.xlane.xlu0 %6406
        %v6408 = vadd.f32 %v6366, %v6367
        %6409 = vadd.xlane.f32.xlu0 %v6408
        %v6410 = vpop.xlane.xlu0 %6409
        %v6411 = vadd.f32 %v6368, %v6369
        %6412 = vadd.xlane.f32.xlu0 %v6411
        %v6413 = vpop.xlane.xlu0 %6412
        %v6414 = vadd.f32 %v6370, %v6371
        %6415 = vadd.xlane.f32.xlu0 %v6414
        %v6416 = vpop.xlane.xlu0 %6415
        %v6417 = vadd.f32 %v6372, %v6373
        %6418 = vadd.xlane.f32.xlu0 %v6417
        %v6419 = vpop.xlane.xlu0 %6418
        %v6420 = vadd.f32 %v6374, %v6375
        %6421 = vadd.xlane.f32.xlu0 %v6420
        %v6422 = vpop.xlane.xlu0 %6421
        %v6423 = vadd.f32 %v6376, %v6377
        %6424 = vadd.xlane.f32.xlu0 %v6423
        %v6425 = vpop.xlane.xlu0 %6424
        %v6442 = vperm.slane %v6380, %v3835
        %v6443 = vperm.slane %v6383, %v3837
        %v6444 = vsel %vm3839, %v6443, %v6442
        %v6445 = vperm.slane %v6386, %v3841
        %v6446 = vsel %vm3843, %v6445, %v6444
        %v6447 = vperm.slane %v6389, %v3845
        %v6448 = vsel %vm3847, %v6447, %v6446
        %v6449 = vperm.slane %v6392, %v3849
        %v6450 = vsel %vm3851, %v6449, %v6448
        %v6451 = vperm.slane %v6395, %v3853
        %v6452 = vsel %vm3855, %v6451, %v6450
        %v6453 = vperm.slane %v6398, %v3857
        %v6454 = vsel %vm3859, %v6453, %v6452
        %v6455 = vperm.slane %v6401, %v3861
        %v6456 = vsel %vm3863, %v6455, %v6454
        %v6457 = vperm.slane %v6404, %v3865
        %v6458 = vsel %vm3867, %v6457, %v6456
        %v6459 = vperm.slane %v6407, %v3869
        %v6460 = vsel %vm3871, %v6459, %v6458
        %v6461 = vperm.slane %v6410, %v3873
        %v6462 = vsel %vm3875, %v6461, %v6460
        %v6463 = vperm.slane %v6413, %v3877
        %v6464 = vsel %vm3879, %v6463, %v6462
        %v6465 = vperm.slane %v6416, %v3881
        %v6466 = vsel %vm3883, %v6465, %v6464
        %v6467 = vperm.slane %v6419, %v3885
        %v6468 = vsel %vm3887, %v6467, %v6466
        %v6469 = vperm.slane %v6422, %v3889
        %v6470 = vsel %vm3891, %v6469, %v6468
        %v6471 = vperm.slane %v6425, %v3893
        %v6472 = vsel %vm3895, %v6471, %v6470
        %6474 = vst [vmem:[%s231 + $0x10] sm:$0x1] %v6472
        %v6475 = vld [vmem:[%s1918] sm:$0xff]
        %v6476 = vld [vmem:[%s1918 + $0x8] sm:$0xff]
        %v6477 = vld [vmem:[%s1918 + $0x10] sm:$0xff]
        %v6478 = vld [vmem:[%s1918 + $0x18] sm:$0xff]
        %v6479 = vld [vmem:[%s1918 + $0x20] sm:$0xff]
        %v6480 = vld [vmem:[%s1918 + $0x28] sm:$0xff]
        %v6481 = vld [vmem:[%s1918 + $0x30] sm:$0xff]
        %v6482 = vld [vmem:[%s1918 + $0x38] sm:$0xff]
        %v6483 = vld [vmem:[%s1918 + $0x40] sm:$0xff]
        %v6484 = vld [vmem:[%s1918 + $0x48] sm:$0xff]
        %v6485 = vld [vmem:[%s1918 + $0x50] sm:$0xff]
        %v6486 = vld [vmem:[%s1918 + $0x58] sm:$0xff]
        %v6487 = vld [vmem:[%s1918 + $0x60] sm:$0xff]
        %v6488 = vld [vmem:[%s1918 + $0x68] sm:$0xff]
        %v6489 = vld [vmem:[%s1918 + $0x70] sm:$0xff]
        %v6490 = vld [vmem:[%s1918 + $0x78] sm:$0xff]
        %v6491 = vld [vmem:[%s1918 + $0x80] sm:$0xff]
        %v6492 = vld [vmem:[%s1918 + $0x88] sm:$0xff]
        %v6493 = vld [vmem:[%s1918 + $0x90] sm:$0xff]
        %v6494 = vld [vmem:[%s1918 + $0x98] sm:$0xff]
        %v6495 = vld [vmem:[%s1918 + $0xa0] sm:$0xff]
        %v6496 = vld [vmem:[%s1918 + $0xa8] sm:$0xff]
        %v6497 = vld [vmem:[%s1918 + $0xb0] sm:$0xff]
        %v6498 = vld [vmem:[%s1918 + $0xb8] sm:$0xff]
        %v6499 = vld [vmem:[%s1918 + $0xc0] sm:$0xff]
        %v6500 = vld [vmem:[%s1918 + $0xc8] sm:$0xff]
        %v6501 = vld [vmem:[%s1918 + $0xd0] sm:$0xff]
        %v6502 = vld [vmem:[%s1918 + $0xd8] sm:$0xff]
        %v6503 = vld [vmem:[%s1918 + $0xe0] sm:$0xff]
        %v6504 = vld [vmem:[%s1918 + $0xe8] sm:$0xff]
        %v6505 = vld [vmem:[%s1918 + $0xf0] sm:$0xff]
        %v6506 = vld [vmem:[%s1918 + $0xf8] sm:$0xff]
        %v6507 = vmul.f32 %v3706, %v6475
        %v6508 = vmul.f32 %v3707, %v6476
        %v6509 = vmul.f32 %v3708, %v6477
        %v6510 = vmul.f32 %v3709, %v6478
        %v6511 = vmul.f32 %v3710, %v6479
        %v6512 = vmul.f32 %v3711, %v6480
        %v6513 = vmul.f32 %v3712, %v6481
        %v6514 = vmul.f32 %v3713, %v6482
        %v6515 = vmul.f32 %v3714, %v6483
        %v6516 = vmul.f32 %v3715, %v6484
        %v6517 = vmul.f32 %v3716, %v6485
        %v6518 = vmul.f32 %v3717, %v6486
        %v6519 = vmul.f32 %v3718, %v6487
        %v6520 = vmul.f32 %v3719, %v6488
        %v6521 = vmul.f32 %v3720, %v6489
        %v6522 = vmul.f32 %v3721, %v6490
        %v6523 = vmul.f32 %v3722, %v6491
        %v6524 = vmul.f32 %v3723, %v6492
        %v6525 = vmul.f32 %v3724, %v6493
        %v6526 = vmul.f32 %v3725, %v6494
        %v6527 = vmul.f32 %v3726, %v6495
        %v6528 = vmul.f32 %v3727, %v6496
        %v6529 = vmul.f32 %v3728, %v6497
        %v6530 = vmul.f32 %v3729, %v6498
        %v6531 = vmul.f32 %v3730, %v6499
        %v6532 = vmul.f32 %v3731, %v6500
        %v6533 = vmul.f32 %v3732, %v6501
        %v6534 = vmul.f32 %v3733, %v6502
        %v6535 = vmul.f32 %v3734, %v6503
        %v6536 = vmul.f32 %v3735, %v6504
        %v6537 = vmul.f32 %v3736, %v6505
        %v6538 = vmul.f32 %v3737, %v6506
        %v6539 = vadd.f32 %v6507, %v6508
        %6540 = vadd.xlane.f32.xlu0 %v6539
        %v6541 = vpop.xlane.xlu0 %6540
        %v6542 = vadd.f32 %v6509, %v6510
        %6543 = vadd.xlane.f32.xlu0 %v6542
        %v6544 = vpop.xlane.xlu0 %6543
        %v6545 = vadd.f32 %v6511, %v6512
        %6546 = vadd.xlane.f32.xlu0 %v6545
        %v6547 = vpop.xlane.xlu0 %6546
        %v6548 = vadd.f32 %v6513, %v6514
        %6549 = vadd.xlane.f32.xlu0 %v6548
        %v6550 = vpop.xlane.xlu0 %6549
        %v6551 = vadd.f32 %v6515, %v6516
        %6552 = vadd.xlane.f32.xlu0 %v6551
        %v6553 = vpop.xlane.xlu0 %6552
        %v6554 = vadd.f32 %v6517, %v6518
        %6555 = vadd.xlane.f32.xlu0 %v6554
        %v6556 = vpop.xlane.xlu0 %6555
        %v6557 = vadd.f32 %v6519, %v6520
        %6558 = vadd.xlane.f32.xlu0 %v6557
        %v6559 = vpop.xlane.xlu0 %6558
        %v6560 = vadd.f32 %v6521, %v6522
        %6561 = vadd.xlane.f32.xlu0 %v6560
        %v6562 = vpop.xlane.xlu0 %6561
        %v6563 = vadd.f32 %v6523, %v6524
        %6564 = vadd.xlane.f32.xlu0 %v6563
        %v6565 = vpop.xlane.xlu0 %6564
        %v6566 = vadd.f32 %v6525, %v6526
        %6567 = vadd.xlane.f32.xlu0 %v6566
        %v6568 = vpop.xlane.xlu0 %6567
        %v6569 = vadd.f32 %v6527, %v6528
        %6570 = vadd.xlane.f32.xlu0 %v6569
        %v6571 = vpop.xlane.xlu0 %6570
        %v6572 = vadd.f32 %v6529, %v6530
        %6573 = vadd.xlane.f32.xlu0 %v6572
        %v6574 = vpop.xlane.xlu0 %6573
        %v6575 = vadd.f32 %v6531, %v6532
        %6576 = vadd.xlane.f32.xlu0 %v6575
        %v6577 = vpop.xlane.xlu0 %6576
        %v6578 = vadd.f32 %v6533, %v6534
        %6579 = vadd.xlane.f32.xlu0 %v6578
        %v6580 = vpop.xlane.xlu0 %6579
        %v6581 = vadd.f32 %v6535, %v6536
        %6582 = vadd.xlane.f32.xlu0 %v6581
        %v6583 = vpop.xlane.xlu0 %6582
        %v6584 = vadd.f32 %v6537, %v6538
        %6585 = vadd.xlane.f32.xlu0 %v6584
        %v6586 = vpop.xlane.xlu0 %6585
        %v6603 = vperm.slane %v6541, %v3835
        %v6604 = vperm.slane %v6544, %v3837
        %v6605 = vsel %vm3839, %v6604, %v6603
        %v6606 = vperm.slane %v6547, %v3841
        %v6607 = vsel %vm3843, %v6606, %v6605
        %v6608 = vperm.slane %v6550, %v3845
        %v6609 = vsel %vm3847, %v6608, %v6607
        %v6610 = vperm.slane %v6553, %v3849
        %v6611 = vsel %vm3851, %v6610, %v6609
        %v6612 = vperm.slane %v6556, %v3853
        %v6613 = vsel %vm3855, %v6612, %v6611
        %v6614 = vperm.slane %v6559, %v3857
        %v6615 = vsel %vm3859, %v6614, %v6613
        %v6616 = vperm.slane %v6562, %v3861
        %v6617 = vsel %vm3863, %v6616, %v6615
        %v6618 = vperm.slane %v6565, %v3865
        %v6619 = vsel %vm3867, %v6618, %v6617
        %v6620 = vperm.slane %v6568, %v3869
        %v6621 = vsel %vm3871, %v6620, %v6619
        %v6622 = vperm.slane %v6571, %v3873
        %v6623 = vsel %vm3875, %v6622, %v6621
        %v6624 = vperm.slane %v6574, %v3877
        %v6625 = vsel %vm3879, %v6624, %v6623
        %v6626 = vperm.slane %v6577, %v3881
        %v6627 = vsel %vm3883, %v6626, %v6625
        %v6628 = vperm.slane %v6580, %v3885
        %v6629 = vsel %vm3887, %v6628, %v6627
        %v6630 = vperm.slane %v6583, %v3889
        %v6631 = vsel %vm3891, %v6630, %v6629
        %v6632 = vperm.slane %v6586, %v3893
        %v6633 = vsel %vm3895, %v6632, %v6631
        %6635 = vst [vmem:[%s231 + $0x11] sm:$0x1] %v6633
        %v6636 = vld [vmem:[%s2017] sm:$0xff]
        %v6637 = vld [vmem:[%s2017 + $0x8] sm:$0xff]
        %v6638 = vld [vmem:[%s2017 + $0x10] sm:$0xff]
        %v6639 = vld [vmem:[%s2017 + $0x18] sm:$0xff]
        %v6640 = vld [vmem:[%s2017 + $0x20] sm:$0xff]
        %v6641 = vld [vmem:[%s2017 + $0x28] sm:$0xff]
        %v6642 = vld [vmem:[%s2017 + $0x30] sm:$0xff]
        %v6643 = vld [vmem:[%s2017 + $0x38] sm:$0xff]
        %v6644 = vld [vmem:[%s2017 + $0x40] sm:$0xff]
        %v6645 = vld [vmem:[%s2017 + $0x48] sm:$0xff]
        %v6646 = vld [vmem:[%s2017 + $0x50] sm:$0xff]
        %v6647 = vld [vmem:[%s2017 + $0x58] sm:$0xff]
        %v6648 = vld [vmem:[%s2017 + $0x60] sm:$0xff]
        %v6649 = vld [vmem:[%s2017 + $0x68] sm:$0xff]
        %v6650 = vld [vmem:[%s2017 + $0x70] sm:$0xff]
        %v6651 = vld [vmem:[%s2017 + $0x78] sm:$0xff]
        %v6652 = vld [vmem:[%s2017 + $0x80] sm:$0xff]
        %v6653 = vld [vmem:[%s2017 + $0x88] sm:$0xff]
        %v6654 = vld [vmem:[%s2017 + $0x90] sm:$0xff]
        %v6655 = vld [vmem:[%s2017 + $0x98] sm:$0xff]
        %v6656 = vld [vmem:[%s2017 + $0xa0] sm:$0xff]
        %v6657 = vld [vmem:[%s2017 + $0xa8] sm:$0xff]
        %v6658 = vld [vmem:[%s2017 + $0xb0] sm:$0xff]
        %v6659 = vld [vmem:[%s2017 + $0xb8] sm:$0xff]
        %v6660 = vld [vmem:[%s2017 + $0xc0] sm:$0xff]
        %v6661 = vld [vmem:[%s2017 + $0xc8] sm:$0xff]
        %v6662 = vld [vmem:[%s2017 + $0xd0] sm:$0xff]
        %v6663 = vld [vmem:[%s2017 + $0xd8] sm:$0xff]
        %v6664 = vld [vmem:[%s2017 + $0xe0] sm:$0xff]
        %v6665 = vld [vmem:[%s2017 + $0xe8] sm:$0xff]
        %v6666 = vld [vmem:[%s2017 + $0xf0] sm:$0xff]
        %v6667 = vld [vmem:[%s2017 + $0xf8] sm:$0xff]
        %v6668 = vmul.f32 %v3706, %v6636
        %v6669 = vmul.f32 %v3707, %v6637
        %v6670 = vmul.f32 %v3708, %v6638
        %v6671 = vmul.f32 %v3709, %v6639
        %v6672 = vmul.f32 %v3710, %v6640
        %v6673 = vmul.f32 %v3711, %v6641
        %v6674 = vmul.f32 %v3712, %v6642
        %v6675 = vmul.f32 %v3713, %v6643
        %v6676 = vmul.f32 %v3714, %v6644
        %v6677 = vmul.f32 %v3715, %v6645
        %v6678 = vmul.f32 %v3716, %v6646
        %v6679 = vmul.f32 %v3717, %v6647
        %v6680 = vmul.f32 %v3718, %v6648
        %v6681 = vmul.f32 %v3719, %v6649
        %v6682 = vmul.f32 %v3720, %v6650
        %v6683 = vmul.f32 %v3721, %v6651
        %v6684 = vmul.f32 %v3722, %v6652
        %v6685 = vmul.f32 %v3723, %v6653
        %v6686 = vmul.f32 %v3724, %v6654
        %v6687 = vmul.f32 %v3725, %v6655
        %v6688 = vmul.f32 %v3726, %v6656
        %v6689 = vmul.f32 %v3727, %v6657
        %v6690 = vmul.f32 %v3728, %v6658
        %v6691 = vmul.f32 %v3729, %v6659
        %v6692 = vmul.f32 %v3730, %v6660
        %v6693 = vmul.f32 %v3731, %v6661
        %v6694 = vmul.f32 %v3732, %v6662
        %v6695 = vmul.f32 %v3733, %v6663
        %v6696 = vmul.f32 %v3734, %v6664
        %v6697 = vmul.f32 %v3735, %v6665
        %v6698 = vmul.f32 %v3736, %v6666
        %v6699 = vmul.f32 %v3737, %v6667
        %v6700 = vadd.f32 %v6668, %v6669
        %6701 = vadd.xlane.f32.xlu0 %v6700
        %v6702 = vpop.xlane.xlu0 %6701
        %v6703 = vadd.f32 %v6670, %v6671
        %6704 = vadd.xlane.f32.xlu0 %v6703
        %v6705 = vpop.xlane.xlu0 %6704
        %v6706 = vadd.f32 %v6672, %v6673
        %6707 = vadd.xlane.f32.xlu0 %v6706
        %v6708 = vpop.xlane.xlu0 %6707
        %v6709 = vadd.f32 %v6674, %v6675
        %6710 = vadd.xlane.f32.xlu0 %v6709
        %v6711 = vpop.xlane.xlu0 %6710
        %v6712 = vadd.f32 %v6676, %v6677
        %6713 = vadd.xlane.f32.xlu0 %v6712
        %v6714 = vpop.xlane.xlu0 %6713
        %v6715 = vadd.f32 %v6678, %v6679
        %6716 = vadd.xlane.f32.xlu0 %v6715
        %v6717 = vpop.xlane.xlu0 %6716
        %v6718 = vadd.f32 %v6680, %v6681
        %6719 = vadd.xlane.f32.xlu0 %v6718
        %v6720 = vpop.xlane.xlu0 %6719
        %v6721 = vadd.f32 %v6682, %v6683
        %6722 = vadd.xlane.f32.xlu0 %v6721
        %v6723 = vpop.xlane.xlu0 %6722
        %v6724 = vadd.f32 %v6684, %v6685
        %6725 = vadd.xlane.f32.xlu0 %v6724
        %v6726 = vpop.xlane.xlu0 %6725
        %v6727 = vadd.f32 %v6686, %v6687
        %6728 = vadd.xlane.f32.xlu0 %v6727
        %v6729 = vpop.xlane.xlu0 %6728
        %v6730 = vadd.f32 %v6688, %v6689
        %6731 = vadd.xlane.f32.xlu0 %v6730
        %v6732 = vpop.xlane.xlu0 %6731
        %v6733 = vadd.f32 %v6690, %v6691
        %6734 = vadd.xlane.f32.xlu0 %v6733
        %v6735 = vpop.xlane.xlu0 %6734
        %v6736 = vadd.f32 %v6692, %v6693
        %6737 = vadd.xlane.f32.xlu0 %v6736
        %v6738 = vpop.xlane.xlu0 %6737
        %v6739 = vadd.f32 %v6694, %v6695
        %6740 = vadd.xlane.f32.xlu0 %v6739
        %v6741 = vpop.xlane.xlu0 %6740
        %v6742 = vadd.f32 %v6696, %v6697
        %6743 = vadd.xlane.f32.xlu0 %v6742
        %v6744 = vpop.xlane.xlu0 %6743
        %v6745 = vadd.f32 %v6698, %v6699
        %6746 = vadd.xlane.f32.xlu0 %v6745
        %v6747 = vpop.xlane.xlu0 %6746
        %v6764 = vperm.slane %v6702, %v3835
        %v6765 = vperm.slane %v6705, %v3837
        %v6766 = vsel %vm3839, %v6765, %v6764
        %v6767 = vperm.slane %v6708, %v3841
        %v6768 = vsel %vm3843, %v6767, %v6766
        %v6769 = vperm.slane %v6711, %v3845
        %v6770 = vsel %vm3847, %v6769, %v6768
        %v6771 = vperm.slane %v6714, %v3849
        %v6772 = vsel %vm3851, %v6771, %v6770
        %v6773 = vperm.slane %v6717, %v3853
        %v6774 = vsel %vm3855, %v6773, %v6772
        %v6775 = vperm.slane %v6720, %v3857
        %v6776 = vsel %vm3859, %v6775, %v6774
        %v6777 = vperm.slane %v6723, %v3861
        %v6778 = vsel %vm3863, %v6777, %v6776
        %v6779 = vperm.slane %v6726, %v3865
        %v6780 = vsel %vm3867, %v6779, %v6778
        %v6781 = vperm.slane %v6729, %v3869
        %v6782 = vsel %vm3871, %v6781, %v6780
        %v6783 = vperm.slane %v6732, %v3873
        %v6784 = vsel %vm3875, %v6783, %v6782
        %v6785 = vperm.slane %v6735, %v3877
        %v6786 = vsel %vm3879, %v6785, %v6784
        %v6787 = vperm.slane %v6738, %v3881
        %v6788 = vsel %vm3883, %v6787, %v6786
        %v6789 = vperm.slane %v6741, %v3885
        %v6790 = vsel %vm3887, %v6789, %v6788
        %v6791 = vperm.slane %v6744, %v3889
        %v6792 = vsel %vm3891, %v6791, %v6790
        %v6793 = vperm.slane %v6747, %v3893
        %v6794 = vsel %vm3895, %v6793, %v6792
        %6796 = vst [vmem:[%s231 + $0x12] sm:$0x1] %v6794
        %v6797 = vld [vmem:[%s2116] sm:$0xff]
        %v6798 = vld [vmem:[%s2116 + $0x8] sm:$0xff]
        %v6799 = vld [vmem:[%s2116 + $0x10] sm:$0xff]
        %v6800 = vld [vmem:[%s2116 + $0x18] sm:$0xff]
        %v6801 = vld [vmem:[%s2116 + $0x20] sm:$0xff]
        %v6802 = vld [vmem:[%s2116 + $0x28] sm:$0xff]
        %v6803 = vld [vmem:[%s2116 + $0x30] sm:$0xff]
        %v6804 = vld [vmem:[%s2116 + $0x38] sm:$0xff]
        %v6805 = vld [vmem:[%s2116 + $0x40] sm:$0xff]
        %v6806 = vld [vmem:[%s2116 + $0x48] sm:$0xff]
        %v6807 = vld [vmem:[%s2116 + $0x50] sm:$0xff]
        %v6808 = vld [vmem:[%s2116 + $0x58] sm:$0xff]
        %v6809 = vld [vmem:[%s2116 + $0x60] sm:$0xff]
        %v6810 = vld [vmem:[%s2116 + $0x68] sm:$0xff]
        %v6811 = vld [vmem:[%s2116 + $0x70] sm:$0xff]
        %v6812 = vld [vmem:[%s2116 + $0x78] sm:$0xff]
        %v6813 = vld [vmem:[%s2116 + $0x80] sm:$0xff]
        %v6814 = vld [vmem:[%s2116 + $0x88] sm:$0xff]
        %v6815 = vld [vmem:[%s2116 + $0x90] sm:$0xff]
        %v6816 = vld [vmem:[%s2116 + $0x98] sm:$0xff]
        %v6817 = vld [vmem:[%s2116 + $0xa0] sm:$0xff]
        %v6818 = vld [vmem:[%s2116 + $0xa8] sm:$0xff]
        %v6819 = vld [vmem:[%s2116 + $0xb0] sm:$0xff]
        %v6820 = vld [vmem:[%s2116 + $0xb8] sm:$0xff]
        %v6821 = vld [vmem:[%s2116 + $0xc0] sm:$0xff]
        %v6822 = vld [vmem:[%s2116 + $0xc8] sm:$0xff]
        %v6823 = vld [vmem:[%s2116 + $0xd0] sm:$0xff]
        %v6824 = vld [vmem:[%s2116 + $0xd8] sm:$0xff]
        %v6825 = vld [vmem:[%s2116 + $0xe0] sm:$0xff]
        %v6826 = vld [vmem:[%s2116 + $0xe8] sm:$0xff]
        %v6827 = vld [vmem:[%s2116 + $0xf0] sm:$0xff]
        %v6828 = vld [vmem:[%s2116 + $0xf8] sm:$0xff]
        %v6829 = vmul.f32 %v3706, %v6797
        %v6830 = vmul.f32 %v3707, %v6798
        %v6831 = vmul.f32 %v3708, %v6799
        %v6832 = vmul.f32 %v3709, %v6800
        %v6833 = vmul.f32 %v3710, %v6801
        %v6834 = vmul.f32 %v3711, %v6802
        %v6835 = vmul.f32 %v3712, %v6803
        %v6836 = vmul.f32 %v3713, %v6804
        %v6837 = vmul.f32 %v3714, %v6805
        %v6838 = vmul.f32 %v3715, %v6806
        %v6839 = vmul.f32 %v3716, %v6807
        %v6840 = vmul.f32 %v3717, %v6808
        %v6841 = vmul.f32 %v3718, %v6809
        %v6842 = vmul.f32 %v3719, %v6810
        %v6843 = vmul.f32 %v3720, %v6811
        %v6844 = vmul.f32 %v3721, %v6812
        %v6845 = vmul.f32 %v3722, %v6813
        %v6846 = vmul.f32 %v3723, %v6814
        %v6847 = vmul.f32 %v3724, %v6815
        %v6848 = vmul.f32 %v3725, %v6816
        %v6849 = vmul.f32 %v3726, %v6817
        %v6850 = vmul.f32 %v3727, %v6818
        %v6851 = vmul.f32 %v3728, %v6819
        %v6852 = vmul.f32 %v3729, %v6820
        %v6853 = vmul.f32 %v3730, %v6821
        %v6854 = vmul.f32 %v3731, %v6822
        %v6855 = vmul.f32 %v3732, %v6823
        %v6856 = vmul.f32 %v3733, %v6824
        %v6857 = vmul.f32 %v3734, %v6825
        %v6858 = vmul.f32 %v3735, %v6826
        %v6859 = vmul.f32 %v3736, %v6827
        %v6860 = vmul.f32 %v3737, %v6828
        %v6861 = vadd.f32 %v6829, %v6830
        %6862 = vadd.xlane.f32.xlu0 %v6861
        %v6863 = vpop.xlane.xlu0 %6862
        %v6864 = vadd.f32 %v6831, %v6832
        %6865 = vadd.xlane.f32.xlu0 %v6864
        %v6866 = vpop.xlane.xlu0 %6865
        %v6867 = vadd.f32 %v6833, %v6834
        %6868 = vadd.xlane.f32.xlu0 %v6867
        %v6869 = vpop.xlane.xlu0 %6868
        %v6870 = vadd.f32 %v6835, %v6836
        %6871 = vadd.xlane.f32.xlu0 %v6870
        %v6872 = vpop.xlane.xlu0 %6871
        %v6873 = vadd.f32 %v6837, %v6838
        %6874 = vadd.xlane.f32.xlu0 %v6873
        %v6875 = vpop.xlane.xlu0 %6874
        %v6876 = vadd.f32 %v6839, %v6840
        %6877 = vadd.xlane.f32.xlu0 %v6876
        %v6878 = vpop.xlane.xlu0 %6877
        %v6879 = vadd.f32 %v6841, %v6842
        %6880 = vadd.xlane.f32.xlu0 %v6879
        %v6881 = vpop.xlane.xlu0 %6880
        %v6882 = vadd.f32 %v6843, %v6844
        %6883 = vadd.xlane.f32.xlu0 %v6882
        %v6884 = vpop.xlane.xlu0 %6883
        %v6885 = vadd.f32 %v6845, %v6846
        %6886 = vadd.xlane.f32.xlu0 %v6885
        %v6887 = vpop.xlane.xlu0 %6886
        %v6888 = vadd.f32 %v6847, %v6848
        %6889 = vadd.xlane.f32.xlu0 %v6888
        %v6890 = vpop.xlane.xlu0 %6889
        %v6891 = vadd.f32 %v6849, %v6850
        %6892 = vadd.xlane.f32.xlu0 %v6891
        %v6893 = vpop.xlane.xlu0 %6892
        %v6894 = vadd.f32 %v6851, %v6852
        %6895 = vadd.xlane.f32.xlu0 %v6894
        %v6896 = vpop.xlane.xlu0 %6895
        %v6897 = vadd.f32 %v6853, %v6854
        %6898 = vadd.xlane.f32.xlu0 %v6897
        %v6899 = vpop.xlane.xlu0 %6898
        %v6900 = vadd.f32 %v6855, %v6856
        %6901 = vadd.xlane.f32.xlu0 %v6900
        %v6902 = vpop.xlane.xlu0 %6901
        %v6903 = vadd.f32 %v6857, %v6858
        %6904 = vadd.xlane.f32.xlu0 %v6903
        %v6905 = vpop.xlane.xlu0 %6904
        %v6906 = vadd.f32 %v6859, %v6860
        %6907 = vadd.xlane.f32.xlu0 %v6906
        %v6908 = vpop.xlane.xlu0 %6907
        %v6925 = vperm.slane %v6863, %v3835
        %v6926 = vperm.slane %v6866, %v3837
        %v6927 = vsel %vm3839, %v6926, %v6925
        %v6928 = vperm.slane %v6869, %v3841
        %v6929 = vsel %vm3843, %v6928, %v6927
        %v6930 = vperm.slane %v6872, %v3845
        %v6931 = vsel %vm3847, %v6930, %v6929
        %v6932 = vperm.slane %v6875, %v3849
        %v6933 = vsel %vm3851, %v6932, %v6931
        %v6934 = vperm.slane %v6878, %v3853
        %v6935 = vsel %vm3855, %v6934, %v6933
        %v6936 = vperm.slane %v6881, %v3857
        %v6937 = vsel %vm3859, %v6936, %v6935
        %v6938 = vperm.slane %v6884, %v3861
        %v6939 = vsel %vm3863, %v6938, %v6937
        %v6940 = vperm.slane %v6887, %v3865
        %v6941 = vsel %vm3867, %v6940, %v6939
        %v6942 = vperm.slane %v6890, %v3869
        %v6943 = vsel %vm3871, %v6942, %v6941
        %v6944 = vperm.slane %v6893, %v3873
        %v6945 = vsel %vm3875, %v6944, %v6943
        %v6946 = vperm.slane %v6896, %v3877
        %v6947 = vsel %vm3879, %v6946, %v6945
        %v6948 = vperm.slane %v6899, %v3881
        %v6949 = vsel %vm3883, %v6948, %v6947
        %v6950 = vperm.slane %v6902, %v3885
        %v6951 = vsel %vm3887, %v6950, %v6949
        %v6952 = vperm.slane %v6905, %v3889
        %v6953 = vsel %vm3891, %v6952, %v6951
        %v6954 = vperm.slane %v6908, %v3893
        %v6955 = vsel %vm3895, %v6954, %v6953
        %6957 = vst [vmem:[%s231 + $0x13] sm:$0x1] %v6955
        %v6958 = vld [vmem:[%s2215] sm:$0xff]
        %v6959 = vld [vmem:[%s2215 + $0x8] sm:$0xff]
        %v6960 = vld [vmem:[%s2215 + $0x10] sm:$0xff]
        %v6961 = vld [vmem:[%s2215 + $0x18] sm:$0xff]
        %v6962 = vld [vmem:[%s2215 + $0x20] sm:$0xff]
        %v6963 = vld [vmem:[%s2215 + $0x28] sm:$0xff]
        %v6964 = vld [vmem:[%s2215 + $0x30] sm:$0xff]
        %v6965 = vld [vmem:[%s2215 + $0x38] sm:$0xff]
        %v6966 = vld [vmem:[%s2215 + $0x40] sm:$0xff]
        %v6967 = vld [vmem:[%s2215 + $0x48] sm:$0xff]
        %v6968 = vld [vmem:[%s2215 + $0x50] sm:$0xff]
        %v6969 = vld [vmem:[%s2215 + $0x58] sm:$0xff]
        %v6970 = vld [vmem:[%s2215 + $0x60] sm:$0xff]
        %v6971 = vld [vmem:[%s2215 + $0x68] sm:$0xff]
        %v6972 = vld [vmem:[%s2215 + $0x70] sm:$0xff]
        %v6973 = vld [vmem:[%s2215 + $0x78] sm:$0xff]
        %v6974 = vld [vmem:[%s2215 + $0x80] sm:$0xff]
        %v6975 = vld [vmem:[%s2215 + $0x88] sm:$0xff]
        %v6976 = vld [vmem:[%s2215 + $0x90] sm:$0xff]
        %v6977 = vld [vmem:[%s2215 + $0x98] sm:$0xff]
        %v6978 = vld [vmem:[%s2215 + $0xa0] sm:$0xff]
        %v6979 = vld [vmem:[%s2215 + $0xa8] sm:$0xff]
        %v6980 = vld [vmem:[%s2215 + $0xb0] sm:$0xff]
        %v6981 = vld [vmem:[%s2215 + $0xb8] sm:$0xff]
        %v6982 = vld [vmem:[%s2215 + $0xc0] sm:$0xff]
        %v6983 = vld [vmem:[%s2215 + $0xc8] sm:$0xff]
        %v6984 = vld [vmem:[%s2215 + $0xd0] sm:$0xff]
        %v6985 = vld [vmem:[%s2215 + $0xd8] sm:$0xff]
        %v6986 = vld [vmem:[%s2215 + $0xe0] sm:$0xff]
        %v6987 = vld [vmem:[%s2215 + $0xe8] sm:$0xff]
        %v6988 = vld [vmem:[%s2215 + $0xf0] sm:$0xff]
        %v6989 = vld [vmem:[%s2215 + $0xf8] sm:$0xff]
        %v6990 = vmul.f32 %v3706, %v6958
        %v6991 = vmul.f32 %v3707, %v6959
        %v6992 = vmul.f32 %v3708, %v6960
        %v6993 = vmul.f32 %v3709, %v6961
        %v6994 = vmul.f32 %v3710, %v6962
        %v6995 = vmul.f32 %v3711, %v6963
        %v6996 = vmul.f32 %v3712, %v6964
        %v6997 = vmul.f32 %v3713, %v6965
        %v6998 = vmul.f32 %v3714, %v6966
        %v6999 = vmul.f32 %v3715, %v6967
        %v7000 = vmul.f32 %v3716, %v6968
        %v7001 = vmul.f32 %v3717, %v6969
        %v7002 = vmul.f32 %v3718, %v6970
        %v7003 = vmul.f32 %v3719, %v6971
        %v7004 = vmul.f32 %v3720, %v6972
        %v7005 = vmul.f32 %v3721, %v6973
        %v7006 = vmul.f32 %v3722, %v6974
        %v7007 = vmul.f32 %v3723, %v6975
        %v7008 = vmul.f32 %v3724, %v6976
        %v7009 = vmul.f32 %v3725, %v6977
        %v7010 = vmul.f32 %v3726, %v6978
        %v7011 = vmul.f32 %v3727, %v6979
        %v7012 = vmul.f32 %v3728, %v6980
        %v7013 = vmul.f32 %v3729, %v6981
        %v7014 = vmul.f32 %v3730, %v6982
        %v7015 = vmul.f32 %v3731, %v6983
        %v7016 = vmul.f32 %v3732, %v6984
        %v7017 = vmul.f32 %v3733, %v6985
        %v7018 = vmul.f32 %v3734, %v6986
        %v7019 = vmul.f32 %v3735, %v6987
        %v7020 = vmul.f32 %v3736, %v6988
        %v7021 = vmul.f32 %v3737, %v6989
        %v7022 = vadd.f32 %v6990, %v6991
        %7023 = vadd.xlane.f32.xlu0 %v7022
        %v7024 = vpop.xlane.xlu0 %7023
        %v7025 = vadd.f32 %v6992, %v6993
        %7026 = vadd.xlane.f32.xlu0 %v7025
        %v7027 = vpop.xlane.xlu0 %7026
        %v7028 = vadd.f32 %v6994, %v6995
        %7029 = vadd.xlane.f32.xlu0 %v7028
        %v7030 = vpop.xlane.xlu0 %7029
        %v7031 = vadd.f32 %v6996, %v6997
        %7032 = vadd.xlane.f32.xlu0 %v7031
        %v7033 = vpop.xlane.xlu0 %7032
        %v7034 = vadd.f32 %v6998, %v6999
        %7035 = vadd.xlane.f32.xlu0 %v7034
        %v7036 = vpop.xlane.xlu0 %7035
        %v7037 = vadd.f32 %v7000, %v7001
        %7038 = vadd.xlane.f32.xlu0 %v7037
        %v7039 = vpop.xlane.xlu0 %7038
        %v7040 = vadd.f32 %v7002, %v7003
        %7041 = vadd.xlane.f32.xlu0 %v7040
        %v7042 = vpop.xlane.xlu0 %7041
        %v7043 = vadd.f32 %v7004, %v7005
        %7044 = vadd.xlane.f32.xlu0 %v7043
        %v7045 = vpop.xlane.xlu0 %7044
        %v7046 = vadd.f32 %v7006, %v7007
        %7047 = vadd.xlane.f32.xlu0 %v7046
        %v7048 = vpop.xlane.xlu0 %7047
        %v7049 = vadd.f32 %v7008, %v7009
        %7050 = vadd.xlane.f32.xlu0 %v7049
        %v7051 = vpop.xlane.xlu0 %7050
        %v7052 = vadd.f32 %v7010, %v7011
        %7053 = vadd.xlane.f32.xlu0 %v7052
        %v7054 = vpop.xlane.xlu0 %7053
        %v7055 = vadd.f32 %v7012, %v7013
        %7056 = vadd.xlane.f32.xlu0 %v7055
        %v7057 = vpop.xlane.xlu0 %7056
        %v7058 = vadd.f32 %v7014, %v7015
        %7059 = vadd.xlane.f32.xlu0 %v7058
        %v7060 = vpop.xlane.xlu0 %7059
        %v7061 = vadd.f32 %v7016, %v7017
        %7062 = vadd.xlane.f32.xlu0 %v7061
        %v7063 = vpop.xlane.xlu0 %7062
        %v7064 = vadd.f32 %v7018, %v7019
        %7065 = vadd.xlane.f32.xlu0 %v7064
        %v7066 = vpop.xlane.xlu0 %7065
        %v7067 = vadd.f32 %v7020, %v7021
        %7068 = vadd.xlane.f32.xlu0 %v7067
        %v7069 = vpop.xlane.xlu0 %7068
        %v7086 = vperm.slane %v7024, %v3835
        %v7087 = vperm.slane %v7027, %v3837
        %v7088 = vsel %vm3839, %v7087, %v7086
        %v7089 = vperm.slane %v7030, %v3841
        %v7090 = vsel %vm3843, %v7089, %v7088
        %v7091 = vperm.slane %v7033, %v3845
        %v7092 = vsel %vm3847, %v7091, %v7090
        %v7093 = vperm.slane %v7036, %v3849
        %v7094 = vsel %vm3851, %v7093, %v7092
        %v7095 = vperm.slane %v7039, %v3853
        %v7096 = vsel %vm3855, %v7095, %v7094
        %v7097 = vperm.slane %v7042, %v3857
        %v7098 = vsel %vm3859, %v7097, %v7096
        %v7099 = vperm.slane %v7045, %v3861
        %v7100 = vsel %vm3863, %v7099, %v7098
        %v7101 = vperm.slane %v7048, %v3865
        %v7102 = vsel %vm3867, %v7101, %v7100
        %v7103 = vperm.slane %v7051, %v3869
        %v7104 = vsel %vm3871, %v7103, %v7102
        %v7105 = vperm.slane %v7054, %v3873
        %v7106 = vsel %vm3875, %v7105, %v7104
        %v7107 = vperm.slane %v7057, %v3877
        %v7108 = vsel %vm3879, %v7107, %v7106
        %v7109 = vperm.slane %v7060, %v3881
        %v7110 = vsel %vm3883, %v7109, %v7108
        %v7111 = vperm.slane %v7063, %v3885
        %v7112 = vsel %vm3887, %v7111, %v7110
        %v7113 = vperm.slane %v7066, %v3889
        %v7114 = vsel %vm3891, %v7113, %v7112
        %v7115 = vperm.slane %v7069, %v3893
        %v7116 = vsel %vm3895, %v7115, %v7114
        %7118 = vst [vmem:[%s231 + $0x14] sm:$0x1] %v7116
        %v7119 = vld [vmem:[%s2314] sm:$0xff]
        %v7120 = vld [vmem:[%s2314 + $0x8] sm:$0xff]
        %v7121 = vld [vmem:[%s2314 + $0x10] sm:$0xff]
        %v7122 = vld [vmem:[%s2314 + $0x18] sm:$0xff]
        %v7123 = vld [vmem:[%s2314 + $0x20] sm:$0xff]
        %v7124 = vld [vmem:[%s2314 + $0x28] sm:$0xff]
        %v7125 = vld [vmem:[%s2314 + $0x30] sm:$0xff]
        %v7126 = vld [vmem:[%s2314 + $0x38] sm:$0xff]
        %v7127 = vld [vmem:[%s2314 + $0x40] sm:$0xff]
        %v7128 = vld [vmem:[%s2314 + $0x48] sm:$0xff]
        %v7129 = vld [vmem:[%s2314 + $0x50] sm:$0xff]
        %v7130 = vld [vmem:[%s2314 + $0x58] sm:$0xff]
        %v7131 = vld [vmem:[%s2314 + $0x60] sm:$0xff]
        %v7132 = vld [vmem:[%s2314 + $0x68] sm:$0xff]
        %v7133 = vld [vmem:[%s2314 + $0x70] sm:$0xff]
        %v7134 = vld [vmem:[%s2314 + $0x78] sm:$0xff]
        %v7135 = vld [vmem:[%s2314 + $0x80] sm:$0xff]
        %v7136 = vld [vmem:[%s2314 + $0x88] sm:$0xff]
        %v7137 = vld [vmem:[%s2314 + $0x90] sm:$0xff]
        %v7138 = vld [vmem:[%s2314 + $0x98] sm:$0xff]
        %v7139 = vld [vmem:[%s2314 + $0xa0] sm:$0xff]
        %v7140 = vld [vmem:[%s2314 + $0xa8] sm:$0xff]
        %v7141 = vld [vmem:[%s2314 + $0xb0] sm:$0xff]
        %v7142 = vld [vmem:[%s2314 + $0xb8] sm:$0xff]
        %v7143 = vld [vmem:[%s2314 + $0xc0] sm:$0xff]
        %v7144 = vld [vmem:[%s2314 + $0xc8] sm:$0xff]
        %v7145 = vld [vmem:[%s2314 + $0xd0] sm:$0xff]
        %v7146 = vld [vmem:[%s2314 + $0xd8] sm:$0xff]
        %v7147 = vld [vmem:[%s2314 + $0xe0] sm:$0xff]
        %v7148 = vld [vmem:[%s2314 + $0xe8] sm:$0xff]
        %v7149 = vld [vmem:[%s2314 + $0xf0] sm:$0xff]
        %v7150 = vld [vmem:[%s2314 + $0xf8] sm:$0xff]
        %v7151 = vmul.f32 %v3706, %v7119
        %v7152 = vmul.f32 %v3707, %v7120
        %v7153 = vmul.f32 %v3708, %v7121
        %v7154 = vmul.f32 %v3709, %v7122
        %v7155 = vmul.f32 %v3710, %v7123
        %v7156 = vmul.f32 %v3711, %v7124
        %v7157 = vmul.f32 %v3712, %v7125
        %v7158 = vmul.f32 %v3713, %v7126
        %v7159 = vmul.f32 %v3714, %v7127
        %v7160 = vmul.f32 %v3715, %v7128
        %v7161 = vmul.f32 %v3716, %v7129
        %v7162 = vmul.f32 %v3717, %v7130
        %v7163 = vmul.f32 %v3718, %v7131
        %v7164 = vmul.f32 %v3719, %v7132
        %v7165 = vmul.f32 %v3720, %v7133
        %v7166 = vmul.f32 %v3721, %v7134
        %v7167 = vmul.f32 %v3722, %v7135
        %v7168 = vmul.f32 %v3723, %v7136
        %v7169 = vmul.f32 %v3724, %v7137
        %v7170 = vmul.f32 %v3725, %v7138
        %v7171 = vmul.f32 %v3726, %v7139
        %v7172 = vmul.f32 %v3727, %v7140
        %v7173 = vmul.f32 %v3728, %v7141
        %v7174 = vmul.f32 %v3729, %v7142
        %v7175 = vmul.f32 %v3730, %v7143
        %v7176 = vmul.f32 %v3731, %v7144
        %v7177 = vmul.f32 %v3732, %v7145
        %v7178 = vmul.f32 %v3733, %v7146
        %v7179 = vmul.f32 %v3734, %v7147
        %v7180 = vmul.f32 %v3735, %v7148
        %v7181 = vmul.f32 %v3736, %v7149
        %v7182 = vmul.f32 %v3737, %v7150
        %v7183 = vadd.f32 %v7151, %v7152
        %7184 = vadd.xlane.f32.xlu0 %v7183
        %v7185 = vpop.xlane.xlu0 %7184
        %v7186 = vadd.f32 %v7153, %v7154
        %7187 = vadd.xlane.f32.xlu0 %v7186
        %v7188 = vpop.xlane.xlu0 %7187
        %v7189 = vadd.f32 %v7155, %v7156
        %7190 = vadd.xlane.f32.xlu0 %v7189
        %v7191 = vpop.xlane.xlu0 %7190
        %v7192 = vadd.f32 %v7157, %v7158
        %7193 = vadd.xlane.f32.xlu0 %v7192
        %v7194 = vpop.xlane.xlu0 %7193
        %v7195 = vadd.f32 %v7159, %v7160
        %7196 = vadd.xlane.f32.xlu0 %v7195
        %v7197 = vpop.xlane.xlu0 %7196
        %v7198 = vadd.f32 %v7161, %v7162
        %7199 = vadd.xlane.f32.xlu0 %v7198
        %v7200 = vpop.xlane.xlu0 %7199
        %v7201 = vadd.f32 %v7163, %v7164
        %7202 = vadd.xlane.f32.xlu0 %v7201
        %v7203 = vpop.xlane.xlu0 %7202
        %v7204 = vadd.f32 %v7165, %v7166
        %7205 = vadd.xlane.f32.xlu0 %v7204
        %v7206 = vpop.xlane.xlu0 %7205
        %v7207 = vadd.f32 %v7167, %v7168
        %7208 = vadd.xlane.f32.xlu0 %v7207
        %v7209 = vpop.xlane.xlu0 %7208
        %v7210 = vadd.f32 %v7169, %v7170
        %7211 = vadd.xlane.f32.xlu0 %v7210
        %v7212 = vpop.xlane.xlu0 %7211
        %v7213 = vadd.f32 %v7171, %v7172
        %7214 = vadd.xlane.f32.xlu0 %v7213
        %v7215 = vpop.xlane.xlu0 %7214
        %v7216 = vadd.f32 %v7173, %v7174
        %7217 = vadd.xlane.f32.xlu0 %v7216
        %v7218 = vpop.xlane.xlu0 %7217
        %v7219 = vadd.f32 %v7175, %v7176
        %7220 = vadd.xlane.f32.xlu0 %v7219
        %v7221 = vpop.xlane.xlu0 %7220
        %v7222 = vadd.f32 %v7177, %v7178
        %7223 = vadd.xlane.f32.xlu0 %v7222
        %v7224 = vpop.xlane.xlu0 %7223
        %v7225 = vadd.f32 %v7179, %v7180
        %7226 = vadd.xlane.f32.xlu0 %v7225
        %v7227 = vpop.xlane.xlu0 %7226
        %v7228 = vadd.f32 %v7181, %v7182
        %7229 = vadd.xlane.f32.xlu0 %v7228
        %v7230 = vpop.xlane.xlu0 %7229
        %v7247 = vperm.slane %v7185, %v3835
        %v7248 = vperm.slane %v7188, %v3837
        %v7249 = vsel %vm3839, %v7248, %v7247
        %v7250 = vperm.slane %v7191, %v3841
        %v7251 = vsel %vm3843, %v7250, %v7249
        %v7252 = vperm.slane %v7194, %v3845
        %v7253 = vsel %vm3847, %v7252, %v7251
        %v7254 = vperm.slane %v7197, %v3849
        %v7255 = vsel %vm3851, %v7254, %v7253
        %v7256 = vperm.slane %v7200, %v3853
        %v7257 = vsel %vm3855, %v7256, %v7255
        %v7258 = vperm.slane %v7203, %v3857
        %v7259 = vsel %vm3859, %v7258, %v7257
        %v7260 = vperm.slane %v7206, %v3861
        %v7261 = vsel %vm3863, %v7260, %v7259
        %v7262 = vperm.slane %v7209, %v3865
        %v7263 = vsel %vm3867, %v7262, %v7261
        %v7264 = vperm.slane %v7212, %v3869
        %v7265 = vsel %vm3871, %v7264, %v7263
        %v7266 = vperm.slane %v7215, %v3873
        %v7267 = vsel %vm3875, %v7266, %v7265
        %v7268 = vperm.slane %v7218, %v3877
        %v7269 = vsel %vm3879, %v7268, %v7267
        %v7270 = vperm.slane %v7221, %v3881
        %v7271 = vsel %vm3883, %v7270, %v7269
        %v7272 = vperm.slane %v7224, %v3885
        %v7273 = vsel %vm3887, %v7272, %v7271
        %v7274 = vperm.slane %v7227, %v3889
        %v7275 = vsel %vm3891, %v7274, %v7273
        %v7276 = vperm.slane %v7230, %v3893
        %v7277 = vsel %vm3895, %v7276, %v7275
        %7279 = vst [vmem:[%s231 + $0x15] sm:$0x1] %v7277
        %v7280 = vld [vmem:[%s2413] sm:$0xff]
        %v7281 = vld [vmem:[%s2413 + $0x8] sm:$0xff]
        %v7282 = vld [vmem:[%s2413 + $0x10] sm:$0xff]
        %v7283 = vld [vmem:[%s2413 + $0x18] sm:$0xff]
        %v7284 = vld [vmem:[%s2413 + $0x20] sm:$0xff]
        %v7285 = vld [vmem:[%s2413 + $0x28] sm:$0xff]
        %v7286 = vld [vmem:[%s2413 + $0x30] sm:$0xff]
        %v7287 = vld [vmem:[%s2413 + $0x38] sm:$0xff]
        %v7288 = vld [vmem:[%s2413 + $0x40] sm:$0xff]
        %v7289 = vld [vmem:[%s2413 + $0x48] sm:$0xff]
        %v7290 = vld [vmem:[%s2413 + $0x50] sm:$0xff]
        %v7291 = vld [vmem:[%s2413 + $0x58] sm:$0xff]
        %v7292 = vld [vmem:[%s2413 + $0x60] sm:$0xff]
        %v7293 = vld [vmem:[%s2413 + $0x68] sm:$0xff]
        %v7294 = vld [vmem:[%s2413 + $0x70] sm:$0xff]
        %v7295 = vld [vmem:[%s2413 + $0x78] sm:$0xff]
        %v7296 = vld [vmem:[%s2413 + $0x80] sm:$0xff]
        %v7297 = vld [vmem:[%s2413 + $0x88] sm:$0xff]
        %v7298 = vld [vmem:[%s2413 + $0x90] sm:$0xff]
        %v7299 = vld [vmem:[%s2413 + $0x98] sm:$0xff]
        %v7300 = vld [vmem:[%s2413 + $0xa0] sm:$0xff]
        %v7301 = vld [vmem:[%s2413 + $0xa8] sm:$0xff]
        %v7302 = vld [vmem:[%s2413 + $0xb0] sm:$0xff]
        %v7303 = vld [vmem:[%s2413 + $0xb8] sm:$0xff]
        %v7304 = vld [vmem:[%s2413 + $0xc0] sm:$0xff]
        %v7305 = vld [vmem:[%s2413 + $0xc8] sm:$0xff]
        %v7306 = vld [vmem:[%s2413 + $0xd0] sm:$0xff]
        %v7307 = vld [vmem:[%s2413 + $0xd8] sm:$0xff]
        %v7308 = vld [vmem:[%s2413 + $0xe0] sm:$0xff]
        %v7309 = vld [vmem:[%s2413 + $0xe8] sm:$0xff]
        %v7310 = vld [vmem:[%s2413 + $0xf0] sm:$0xff]
        %v7311 = vld [vmem:[%s2413 + $0xf8] sm:$0xff]
        %v7312 = vmul.f32 %v3706, %v7280
        %v7313 = vmul.f32 %v3707, %v7281
        %v7314 = vmul.f32 %v3708, %v7282
        %v7315 = vmul.f32 %v3709, %v7283
        %v7316 = vmul.f32 %v3710, %v7284
        %v7317 = vmul.f32 %v3711, %v7285
        %v7318 = vmul.f32 %v3712, %v7286
        %v7319 = vmul.f32 %v3713, %v7287
        %v7320 = vmul.f32 %v3714, %v7288
        %v7321 = vmul.f32 %v3715, %v7289
        %v7322 = vmul.f32 %v3716, %v7290
        %v7323 = vmul.f32 %v3717, %v7291
        %v7324 = vmul.f32 %v3718, %v7292
        %v7325 = vmul.f32 %v3719, %v7293
        %v7326 = vmul.f32 %v3720, %v7294
        %v7327 = vmul.f32 %v3721, %v7295
        %v7328 = vmul.f32 %v3722, %v7296
        %v7329 = vmul.f32 %v3723, %v7297
        %v7330 = vmul.f32 %v3724, %v7298
        %v7331 = vmul.f32 %v3725, %v7299
        %v7332 = vmul.f32 %v3726, %v7300
        %v7333 = vmul.f32 %v3727, %v7301
        %v7334 = vmul.f32 %v3728, %v7302
        %v7335 = vmul.f32 %v3729, %v7303
        %v7336 = vmul.f32 %v3730, %v7304
        %v7337 = vmul.f32 %v3731, %v7305
        %v7338 = vmul.f32 %v3732, %v7306
        %v7339 = vmul.f32 %v3733, %v7307
        %v7340 = vmul.f32 %v3734, %v7308
        %v7341 = vmul.f32 %v3735, %v7309
        %v7342 = vmul.f32 %v3736, %v7310
        %v7343 = vmul.f32 %v3737, %v7311
        %v7344 = vadd.f32 %v7312, %v7313
        %7345 = vadd.xlane.f32.xlu0 %v7344
        %v7346 = vpop.xlane.xlu0 %7345
        %v7347 = vadd.f32 %v7314, %v7315
        %7348 = vadd.xlane.f32.xlu0 %v7347
        %v7349 = vpop.xlane.xlu0 %7348
        %v7350 = vadd.f32 %v7316, %v7317
        %7351 = vadd.xlane.f32.xlu0 %v7350
        %v7352 = vpop.xlane.xlu0 %7351
        %v7353 = vadd.f32 %v7318, %v7319
        %7354 = vadd.xlane.f32.xlu0 %v7353
        %v7355 = vpop.xlane.xlu0 %7354
        %v7356 = vadd.f32 %v7320, %v7321
        %7357 = vadd.xlane.f32.xlu0 %v7356
        %v7358 = vpop.xlane.xlu0 %7357
        %v7359 = vadd.f32 %v7322, %v7323
        %7360 = vadd.xlane.f32.xlu0 %v7359
        %v7361 = vpop.xlane.xlu0 %7360
        %v7362 = vadd.f32 %v7324, %v7325
        %7363 = vadd.xlane.f32.xlu0 %v7362
        %v7364 = vpop.xlane.xlu0 %7363
        %v7365 = vadd.f32 %v7326, %v7327
        %7366 = vadd.xlane.f32.xlu0 %v7365
        %v7367 = vpop.xlane.xlu0 %7366
        %v7368 = vadd.f32 %v7328, %v7329
        %7369 = vadd.xlane.f32.xlu0 %v7368
        %v7370 = vpop.xlane.xlu0 %7369
        %v7371 = vadd.f32 %v7330, %v7331
        %7372 = vadd.xlane.f32.xlu0 %v7371
        %v7373 = vpop.xlane.xlu0 %7372
        %v7374 = vadd.f32 %v7332, %v7333
        %7375 = vadd.xlane.f32.xlu0 %v7374
        %v7376 = vpop.xlane.xlu0 %7375
        %v7377 = vadd.f32 %v7334, %v7335
        %7378 = vadd.xlane.f32.xlu0 %v7377
        %v7379 = vpop.xlane.xlu0 %7378
        %v7380 = vadd.f32 %v7336, %v7337
        %7381 = vadd.xlane.f32.xlu0 %v7380
        %v7382 = vpop.xlane.xlu0 %7381
        %v7383 = vadd.f32 %v7338, %v7339
        %7384 = vadd.xlane.f32.xlu0 %v7383
        %v7385 = vpop.xlane.xlu0 %7384
        %v7386 = vadd.f32 %v7340, %v7341
        %7387 = vadd.xlane.f32.xlu0 %v7386
        %v7388 = vpop.xlane.xlu0 %7387
        %v7389 = vadd.f32 %v7342, %v7343
        %7390 = vadd.xlane.f32.xlu0 %v7389
        %v7391 = vpop.xlane.xlu0 %7390
        %v7408 = vperm.slane %v7346, %v3835
        %v7409 = vperm.slane %v7349, %v3837
        %v7410 = vsel %vm3839, %v7409, %v7408
        %v7411 = vperm.slane %v7352, %v3841
        %v7412 = vsel %vm3843, %v7411, %v7410
        %v7413 = vperm.slane %v7355, %v3845
        %v7414 = vsel %vm3847, %v7413, %v7412
        %v7415 = vperm.slane %v7358, %v3849
        %v7416 = vsel %vm3851, %v7415, %v7414
        %v7417 = vperm.slane %v7361, %v3853
        %v7418 = vsel %vm3855, %v7417, %v7416
        %v7419 = vperm.slane %v7364, %v3857
        %v7420 = vsel %vm3859, %v7419, %v7418
        %v7421 = vperm.slane %v7367, %v3861
        %v7422 = vsel %vm3863, %v7421, %v7420
        %v7423 = vperm.slane %v7370, %v3865
        %v7424 = vsel %vm3867, %v7423, %v7422
        %v7425 = vperm.slane %v7373, %v3869
        %v7426 = vsel %vm3871, %v7425, %v7424
        %v7427 = vperm.slane %v7376, %v3873
        %v7428 = vsel %vm3875, %v7427, %v7426
        %v7429 = vperm.slane %v7379, %v3877
        %v7430 = vsel %vm3879, %v7429, %v7428
        %v7431 = vperm.slane %v7382, %v3881
        %v7432 = vsel %vm3883, %v7431, %v7430
        %v7433 = vperm.slane %v7385, %v3885
        %v7434 = vsel %vm3887, %v7433, %v7432
        %v7435 = vperm.slane %v7388, %v3889
        %v7436 = vsel %vm3891, %v7435, %v7434
        %v7437 = vperm.slane %v7391, %v3893
        %v7438 = vsel %vm3895, %v7437, %v7436
        %7440 = vst [vmem:[%s231 + $0x16] sm:$0x1] %v7438
        %v7441 = vld [vmem:[%s2512] sm:$0xff]
        %v7442 = vld [vmem:[%s2512 + $0x8] sm:$0xff]
        %v7443 = vld [vmem:[%s2512 + $0x10] sm:$0xff]
        %v7444 = vld [vmem:[%s2512 + $0x18] sm:$0xff]
        %v7445 = vld [vmem:[%s2512 + $0x20] sm:$0xff]
        %v7446 = vld [vmem:[%s2512 + $0x28] sm:$0xff]
        %v7447 = vld [vmem:[%s2512 + $0x30] sm:$0xff]
        %v7448 = vld [vmem:[%s2512 + $0x38] sm:$0xff]
        %v7449 = vld [vmem:[%s2512 + $0x40] sm:$0xff]
        %v7450 = vld [vmem:[%s2512 + $0x48] sm:$0xff]
        %v7451 = vld [vmem:[%s2512 + $0x50] sm:$0xff]
        %v7452 = vld [vmem:[%s2512 + $0x58] sm:$0xff]
        %v7453 = vld [vmem:[%s2512 + $0x60] sm:$0xff]
        %v7454 = vld [vmem:[%s2512 + $0x68] sm:$0xff]
        %v7455 = vld [vmem:[%s2512 + $0x70] sm:$0xff]
        %v7456 = vld [vmem:[%s2512 + $0x78] sm:$0xff]
        %v7457 = vld [vmem:[%s2512 + $0x80] sm:$0xff]
        %v7458 = vld [vmem:[%s2512 + $0x88] sm:$0xff]
        %v7459 = vld [vmem:[%s2512 + $0x90] sm:$0xff]
        %v7460 = vld [vmem:[%s2512 + $0x98] sm:$0xff]
        %v7461 = vld [vmem:[%s2512 + $0xa0] sm:$0xff]
        %v7462 = vld [vmem:[%s2512 + $0xa8] sm:$0xff]
        %v7463 = vld [vmem:[%s2512 + $0xb0] sm:$0xff]
        %v7464 = vld [vmem:[%s2512 + $0xb8] sm:$0xff]
        %v7465 = vld [vmem:[%s2512 + $0xc0] sm:$0xff]
        %v7466 = vld [vmem:[%s2512 + $0xc8] sm:$0xff]
        %v7467 = vld [vmem:[%s2512 + $0xd0] sm:$0xff]
        %v7468 = vld [vmem:[%s2512 + $0xd8] sm:$0xff]
        %v7469 = vld [vmem:[%s2512 + $0xe0] sm:$0xff]
        %v7470 = vld [vmem:[%s2512 + $0xe8] sm:$0xff]
        %v7471 = vld [vmem:[%s2512 + $0xf0] sm:$0xff]
        %v7472 = vld [vmem:[%s2512 + $0xf8] sm:$0xff]
        %v7473 = vmul.f32 %v3706, %v7441
        %v7474 = vmul.f32 %v3707, %v7442
        %v7475 = vmul.f32 %v3708, %v7443
        %v7476 = vmul.f32 %v3709, %v7444
        %v7477 = vmul.f32 %v3710, %v7445
        %v7478 = vmul.f32 %v3711, %v7446
        %v7479 = vmul.f32 %v3712, %v7447
        %v7480 = vmul.f32 %v3713, %v7448
        %v7481 = vmul.f32 %v3714, %v7449
        %v7482 = vmul.f32 %v3715, %v7450
        %v7483 = vmul.f32 %v3716, %v7451
        %v7484 = vmul.f32 %v3717, %v7452
        %v7485 = vmul.f32 %v3718, %v7453
        %v7486 = vmul.f32 %v3719, %v7454
        %v7487 = vmul.f32 %v3720, %v7455
        %v7488 = vmul.f32 %v3721, %v7456
        %v7489 = vmul.f32 %v3722, %v7457
        %v7490 = vmul.f32 %v3723, %v7458
        %v7491 = vmul.f32 %v3724, %v7459
        %v7492 = vmul.f32 %v3725, %v7460
        %v7493 = vmul.f32 %v3726, %v7461
        %v7494 = vmul.f32 %v3727, %v7462
        %v7495 = vmul.f32 %v3728, %v7463
        %v7496 = vmul.f32 %v3729, %v7464
        %v7497 = vmul.f32 %v3730, %v7465
        %v7498 = vmul.f32 %v3731, %v7466
        %v7499 = vmul.f32 %v3732, %v7467
        %v7500 = vmul.f32 %v3733, %v7468
        %v7501 = vmul.f32 %v3734, %v7469
        %v7502 = vmul.f32 %v3735, %v7470
        %v7503 = vmul.f32 %v3736, %v7471
        %v7504 = vmul.f32 %v3737, %v7472
        %v7505 = vadd.f32 %v7473, %v7474
        %7506 = vadd.xlane.f32.xlu0 %v7505
        %v7507 = vpop.xlane.xlu0 %7506
        %v7508 = vadd.f32 %v7475, %v7476
        %7509 = vadd.xlane.f32.xlu0 %v7508
        %v7510 = vpop.xlane.xlu0 %7509
        %v7511 = vadd.f32 %v7477, %v7478
        %7512 = vadd.xlane.f32.xlu0 %v7511
        %v7513 = vpop.xlane.xlu0 %7512
        %v7514 = vadd.f32 %v7479, %v7480
        %7515 = vadd.xlane.f32.xlu0 %v7514
        %v7516 = vpop.xlane.xlu0 %7515
        %v7517 = vadd.f32 %v7481, %v7482
        %7518 = vadd.xlane.f32.xlu0 %v7517
        %v7519 = vpop.xlane.xlu0 %7518
        %v7520 = vadd.f32 %v7483, %v7484
        %7521 = vadd.xlane.f32.xlu0 %v7520
        %v7522 = vpop.xlane.xlu0 %7521
        %v7523 = vadd.f32 %v7485, %v7486
        %7524 = vadd.xlane.f32.xlu0 %v7523
        %v7525 = vpop.xlane.xlu0 %7524
        %v7526 = vadd.f32 %v7487, %v7488
        %7527 = vadd.xlane.f32.xlu0 %v7526
        %v7528 = vpop.xlane.xlu0 %7527
        %v7529 = vadd.f32 %v7489, %v7490
        %7530 = vadd.xlane.f32.xlu0 %v7529
        %v7531 = vpop.xlane.xlu0 %7530
        %v7532 = vadd.f32 %v7491, %v7492
        %7533 = vadd.xlane.f32.xlu0 %v7532
        %v7534 = vpop.xlane.xlu0 %7533
        %v7535 = vadd.f32 %v7493, %v7494
        %7536 = vadd.xlane.f32.xlu0 %v7535
        %v7537 = vpop.xlane.xlu0 %7536
        %v7538 = vadd.f32 %v7495, %v7496
        %7539 = vadd.xlane.f32.xlu0 %v7538
        %v7540 = vpop.xlane.xlu0 %7539
        %v7541 = vadd.f32 %v7497, %v7498
        %7542 = vadd.xlane.f32.xlu0 %v7541
        %v7543 = vpop.xlane.xlu0 %7542
        %v7544 = vadd.f32 %v7499, %v7500
        %7545 = vadd.xlane.f32.xlu0 %v7544
        %v7546 = vpop.xlane.xlu0 %7545
        %v7547 = vadd.f32 %v7501, %v7502
        %7548 = vadd.xlane.f32.xlu0 %v7547
        %v7549 = vpop.xlane.xlu0 %7548
        %v7550 = vadd.f32 %v7503, %v7504
        %7551 = vadd.xlane.f32.xlu0 %v7550
        %v7552 = vpop.xlane.xlu0 %7551
        %v7569 = vperm.slane %v7507, %v3835
        %v7570 = vperm.slane %v7510, %v3837
        %v7571 = vsel %vm3839, %v7570, %v7569
        %v7572 = vperm.slane %v7513, %v3841
        %v7573 = vsel %vm3843, %v7572, %v7571
        %v7574 = vperm.slane %v7516, %v3845
        %v7575 = vsel %vm3847, %v7574, %v7573
        %v7576 = vperm.slane %v7519, %v3849
        %v7577 = vsel %vm3851, %v7576, %v7575
        %v7578 = vperm.slane %v7522, %v3853
        %v7579 = vsel %vm3855, %v7578, %v7577
        %v7580 = vperm.slane %v7525, %v3857
        %v7581 = vsel %vm3859, %v7580, %v7579
        %v7582 = vperm.slane %v7528, %v3861
        %v7583 = vsel %vm3863, %v7582, %v7581
        %v7584 = vperm.slane %v7531, %v3865
        %v7585 = vsel %vm3867, %v7584, %v7583
        %v7586 = vperm.slane %v7534, %v3869
        %v7587 = vsel %vm3871, %v7586, %v7585
        %v7588 = vperm.slane %v7537, %v3873
        %v7589 = vsel %vm3875, %v7588, %v7587
        %v7590 = vperm.slane %v7540, %v3877
        %v7591 = vsel %vm3879, %v7590, %v7589
        %v7592 = vperm.slane %v7543, %v3881
        %v7593 = vsel %vm3883, %v7592, %v7591
        %v7594 = vperm.slane %v7546, %v3885
        %v7595 = vsel %vm3887, %v7594, %v7593
        %v7596 = vperm.slane %v7549, %v3889
        %v7597 = vsel %vm3891, %v7596, %v7595
        %v7598 = vperm.slane %v7552, %v3893
        %v7599 = vsel %vm3895, %v7598, %v7597
        %7601 = vst [vmem:[%s231 + $0x17] sm:$0x1] %v7599
        %v7602 = vld [vmem:[%s2611] sm:$0xff]
        %v7603 = vld [vmem:[%s2611 + $0x8] sm:$0xff]
        %v7604 = vld [vmem:[%s2611 + $0x10] sm:$0xff]
        %v7605 = vld [vmem:[%s2611 + $0x18] sm:$0xff]
        %v7606 = vld [vmem:[%s2611 + $0x20] sm:$0xff]
        %v7607 = vld [vmem:[%s2611 + $0x28] sm:$0xff]
        %v7608 = vld [vmem:[%s2611 + $0x30] sm:$0xff]
        %v7609 = vld [vmem:[%s2611 + $0x38] sm:$0xff]
        %v7610 = vld [vmem:[%s2611 + $0x40] sm:$0xff]
        %v7611 = vld [vmem:[%s2611 + $0x48] sm:$0xff]
        %v7612 = vld [vmem:[%s2611 + $0x50] sm:$0xff]
        %v7613 = vld [vmem:[%s2611 + $0x58] sm:$0xff]
        %v7614 = vld [vmem:[%s2611 + $0x60] sm:$0xff]
        %v7615 = vld [vmem:[%s2611 + $0x68] sm:$0xff]
        %v7616 = vld [vmem:[%s2611 + $0x70] sm:$0xff]
        %v7617 = vld [vmem:[%s2611 + $0x78] sm:$0xff]
        %v7618 = vld [vmem:[%s2611 + $0x80] sm:$0xff]
        %v7619 = vld [vmem:[%s2611 + $0x88] sm:$0xff]
        %v7620 = vld [vmem:[%s2611 + $0x90] sm:$0xff]
        %v7621 = vld [vmem:[%s2611 + $0x98] sm:$0xff]
        %v7622 = vld [vmem:[%s2611 + $0xa0] sm:$0xff]
        %v7623 = vld [vmem:[%s2611 + $0xa8] sm:$0xff]
        %v7624 = vld [vmem:[%s2611 + $0xb0] sm:$0xff]
        %v7625 = vld [vmem:[%s2611 + $0xb8] sm:$0xff]
        %v7626 = vld [vmem:[%s2611 + $0xc0] sm:$0xff]
        %v7627 = vld [vmem:[%s2611 + $0xc8] sm:$0xff]
        %v7628 = vld [vmem:[%s2611 + $0xd0] sm:$0xff]
        %v7629 = vld [vmem:[%s2611 + $0xd8] sm:$0xff]
        %v7630 = vld [vmem:[%s2611 + $0xe0] sm:$0xff]
        %v7631 = vld [vmem:[%s2611 + $0xe8] sm:$0xff]
        %v7632 = vld [vmem:[%s2611 + $0xf0] sm:$0xff]
        %v7633 = vld [vmem:[%s2611 + $0xf8] sm:$0xff]
        %v7634 = vmul.f32 %v3706, %v7602
        %v7635 = vmul.f32 %v3707, %v7603
        %v7636 = vmul.f32 %v3708, %v7604
        %v7637 = vmul.f32 %v3709, %v7605
        %v7638 = vmul.f32 %v3710, %v7606
        %v7639 = vmul.f32 %v3711, %v7607
        %v7640 = vmul.f32 %v3712, %v7608
        %v7641 = vmul.f32 %v3713, %v7609
        %v7642 = vmul.f32 %v3714, %v7610
        %v7643 = vmul.f32 %v3715, %v7611
        %v7644 = vmul.f32 %v3716, %v7612
        %v7645 = vmul.f32 %v3717, %v7613
        %v7646 = vmul.f32 %v3718, %v7614
        %v7647 = vmul.f32 %v3719, %v7615
        %v7648 = vmul.f32 %v3720, %v7616
        %v7649 = vmul.f32 %v3721, %v7617
        %v7650 = vmul.f32 %v3722, %v7618
        %v7651 = vmul.f32 %v3723, %v7619
        %v7652 = vmul.f32 %v3724, %v7620
        %v7653 = vmul.f32 %v3725, %v7621
        %v7654 = vmul.f32 %v3726, %v7622
        %v7655 = vmul.f32 %v3727, %v7623
        %v7656 = vmul.f32 %v3728, %v7624
        %v7657 = vmul.f32 %v3729, %v7625
        %v7658 = vmul.f32 %v3730, %v7626
        %v7659 = vmul.f32 %v3731, %v7627
        %v7660 = vmul.f32 %v3732, %v7628
        %v7661 = vmul.f32 %v3733, %v7629
        %v7662 = vmul.f32 %v3734, %v7630
        %v7663 = vmul.f32 %v3735, %v7631
        %v7664 = vmul.f32 %v3736, %v7632
        %v7665 = vmul.f32 %v3737, %v7633
        %v7666 = vadd.f32 %v7634, %v7635
        %7667 = vadd.xlane.f32.xlu0 %v7666
        %v7668 = vpop.xlane.xlu0 %7667
        %v7669 = vadd.f32 %v7636, %v7637
        %7670 = vadd.xlane.f32.xlu0 %v7669
        %v7671 = vpop.xlane.xlu0 %7670
        %v7672 = vadd.f32 %v7638, %v7639
        %7673 = vadd.xlane.f32.xlu0 %v7672
        %v7674 = vpop.xlane.xlu0 %7673
        %v7675 = vadd.f32 %v7640, %v7641
        %7676 = vadd.xlane.f32.xlu0 %v7675
        %v7677 = vpop.xlane.xlu0 %7676
        %v7678 = vadd.f32 %v7642, %v7643
        %7679 = vadd.xlane.f32.xlu0 %v7678
        %v7680 = vpop.xlane.xlu0 %7679
        %v7681 = vadd.f32 %v7644, %v7645
        %7682 = vadd.xlane.f32.xlu0 %v7681
        %v7683 = vpop.xlane.xlu0 %7682
        %v7684 = vadd.f32 %v7646, %v7647
        %7685 = vadd.xlane.f32.xlu0 %v7684
        %v7686 = vpop.xlane.xlu0 %7685
        %v7687 = vadd.f32 %v7648, %v7649
        %7688 = vadd.xlane.f32.xlu0 %v7687
        %v7689 = vpop.xlane.xlu0 %7688
        %v7690 = vadd.f32 %v7650, %v7651
        %7691 = vadd.xlane.f32.xlu0 %v7690
        %v7692 = vpop.xlane.xlu0 %7691
        %v7693 = vadd.f32 %v7652, %v7653
        %7694 = vadd.xlane.f32.xlu0 %v7693
        %v7695 = vpop.xlane.xlu0 %7694
        %v7696 = vadd.f32 %v7654, %v7655
        %7697 = vadd.xlane.f32.xlu0 %v7696
        %v7698 = vpop.xlane.xlu0 %7697
        %v7699 = vadd.f32 %v7656, %v7657
        %7700 = vadd.xlane.f32.xlu0 %v7699
        %v7701 = vpop.xlane.xlu0 %7700
        %v7702 = vadd.f32 %v7658, %v7659
        %7703 = vadd.xlane.f32.xlu0 %v7702
        %v7704 = vpop.xlane.xlu0 %7703
        %v7705 = vadd.f32 %v7660, %v7661
        %7706 = vadd.xlane.f32.xlu0 %v7705
        %v7707 = vpop.xlane.xlu0 %7706
        %v7708 = vadd.f32 %v7662, %v7663
        %7709 = vadd.xlane.f32.xlu0 %v7708
        %v7710 = vpop.xlane.xlu0 %7709
        %v7711 = vadd.f32 %v7664, %v7665
        %7712 = vadd.xlane.f32.xlu0 %v7711
        %v7713 = vpop.xlane.xlu0 %7712
        %v7730 = vperm.slane %v7668, %v3835
        %v7731 = vperm.slane %v7671, %v3837
        %v7732 = vsel %vm3839, %v7731, %v7730
        %v7733 = vperm.slane %v7674, %v3841
        %v7734 = vsel %vm3843, %v7733, %v7732
        %v7735 = vperm.slane %v7677, %v3845
        %v7736 = vsel %vm3847, %v7735, %v7734
        %v7737 = vperm.slane %v7680, %v3849
        %v7738 = vsel %vm3851, %v7737, %v7736
        %v7739 = vperm.slane %v7683, %v3853
        %v7740 = vsel %vm3855, %v7739, %v7738
        %v7741 = vperm.slane %v7686, %v3857
        %v7742 = vsel %vm3859, %v7741, %v7740
        %v7743 = vperm.slane %v7689, %v3861
        %v7744 = vsel %vm3863, %v7743, %v7742
        %v7745 = vperm.slane %v7692, %v3865
        %v7746 = vsel %vm3867, %v7745, %v7744
        %v7747 = vperm.slane %v7695, %v3869
        %v7748 = vsel %vm3871, %v7747, %v7746
        %v7749 = vperm.slane %v7698, %v3873
        %v7750 = vsel %vm3875, %v7749, %v7748
        %v7751 = vperm.slane %v7701, %v3877
        %v7752 = vsel %vm3879, %v7751, %v7750
        %v7753 = vperm.slane %v7704, %v3881
        %v7754 = vsel %vm3883, %v7753, %v7752
        %v7755 = vperm.slane %v7707, %v3885
        %v7756 = vsel %vm3887, %v7755, %v7754
        %v7757 = vperm.slane %v7710, %v3889
        %v7758 = vsel %vm3891, %v7757, %v7756
        %v7759 = vperm.slane %v7713, %v3893
        %v7760 = vsel %vm3895, %v7759, %v7758
        %7762 = vst [vmem:[%s231 + $0x18] sm:$0x1] %v7760
        %v7763 = vld [vmem:[%s2710] sm:$0xff]
        %v7764 = vld [vmem:[%s2710 + $0x8] sm:$0xff]
        %v7765 = vld [vmem:[%s2710 + $0x10] sm:$0xff]
        %v7766 = vld [vmem:[%s2710 + $0x18] sm:$0xff]
        %v7767 = vld [vmem:[%s2710 + $0x20] sm:$0xff]
        %v7768 = vld [vmem:[%s2710 + $0x28] sm:$0xff]
        %v7769 = vld [vmem:[%s2710 + $0x30] sm:$0xff]
        %v7770 = vld [vmem:[%s2710 + $0x38] sm:$0xff]
        %v7771 = vld [vmem:[%s2710 + $0x40] sm:$0xff]
        %v7772 = vld [vmem:[%s2710 + $0x48] sm:$0xff]
        %v7773 = vld [vmem:[%s2710 + $0x50] sm:$0xff]
        %v7774 = vld [vmem:[%s2710 + $0x58] sm:$0xff]
        %v7775 = vld [vmem:[%s2710 + $0x60] sm:$0xff]
        %v7776 = vld [vmem:[%s2710 + $0x68] sm:$0xff]
        %v7777 = vld [vmem:[%s2710 + $0x70] sm:$0xff]
        %v7778 = vld [vmem:[%s2710 + $0x78] sm:$0xff]
        %v7779 = vld [vmem:[%s2710 + $0x80] sm:$0xff]
        %v7780 = vld [vmem:[%s2710 + $0x88] sm:$0xff]
        %v7781 = vld [vmem:[%s2710 + $0x90] sm:$0xff]
        %v7782 = vld [vmem:[%s2710 + $0x98] sm:$0xff]
        %v7783 = vld [vmem:[%s2710 + $0xa0] sm:$0xff]
        %v7784 = vld [vmem:[%s2710 + $0xa8] sm:$0xff]
        %v7785 = vld [vmem:[%s2710 + $0xb0] sm:$0xff]
        %v7786 = vld [vmem:[%s2710 + $0xb8] sm:$0xff]
        %v7787 = vld [vmem:[%s2710 + $0xc0] sm:$0xff]
        %v7788 = vld [vmem:[%s2710 + $0xc8] sm:$0xff]
        %v7789 = vld [vmem:[%s2710 + $0xd0] sm:$0xff]
        %v7790 = vld [vmem:[%s2710 + $0xd8] sm:$0xff]
        %v7791 = vld [vmem:[%s2710 + $0xe0] sm:$0xff]
        %v7792 = vld [vmem:[%s2710 + $0xe8] sm:$0xff]
        %v7793 = vld [vmem:[%s2710 + $0xf0] sm:$0xff]
        %v7794 = vld [vmem:[%s2710 + $0xf8] sm:$0xff]
        %v7795 = vmul.f32 %v3706, %v7763
        %v7796 = vmul.f32 %v3707, %v7764
        %v7797 = vmul.f32 %v3708, %v7765
        %v7798 = vmul.f32 %v3709, %v7766
        %v7799 = vmul.f32 %v3710, %v7767
        %v7800 = vmul.f32 %v3711, %v7768
        %v7801 = vmul.f32 %v3712, %v7769
        %v7802 = vmul.f32 %v3713, %v7770
        %v7803 = vmul.f32 %v3714, %v7771
        %v7804 = vmul.f32 %v3715, %v7772
        %v7805 = vmul.f32 %v3716, %v7773
        %v7806 = vmul.f32 %v3717, %v7774
        %v7807 = vmul.f32 %v3718, %v7775
        %v7808 = vmul.f32 %v3719, %v7776
        %v7809 = vmul.f32 %v3720, %v7777
        %v7810 = vmul.f32 %v3721, %v7778
        %v7811 = vmul.f32 %v3722, %v7779
        %v7812 = vmul.f32 %v3723, %v7780
        %v7813 = vmul.f32 %v3724, %v7781
        %v7814 = vmul.f32 %v3725, %v7782
        %v7815 = vmul.f32 %v3726, %v7783
        %v7816 = vmul.f32 %v3727, %v7784
        %v7817 = vmul.f32 %v3728, %v7785
        %v7818 = vmul.f32 %v3729, %v7786
        %v7819 = vmul.f32 %v3730, %v7787
        %v7820 = vmul.f32 %v3731, %v7788
        %v7821 = vmul.f32 %v3732, %v7789
        %v7822 = vmul.f32 %v3733, %v7790
        %v7823 = vmul.f32 %v3734, %v7791
        %v7824 = vmul.f32 %v3735, %v7792
        %v7825 = vmul.f32 %v3736, %v7793
        %v7826 = vmul.f32 %v3737, %v7794
        %v7827 = vadd.f32 %v7795, %v7796
        %7828 = vadd.xlane.f32.xlu0 %v7827
        %v7829 = vpop.xlane.xlu0 %7828
        %v7830 = vadd.f32 %v7797, %v7798
        %7831 = vadd.xlane.f32.xlu0 %v7830
        %v7832 = vpop.xlane.xlu0 %7831
        %v7833 = vadd.f32 %v7799, %v7800
        %7834 = vadd.xlane.f32.xlu0 %v7833
        %v7835 = vpop.xlane.xlu0 %7834
        %v7836 = vadd.f32 %v7801, %v7802
        %7837 = vadd.xlane.f32.xlu0 %v7836
        %v7838 = vpop.xlane.xlu0 %7837
        %v7839 = vadd.f32 %v7803, %v7804
        %7840 = vadd.xlane.f32.xlu0 %v7839
        %v7841 = vpop.xlane.xlu0 %7840
        %v7842 = vadd.f32 %v7805, %v7806
        %7843 = vadd.xlane.f32.xlu0 %v7842
        %v7844 = vpop.xlane.xlu0 %7843
        %v7845 = vadd.f32 %v7807, %v7808
        %7846 = vadd.xlane.f32.xlu0 %v7845
        %v7847 = vpop.xlane.xlu0 %7846
        %v7848 = vadd.f32 %v7809, %v7810
        %7849 = vadd.xlane.f32.xlu0 %v7848
        %v7850 = vpop.xlane.xlu0 %7849
        %v7851 = vadd.f32 %v7811, %v7812
        %7852 = vadd.xlane.f32.xlu0 %v7851
        %v7853 = vpop.xlane.xlu0 %7852
        %v7854 = vadd.f32 %v7813, %v7814
        %7855 = vadd.xlane.f32.xlu0 %v7854
        %v7856 = vpop.xlane.xlu0 %7855
        %v7857 = vadd.f32 %v7815, %v7816
        %7858 = vadd.xlane.f32.xlu0 %v7857
        %v7859 = vpop.xlane.xlu0 %7858
        %v7860 = vadd.f32 %v7817, %v7818
        %7861 = vadd.xlane.f32.xlu0 %v7860
        %v7862 = vpop.xlane.xlu0 %7861
        %v7863 = vadd.f32 %v7819, %v7820
        %7864 = vadd.xlane.f32.xlu0 %v7863
        %v7865 = vpop.xlane.xlu0 %7864
        %v7866 = vadd.f32 %v7821, %v7822
        %7867 = vadd.xlane.f32.xlu0 %v7866
        %v7868 = vpop.xlane.xlu0 %7867
        %v7869 = vadd.f32 %v7823, %v7824
        %7870 = vadd.xlane.f32.xlu0 %v7869
        %v7871 = vpop.xlane.xlu0 %7870
        %v7872 = vadd.f32 %v7825, %v7826
        %7873 = vadd.xlane.f32.xlu0 %v7872
        %v7874 = vpop.xlane.xlu0 %7873
        %v7891 = vperm.slane %v7829, %v3835
        %v7892 = vperm.slane %v7832, %v3837
        %v7893 = vsel %vm3839, %v7892, %v7891
        %v7894 = vperm.slane %v7835, %v3841
        %v7895 = vsel %vm3843, %v7894, %v7893
        %v7896 = vperm.slane %v7838, %v3845
        %v7897 = vsel %vm3847, %v7896, %v7895
        %v7898 = vperm.slane %v7841, %v3849
        %v7899 = vsel %vm3851, %v7898, %v7897
        %v7900 = vperm.slane %v7844, %v3853
        %v7901 = vsel %vm3855, %v7900, %v7899
        %v7902 = vperm.slane %v7847, %v3857
        %v7903 = vsel %vm3859, %v7902, %v7901
        %v7904 = vperm.slane %v7850, %v3861
        %v7905 = vsel %vm3863, %v7904, %v7903
        %v7906 = vperm.slane %v7853, %v3865
        %v7907 = vsel %vm3867, %v7906, %v7905
        %v7908 = vperm.slane %v7856, %v3869
        %v7909 = vsel %vm3871, %v7908, %v7907
        %v7910 = vperm.slane %v7859, %v3873
        %v7911 = vsel %vm3875, %v7910, %v7909
        %v7912 = vperm.slane %v7862, %v3877
        %v7913 = vsel %vm3879, %v7912, %v7911
        %v7914 = vperm.slane %v7865, %v3881
        %v7915 = vsel %vm3883, %v7914, %v7913
        %v7916 = vperm.slane %v7868, %v3885
        %v7917 = vsel %vm3887, %v7916, %v7915
        %v7918 = vperm.slane %v7871, %v3889
        %v7919 = vsel %vm3891, %v7918, %v7917
        %v7920 = vperm.slane %v7874, %v3893
        %v7921 = vsel %vm3895, %v7920, %v7919
        %7923 = vst [vmem:[%s231 + $0x19] sm:$0x1] %v7921
        %v7924 = vld [vmem:[%s2809] sm:$0xff]
        %v7925 = vld [vmem:[%s2809 + $0x8] sm:$0xff]
        %v7926 = vld [vmem:[%s2809 + $0x10] sm:$0xff]
        %v7927 = vld [vmem:[%s2809 + $0x18] sm:$0xff]
        %v7928 = vld [vmem:[%s2809 + $0x20] sm:$0xff]
        %v7929 = vld [vmem:[%s2809 + $0x28] sm:$0xff]
        %v7930 = vld [vmem:[%s2809 + $0x30] sm:$0xff]
        %v7931 = vld [vmem:[%s2809 + $0x38] sm:$0xff]
        %v7932 = vld [vmem:[%s2809 + $0x40] sm:$0xff]
        %v7933 = vld [vmem:[%s2809 + $0x48] sm:$0xff]
        %v7934 = vld [vmem:[%s2809 + $0x50] sm:$0xff]
        %v7935 = vld [vmem:[%s2809 + $0x58] sm:$0xff]
        %v7936 = vld [vmem:[%s2809 + $0x60] sm:$0xff]
        %v7937 = vld [vmem:[%s2809 + $0x68] sm:$0xff]
        %v7938 = vld [vmem:[%s2809 + $0x70] sm:$0xff]
        %v7939 = vld [vmem:[%s2809 + $0x78] sm:$0xff]
        %v7940 = vld [vmem:[%s2809 + $0x80] sm:$0xff]
        %v7941 = vld [vmem:[%s2809 + $0x88] sm:$0xff]
        %v7942 = vld [vmem:[%s2809 + $0x90] sm:$0xff]
        %v7943 = vld [vmem:[%s2809 + $0x98] sm:$0xff]
        %v7944 = vld [vmem:[%s2809 + $0xa0] sm:$0xff]
        %v7945 = vld [vmem:[%s2809 + $0xa8] sm:$0xff]
        %v7946 = vld [vmem:[%s2809 + $0xb0] sm:$0xff]
        %v7947 = vld [vmem:[%s2809 + $0xb8] sm:$0xff]
        %v7948 = vld [vmem:[%s2809 + $0xc0] sm:$0xff]
        %v7949 = vld [vmem:[%s2809 + $0xc8] sm:$0xff]
        %v7950 = vld [vmem:[%s2809 + $0xd0] sm:$0xff]
        %v7951 = vld [vmem:[%s2809 + $0xd8] sm:$0xff]
        %v7952 = vld [vmem:[%s2809 + $0xe0] sm:$0xff]
        %v7953 = vld [vmem:[%s2809 + $0xe8] sm:$0xff]
        %v7954 = vld [vmem:[%s2809 + $0xf0] sm:$0xff]
        %v7955 = vld [vmem:[%s2809 + $0xf8] sm:$0xff]
        %v7956 = vmul.f32 %v3706, %v7924
        %v7957 = vmul.f32 %v3707, %v7925
        %v7958 = vmul.f32 %v3708, %v7926
        %v7959 = vmul.f32 %v3709, %v7927
        %v7960 = vmul.f32 %v3710, %v7928
        %v7961 = vmul.f32 %v3711, %v7929
        %v7962 = vmul.f32 %v3712, %v7930
        %v7963 = vmul.f32 %v3713, %v7931
        %v7964 = vmul.f32 %v3714, %v7932
        %v7965 = vmul.f32 %v3715, %v7933
        %v7966 = vmul.f32 %v3716, %v7934
        %v7967 = vmul.f32 %v3717, %v7935
        %v7968 = vmul.f32 %v3718, %v7936
        %v7969 = vmul.f32 %v3719, %v7937
        %v7970 = vmul.f32 %v3720, %v7938
        %v7971 = vmul.f32 %v3721, %v7939
        %v7972 = vmul.f32 %v3722, %v7940
        %v7973 = vmul.f32 %v3723, %v7941
        %v7974 = vmul.f32 %v3724, %v7942
        %v7975 = vmul.f32 %v3725, %v7943
        %v7976 = vmul.f32 %v3726, %v7944
        %v7977 = vmul.f32 %v3727, %v7945
        %v7978 = vmul.f32 %v3728, %v7946
        %v7979 = vmul.f32 %v3729, %v7947
        %v7980 = vmul.f32 %v3730, %v7948
        %v7981 = vmul.f32 %v3731, %v7949
        %v7982 = vmul.f32 %v3732, %v7950
        %v7983 = vmul.f32 %v3733, %v7951
        %v7984 = vmul.f32 %v3734, %v7952
        %v7985 = vmul.f32 %v3735, %v7953
        %v7986 = vmul.f32 %v3736, %v7954
        %v7987 = vmul.f32 %v3737, %v7955
        %v7988 = vadd.f32 %v7956, %v7957
        %7989 = vadd.xlane.f32.xlu0 %v7988
        %v7990 = vpop.xlane.xlu0 %7989
        %v7991 = vadd.f32 %v7958, %v7959
        %7992 = vadd.xlane.f32.xlu0 %v7991
        %v7993 = vpop.xlane.xlu0 %7992
        %v7994 = vadd.f32 %v7960, %v7961
        %7995 = vadd.xlane.f32.xlu0 %v7994
        %v7996 = vpop.xlane.xlu0 %7995
        %v7997 = vadd.f32 %v7962, %v7963
        %7998 = vadd.xlane.f32.xlu0 %v7997
        %v7999 = vpop.xlane.xlu0 %7998
        %v8000 = vadd.f32 %v7964, %v7965
        %8001 = vadd.xlane.f32.xlu0 %v8000
        %v8002 = vpop.xlane.xlu0 %8001
        %v8003 = vadd.f32 %v7966, %v7967
        %8004 = vadd.xlane.f32.xlu0 %v8003
        %v8005 = vpop.xlane.xlu0 %8004
        %v8006 = vadd.f32 %v7968, %v7969
        %8007 = vadd.xlane.f32.xlu0 %v8006
        %v8008 = vpop.xlane.xlu0 %8007
        %v8009 = vadd.f32 %v7970, %v7971
        %8010 = vadd.xlane.f32.xlu0 %v8009
        %v8011 = vpop.xlane.xlu0 %8010
        %v8012 = vadd.f32 %v7972, %v7973
        %8013 = vadd.xlane.f32.xlu0 %v8012
        %v8014 = vpop.xlane.xlu0 %8013
        %v8015 = vadd.f32 %v7974, %v7975
        %8016 = vadd.xlane.f32.xlu0 %v8015
        %v8017 = vpop.xlane.xlu0 %8016
        %v8018 = vadd.f32 %v7976, %v7977
        %8019 = vadd.xlane.f32.xlu0 %v8018
        %v8020 = vpop.xlane.xlu0 %8019
        %v8021 = vadd.f32 %v7978, %v7979
        %8022 = vadd.xlane.f32.xlu0 %v8021
        %v8023 = vpop.xlane.xlu0 %8022
        %v8024 = vadd.f32 %v7980, %v7981
        %8025 = vadd.xlane.f32.xlu0 %v8024
        %v8026 = vpop.xlane.xlu0 %8025
        %v8027 = vadd.f32 %v7982, %v7983
        %8028 = vadd.xlane.f32.xlu0 %v8027
        %v8029 = vpop.xlane.xlu0 %8028
        %v8030 = vadd.f32 %v7984, %v7985
        %8031 = vadd.xlane.f32.xlu0 %v8030
        %v8032 = vpop.xlane.xlu0 %8031
        %v8033 = vadd.f32 %v7986, %v7987
        %8034 = vadd.xlane.f32.xlu0 %v8033
        %v8035 = vpop.xlane.xlu0 %8034
        %v8052 = vperm.slane %v7990, %v3835
        %v8053 = vperm.slane %v7993, %v3837
        %v8054 = vsel %vm3839, %v8053, %v8052
        %v8055 = vperm.slane %v7996, %v3841
        %v8056 = vsel %vm3843, %v8055, %v8054
        %v8057 = vperm.slane %v7999, %v3845
        %v8058 = vsel %vm3847, %v8057, %v8056
        %v8059 = vperm.slane %v8002, %v3849
        %v8060 = vsel %vm3851, %v8059, %v8058
        %v8061 = vperm.slane %v8005, %v3853
        %v8062 = vsel %vm3855, %v8061, %v8060
        %v8063 = vperm.slane %v8008, %v3857
        %v8064 = vsel %vm3859, %v8063, %v8062
        %v8065 = vperm.slane %v8011, %v3861
        %v8066 = vsel %vm3863, %v8065, %v8064
        %v8067 = vperm.slane %v8014, %v3865
        %v8068 = vsel %vm3867, %v8067, %v8066
        %v8069 = vperm.slane %v8017, %v3869
        %v8070 = vsel %vm3871, %v8069, %v8068
        %v8071 = vperm.slane %v8020, %v3873
        %v8072 = vsel %vm3875, %v8071, %v8070
        %v8073 = vperm.slane %v8023, %v3877
        %v8074 = vsel %vm3879, %v8073, %v8072
        %v8075 = vperm.slane %v8026, %v3881
        %v8076 = vsel %vm3883, %v8075, %v8074
        %v8077 = vperm.slane %v8029, %v3885
        %v8078 = vsel %vm3887, %v8077, %v8076
        %v8079 = vperm.slane %v8032, %v3889
        %v8080 = vsel %vm3891, %v8079, %v8078
        %v8081 = vperm.slane %v8035, %v3893
        %v8082 = vsel %vm3895, %v8081, %v8080
        %8084 = vst [vmem:[%s231 + $0x1a] sm:$0x1] %v8082
        %v8085 = vld [vmem:[%s2908] sm:$0xff]
        %v8086 = vld [vmem:[%s2908 + $0x8] sm:$0xff]
        %v8087 = vld [vmem:[%s2908 + $0x10] sm:$0xff]
        %v8088 = vld [vmem:[%s2908 + $0x18] sm:$0xff]
        %v8089 = vld [vmem:[%s2908 + $0x20] sm:$0xff]
        %v8090 = vld [vmem:[%s2908 + $0x28] sm:$0xff]
        %v8091 = vld [vmem:[%s2908 + $0x30] sm:$0xff]
        %v8092 = vld [vmem:[%s2908 + $0x38] sm:$0xff]
        %v8093 = vld [vmem:[%s2908 + $0x40] sm:$0xff]
        %v8094 = vld [vmem:[%s2908 + $0x48] sm:$0xff]
        %v8095 = vld [vmem:[%s2908 + $0x50] sm:$0xff]
        %v8096 = vld [vmem:[%s2908 + $0x58] sm:$0xff]
        %v8097 = vld [vmem:[%s2908 + $0x60] sm:$0xff]
        %v8098 = vld [vmem:[%s2908 + $0x68] sm:$0xff]
        %v8099 = vld [vmem:[%s2908 + $0x70] sm:$0xff]
        %v8100 = vld [vmem:[%s2908 + $0x78] sm:$0xff]
        %v8101 = vld [vmem:[%s2908 + $0x80] sm:$0xff]
        %v8102 = vld [vmem:[%s2908 + $0x88] sm:$0xff]
        %v8103 = vld [vmem:[%s2908 + $0x90] sm:$0xff]
        %v8104 = vld [vmem:[%s2908 + $0x98] sm:$0xff]
        %v8105 = vld [vmem:[%s2908 + $0xa0] sm:$0xff]
        %v8106 = vld [vmem:[%s2908 + $0xa8] sm:$0xff]
        %v8107 = vld [vmem:[%s2908 + $0xb0] sm:$0xff]
        %v8108 = vld [vmem:[%s2908 + $0xb8] sm:$0xff]
        %v8109 = vld [vmem:[%s2908 + $0xc0] sm:$0xff]
        %v8110 = vld [vmem:[%s2908 + $0xc8] sm:$0xff]
        %v8111 = vld [vmem:[%s2908 + $0xd0] sm:$0xff]
        %v8112 = vld [vmem:[%s2908 + $0xd8] sm:$0xff]
        %v8113 = vld [vmem:[%s2908 + $0xe0] sm:$0xff]
        %v8114 = vld [vmem:[%s2908 + $0xe8] sm:$0xff]
        %v8115 = vld [vmem:[%s2908 + $0xf0] sm:$0xff]
        %v8116 = vld [vmem:[%s2908 + $0xf8] sm:$0xff]
        %v8117 = vmul.f32 %v3706, %v8085
        %v8118 = vmul.f32 %v3707, %v8086
        %v8119 = vmul.f32 %v3708, %v8087
        %v8120 = vmul.f32 %v3709, %v8088
        %v8121 = vmul.f32 %v3710, %v8089
        %v8122 = vmul.f32 %v3711, %v8090
        %v8123 = vmul.f32 %v3712, %v8091
        %v8124 = vmul.f32 %v3713, %v8092
        %v8125 = vmul.f32 %v3714, %v8093
        %v8126 = vmul.f32 %v3715, %v8094
        %v8127 = vmul.f32 %v3716, %v8095
        %v8128 = vmul.f32 %v3717, %v8096
        %v8129 = vmul.f32 %v3718, %v8097
        %v8130 = vmul.f32 %v3719, %v8098
        %v8131 = vmul.f32 %v3720, %v8099
        %v8132 = vmul.f32 %v3721, %v8100
        %v8133 = vmul.f32 %v3722, %v8101
        %v8134 = vmul.f32 %v3723, %v8102
        %v8135 = vmul.f32 %v3724, %v8103
        %v8136 = vmul.f32 %v3725, %v8104
        %v8137 = vmul.f32 %v3726, %v8105
        %v8138 = vmul.f32 %v3727, %v8106
        %v8139 = vmul.f32 %v3728, %v8107
        %v8140 = vmul.f32 %v3729, %v8108
        %v8141 = vmul.f32 %v3730, %v8109
        %v8142 = vmul.f32 %v3731, %v8110
        %v8143 = vmul.f32 %v3732, %v8111
        %v8144 = vmul.f32 %v3733, %v8112
        %v8145 = vmul.f32 %v3734, %v8113
        %v8146 = vmul.f32 %v3735, %v8114
        %v8147 = vmul.f32 %v3736, %v8115
        %v8148 = vmul.f32 %v3737, %v8116
        %v8149 = vadd.f32 %v8117, %v8118
        %8150 = vadd.xlane.f32.xlu0 %v8149
        %v8151 = vpop.xlane.xlu0 %8150
        %v8152 = vadd.f32 %v8119, %v8120
        %8153 = vadd.xlane.f32.xlu0 %v8152
        %v8154 = vpop.xlane.xlu0 %8153
        %v8155 = vadd.f32 %v8121, %v8122
        %8156 = vadd.xlane.f32.xlu0 %v8155
        %v8157 = vpop.xlane.xlu0 %8156
        %v8158 = vadd.f32 %v8123, %v8124
        %8159 = vadd.xlane.f32.xlu0 %v8158
        %v8160 = vpop.xlane.xlu0 %8159
        %v8161 = vadd.f32 %v8125, %v8126
        %8162 = vadd.xlane.f32.xlu0 %v8161
        %v8163 = vpop.xlane.xlu0 %8162
        %v8164 = vadd.f32 %v8127, %v8128
        %8165 = vadd.xlane.f32.xlu0 %v8164
        %v8166 = vpop.xlane.xlu0 %8165
        %v8167 = vadd.f32 %v8129, %v8130
        %8168 = vadd.xlane.f32.xlu0 %v8167
        %v8169 = vpop.xlane.xlu0 %8168
        %v8170 = vadd.f32 %v8131, %v8132
        %8171 = vadd.xlane.f32.xlu0 %v8170
        %v8172 = vpop.xlane.xlu0 %8171
        %v8173 = vadd.f32 %v8133, %v8134
        %8174 = vadd.xlane.f32.xlu0 %v8173
        %v8175 = vpop.xlane.xlu0 %8174
        %v8176 = vadd.f32 %v8135, %v8136
        %8177 = vadd.xlane.f32.xlu0 %v8176
        %v8178 = vpop.xlane.xlu0 %8177
        %v8179 = vadd.f32 %v8137, %v8138
        %8180 = vadd.xlane.f32.xlu0 %v8179
        %v8181 = vpop.xlane.xlu0 %8180
        %v8182 = vadd.f32 %v8139, %v8140
        %8183 = vadd.xlane.f32.xlu0 %v8182
        %v8184 = vpop.xlane.xlu0 %8183
        %v8185 = vadd.f32 %v8141, %v8142
        %8186 = vadd.xlane.f32.xlu0 %v8185
        %v8187 = vpop.xlane.xlu0 %8186
        %v8188 = vadd.f32 %v8143, %v8144
        %8189 = vadd.xlane.f32.xlu0 %v8188
        %v8190 = vpop.xlane.xlu0 %8189
        %v8191 = vadd.f32 %v8145, %v8146
        %8192 = vadd.xlane.f32.xlu0 %v8191
        %v8193 = vpop.xlane.xlu0 %8192
        %v8194 = vadd.f32 %v8147, %v8148
        %8195 = vadd.xlane.f32.xlu0 %v8194
        %v8196 = vpop.xlane.xlu0 %8195
        %v8213 = vperm.slane %v8151, %v3835
        %v8214 = vperm.slane %v8154, %v3837
        %v8215 = vsel %vm3839, %v8214, %v8213
        %v8216 = vperm.slane %v8157, %v3841
        %v8217 = vsel %vm3843, %v8216, %v8215
        %v8218 = vperm.slane %v8160, %v3845
        %v8219 = vsel %vm3847, %v8218, %v8217
        %v8220 = vperm.slane %v8163, %v3849
        %v8221 = vsel %vm3851, %v8220, %v8219
        %v8222 = vperm.slane %v8166, %v3853
        %v8223 = vsel %vm3855, %v8222, %v8221
        %v8224 = vperm.slane %v8169, %v3857
        %v8225 = vsel %vm3859, %v8224, %v8223
        %v8226 = vperm.slane %v8172, %v3861
        %v8227 = vsel %vm3863, %v8226, %v8225
        %v8228 = vperm.slane %v8175, %v3865
        %v8229 = vsel %vm3867, %v8228, %v8227
        %v8230 = vperm.slane %v8178, %v3869
        %v8231 = vsel %vm3871, %v8230, %v8229
        %v8232 = vperm.slane %v8181, %v3873
        %v8233 = vsel %vm3875, %v8232, %v8231
        %v8234 = vperm.slane %v8184, %v3877
        %v8235 = vsel %vm3879, %v8234, %v8233
        %v8236 = vperm.slane %v8187, %v3881
        %v8237 = vsel %vm3883, %v8236, %v8235
        %v8238 = vperm.slane %v8190, %v3885
        %v8239 = vsel %vm3887, %v8238, %v8237
        %v8240 = vperm.slane %v8193, %v3889
        %v8241 = vsel %vm3891, %v8240, %v8239
        %v8242 = vperm.slane %v8196, %v3893
        %v8243 = vsel %vm3895, %v8242, %v8241
        %8245 = vst [vmem:[%s231 + $0x1b] sm:$0x1] %v8243
        %v8246 = vld [vmem:[%s3007] sm:$0xff]
        %v8247 = vld [vmem:[%s3007 + $0x8] sm:$0xff]
        %v8248 = vld [vmem:[%s3007 + $0x10] sm:$0xff]
        %v8249 = vld [vmem:[%s3007 + $0x18] sm:$0xff]
        %v8250 = vld [vmem:[%s3007 + $0x20] sm:$0xff]
        %v8251 = vld [vmem:[%s3007 + $0x28] sm:$0xff]
        %v8252 = vld [vmem:[%s3007 + $0x30] sm:$0xff]
        %v8253 = vld [vmem:[%s3007 + $0x38] sm:$0xff]
        %v8254 = vld [vmem:[%s3007 + $0x40] sm:$0xff]
        %v8255 = vld [vmem:[%s3007 + $0x48] sm:$0xff]
        %v8256 = vld [vmem:[%s3007 + $0x50] sm:$0xff]
        %v8257 = vld [vmem:[%s3007 + $0x58] sm:$0xff]
        %v8258 = vld [vmem:[%s3007 + $0x60] sm:$0xff]
        %v8259 = vld [vmem:[%s3007 + $0x68] sm:$0xff]
        %v8260 = vld [vmem:[%s3007 + $0x70] sm:$0xff]
        %v8261 = vld [vmem:[%s3007 + $0x78] sm:$0xff]
        %v8262 = vld [vmem:[%s3007 + $0x80] sm:$0xff]
        %v8263 = vld [vmem:[%s3007 + $0x88] sm:$0xff]
        %v8264 = vld [vmem:[%s3007 + $0x90] sm:$0xff]
        %v8265 = vld [vmem:[%s3007 + $0x98] sm:$0xff]
        %v8266 = vld [vmem:[%s3007 + $0xa0] sm:$0xff]
        %v8267 = vld [vmem:[%s3007 + $0xa8] sm:$0xff]
        %v8268 = vld [vmem:[%s3007 + $0xb0] sm:$0xff]
        %v8269 = vld [vmem:[%s3007 + $0xb8] sm:$0xff]
        %v8270 = vld [vmem:[%s3007 + $0xc0] sm:$0xff]
        %v8271 = vld [vmem:[%s3007 + $0xc8] sm:$0xff]
        %v8272 = vld [vmem:[%s3007 + $0xd0] sm:$0xff]
        %v8273 = vld [vmem:[%s3007 + $0xd8] sm:$0xff]
        %v8274 = vld [vmem:[%s3007 + $0xe0] sm:$0xff]
        %v8275 = vld [vmem:[%s3007 + $0xe8] sm:$0xff]
        %v8276 = vld [vmem:[%s3007 + $0xf0] sm:$0xff]
        %v8277 = vld [vmem:[%s3007 + $0xf8] sm:$0xff]
        %v8278 = vmul.f32 %v3706, %v8246
        %v8279 = vmul.f32 %v3707, %v8247
        %v8280 = vmul.f32 %v3708, %v8248
        %v8281 = vmul.f32 %v3709, %v8249
        %v8282 = vmul.f32 %v3710, %v8250
        %v8283 = vmul.f32 %v3711, %v8251
        %v8284 = vmul.f32 %v3712, %v8252
        %v8285 = vmul.f32 %v3713, %v8253
        %v8286 = vmul.f32 %v3714, %v8254
        %v8287 = vmul.f32 %v3715, %v8255
        %v8288 = vmul.f32 %v3716, %v8256
        %v8289 = vmul.f32 %v3717, %v8257
        %v8290 = vmul.f32 %v3718, %v8258
        %v8291 = vmul.f32 %v3719, %v8259
        %v8292 = vmul.f32 %v3720, %v8260
        %v8293 = vmul.f32 %v3721, %v8261
        %v8294 = vmul.f32 %v3722, %v8262
        %v8295 = vmul.f32 %v3723, %v8263
        %v8296 = vmul.f32 %v3724, %v8264
        %v8297 = vmul.f32 %v3725, %v8265
        %v8298 = vmul.f32 %v3726, %v8266
        %v8299 = vmul.f32 %v3727, %v8267
        %v8300 = vmul.f32 %v3728, %v8268
        %v8301 = vmul.f32 %v3729, %v8269
        %v8302 = vmul.f32 %v3730, %v8270
        %v8303 = vmul.f32 %v3731, %v8271
        %v8304 = vmul.f32 %v3732, %v8272
        %v8305 = vmul.f32 %v3733, %v8273
        %v8306 = vmul.f32 %v3734, %v8274
        %v8307 = vmul.f32 %v3735, %v8275
        %v8308 = vmul.f32 %v3736, %v8276
        %v8309 = vmul.f32 %v3737, %v8277
        %v8310 = vadd.f32 %v8278, %v8279
        %8311 = vadd.xlane.f32.xlu0 %v8310
        %v8312 = vpop.xlane.xlu0 %8311
        %v8313 = vadd.f32 %v8280, %v8281
        %8314 = vadd.xlane.f32.xlu0 %v8313
        %v8315 = vpop.xlane.xlu0 %8314
        %v8316 = vadd.f32 %v8282, %v8283
        %8317 = vadd.xlane.f32.xlu0 %v8316
        %v8318 = vpop.xlane.xlu0 %8317
        %v8319 = vadd.f32 %v8284, %v8285
        %8320 = vadd.xlane.f32.xlu0 %v8319
        %v8321 = vpop.xlane.xlu0 %8320
        %v8322 = vadd.f32 %v8286, %v8287
        %8323 = vadd.xlane.f32.xlu0 %v8322
        %v8324 = vpop.xlane.xlu0 %8323
        %v8325 = vadd.f32 %v8288, %v8289
        %8326 = vadd.xlane.f32.xlu0 %v8325
        %v8327 = vpop.xlane.xlu0 %8326
        %v8328 = vadd.f32 %v8290, %v8291
        %8329 = vadd.xlane.f32.xlu0 %v8328
        %v8330 = vpop.xlane.xlu0 %8329
        %v8331 = vadd.f32 %v8292, %v8293
        %8332 = vadd.xlane.f32.xlu0 %v8331
        %v8333 = vpop.xlane.xlu0 %8332
        %v8334 = vadd.f32 %v8294, %v8295
        %8335 = vadd.xlane.f32.xlu0 %v8334
        %v8336 = vpop.xlane.xlu0 %8335
        %v8337 = vadd.f32 %v8296, %v8297
        %8338 = vadd.xlane.f32.xlu0 %v8337
        %v8339 = vpop.xlane.xlu0 %8338
        %v8340 = vadd.f32 %v8298, %v8299
        %8341 = vadd.xlane.f32.xlu0 %v8340
        %v8342 = vpop.xlane.xlu0 %8341
        %v8343 = vadd.f32 %v8300, %v8301
        %8344 = vadd.xlane.f32.xlu0 %v8343
        %v8345 = vpop.xlane.xlu0 %8344
        %v8346 = vadd.f32 %v8302, %v8303
        %8347 = vadd.xlane.f32.xlu0 %v8346
        %v8348 = vpop.xlane.xlu0 %8347
        %v8349 = vadd.f32 %v8304, %v8305
        %8350 = vadd.xlane.f32.xlu0 %v8349
        %v8351 = vpop.xlane.xlu0 %8350
        %v8352 = vadd.f32 %v8306, %v8307
        %8353 = vadd.xlane.f32.xlu0 %v8352
        %v8354 = vpop.xlane.xlu0 %8353
        %v8355 = vadd.f32 %v8308, %v8309
        %8356 = vadd.xlane.f32.xlu0 %v8355
        %v8357 = vpop.xlane.xlu0 %8356
        %v8374 = vperm.slane %v8312, %v3835
        %v8375 = vperm.slane %v8315, %v3837
        %v8376 = vsel %vm3839, %v8375, %v8374
        %v8377 = vperm.slane %v8318, %v3841
        %v8378 = vsel %vm3843, %v8377, %v8376
        %v8379 = vperm.slane %v8321, %v3845
        %v8380 = vsel %vm3847, %v8379, %v8378
        %v8381 = vperm.slane %v8324, %v3849
        %v8382 = vsel %vm3851, %v8381, %v8380
        %v8383 = vperm.slane %v8327, %v3853
        %v8384 = vsel %vm3855, %v8383, %v8382
        %v8385 = vperm.slane %v8330, %v3857
        %v8386 = vsel %vm3859, %v8385, %v8384
        %v8387 = vperm.slane %v8333, %v3861
        %v8388 = vsel %vm3863, %v8387, %v8386
        %v8389 = vperm.slane %v8336, %v3865
        %v8390 = vsel %vm3867, %v8389, %v8388
        %v8391 = vperm.slane %v8339, %v3869
        %v8392 = vsel %vm3871, %v8391, %v8390
        %v8393 = vperm.slane %v8342, %v3873
        %v8394 = vsel %vm3875, %v8393, %v8392
        %v8395 = vperm.slane %v8345, %v3877
        %v8396 = vsel %vm3879, %v8395, %v8394
        %v8397 = vperm.slane %v8348, %v3881
        %v8398 = vsel %vm3883, %v8397, %v8396
        %v8399 = vperm.slane %v8351, %v3885
        %v8400 = vsel %vm3887, %v8399, %v8398
        %v8401 = vperm.slane %v8354, %v3889
        %v8402 = vsel %vm3891, %v8401, %v8400
        %v8403 = vperm.slane %v8357, %v3893
        %v8404 = vsel %vm3895, %v8403, %v8402
        %8406 = vst [vmem:[%s231 + $0x1c] sm:$0x1] %v8404
        %v8407 = vld [vmem:[%s3106] sm:$0xff]
        %v8408 = vld [vmem:[%s3106 + $0x8] sm:$0xff]
        %v8409 = vld [vmem:[%s3106 + $0x10] sm:$0xff]
        %v8410 = vld [vmem:[%s3106 + $0x18] sm:$0xff]
        %v8411 = vld [vmem:[%s3106 + $0x20] sm:$0xff]
        %v8412 = vld [vmem:[%s3106 + $0x28] sm:$0xff]
        %v8413 = vld [vmem:[%s3106 + $0x30] sm:$0xff]
        %v8414 = vld [vmem:[%s3106 + $0x38] sm:$0xff]
        %v8415 = vld [vmem:[%s3106 + $0x40] sm:$0xff]
        %v8416 = vld [vmem:[%s3106 + $0x48] sm:$0xff]
        %v8417 = vld [vmem:[%s3106 + $0x50] sm:$0xff]
        %v8418 = vld [vmem:[%s3106 + $0x58] sm:$0xff]
        %v8419 = vld [vmem:[%s3106 + $0x60] sm:$0xff]
        %v8420 = vld [vmem:[%s3106 + $0x68] sm:$0xff]
        %v8421 = vld [vmem:[%s3106 + $0x70] sm:$0xff]
        %v8422 = vld [vmem:[%s3106 + $0x78] sm:$0xff]
        %v8423 = vld [vmem:[%s3106 + $0x80] sm:$0xff]
        %v8424 = vld [vmem:[%s3106 + $0x88] sm:$0xff]
        %v8425 = vld [vmem:[%s3106 + $0x90] sm:$0xff]
        %v8426 = vld [vmem:[%s3106 + $0x98] sm:$0xff]
        %v8427 = vld [vmem:[%s3106 + $0xa0] sm:$0xff]
        %v8428 = vld [vmem:[%s3106 + $0xa8] sm:$0xff]
        %v8429 = vld [vmem:[%s3106 + $0xb0] sm:$0xff]
        %v8430 = vld [vmem:[%s3106 + $0xb8] sm:$0xff]
        %v8431 = vld [vmem:[%s3106 + $0xc0] sm:$0xff]
        %v8432 = vld [vmem:[%s3106 + $0xc8] sm:$0xff]
        %v8433 = vld [vmem:[%s3106 + $0xd0] sm:$0xff]
        %v8434 = vld [vmem:[%s3106 + $0xd8] sm:$0xff]
        %v8435 = vld [vmem:[%s3106 + $0xe0] sm:$0xff]
        %v8436 = vld [vmem:[%s3106 + $0xe8] sm:$0xff]
        %v8437 = vld [vmem:[%s3106 + $0xf0] sm:$0xff]
        %v8438 = vld [vmem:[%s3106 + $0xf8] sm:$0xff]
        %v8439 = vmul.f32 %v3706, %v8407
        %v8440 = vmul.f32 %v3707, %v8408
        %v8441 = vmul.f32 %v3708, %v8409
        %v8442 = vmul.f32 %v3709, %v8410
        %v8443 = vmul.f32 %v3710, %v8411
        %v8444 = vmul.f32 %v3711, %v8412
        %v8445 = vmul.f32 %v3712, %v8413
        %v8446 = vmul.f32 %v3713, %v8414
        %v8447 = vmul.f32 %v3714, %v8415
        %v8448 = vmul.f32 %v3715, %v8416
        %v8449 = vmul.f32 %v3716, %v8417
        %v8450 = vmul.f32 %v3717, %v8418
        %v8451 = vmul.f32 %v3718, %v8419
        %v8452 = vmul.f32 %v3719, %v8420
        %v8453 = vmul.f32 %v3720, %v8421
        %v8454 = vmul.f32 %v3721, %v8422
        %v8455 = vmul.f32 %v3722, %v8423
        %v8456 = vmul.f32 %v3723, %v8424
        %v8457 = vmul.f32 %v3724, %v8425
        %v8458 = vmul.f32 %v3725, %v8426
        %v8459 = vmul.f32 %v3726, %v8427
        %v8460 = vmul.f32 %v3727, %v8428
        %v8461 = vmul.f32 %v3728, %v8429
        %v8462 = vmul.f32 %v3729, %v8430
        %v8463 = vmul.f32 %v3730, %v8431
        %v8464 = vmul.f32 %v3731, %v8432
        %v8465 = vmul.f32 %v3732, %v8433
        %v8466 = vmul.f32 %v3733, %v8434
        %v8467 = vmul.f32 %v3734, %v8435
        %v8468 = vmul.f32 %v3735, %v8436
        %v8469 = vmul.f32 %v3736, %v8437
        %v8470 = vmul.f32 %v3737, %v8438
        %v8471 = vadd.f32 %v8439, %v8440
        %8472 = vadd.xlane.f32.xlu0 %v8471
        %v8473 = vpop.xlane.xlu0 %8472
        %v8474 = vadd.f32 %v8441, %v8442
        %8475 = vadd.xlane.f32.xlu0 %v8474
        %v8476 = vpop.xlane.xlu0 %8475
        %v8477 = vadd.f32 %v8443, %v8444
        %8478 = vadd.xlane.f32.xlu0 %v8477
        %v8479 = vpop.xlane.xlu0 %8478
        %v8480 = vadd.f32 %v8445, %v8446
        %8481 = vadd.xlane.f32.xlu0 %v8480
        %v8482 = vpop.xlane.xlu0 %8481
        %v8483 = vadd.f32 %v8447, %v8448
        %8484 = vadd.xlane.f32.xlu0 %v8483
        %v8485 = vpop.xlane.xlu0 %8484
        %v8486 = vadd.f32 %v8449, %v8450
        %8487 = vadd.xlane.f32.xlu0 %v8486
        %v8488 = vpop.xlane.xlu0 %8487
        %v8489 = vadd.f32 %v8451, %v8452
        %8490 = vadd.xlane.f32.xlu0 %v8489
        %v8491 = vpop.xlane.xlu0 %8490
        %v8492 = vadd.f32 %v8453, %v8454
        %8493 = vadd.xlane.f32.xlu0 %v8492
        %v8494 = vpop.xlane.xlu0 %8493
        %v8495 = vadd.f32 %v8455, %v8456
        %8496 = vadd.xlane.f32.xlu0 %v8495
        %v8497 = vpop.xlane.xlu0 %8496
        %v8498 = vadd.f32 %v8457, %v8458
        %8499 = vadd.xlane.f32.xlu0 %v8498
        %v8500 = vpop.xlane.xlu0 %8499
        %v8501 = vadd.f32 %v8459, %v8460
        %8502 = vadd.xlane.f32.xlu0 %v8501
        %v8503 = vpop.xlane.xlu0 %8502
        %v8504 = vadd.f32 %v8461, %v8462
        %8505 = vadd.xlane.f32.xlu0 %v8504
        %v8506 = vpop.xlane.xlu0 %8505
        %v8507 = vadd.f32 %v8463, %v8464
        %8508 = vadd.xlane.f32.xlu0 %v8507
        %v8509 = vpop.xlane.xlu0 %8508
        %v8510 = vadd.f32 %v8465, %v8466
        %8511 = vadd.xlane.f32.xlu0 %v8510
        %v8512 = vpop.xlane.xlu0 %8511
        %v8513 = vadd.f32 %v8467, %v8468
        %8514 = vadd.xlane.f32.xlu0 %v8513
        %v8515 = vpop.xlane.xlu0 %8514
        %v8516 = vadd.f32 %v8469, %v8470
        %8517 = vadd.xlane.f32.xlu0 %v8516
        %v8518 = vpop.xlane.xlu0 %8517
        %v8535 = vperm.slane %v8473, %v3835
        %v8536 = vperm.slane %v8476, %v3837
        %v8537 = vsel %vm3839, %v8536, %v8535
        %v8538 = vperm.slane %v8479, %v3841
        %v8539 = vsel %vm3843, %v8538, %v8537
        %v8540 = vperm.slane %v8482, %v3845
        %v8541 = vsel %vm3847, %v8540, %v8539
        %v8542 = vperm.slane %v8485, %v3849
        %v8543 = vsel %vm3851, %v8542, %v8541
        %v8544 = vperm.slane %v8488, %v3853
        %v8545 = vsel %vm3855, %v8544, %v8543
        %v8546 = vperm.slane %v8491, %v3857
        %v8547 = vsel %vm3859, %v8546, %v8545
        %v8548 = vperm.slane %v8494, %v3861
        %v8549 = vsel %vm3863, %v8548, %v8547
        %v8550 = vperm.slane %v8497, %v3865
        %v8551 = vsel %vm3867, %v8550, %v8549
        %v8552 = vperm.slane %v8500, %v3869
        %v8553 = vsel %vm3871, %v8552, %v8551
        %v8554 = vperm.slane %v8503, %v3873
        %v8555 = vsel %vm3875, %v8554, %v8553
        %v8556 = vperm.slane %v8506, %v3877
        %v8557 = vsel %vm3879, %v8556, %v8555
        %v8558 = vperm.slane %v8509, %v3881
        %v8559 = vsel %vm3883, %v8558, %v8557
        %v8560 = vperm.slane %v8512, %v3885
        %v8561 = vsel %vm3887, %v8560, %v8559
        %v8562 = vperm.slane %v8515, %v3889
        %v8563 = vsel %vm3891, %v8562, %v8561
        %v8564 = vperm.slane %v8518, %v3893
        %v8565 = vsel %vm3895, %v8564, %v8563
        %8567 = vst [vmem:[%s231 + $0x1d] sm:$0x1] %v8565
        %v8568 = vld [vmem:[%s3205] sm:$0xff]
        %v8569 = vld [vmem:[%s3205 + $0x8] sm:$0xff]
        %v8570 = vld [vmem:[%s3205 + $0x10] sm:$0xff]
        %v8571 = vld [vmem:[%s3205 + $0x18] sm:$0xff]
        %v8572 = vld [vmem:[%s3205 + $0x20] sm:$0xff]
        %v8573 = vld [vmem:[%s3205 + $0x28] sm:$0xff]
        %v8574 = vld [vmem:[%s3205 + $0x30] sm:$0xff]
        %v8575 = vld [vmem:[%s3205 + $0x38] sm:$0xff]
        %v8576 = vld [vmem:[%s3205 + $0x40] sm:$0xff]
        %v8577 = vld [vmem:[%s3205 + $0x48] sm:$0xff]
        %v8578 = vld [vmem:[%s3205 + $0x50] sm:$0xff]
        %v8579 = vld [vmem:[%s3205 + $0x58] sm:$0xff]
        %v8580 = vld [vmem:[%s3205 + $0x60] sm:$0xff]
        %v8581 = vld [vmem:[%s3205 + $0x68] sm:$0xff]
        %v8582 = vld [vmem:[%s3205 + $0x70] sm:$0xff]
        %v8583 = vld [vmem:[%s3205 + $0x78] sm:$0xff]
        %v8584 = vld [vmem:[%s3205 + $0x80] sm:$0xff]
        %v8585 = vld [vmem:[%s3205 + $0x88] sm:$0xff]
        %v8586 = vld [vmem:[%s3205 + $0x90] sm:$0xff]
        %v8587 = vld [vmem:[%s3205 + $0x98] sm:$0xff]
        %v8588 = vld [vmem:[%s3205 + $0xa0] sm:$0xff]
        %v8589 = vld [vmem:[%s3205 + $0xa8] sm:$0xff]
        %v8590 = vld [vmem:[%s3205 + $0xb0] sm:$0xff]
        %v8591 = vld [vmem:[%s3205 + $0xb8] sm:$0xff]
        %v8592 = vld [vmem:[%s3205 + $0xc0] sm:$0xff]
        %v8593 = vld [vmem:[%s3205 + $0xc8] sm:$0xff]
        %v8594 = vld [vmem:[%s3205 + $0xd0] sm:$0xff]
        %v8595 = vld [vmem:[%s3205 + $0xd8] sm:$0xff]
        %v8596 = vld [vmem:[%s3205 + $0xe0] sm:$0xff]
        %v8597 = vld [vmem:[%s3205 + $0xe8] sm:$0xff]
        %v8598 = vld [vmem:[%s3205 + $0xf0] sm:$0xff]
        %v8599 = vld [vmem:[%s3205 + $0xf8] sm:$0xff]
        %v8600 = vmul.f32 %v3706, %v8568
        %v8601 = vmul.f32 %v3707, %v8569
        %v8602 = vmul.f32 %v3708, %v8570
        %v8603 = vmul.f32 %v3709, %v8571
        %v8604 = vmul.f32 %v3710, %v8572
        %v8605 = vmul.f32 %v3711, %v8573
        %v8606 = vmul.f32 %v3712, %v8574
        %v8607 = vmul.f32 %v3713, %v8575
        %v8608 = vmul.f32 %v3714, %v8576
        %v8609 = vmul.f32 %v3715, %v8577
        %v8610 = vmul.f32 %v3716, %v8578
        %v8611 = vmul.f32 %v3717, %v8579
        %v8612 = vmul.f32 %v3718, %v8580
        %v8613 = vmul.f32 %v3719, %v8581
        %v8614 = vmul.f32 %v3720, %v8582
        %v8615 = vmul.f32 %v3721, %v8583
        %v8616 = vmul.f32 %v3722, %v8584
        %v8617 = vmul.f32 %v3723, %v8585
        %v8618 = vmul.f32 %v3724, %v8586
        %v8619 = vmul.f32 %v3725, %v8587
        %v8620 = vmul.f32 %v3726, %v8588
        %v8621 = vmul.f32 %v3727, %v8589
        %v8622 = vmul.f32 %v3728, %v8590
        %v8623 = vmul.f32 %v3729, %v8591
        %v8624 = vmul.f32 %v3730, %v8592
        %v8625 = vmul.f32 %v3731, %v8593
        %v8626 = vmul.f32 %v3732, %v8594
        %v8627 = vmul.f32 %v3733, %v8595
        %v8628 = vmul.f32 %v3734, %v8596
        %v8629 = vmul.f32 %v3735, %v8597
        %v8630 = vmul.f32 %v3736, %v8598
        %v8631 = vmul.f32 %v3737, %v8599
        %v8632 = vadd.f32 %v8600, %v8601
        %8633 = vadd.xlane.f32.xlu0 %v8632
        %v8634 = vpop.xlane.xlu0 %8633
        %v8635 = vadd.f32 %v8602, %v8603
        %8636 = vadd.xlane.f32.xlu0 %v8635
        %v8637 = vpop.xlane.xlu0 %8636
        %v8638 = vadd.f32 %v8604, %v8605
        %8639 = vadd.xlane.f32.xlu0 %v8638
        %v8640 = vpop.xlane.xlu0 %8639
        %v8641 = vadd.f32 %v8606, %v8607
        %8642 = vadd.xlane.f32.xlu0 %v8641
        %v8643 = vpop.xlane.xlu0 %8642
        %v8644 = vadd.f32 %v8608, %v8609
        %8645 = vadd.xlane.f32.xlu0 %v8644
        %v8646 = vpop.xlane.xlu0 %8645
        %v8647 = vadd.f32 %v8610, %v8611
        %8648 = vadd.xlane.f32.xlu0 %v8647
        %v8649 = vpop.xlane.xlu0 %8648
        %v8650 = vadd.f32 %v8612, %v8613
        %8651 = vadd.xlane.f32.xlu0 %v8650
        %v8652 = vpop.xlane.xlu0 %8651
        %v8653 = vadd.f32 %v8614, %v8615
        %8654 = vadd.xlane.f32.xlu0 %v8653
        %v8655 = vpop.xlane.xlu0 %8654
        %v8656 = vadd.f32 %v8616, %v8617
        %8657 = vadd.xlane.f32.xlu0 %v8656
        %v8658 = vpop.xlane.xlu0 %8657
        %v8659 = vadd.f32 %v8618, %v8619
        %8660 = vadd.xlane.f32.xlu0 %v8659
        %v8661 = vpop.xlane.xlu0 %8660
        %v8662 = vadd.f32 %v8620, %v8621
        %8663 = vadd.xlane.f32.xlu0 %v8662
        %v8664 = vpop.xlane.xlu0 %8663
        %v8665 = vadd.f32 %v8622, %v8623
        %8666 = vadd.xlane.f32.xlu0 %v8665
        %v8667 = vpop.xlane.xlu0 %8666
        %v8668 = vadd.f32 %v8624, %v8625
        %8669 = vadd.xlane.f32.xlu0 %v8668
        %v8670 = vpop.xlane.xlu0 %8669
        %v8671 = vadd.f32 %v8626, %v8627
        %8672 = vadd.xlane.f32.xlu0 %v8671
        %v8673 = vpop.xlane.xlu0 %8672
        %v8674 = vadd.f32 %v8628, %v8629
        %8675 = vadd.xlane.f32.xlu0 %v8674
        %v8676 = vpop.xlane.xlu0 %8675
        %v8677 = vadd.f32 %v8630, %v8631
        %8678 = vadd.xlane.f32.xlu0 %v8677
        %v8679 = vpop.xlane.xlu0 %8678
        %v8696 = vperm.slane %v8634, %v3835
        %v8697 = vperm.slane %v8637, %v3837
        %v8698 = vsel %vm3839, %v8697, %v8696
        %v8699 = vperm.slane %v8640, %v3841
        %v8700 = vsel %vm3843, %v8699, %v8698
        %v8701 = vperm.slane %v8643, %v3845
        %v8702 = vsel %vm3847, %v8701, %v8700
        %v8703 = vperm.slane %v8646, %v3849
        %v8704 = vsel %vm3851, %v8703, %v8702
        %v8705 = vperm.slane %v8649, %v3853
        %v8706 = vsel %vm3855, %v8705, %v8704
        %v8707 = vperm.slane %v8652, %v3857
        %v8708 = vsel %vm3859, %v8707, %v8706
        %v8709 = vperm.slane %v8655, %v3861
        %v8710 = vsel %vm3863, %v8709, %v8708
        %v8711 = vperm.slane %v8658, %v3865
        %v8712 = vsel %vm3867, %v8711, %v8710
        %v8713 = vperm.slane %v8661, %v3869
        %v8714 = vsel %vm3871, %v8713, %v8712
        %v8715 = vperm.slane %v8664, %v3873
        %v8716 = vsel %vm3875, %v8715, %v8714
        %v8717 = vperm.slane %v8667, %v3877
        %v8718 = vsel %vm3879, %v8717, %v8716
        %v8719 = vperm.slane %v8670, %v3881
        %v8720 = vsel %vm3883, %v8719, %v8718
        %v8721 = vperm.slane %v8673, %v3885
        %v8722 = vsel %vm3887, %v8721, %v8720
        %v8723 = vperm.slane %v8676, %v3889
        %v8724 = vsel %vm3891, %v8723, %v8722
        %v8725 = vperm.slane %v8679, %v3893
        %v8726 = vsel %vm3895, %v8725, %v8724
        %8728 = vst [vmem:[%s231 + $0x1e] sm:$0x1] %v8726
        %v8729 = vld [vmem:[%s3304] sm:$0xff]
        %v8730 = vld [vmem:[%s3304 + $0x8] sm:$0xff]
        %v8731 = vld [vmem:[%s3304 + $0x10] sm:$0xff]
        %v8732 = vld [vmem:[%s3304 + $0x18] sm:$0xff]
        %v8733 = vld [vmem:[%s3304 + $0x20] sm:$0xff]
        %v8734 = vld [vmem:[%s3304 + $0x28] sm:$0xff]
        %v8735 = vld [vmem:[%s3304 + $0x30] sm:$0xff]
        %v8736 = vld [vmem:[%s3304 + $0x38] sm:$0xff]
        %v8737 = vld [vmem:[%s3304 + $0x40] sm:$0xff]
        %v8738 = vld [vmem:[%s3304 + $0x48] sm:$0xff]
        %v8739 = vld [vmem:[%s3304 + $0x50] sm:$0xff]
        %v8740 = vld [vmem:[%s3304 + $0x58] sm:$0xff]
        %v8741 = vld [vmem:[%s3304 + $0x60] sm:$0xff]
        %v8742 = vld [vmem:[%s3304 + $0x68] sm:$0xff]
        %v8743 = vld [vmem:[%s3304 + $0x70] sm:$0xff]
        %v8744 = vld [vmem:[%s3304 + $0x78] sm:$0xff]
        %v8745 = vld [vmem:[%s3304 + $0x80] sm:$0xff]
        %v8746 = vld [vmem:[%s3304 + $0x88] sm:$0xff]
        %v8747 = vld [vmem:[%s3304 + $0x90] sm:$0xff]
        %v8748 = vld [vmem:[%s3304 + $0x98] sm:$0xff]
        %v8749 = vld [vmem:[%s3304 + $0xa0] sm:$0xff]
        %v8750 = vld [vmem:[%s3304 + $0xa8] sm:$0xff]
        %v8751 = vld [vmem:[%s3304 + $0xb0] sm:$0xff]
        %v8752 = vld [vmem:[%s3304 + $0xb8] sm:$0xff]
        %v8753 = vld [vmem:[%s3304 + $0xc0] sm:$0xff]
        %v8754 = vld [vmem:[%s3304 + $0xc8] sm:$0xff]
        %v8755 = vld [vmem:[%s3304 + $0xd0] sm:$0xff]
        %v8756 = vld [vmem:[%s3304 + $0xd8] sm:$0xff]
        %v8757 = vld [vmem:[%s3304 + $0xe0] sm:$0xff]
        %v8758 = vld [vmem:[%s3304 + $0xe8] sm:$0xff]
        %v8759 = vld [vmem:[%s3304 + $0xf0] sm:$0xff]
        %v8760 = vld [vmem:[%s3304 + $0xf8] sm:$0xff]
        %v8761 = vmul.f32 %v3706, %v8729
        %v8762 = vmul.f32 %v3707, %v8730
        %v8763 = vmul.f32 %v3708, %v8731
        %v8764 = vmul.f32 %v3709, %v8732
        %v8765 = vmul.f32 %v3710, %v8733
        %v8766 = vmul.f32 %v3711, %v8734
        %v8767 = vmul.f32 %v3712, %v8735
        %v8768 = vmul.f32 %v3713, %v8736
        %v8769 = vmul.f32 %v3714, %v8737
        %v8770 = vmul.f32 %v3715, %v8738
        %v8771 = vmul.f32 %v3716, %v8739
        %v8772 = vmul.f32 %v3717, %v8740
        %v8773 = vmul.f32 %v3718, %v8741
        %v8774 = vmul.f32 %v3719, %v8742
        %v8775 = vmul.f32 %v3720, %v8743
        %v8776 = vmul.f32 %v3721, %v8744
        %v8777 = vmul.f32 %v3722, %v8745
        %v8778 = vmul.f32 %v3723, %v8746
        %v8779 = vmul.f32 %v3724, %v8747
        %v8780 = vmul.f32 %v3725, %v8748
        %v8781 = vmul.f32 %v3726, %v8749
        %v8782 = vmul.f32 %v3727, %v8750
        %v8783 = vmul.f32 %v3728, %v8751
        %v8784 = vmul.f32 %v3729, %v8752
        %v8785 = vmul.f32 %v3730, %v8753
        %v8786 = vmul.f32 %v3731, %v8754
        %v8787 = vmul.f32 %v3732, %v8755
        %v8788 = vmul.f32 %v3733, %v8756
        %v8789 = vmul.f32 %v3734, %v8757
        %v8790 = vmul.f32 %v3735, %v8758
        %v8791 = vmul.f32 %v3736, %v8759
        %v8792 = vmul.f32 %v3737, %v8760
        %v8793 = vadd.f32 %v8761, %v8762
        %8794 = vadd.xlane.f32.xlu0 %v8793
        %v8795 = vpop.xlane.xlu0 %8794
        %v8796 = vadd.f32 %v8763, %v8764
        %8797 = vadd.xlane.f32.xlu0 %v8796
        %v8798 = vpop.xlane.xlu0 %8797
        %v8799 = vadd.f32 %v8765, %v8766
        %8800 = vadd.xlane.f32.xlu0 %v8799
        %v8801 = vpop.xlane.xlu0 %8800
        %v8802 = vadd.f32 %v8767, %v8768
        %8803 = vadd.xlane.f32.xlu0 %v8802
        %v8804 = vpop.xlane.xlu0 %8803
        %v8805 = vadd.f32 %v8769, %v8770
        %8806 = vadd.xlane.f32.xlu0 %v8805
        %v8807 = vpop.xlane.xlu0 %8806
        %v8808 = vadd.f32 %v8771, %v8772
        %8809 = vadd.xlane.f32.xlu0 %v8808
        %v8810 = vpop.xlane.xlu0 %8809
        %v8811 = vadd.f32 %v8773, %v8774
        %8812 = vadd.xlane.f32.xlu0 %v8811
        %v8813 = vpop.xlane.xlu0 %8812
        %v8814 = vadd.f32 %v8775, %v8776
        %8815 = vadd.xlane.f32.xlu0 %v8814
        %v8816 = vpop.xlane.xlu0 %8815
        %v8817 = vadd.f32 %v8777, %v8778
        %8818 = vadd.xlane.f32.xlu0 %v8817
        %v8819 = vpop.xlane.xlu0 %8818
        %v8820 = vadd.f32 %v8779, %v8780
        %8821 = vadd.xlane.f32.xlu0 %v8820
        %v8822 = vpop.xlane.xlu0 %8821
        %v8823 = vadd.f32 %v8781, %v8782
        %8824 = vadd.xlane.f32.xlu0 %v8823
        %v8825 = vpop.xlane.xlu0 %8824
        %v8826 = vadd.f32 %v8783, %v8784
        %8827 = vadd.xlane.f32.xlu0 %v8826
        %v8828 = vpop.xlane.xlu0 %8827
        %v8829 = vadd.f32 %v8785, %v8786
        %8830 = vadd.xlane.f32.xlu0 %v8829
        %v8831 = vpop.xlane.xlu0 %8830
        %v8832 = vadd.f32 %v8787, %v8788
        %8833 = vadd.xlane.f32.xlu0 %v8832
        %v8834 = vpop.xlane.xlu0 %8833
        %v8835 = vadd.f32 %v8789, %v8790
        %8836 = vadd.xlane.f32.xlu0 %v8835
        %v8837 = vpop.xlane.xlu0 %8836
        %v8838 = vadd.f32 %v8791, %v8792
        %8839 = vadd.xlane.f32.xlu0 %v8838
        %v8840 = vpop.xlane.xlu0 %8839
        %v8857 = vperm.slane %v8795, %v3835
        %v8858 = vperm.slane %v8798, %v3837
        %v8859 = vsel %vm3839, %v8858, %v8857
        %v8860 = vperm.slane %v8801, %v3841
        %v8861 = vsel %vm3843, %v8860, %v8859
        %v8862 = vperm.slane %v8804, %v3845
        %v8863 = vsel %vm3847, %v8862, %v8861
        %v8864 = vperm.slane %v8807, %v3849
        %v8865 = vsel %vm3851, %v8864, %v8863
        %v8866 = vperm.slane %v8810, %v3853
        %v8867 = vsel %vm3855, %v8866, %v8865
        %v8868 = vperm.slane %v8813, %v3857
        %v8869 = vsel %vm3859, %v8868, %v8867
        %v8870 = vperm.slane %v8816, %v3861
        %v8871 = vsel %vm3863, %v8870, %v8869
        %v8872 = vperm.slane %v8819, %v3865
        %v8873 = vsel %vm3867, %v8872, %v8871
        %v8874 = vperm.slane %v8822, %v3869
        %v8875 = vsel %vm3871, %v8874, %v8873
        %v8876 = vperm.slane %v8825, %v3873
        %v8877 = vsel %vm3875, %v8876, %v8875
        %v8878 = vperm.slane %v8828, %v3877
        %v8879 = vsel %vm3879, %v8878, %v8877
        %v8880 = vperm.slane %v8831, %v3881
        %v8881 = vsel %vm3883, %v8880, %v8879
        %v8882 = vperm.slane %v8834, %v3885
        %v8883 = vsel %vm3887, %v8882, %v8881
        %v8884 = vperm.slane %v8837, %v3889
        %v8885 = vsel %vm3891, %v8884, %v8883
        %v8886 = vperm.slane %v8840, %v3893
        %v8887 = vsel %vm3895, %v8886, %v8885
        %8889 = vst [vmem:[%s231 + $0x1f] sm:$0x1] %v8887
        %s8890 = sand.u32 %s98, 1
        %s8891 = scalar_lea.sflag [#allocation5], %s8890
        %s8892 = sand.u32 %s98, 1
        %s8893 = smul.addr %s8892, 32
        %s8894 = scalar_lea.vmem [#allocation8], %s8893
        // Predicated region
        $region41: #{tpu_custom_call.1} parent=31 // pred_check
          %p8895 = pneg %p108
        $region42: #{tpu_custom_call.1} parent=31 // pred_check_branch
          %8897 = sbr.rel (%p8895) target = $region44
        $region43: #{tpu_custom_call.1} parent=31 // pred_region
          %8899 = vsyncadd %s8891, 0
          %s8900 = smul.addr %s22, 8
          %s8901 = scalar_lea.hbm %s3, %s8900
          %s8902 = sshll.u32 %s8894, 4
          %s8903 = int_to_ptr.vmem [resolvable:$true] %s8902
          %s8904 = sshll.u32 %s8901, 4
          %s8905 = int_to_ptr.hbm [resolvable:$true] %s8904
          %8910 = dma.vmem_to_hbm [thread:$0]  %s8903, 512, %s8905, %s8891, 128, 256, 8
        $region44: #{tpu_custom_call.1} parent=31 // pred_fallthru
          _
      $region32: #{tpu_custom_call.1} parent=5 // pred_fallthru
        _
      %p8911 = scmp.le.s32.totalorder 2, %s17
      // Predicated region
      $region45: #{tpu_custom_call.1} parent=5 // pred_check
        %p8912 = pneg %p8911
      $region46: #{tpu_custom_call.1} parent=5 // pred_check_branch
        %8914 = sbr.rel (%p8912) target = $region48
      $region47: #{tpu_custom_call.1} parent=5 // pred_region
        %s8915 = ssub.s32 %s17, 2
        // Predicated region
        $region49: #{tpu_custom_call.1} parent=47 // pred_check
          %p8916 = pneg %p114
        $region50: #{tpu_custom_call.1} parent=47 // pred_check_branch
          %8918 = sbr.rel (%p8916) target = $region52
        $region51: #{tpu_custom_call.1} parent=47 // pred_region
          %s8919 = sand.u32 %s99, 1
          %s8920 = scalar_lea.sflag [#allocation5], %s8919
          %s8921 = sand.u32 %s99, 1
          %s8922 = smul.addr %s8921, 32
          %s8923 = scalar_lea.vmem [#allocation8], %s8922
          %8925 = dma.done %s8920, 512
        $region52: #{tpu_custom_call.1} parent=47 // pred_fallthru
          _
      $region48: #{tpu_custom_call.1} parent=5 // pred_fallthru
        _
    $region6: #{tpu_custom_call.1} parent=1 // loop_footer
      %s21 = sadd.s32 1, %s17
    $region7: #{tpu_custom_call.1} parent=1 // loop_footer_branch
      %16 = sbr.rel target = $region3
    $region8: #{tpu_custom_call.1} parent=1 // loop_exit
      _
    %8926 = vsyncpa [#allocation4], 1
    %s8927 = scalar_lea.sflag [#allocation4], 1
    %8928 = vsyncpa %s8927, 1
    %8929 = vsyncpa [#allocation5], 1
    %s8930 = scalar_lea.sflag [#allocation5], 1
    %8931 = vsyncpa %s8930, 1
    %8932 = vsyncpa [#allocation6], 1
    %s8933 = scalar_lea.sflag [#allocation6], 1
    %8934 = vsyncpa %s8933, 1

</llo_original>
